<compile_context>
chip_gen: v6e
topology: v6e:2x2x1
jax: 0.10.0
libtpu: 0.0.40
codegen_flags: <defaults>
</compile_context>

<pallas_src>
import functools
import math

import jax
import jax.numpy as jnp
from jax.experimental import pallas as pl
from jax.experimental.pallas import tpu as pltpu

# Original (unfused) layer shapes; weights stored as (in, out) so the kernel
# computes h @ W + b, matching PyTorch's x @ W_torch.T + b.
ORIG_DIMS = [(784, 256), (256, 128), (128, 64), (64, 32),
             (32, 64), (64, 128), (128, 256), (256, 784)]
ORIG_RELU_AFTER = (0, 1, 2, 4, 5, 6)
N_ORIG = len(ORIG_DIMS)

# Fused stack actually executed by the kernel (encoder 64->32 and decoder
# 32->64 folded into one 64->64 matmul). ReLU after every fused layer except
# the last. No output padding.
FUSED_DIMS = [(784, 256), (256, 128), (128, 64), (64, 64),
              (64, 128), (128, 256), (256, 784)]
N_FUSED = len(FUSED_DIMS)


def _round_up(n, m):
    return ((n + m - 1) // m) * m


# Packed-bias layout: each layer's (1, dout) f32 bias starts at a 128-lane-
# aligned offset so in-kernel static slices are lane-aligned.
BIAS_OFFSETS = []
_off = 0
for _, _dout in FUSED_DIMS:
    BIAS_OFFSETS.append(_off)
    _off += _round_up(_dout, 128)
BIAS_TOTAL = _off  # 1920 = 15 * 128


def autoencoder_kernel(x_ref, *refs):
    """Fully fused 7-matmul MLP forward; weights & packed bias resident in VMEM.

    refs = (w0..w6 [bf16, (in,out)], b_packed [f32, (1, BIAS_TOTAL)], out_ref)
    """
    w_refs = refs[:N_FUSED]
    b_ref = refs[N_FUSED]
    out_ref = refs[N_FUSED + 1]

    h = x_ref[...]  # bf16 straight from HBM -> MXU, no cast
    for i, (_, dout) in enumerate(FUSED_DIMS):
        off = BIAS_OFFSETS[i]
        acc = jnp.dot(h, w_refs[i][...], preferred_element_type=jnp.float32)
        acc = acc + b_ref[:, off:off + dout]  # f32 bias, broadcasts over rows
        if i < N_FUSED - 1:
            # ReLU in f32 on the VPU (v5e VPU has no bf16), back to bf16 for MXU.
            h = jnp.maximum(acc, 0.0).astype(jnp.bfloat16)
        else:
            out_ref[...] = acc.astype(out_ref.dtype)  # bf16 store, 784 lanes


def _resident_spec(block_shape):
    """Whole-array block with a constant index_map: DMA'd once, resident in VMEM.

    Single-buffer it (double buffering buys nothing for a never-changing block)
    to free ~1 MiB of VMEM -- matters when pushing batch_tile to 1024 on
    v6e/v7x, and under v5e's 16 MiB scoped-VMEM default.
    """
    idx_map = lambda i: (0,) * len(block_shape)
    try:
        return pl.BlockSpec(block_shape, idx_map, pipeline_mode=pl.Buffered(1))
    except (AttributeError, TypeError):
        # Fallback for jax versions without pipeline_mode / Buffered.
        return pl.BlockSpec(block_shape, idx_map)


@functools.partial(jax.jit, static_argnames=("batch_tile",))
def autoencoder_forward(x, fused_w, b_packed, batch_tile=512):
    """x: [B, 784] bfloat16 (bf16 I/O end-to-end). Returns [B, 784] bfloat16.

    fused_w[i]: (in, out) bf16.  b_packed: (1, BIAS_TOTAL) f32.
    batch_tile=512 fits comfortably in every generation's default scoped VMEM
    (~6-8 MiB total); 1024 is fine on v6e/v7x (32 MiB default).
    """
    B, d_in = x.shape
    assert d_in == FUSED_DIMS[0][0]
    d_out = FUSED_DIMS[-1][1]

    n_tiles = pl.cdiv(B, batch_tile)
    # Ragged last tile (B % batch_tile != 0): handled by Pallas boundary
    # masking -- OOB rows of the last input block are garbage but rows are
    # independent, and the matching output rows are masked on store. No
    # wrapper-side jnp.pad (would be an extra full HBM pass over the input).

    in_specs = [pl.BlockSpec((batch_tile, d_in), lambda i: (i, 0))]
    in_specs += [_resident_spec((din, dout)) for (din, dout) in FUSED_DIMS]
    in_specs.append(_resident_spec((1, BIAS_TOTAL)))
    out_spec = pl.BlockSpec((batch_tile, d_out), lambda i: (i, 0))

    return pl.pallas_call(
        autoencoder_kernel,
        out_shape=jax.ShapeDtypeStruct((B, d_out), jnp.bfloat16),
        grid_spec=pltpu.PrefetchScalarGridSpec(
            num_scalar_prefetch=0,
            grid=(n_tiles,),
            in_specs=in_specs,
            out_specs=out_spec,
        ),
        compiler_params=pltpu.CompilerParams(
            # Batch axis is embarrassingly parallel; on v7x this shards the grid
            # across the two TensorCores (keep n_tiles even and >= 4 so each
            # core retains a pipelined >=2-step grid).
            # TODO(synk): if plain "parallel" is ever observed not to core-shard
            # on v7x, switch this axis to pltpu.CORE_PARALLEL.
            dimension_semantics=("parallel",),
        ),
    )(x, *fused_w, b_packed)


def init_params(key):
    """PyTorch nn.Linear default init: U(-1/sqrt(fan_in), +1/sqrt(fan_in)).
    Weights stored as (in, out), i.e. already transposed vs torch's (out, in)."""
    weights, biases = [], []
    for (din, dout) in ORIG_DIMS:
        key, kw, kb = jax.random.split(key, 3)
        bound = 1.0 / math.sqrt(din)
        weights.append(jax.random.uniform(kw, (din, dout), jnp.float32, -bound, bound))
        biases.append(jax.random.uniform(kb, (1, dout), jnp.float32, -bound, bound))
    return weights, biases


def prepare_params(weights, biases):
    """Host-side prep: fold the bottleneck pair, cast weights to bf16, pack the
    f32 biases into one lane-aligned row."""
    w0, w1, w2, w3, w4, w5, w6, w7 = weights
    b0, b1, b2, b3, b4, b5, b6, b7 = biases

    w34 = w3 @ w4                      # (64, 32) @ (32, 64) -> (64, 64), in f32
    b34 = b3 @ w4 + b4                 # (1, 64)

    fused_w = [w.astype(jnp.bfloat16) for w in (w0, w1, w2, w34, w5, w6, w7)]
    fused_b = [b.astype(jnp.float32) for b in (b0, b1, b2, b34, b5, b6, b7)]

    b_packed = jnp.zeros((1, BIAS_TOTAL), jnp.float32)
    for off, b in zip(BIAS_OFFSETS, fused_b):
        b_packed = b_packed.at[:, off:off + b.shape[1]].set(b)
    return fused_w, fused_b, b_packed


def kernel_math_reference(x, fused_w, fused_b):
    """Plain-JAX replica of the exact kernel arithmetic (bf16 matmuls, f32
    accumulation + bias + ReLU, bf16 output)."""
    h = x.astype(jnp.bfloat16)
    for i in range(N_FUSED):
        acc = jnp.dot(h, fused_w[i], preferred_element_type=jnp.float32) + fused_b[i]
        if i < N_FUSED - 1:
            h = jnp.maximum(acc, 0.0).astype(jnp.bfloat16)
        else:
            return acc.astype(jnp.bfloat16)


def module_reference(x, weights, biases):
    """Full-f32, unfused reference of the original PyTorch module."""
    h = x.astype(jnp.float32)
    for i in range(N_ORIG):
        h = h @ weights[i] + biases[i]
        if i in ORIG_RELU_AFTER:
            h = jnp.maximum(h, 0.0)
    return h


def _max_rel_err(a, b):
    """Max abs error normalized by the reference's max magnitude (robust to the
    MXU accumulating in a different order than host XLA)."""
    a = a.astype(jnp.float32)
    b = b.astype(jnp.float32)
    return float(jnp.max(jnp.abs(a - b)) / (jnp.max(jnp.abs(b)) + 1e-6))


if __name__ == "__main__":
    key = jax.random.PRNGKey(0)
    key, kx = jax.random.split(key)

    # 4 grid steps of batch_tile=512: even and >= 4, so a v7x megacore gets a
    # pipelined >=2-step grid per TensorCore; also exercises DMA/compute
    # overlap on v5e/v6e. Input is produced directly in bf16 (bf16 I/O end to
    # end); the consumer receives a bf16 output.
    B = 2048
    x = jax.random.normal(kx, (B, 784), jnp.bfloat16)

    weights, biases = init_params(key)
    fused_w, fused_b, b_packed = prepare_params(weights, biases)

    out = autoencoder_forward(x, fused_w, b_packed, batch_tile=512)
    out = jax.block_until_ready(out)
    assert out.shape == (B, 784) and out.dtype == jnp.bfloat16, (out.shape, out.dtype)

    # Exact-arithmetic check (same bf16/f32 math; residual differences are MXU
    # vs XLA accumulation order + final bf16 rounding) -> relative-error check.
    err_exact = _max_rel_err(out, kernel_math_reference(x, fused_w, fused_b))
    assert err_exact < 2e-2, f"mismatch vs exact-math reference: rel err {err_exact}"

    # Semantic check vs the full-f32 unfused module (bf16 weights, folded
    # bottleneck, bf16 output) -> loose tolerance.
    err_mod = _max_rel_err(out, module_reference(x, weights, biases))
    assert err_mod < 1e-1, f"mismatch vs f32 module reference: rel err {err_mod}"

    print("KERNEL_OK")
</pallas_src>

<mosaic_0001>
module attributes {stable_mosaic.version = 11 : i64} {
  func.func @autoencoder_kernel(%arg0: i32, %arg1: memref<512x784xbf16, #tpu.memory_space<vmem>>, %arg2: memref<784x256xbf16, #tpu.memory_space<vmem>>, %arg3: memref<256x128xbf16, #tpu.memory_space<vmem>>, %arg4: memref<128x64xbf16, #tpu.memory_space<vmem>>, %arg5: memref<64x64xbf16, #tpu.memory_space<vmem>>, %arg6: memref<64x128xbf16, #tpu.memory_space<vmem>>, %arg7: memref<128x256xbf16, #tpu.memory_space<vmem>>, %arg8: memref<256x784xbf16, #tpu.memory_space<vmem>>, %arg9: memref<1x1920xf32, #tpu.memory_space<vmem>>, %arg10: memref<512x784xbf16, #tpu.memory_space<vmem>>) attributes {dimension_semantics = [#tpu.dimension_semantics<parallel>], iteration_bounds = array<i64: 4>, scalar_prefetch = 0 : i64, scratch_operands = 0 : i64, tpu.core_type = #tpu.core_type<tc>, window_params = [{transform_indices = @transform_0, window_bounds = array<i64: 512, 784>}, {pipeline_mode = #tpu.pipeline_mode<synchronous>, transform_indices = @transform_1, window_bounds = array<i64: 784, 256>}, {pipeline_mode = #tpu.pipeline_mode<synchronous>, transform_indices = @transform_2, window_bounds = array<i64: 256, 128>}, {pipeline_mode = #tpu.pipeline_mode<synchronous>, transform_indices = @transform_3, window_bounds = array<i64: 128, 64>}, {pipeline_mode = #tpu.pipeline_mode<synchronous>, transform_indices = @transform_4, window_bounds = array<i64: 64, 64>}, {pipeline_mode = #tpu.pipeline_mode<synchronous>, transform_indices = @transform_5, window_bounds = array<i64: 64, 128>}, {pipeline_mode = #tpu.pipeline_mode<synchronous>, transform_indices = @transform_6, window_bounds = array<i64: 128, 256>}, {pipeline_mode = #tpu.pipeline_mode<synchronous>, transform_indices = @transform_7, window_bounds = array<i64: 256, 784>}, {pipeline_mode = #tpu.pipeline_mode<synchronous>, transform_indices = @transform_8, window_bounds = array<i64: 1, 1920>}, {transform_indices = @transform_9, window_bounds = array<i64: 512, 784>}]} {
    %c0 = arith.constant 0 : index
    %c0_0 = arith.constant 0 : index
    %0 = vector.load %arg1[%c0, %c0_0] : memref<512x784xbf16, #tpu.memory_space<vmem>>, vector<512x784xbf16>
    %c0_1 = arith.constant 0 : index
    %c0_2 = arith.constant 0 : index
    %1 = vector.load %arg2[%c0_1, %c0_2] : memref<784x256xbf16, #tpu.memory_space<vmem>>, vector<784x256xbf16>
    %cst = arith.constant dense<0.000000e+00> : vector<512x256xf32>
    %2 = tpu.matmul %0, %1, %cst {dimension_numbers = #tpu.dot_dimension_numbers<[1], [0], [0], [1], [0, 0, 1, 1], [], []>} : vector<512x784xbf16>, vector<784x256xbf16>, vector<512x256xf32> -> vector<512x256xf32>
    %c0_3 = arith.constant 0 : index
    %c0_4 = arith.constant 0 : index
    %3 = vector.load %arg9[%c0_3, %c0_4] : memref<1x1920xf32, #tpu.memory_space<vmem>>, vector<1x256xf32>
    %4 = vector.broadcast %3 : vector<1x256xf32> to vector<512x256xf32>
    %5 = arith.addf %2, %4 : vector<512x256xf32>
    %cst_5 = arith.constant 0.000000e+00 : f32
    %6 = vector.broadcast %cst_5 : f32 to vector<512x256xf32>
    %7 = arith.maximumf %5, %6 : vector<512x256xf32>
    %8 = arith.truncf %7 : vector<512x256xf32> to vector<512x256xbf16>
    %c0_6 = arith.constant 0 : index
    %c0_7 = arith.constant 0 : index
    %9 = vector.load %arg3[%c0_6, %c0_7] : memref<256x128xbf16, #tpu.memory_space<vmem>>, vector<256x128xbf16>
    %cst_8 = arith.constant dense<0.000000e+00> : vector<512x128xf32>
    %10 = tpu.matmul %8, %9, %cst_8 {dimension_numbers = #tpu.dot_dimension_numbers<[1], [0], [0], [1], [0, 0, 1, 1], [], []>} : vector<512x256xbf16>, vector<256x128xbf16>, vector<512x128xf32> -> vector<512x128xf32>
    %c0_9 = arith.constant 0 : index
    %c256 = arith.constant 256 : index
    %11 = vector.load %arg9[%c0_9, %c256] : memref<1x1920xf32, #tpu.memory_space<vmem>>, vector<1x128xf32>
    %12 = vector.broadcast %11 : vector<1x128xf32> to vector<512x128xf32>
    %13 = arith.addf %10, %12 : vector<512x128xf32>
    %cst_10 = arith.constant 0.000000e+00 : f32
    %14 = vector.broadcast %cst_10 : f32 to vector<512x128xf32>
    %15 = arith.maximumf %13, %14 : vector<512x128xf32>
    %16 = arith.truncf %15 : vector<512x128xf32> to vector<512x128xbf16>
    %c0_11 = arith.constant 0 : index
    %c0_12 = arith.constant 0 : index
    %17 = vector.load %arg4[%c0_11, %c0_12] : memref<128x64xbf16, #tpu.memory_space<vmem>>, vector<128x64xbf16>
    %cst_13 = arith.constant dense<0.000000e+00> : vector<512x64xf32>
    %18 = tpu.matmul %16, %17, %cst_13 {dimension_numbers = #tpu.dot_dimension_numbers<[1], [0], [0], [1], [0, 0, 1, 1], [], []>} : vector<512x128xbf16>, vector<128x64xbf16>, vector<512x64xf32> -> vector<512x64xf32>
    %c0_14 = arith.constant 0 : index
    %c384 = arith.constant 384 : index
    %19 = vector.load %arg9[%c0_14, %c384] : memref<1x1920xf32, #tpu.memory_space<vmem>>, vector<1x64xf32>
    %20 = vector.broadcast %19 : vector<1x64xf32> to vector<512x64xf32>
    %21 = arith.addf %18, %20 : vector<512x64xf32>
    %cst_15 = arith.constant 0.000000e+00 : f32
    %22 = vector.broadcast %cst_15 : f32 to vector<512x64xf32>
    %23 = arith.maximumf %21, %22 : vector<512x64xf32>
    %24 = arith.truncf %23 : vector<512x64xf32> to vector<512x64xbf16>
    %c0_16 = arith.constant 0 : index
    %c0_17 = arith.constant 0 : index
    %25 = vector.load %arg5[%c0_16, %c0_17] : memref<64x64xbf16, #tpu.memory_space<vmem>>, vector<64x64xbf16>
    %cst_18 = arith.constant dense<0.000000e+00> : vector<512x64xf32>
    %26 = tpu.matmul %24, %25, %cst_18 {dimension_numbers = #tpu.dot_dimension_numbers<[1], [0], [0], [1], [0, 0, 1, 1], [], []>} : vector<512x64xbf16>, vector<64x64xbf16>, vector<512x64xf32> -> vector<512x64xf32>
    %c0_19 = arith.constant 0 : index
    %c512 = arith.constant 512 : index
    %27 = vector.load %arg9[%c0_19, %c512] : memref<1x1920xf32, #tpu.memory_space<vmem>>, vector<1x64xf32>
    %28 = vector.broadcast %27 : vector<1x64xf32> to vector<512x64xf32>
    %29 = arith.addf %26, %28 : vector<512x64xf32>
    %cst_20 = arith.constant 0.000000e+00 : f32
    %30 = vector.broadcast %cst_20 : f32 to vector<512x64xf32>
    %31 = arith.maximumf %29, %30 : vector<512x64xf32>
    %32 = arith.truncf %31 : vector<512x64xf32> to vector<512x64xbf16>
    %c0_21 = arith.constant 0 : index
    %c0_22 = arith.constant 0 : index
    %33 = vector.load %arg6[%c0_21, %c0_22] : memref<64x128xbf16, #tpu.memory_space<vmem>>, vector<64x128xbf16>
    %cst_23 = arith.constant dense<0.000000e+00> : vector<512x128xf32>
    %34 = tpu.matmul %32, %33, %cst_23 {dimension_numbers = #tpu.dot_dimension_numbers<[1], [0], [0], [1], [0, 0, 1, 1], [], []>} : vector<512x64xbf16>, vector<64x128xbf16>, vector<512x128xf32> -> vector<512x128xf32>
    %c0_24 = arith.constant 0 : index
    %c640 = arith.constant 640 : index
    %35 = vector.load %arg9[%c0_24, %c640] : memref<1x1920xf32, #tpu.memory_space<vmem>>, vector<1x128xf32>
    %36 = vector.broadcast %35 : vector<1x128xf32> to vector<512x128xf32>
    %37 = arith.addf %34, %36 : vector<512x128xf32>
    %cst_25 = arith.constant 0.000000e+00 : f32
    %38 = vector.broadcast %cst_25 : f32 to vector<512x128xf32>
    %39 = arith.maximumf %37, %38 : vector<512x128xf32>
    %40 = arith.truncf %39 : vector<512x128xf32> to vector<512x128xbf16>
    %c0_26 = arith.constant 0 : index
    %c0_27 = arith.constant 0 : index
    %41 = vector.load %arg7[%c0_26, %c0_27] : memref<128x256xbf16, #tpu.memory_space<vmem>>, vector<128x256xbf16>
    %cst_28 = arith.constant dense<0.000000e+00> : vector<512x256xf32>
    %42 = tpu.matmul %40, %41, %cst_28 {dimension_numbers = #tpu.dot_dimension_numbers<[1], [0], [0], [1], [0, 0, 1, 1], [], []>} : vector<512x128xbf16>, vector<128x256xbf16>, vector<512x256xf32> -> vector<512x256xf32>
    %c0_29 = arith.constant 0 : index
    %c768 = arith.constant 768 : index
    %43 = vector.load %arg9[%c0_29, %c768] : memref<1x1920xf32, #tpu.memory_space<vmem>>, vector<1x256xf32>
    %44 = vector.broadcast %43 : vector<1x256xf32> to vector<512x256xf32>
    %45 = arith.addf %42, %44 : vector<512x256xf32>
    %cst_30 = arith.constant 0.000000e+00 : f32
    %46 = vector.broadcast %cst_30 : f32 to vector<512x256xf32>
    %47 = arith.maximumf %45, %46 : vector<512x256xf32>
    %48 = arith.truncf %47 : vector<512x256xf32> to vector<512x256xbf16>
    %c0_31 = arith.constant 0 : index
    %c0_32 = arith.constant 0 : index
    %49 = vector.load %arg8[%c0_31, %c0_32] : memref<256x784xbf16, #tpu.memory_space<vmem>>, vector<256x784xbf16>
    %cst_33 = arith.constant dense<0.000000e+00> : vector<512x784xf32>
    %50 = tpu.matmul %48, %49, %cst_33 {dimension_numbers = #tpu.dot_dimension_numbers<[1], [0], [0], [1], [0, 0, 1, 1], [], []>} : vector<512x256xbf16>, vector<256x784xbf16>, vector<512x784xf32> -> vector<512x784xf32>
    %c0_34 = arith.constant 0 : index
    %c1024 = arith.constant 1024 : index
    %51 = vector.load %arg9[%c0_34, %c1024] : memref<1x1920xf32, #tpu.memory_space<vmem>>, vector<1x784xf32>
    %52 = vector.broadcast %51 : vector<1x784xf32> to vector<512x784xf32>
    %53 = arith.addf %50, %52 : vector<512x784xf32>
    %54 = arith.truncf %53 : vector<512x784xf32> to vector<512x784xbf16>
    %c0_35 = arith.constant 0 : index
    %c0_36 = arith.constant 0 : index
    %55 = vector.load %arg10[%c0_35, %c0_36] : memref<512x784xbf16, #tpu.memory_space<vmem>>, vector<512x784xbf16>
    tpu.vector_store %arg10[%c0_35, %c0_36], %54 {strides = array<i32>} : memref<512x784xbf16, #tpu.memory_space<vmem>>, vector<512x784xbf16>,
    return
  }
  func.func @transform_0(%arg0: i32) -> (i32, i32) {
    %c0_i32 = arith.constant 0 : i32
    %c0_i32_0 = arith.constant 0 : i32
    return %arg0, %c0_i32 : i32, i32
  }
  func.func @transform_1(%arg0: i32) -> (i32, i32) {
    %c0_i32 = arith.constant 0 : i32
    %c0_i32_0 = arith.constant 0 : i32
    %c0_i32_1 = arith.constant 0 : i32
    return %c0_i32, %c0_i32_0 : i32, i32
  }
  func.func @transform_2(%arg0: i32) -> (i32, i32) {
    %c0_i32 = arith.constant 0 : i32
    %c0_i32_0 = arith.constant 0 : i32
    %c0_i32_1 = arith.constant 0 : i32
    return %c0_i32, %c0_i32_0 : i32, i32
  }
  func.func @transform_3(%arg0: i32) -> (i32, i32) {
    %c0_i32 = arith.constant 0 : i32
    %c0_i32_0 = arith.constant 0 : i32
    %c0_i32_1 = arith.constant 0 : i32
    return %c0_i32, %c0_i32_0 : i32, i32
  }
  func.func @transform_4(%arg0: i32) -> (i32, i32) {
    %c0_i32 = arith.constant 0 : i32
    %c0_i32_0 = arith.constant 0 : i32
    %c0_i32_1 = arith.constant 0 : i32
    return %c0_i32, %c0_i32_0 : i32, i32
  }
  func.func @transform_5(%arg0: i32) -> (i32, i32) {
    %c0_i32 = arith.constant 0 : i32
    %c0_i32_0 = arith.constant 0 : i32
    %c0_i32_1 = arith.constant 0 : i32
    return %c0_i32, %c0_i32_0 : i32, i32
  }
  func.func @transform_6(%arg0: i32) -> (i32, i32) {
    %c0_i32 = arith.constant 0 : i32
    %c0_i32_0 = arith.constant 0 : i32
    %c0_i32_1 = arith.constant 0 : i32
    return %c0_i32, %c0_i32_0 : i32, i32
  }
  func.func @transform_7(%arg0: i32) -> (i32, i32) {
    %c0_i32 = arith.constant 0 : i32
    %c0_i32_0 = arith.constant 0 : i32
    %c0_i32_1 = arith.constant 0 : i32
    return %c0_i32, %c0_i32_0 : i32, i32
  }
  func.func @transform_8(%arg0: i32) -> (i32, i32) {
    %c0_i32 = arith.constant 0 : i32
    %c0_i32_0 = arith.constant 0 : i32
    %c0_i32_1 = arith.constant 0 : i32
    return %c0_i32, %c0_i32_0 : i32, i32
  }
  func.func @transform_9(%arg0: i32) -> (i32, i32) {
    %c0_i32 = arith.constant 0 : i32
    %c0_i32_0 = arith.constant 0 : i32
    return %arg0, %c0_i32 : i32, i32
  }
}

</mosaic_0001>

<llo_original>
// kernel: autoencoder_forward.1
$region0: #{autoencoder_forward.1}
  #allocation0 [shape = 'u32[]', space=smem, size = 0x4, offset = 0x4, fixed_abs, tag = 'smem constant byte address 0x4 - core index']
  #allocation1 [shape = 'u32[144,128]{1,0:T(1,128)}', space=vmem, size = 0x12000, scoped, tag = 'internal scratch']
  %s0 = inlined_call_operand.vmem [shape: bf16[2048,784], index: 0, kind: input, shape index: {}]
  %s1 = inlined_call_operand.vmem [shape: bf16[784,256], index: 1, kind: input, shape index: {}]
  %s2 = inlined_call_operand.vmem [shape: bf16[256,128], index: 2, kind: input, shape index: {}]
  %s3 = inlined_call_operand.vmem [shape: bf16[128,64], index: 3, kind: input, shape index: {}]
  %s4 = inlined_call_operand.vmem [shape: bf16[64,64], index: 4, kind: input, shape index: {}]
  %s5 = inlined_call_operand.vmem [shape: bf16[64,128], index: 5, kind: input, shape index: {}]
  %s6 = inlined_call_operand.vmem [shape: bf16[128,256], index: 6, kind: input, shape index: {}]
  %s7 = inlined_call_operand.vmem [shape: bf16[256,784], index: 7, kind: input, shape index: {}]
  %s8 = inlined_call_operand.vmem [shape: f32[1,1920], index: 8, kind: input, shape index: {}]
  %s9 = inlined_call_operand.vmem [shape: bf16[2048,784], index: 9, kind: output, shape index: {}]
  %s10 = sld [smem:[#allocation0]]
  $region69: #{autoencoder_forward.1} parent=0
    _
  %s12 = ssub.s32 1, %s10
  %s13 = scalar_select 0, %s12, %s10
  loop: start=0, step=1, limit=6
  $region2: #{autoencoder_forward.1} parent=0 // loop_pre_header
    _
  $region3: #{autoencoder_forward.1} parent=0 // loop_header
    %s15 = sphi 0, %s19
    %p16 = scmp.ge.s32.totalorder %s15, 6
    %s25 = sphi 0, %s27
    %s28 = sphi 0, %s25
    %s29 = sphi 0, %s28
    %s45 = sphi 0, %s29
    %s49 = sphi 0, %s49
    %s51 = sphi 0, %s49
    %s52 = sphi 0, %s51
    %s66 = sphi 0, %s52
    %s70 = sphi 0, %s70
    %s72 = sphi 0, %s70
    %s73 = sphi 0, %s72
    %s87 = sphi 0, %s73
    %s91 = sphi 0, %s91
    %s93 = sphi 0, %s91
    %s94 = sphi 0, %s93
    %s108 = sphi 0, %s94
    %s112 = sphi 0, %s112
    %s114 = sphi 0, %s112
    %s115 = sphi 0, %s114
    %s129 = sphi 0, %s115
    %s133 = sphi 0, %s133
    %s135 = sphi 0, %s133
    %s136 = sphi 0, %s135
    %s150 = sphi 0, %s136
    %s154 = sphi 0, %s154
    %s156 = sphi 0, %s154
    %s157 = sphi 0, %s156
    %s171 = sphi 0, %s157
    %s175 = sphi 0, %s175
    %s177 = sphi 0, %s175
    %s178 = sphi 0, %s177
    %s192 = sphi 0, %s178
    %s196 = sphi 0, %s196
    %s198 = sphi 0, %s196
    %s199 = sphi 0, %s198
    %s213 = sphi 0, %s199
    %s219 = sphi 0, %s221
    %s222 = sphi 0, %s219
    %s223 = sphi 0, %s222
    %s239 = sphi 0, %s223
  $region4: #{autoencoder_forward.1} parent=0 // loop_header_branch
    %18 = sbr.rel (%p16) target = $region8
  $region5: #{autoencoder_forward.1} parent=0 // loop_body
    %s20 = ssub.s32 %s15, 1
    %s21 = ssub.s32 %s15, 2
    %s22 = sadd.s32 %s15, 1
    %s23 = ssub.s32 %s15, %s22
    %p24 = scmp.eq.s32.totalorder %s23, 0
    %s26 = sadd.s32 %s25, 1
    %s27 = scalar_select %p24, %s25, %s26
    %p30 = pneg %p24
    %p31 = scmp.eq.s32.totalorder %s15, 3
    %p32 = por %p30, %p31
    %p33 = scmp.ne.s32.totalorder %s25, %s28
    %p34 = scmp.eq.s32.totalorder %s15, 0
    %p35 = por %p33, %p34
    %p36 = scmp.ne.s32.totalorder %s25, %s28
    %p37 = scmp.eq.s32.totalorder %s20, 3
    %p38 = por %p36, %p37
    %p39 = scmp.ne.s32.totalorder %s28, %s29
    %p40 = scmp.eq.s32.totalorder %s20, 0
    %p41 = por %p39, %p40
    %p42 = scmp.ne.s32.totalorder %s28, %s29
    %p43 = scmp.eq.s32.totalorder %s21, 3
    %p44 = por %p42, %p43
    %p46 = scmp.ne.s32.totalorder %s29, %s45
    %p47 = scmp.eq.s32.totalorder %s21, 0
    %p48 = por %p46, %p47
    %s50 = sadd.s32 %s49, 1
    %p53 = scmp.eq.s32.totalorder %s15, 3
    %p54 = scmp.ne.s32.totalorder %s49, %s51
    %p55 = scmp.eq.s32.totalorder %s15, 0
    %p56 = por %p54, %p55
    %p57 = scmp.ne.s32.totalorder %s49, %s51
    %p58 = scmp.eq.s32.totalorder %s20, 3
    %p59 = por %p57, %p58
    %p60 = scmp.ne.s32.totalorder %s51, %s52
    %p61 = scmp.eq.s32.totalorder %s20, 0
    %p62 = por %p60, %p61
    %p63 = scmp.ne.s32.totalorder %s51, %s52
    %p64 = scmp.eq.s32.totalorder %s21, 3
    %p65 = por %p63, %p64
    %p67 = scmp.ne.s32.totalorder %s52, %s66
    %p68 = scmp.eq.s32.totalorder %s21, 0
    %p69 = por %p67, %p68
    %s71 = sadd.s32 %s70, 1
    %p74 = scmp.eq.s32.totalorder %s15, 3
    %p75 = scmp.ne.s32.totalorder %s70, %s72
    %p76 = scmp.eq.s32.totalorder %s15, 0
    %p77 = por %p75, %p76
    %p78 = scmp.ne.s32.totalorder %s70, %s72
    %p79 = scmp.eq.s32.totalorder %s20, 3
    %p80 = por %p78, %p79
    %p81 = scmp.ne.s32.totalorder %s72, %s73
    %p82 = scmp.eq.s32.totalorder %s20, 0
    %p83 = por %p81, %p82
    %p84 = scmp.ne.s32.totalorder %s72, %s73
    %p85 = scmp.eq.s32.totalorder %s21, 3
    %p86 = por %p84, %p85
    %p88 = scmp.ne.s32.totalorder %s73, %s87
    %p89 = scmp.eq.s32.totalorder %s21, 0
    %p90 = por %p88, %p89
    %s92 = sadd.s32 %s91, 1
    %p95 = scmp.eq.s32.totalorder %s15, 3
    %p96 = scmp.ne.s32.totalorder %s91, %s93
    %p97 = scmp.eq.s32.totalorder %s15, 0
    %p98 = por %p96, %p97
    %p99 = scmp.ne.s32.totalorder %s91, %s93
    %p100 = scmp.eq.s32.totalorder %s20, 3
    %p101 = por %p99, %p100
    %p102 = scmp.ne.s32.totalorder %s93, %s94
    %p103 = scmp.eq.s32.totalorder %s20, 0
    %p104 = por %p102, %p103
    %p105 = scmp.ne.s32.totalorder %s93, %s94
    %p106 = scmp.eq.s32.totalorder %s21, 3
    %p107 = por %p105, %p106
    %p109 = scmp.ne.s32.totalorder %s94, %s108
    %p110 = scmp.eq.s32.totalorder %s21, 0
    %p111 = por %p109, %p110
    %s113 = sadd.s32 %s112, 1
    %p116 = scmp.eq.s32.totalorder %s15, 3
    %p117 = scmp.ne.s32.totalorder %s112, %s114
    %p118 = scmp.eq.s32.totalorder %s15, 0
    %p119 = por %p117, %p118
    %p120 = scmp.ne.s32.totalorder %s112, %s114
    %p121 = scmp.eq.s32.totalorder %s20, 3
    %p122 = por %p120, %p121
    %p123 = scmp.ne.s32.totalorder %s114, %s115
    %p124 = scmp.eq.s32.totalorder %s20, 0
    %p125 = por %p123, %p124
    %p126 = scmp.ne.s32.totalorder %s114, %s115
    %p127 = scmp.eq.s32.totalorder %s21, 3
    %p128 = por %p126, %p127
    %p130 = scmp.ne.s32.totalorder %s115, %s129
    %p131 = scmp.eq.s32.totalorder %s21, 0
    %p132 = por %p130, %p131
    %s134 = sadd.s32 %s133, 1
    %p137 = scmp.eq.s32.totalorder %s15, 3
    %p138 = scmp.ne.s32.totalorder %s133, %s135
    %p139 = scmp.eq.s32.totalorder %s15, 0
    %p140 = por %p138, %p139
    %p141 = scmp.ne.s32.totalorder %s133, %s135
    %p142 = scmp.eq.s32.totalorder %s20, 3
    %p143 = por %p141, %p142
    %p144 = scmp.ne.s32.totalorder %s135, %s136
    %p145 = scmp.eq.s32.totalorder %s20, 0
    %p146 = por %p144, %p145
    %p147 = scmp.ne.s32.totalorder %s135, %s136
    %p148 = scmp.eq.s32.totalorder %s21, 3
    %p149 = por %p147, %p148
    %p151 = scmp.ne.s32.totalorder %s136, %s150
    %p152 = scmp.eq.s32.totalorder %s21, 0
    %p153 = por %p151, %p152
    %s155 = sadd.s32 %s154, 1
    %p158 = scmp.eq.s32.totalorder %s15, 3
    %p159 = scmp.ne.s32.totalorder %s154, %s156
    %p160 = scmp.eq.s32.totalorder %s15, 0
    %p161 = por %p159, %p160
    %p162 = scmp.ne.s32.totalorder %s154, %s156
    %p163 = scmp.eq.s32.totalorder %s20, 3
    %p164 = por %p162, %p163
    %p165 = scmp.ne.s32.totalorder %s156, %s157
    %p166 = scmp.eq.s32.totalorder %s20, 0
    %p167 = por %p165, %p166
    %p168 = scmp.ne.s32.totalorder %s156, %s157
    %p169 = scmp.eq.s32.totalorder %s21, 3
    %p170 = por %p168, %p169
    %p172 = scmp.ne.s32.totalorder %s157, %s171
    %p173 = scmp.eq.s32.totalorder %s21, 0
    %p174 = por %p172, %p173
    %s176 = sadd.s32 %s175, 1
    %p179 = scmp.eq.s32.totalorder %s15, 3
    %p180 = scmp.ne.s32.totalorder %s175, %s177
    %p181 = scmp.eq.s32.totalorder %s15, 0
    %p182 = por %p180, %p181
    %p183 = scmp.ne.s32.totalorder %s175, %s177
    %p184 = scmp.eq.s32.totalorder %s20, 3
    %p185 = por %p183, %p184
    %p186 = scmp.ne.s32.totalorder %s177, %s178
    %p187 = scmp.eq.s32.totalorder %s20, 0
    %p188 = por %p186, %p187
    %p189 = scmp.ne.s32.totalorder %s177, %s178
    %p190 = scmp.eq.s32.totalorder %s21, 3
    %p191 = por %p189, %p190
    %p193 = scmp.ne.s32.totalorder %s178, %s192
    %p194 = scmp.eq.s32.totalorder %s21, 0
    %p195 = por %p193, %p194
    %s197 = sadd.s32 %s196, 1
    %p200 = scmp.eq.s32.totalorder %s15, 3
    %p201 = scmp.ne.s32.totalorder %s196, %s198
    %p202 = scmp.eq.s32.totalorder %s15, 0
    %p203 = por %p201, %p202
    %p204 = scmp.ne.s32.totalorder %s196, %s198
    %p205 = scmp.eq.s32.totalorder %s20, 3
    %p206 = por %p204, %p205
    %p207 = scmp.ne.s32.totalorder %s198, %s199
    %p208 = scmp.eq.s32.totalorder %s20, 0
    %p209 = por %p207, %p208
    %p210 = scmp.ne.s32.totalorder %s198, %s199
    %p211 = scmp.eq.s32.totalorder %s21, 3
    %p212 = por %p210, %p211
    %p214 = scmp.ne.s32.totalorder %s199, %s213
    %p215 = scmp.eq.s32.totalorder %s21, 0
    %p216 = por %p214, %p215
    %s217 = ssub.s32 %s15, %s22
    %p218 = scmp.eq.s32.totalorder %s217, 0
    %s220 = sadd.s32 %s219, 1
    %s221 = scalar_select %p218, %s219, %s220
    %p224 = pneg %p218
    %p225 = scmp.eq.s32.totalorder %s15, 3
    %p226 = por %p224, %p225
    %p227 = scmp.ne.s32.totalorder %s219, %s222
    %p228 = scmp.eq.s32.totalorder %s15, 0
    %p229 = por %p227, %p228
    %p230 = scmp.ne.s32.totalorder %s219, %s222
    %p231 = scmp.eq.s32.totalorder %s20, 3
    %p232 = por %p230, %p231
    %p233 = scmp.ne.s32.totalorder %s222, %s223
    %p234 = scmp.eq.s32.totalorder %s20, 0
    %p235 = por %p233, %p234
    %p236 = scmp.ne.s32.totalorder %s222, %s223
    %p237 = scmp.eq.s32.totalorder %s21, 3
    %p238 = por %p236, %p237
    %p240 = scmp.ne.s32.totalorder %s223, %s239
    %p241 = scmp.eq.s32.totalorder %s21, 0
    %p242 = por %p240, %p241
    %p243 = scmp.le.s32.totalorder 1, %s15
    %p244 = scmp.lt.s32.totalorder %s15, 5
    %p245 = pnand %p243, %p244
    %p246 = pneg %p245
    // Predicated region
    $region9: #{autoencoder_forward.1} parent=5 // pred_check
      _
    $region10: #{autoencoder_forward.1} parent=5 // pred_check_branch
      %248 = sbr.rel (%p245) target = $region12
    $region11: #{autoencoder_forward.1} parent=5 // pred_region
      %s249 = ssub.s32 %s15, 1
      // Predicated region
      $region13: #{autoencoder_forward.1} parent=11 // pred_check
        %p250 = pneg %p62
      $region14: #{autoencoder_forward.1} parent=11 // pred_check_branch
        %252 = sbr.rel (%p250) target = $region16
      $region15: #{autoencoder_forward.1} parent=11 // pred_region
        _
      $region16: #{autoencoder_forward.1} parent=11 // pred_fallthru
        _
      // Predicated region
      $region17: #{autoencoder_forward.1} parent=11 // pred_check
        %p253 = pneg %p83
      $region18: #{autoencoder_forward.1} parent=11 // pred_check_branch
        %255 = sbr.rel (%p253) target = $region20
      $region19: #{autoencoder_forward.1} parent=11 // pred_region
        _
      $region20: #{autoencoder_forward.1} parent=11 // pred_fallthru
        _
      // Predicated region
      $region21: #{autoencoder_forward.1} parent=11 // pred_check
        %p256 = pneg %p104
      $region22: #{autoencoder_forward.1} parent=11 // pred_check_branch
        %258 = sbr.rel (%p256) target = $region24
      $region23: #{autoencoder_forward.1} parent=11 // pred_region
        _
      $region24: #{autoencoder_forward.1} parent=11 // pred_fallthru
        _
      // Predicated region
      $region25: #{autoencoder_forward.1} parent=11 // pred_check
        %p259 = pneg %p125
      $region26: #{autoencoder_forward.1} parent=11 // pred_check_branch
        %261 = sbr.rel (%p259) target = $region28
      $region27: #{autoencoder_forward.1} parent=11 // pred_region
        _
      $region28: #{autoencoder_forward.1} parent=11 // pred_fallthru
        _
      // Predicated region
      $region29: #{autoencoder_forward.1} parent=11 // pred_check
        %p262 = pneg %p146
      $region30: #{autoencoder_forward.1} parent=11 // pred_check_branch
        %264 = sbr.rel (%p262) target = $region32
      $region31: #{autoencoder_forward.1} parent=11 // pred_region
        _
      $region32: #{autoencoder_forward.1} parent=11 // pred_fallthru
        _
      // Predicated region
      $region33: #{autoencoder_forward.1} parent=11 // pred_check
        %p265 = pneg %p167
      $region34: #{autoencoder_forward.1} parent=11 // pred_check_branch
        %267 = sbr.rel (%p265) target = $region36
      $region35: #{autoencoder_forward.1} parent=11 // pred_region
        _
      $region36: #{autoencoder_forward.1} parent=11 // pred_fallthru
        _
      // Predicated region
      $region37: #{autoencoder_forward.1} parent=11 // pred_check
        %p268 = pneg %p188
      $region38: #{autoencoder_forward.1} parent=11 // pred_check_branch
        %270 = sbr.rel (%p268) target = $region40
      $region39: #{autoencoder_forward.1} parent=11 // pred_region
        _
      $region40: #{autoencoder_forward.1} parent=11 // pred_fallthru
        _
      // Predicated region
      $region41: #{autoencoder_forward.1} parent=11 // pred_check
        %p271 = pneg %p209
      $region42: #{autoencoder_forward.1} parent=11 // pred_check_branch
        %273 = sbr.rel (%p271) target = $region44
      $region43: #{autoencoder_forward.1} parent=11 // pred_region
        _
      $region44: #{autoencoder_forward.1} parent=11 // pred_fallthru
        _
    $region12: #{autoencoder_forward.1} parent=5 // pred_fallthru
      _
    %p274 = scmp.lt.s32.totalorder %s15, 4
    // Predicated region
    $region45: #{autoencoder_forward.1} parent=5 // pred_check
      %p275 = pneg %p274
    $region46: #{autoencoder_forward.1} parent=5 // pred_check_branch
      %277 = sbr.rel (%p275) target = $region48
    $region47: #{autoencoder_forward.1} parent=5 // pred_region
      // Predicated region
      $region49: #{autoencoder_forward.1} parent=47 // pred_check
        %p278 = pneg %p35
      $region50: #{autoencoder_forward.1} parent=47 // pred_check_branch
        %280 = sbr.rel (%p278) target = $region52
      $region51: #{autoencoder_forward.1} parent=47 // pred_region
        %s281 = smul.u32 64, %s15
        %p282 = scmp.lt.s32.totalorder %s281, 255
        %s283 = scalar_select %p282, %s281, 255
        %s284 = smul.addr %s283, 7
        %s285 = smul.addr %s284, 4
        %s286 = scalar_lea.vmem %s0, %s285
        %s287 = smul.u32 64, %s15
      $region52: #{autoencoder_forward.1} parent=47 // pred_fallthru
        _
    $region48: #{autoencoder_forward.1} parent=5 // pred_fallthru
      _
    %p288 = scmp.le.s32.totalorder 1, %s15
    %p289 = scmp.lt.s32.totalorder %s15, 5
    %p290 = pnand %p288, %p289
    %p291 = pneg %p290
    // Predicated region
    $region53: #{autoencoder_forward.1} parent=5 // pred_check
      _
    $region54: #{autoencoder_forward.1} parent=5 // pred_check_branch
      %293 = sbr.rel (%p290) target = $region56
    $region55: #{autoencoder_forward.1} parent=5 // pred_region
      %s294 = ssub.s32 %s15, 1
      %s295 = smul.u32 64, %s20
      %p296 = scmp.lt.s32.totalorder %s295, 255
      %s297 = scalar_select %p296, %s295, 255
      %s298 = smul.addr %s297, 7
      %s299 = smul.addr %s298, 4
      %s300 = scalar_lea.vmem %s0, %s299
      %p301 = pneg %p41
      %p302 = pneg %p38
      %p303 = pneg %p62
      %p304 = pneg %p59
      %p305 = pneg %p83
      %p306 = pneg %p80
      %p307 = pneg %p104
      %p308 = pneg %p101
      %p309 = pneg %p125
      %p310 = pneg %p122
      %p311 = pneg %p146
      %p312 = pneg %p143
      %p313 = pneg %p167
      %p314 = pneg %p164
      %p315 = pneg %p188
      %p316 = pneg %p185
      %p317 = pneg %p209
      %p318 = pneg %p206
      %p319 = pneg %p235
      %p320 = pneg %p232
      %s321 = smul.u32 64, %s20
      %p322 = scmp.lt.s32.totalorder %s321, 255
      %s323 = scalar_select %p322, %s321, 255
      %s324 = smul.addr %s323, 7
      %s325 = smul.addr %s324, 4
      %s326 = scalar_lea.vmem %s9, %s325
      %s327 = smul.u32 64, %s20
      %p328 = scmp.lt.s32.totalorder %s327, 255
      %s329 = scalar_select %p328, %s327, 255
      %s330 = smul.addr %s329, 7
      %s331 = smul.addr %s330, 4
      %s332 = scalar_lea.vmem %s0, %s331
      %s333 = smul.u32 64, %s20
      %s334 = smul.u32 64, %s20
      %p335 = scmp.lt.s32.totalorder %s334, 255
      %s336 = scalar_select %p335, %s334, 255
      %s337 = smul.addr %s336, 7
      %s338 = smul.addr %s337, 4
      %s339 = scalar_lea.vmem %s9, %s338
      %s340 = smul.u32 64, %s20
      %v342 = vld [vmem:[%s332] sm:$0xff]
      %v343 = vld [vmem:[%s332 + $0x8] sm:$0xff]
      %v344 = vld [vmem:[%s332 + $0x10] sm:$0xff]
      %v345 = vld [vmem:[%s332 + $0x18] sm:$0xf]
      %v346 = vld [vmem:[%s332 + $0x1c] sm:$0xff]
      %v347 = vld [vmem:[%s332 + $0x24] sm:$0xff]
      %v348 = vld [vmem:[%s332 + $0x2c] sm:$0xff]
      %v349 = vld [vmem:[%s332 + $0x34] sm:$0xf]
      %v350 = vld [vmem:[%s332 + $0x38] sm:$0xff]
      %v351 = vld [vmem:[%s332 + $0x40] sm:$0xff]
      %v352 = vld [vmem:[%s332 + $0x48] sm:$0xff]
      %v353 = vld [vmem:[%s332 + $0x50] sm:$0xf]
      %v354 = vld [vmem:[%s332 + $0x54] sm:$0xff]
      %v355 = vld [vmem:[%s332 + $0x5c] sm:$0xff]
      %v356 = vld [vmem:[%s332 + $0x64] sm:$0xff]
      %v357 = vld [vmem:[%s332 + $0x6c] sm:$0xf]
      %v358 = vld [vmem:[%s332 + $0x70] sm:$0xff]
      %v359 = vld [vmem:[%s332 + $0x78] sm:$0xff]
      %v360 = vld [vmem:[%s332 + $0x80] sm:$0xff]
      %v361 = vld [vmem:[%s332 + $0x88] sm:$0xf]
      %v362 = vld [vmem:[%s332 + $0x8c] sm:$0xff]
      %v363 = vld [vmem:[%s332 + $0x94] sm:$0xff]
      %v364 = vld [vmem:[%s332 + $0x9c] sm:$0xff]
      %v365 = vld [vmem:[%s332 + $0xa4] sm:$0xf]
      %v366 = vld [vmem:[%s332 + $0xa8] sm:$0xff]
      %v367 = vld [vmem:[%s332 + $0xb0] sm:$0xff]
      %v368 = vld [vmem:[%s332 + $0xb8] sm:$0xff]
      %v369 = vld [vmem:[%s332 + $0xc0] sm:$0xf]
      %v370 = vld [vmem:[%s332 + $0xc4] sm:$0xff]
      %v371 = vld [vmem:[%s332 + $0xcc] sm:$0xff]
      %v372 = vld [vmem:[%s332 + $0xd4] sm:$0xff]
      %v373 = vld [vmem:[%s332 + $0xdc] sm:$0xf]
      %v374 = vld [vmem:[%s332 + $0xe0] sm:$0xff]
      %v375 = vld [vmem:[%s332 + $0xe8] sm:$0xff]
      %v376 = vld [vmem:[%s332 + $0xf0] sm:$0xff]
      %v377 = vld [vmem:[%s332 + $0xf8] sm:$0xf]
      %v378 = vld [vmem:[%s332 + $0xfc] sm:$0xff]
      %v379 = vld [vmem:[%s332 + $0x104] sm:$0xff]
      %v380 = vld [vmem:[%s332 + $0x10c] sm:$0xff]
      %v381 = vld [vmem:[%s332 + $0x114] sm:$0xf]
      %v382 = vld [vmem:[%s332 + $0x118] sm:$0xff]
      %v383 = vld [vmem:[%s332 + $0x120] sm:$0xff]
      %v384 = vld [vmem:[%s332 + $0x128] sm:$0xff]
      %v385 = vld [vmem:[%s332 + $0x130] sm:$0xf]
      %v386 = vld [vmem:[%s332 + $0x134] sm:$0xff]
      %v387 = vld [vmem:[%s332 + $0x13c] sm:$0xff]
      %v388 = vld [vmem:[%s332 + $0x144] sm:$0xff]
      %v389 = vld [vmem:[%s332 + $0x14c] sm:$0xf]
      %v390 = vld [vmem:[%s332 + $0x150] sm:$0xff]
      %v391 = vld [vmem:[%s332 + $0x158] sm:$0xff]
      %v392 = vld [vmem:[%s332 + $0x160] sm:$0xff]
      %v393 = vld [vmem:[%s332 + $0x168] sm:$0xf]
      %v394 = vld [vmem:[%s332 + $0x16c] sm:$0xff]
      %v395 = vld [vmem:[%s332 + $0x174] sm:$0xff]
      %v396 = vld [vmem:[%s332 + $0x17c] sm:$0xff]
      %v397 = vld [vmem:[%s332 + $0x184] sm:$0xf]
      %v398 = vld [vmem:[%s332 + $0x188] sm:$0xff]
      %v399 = vld [vmem:[%s332 + $0x190] sm:$0xff]
      %v400 = vld [vmem:[%s332 + $0x198] sm:$0xff]
      %v401 = vld [vmem:[%s332 + $0x1a0] sm:$0xf]
      %v402 = vld [vmem:[%s332 + $0x1a4] sm:$0xff]
      %v403 = vld [vmem:[%s332 + $0x1ac] sm:$0xff]
      %v404 = vld [vmem:[%s332 + $0x1b4] sm:$0xff]
      %v405 = vld [vmem:[%s332 + $0x1bc] sm:$0xf]
      %v406 = vld [vmem:[%s332 + $0x1c0] sm:$0xff]
      %v407 = vld [vmem:[%s332 + $0x1c8] sm:$0xff]
      %v408 = vld [vmem:[%s332 + $0x1d0] sm:$0xff]
      %v409 = vld [vmem:[%s332 + $0x1d8] sm:$0xf]
      %v410 = vld [vmem:[%s332 + $0x1dc] sm:$0xff]
      %v411 = vld [vmem:[%s332 + $0x1e4] sm:$0xff]
      %v412 = vld [vmem:[%s332 + $0x1ec] sm:$0xff]
      %v413 = vld [vmem:[%s332 + $0x1f4] sm:$0xf]
      %v414 = vld [vmem:[%s332 + $0x1f8] sm:$0xff]
      %v415 = vld [vmem:[%s332 + $0x200] sm:$0xff]
      %v416 = vld [vmem:[%s332 + $0x208] sm:$0xff]
      %v417 = vld [vmem:[%s332 + $0x210] sm:$0xf]
      %v418 = vld [vmem:[%s332 + $0x214] sm:$0xff]
      %v419 = vld [vmem:[%s332 + $0x21c] sm:$0xff]
      %v420 = vld [vmem:[%s332 + $0x224] sm:$0xff]
      %v421 = vld [vmem:[%s332 + $0x22c] sm:$0xf]
      %v422 = vld [vmem:[%s332 + $0x230] sm:$0xff]
      %v423 = vld [vmem:[%s332 + $0x238] sm:$0xff]
      %v424 = vld [vmem:[%s332 + $0x240] sm:$0xff]
      %v425 = vld [vmem:[%s332 + $0x248] sm:$0xf]
      %v426 = vld [vmem:[%s332 + $0x24c] sm:$0xff]
      %v427 = vld [vmem:[%s332 + $0x254] sm:$0xff]
      %v428 = vld [vmem:[%s332 + $0x25c] sm:$0xff]
      %v429 = vld [vmem:[%s332 + $0x264] sm:$0xf]
      %v430 = vld [vmem:[%s332 + $0x268] sm:$0xff]
      %v431 = vld [vmem:[%s332 + $0x270] sm:$0xff]
      %v432 = vld [vmem:[%s332 + $0x278] sm:$0xff]
      %v433 = vld [vmem:[%s332 + $0x280] sm:$0xf]
      %v434 = vld [vmem:[%s332 + $0x284] sm:$0xff]
      %v435 = vld [vmem:[%s332 + $0x28c] sm:$0xff]
      %v436 = vld [vmem:[%s332 + $0x294] sm:$0xff]
      %v437 = vld [vmem:[%s332 + $0x29c] sm:$0xf]
      %v438 = vld [vmem:[%s332 + $0x2a0] sm:$0xff]
      %v439 = vld [vmem:[%s332 + $0x2a8] sm:$0xff]
      %v440 = vld [vmem:[%s332 + $0x2b0] sm:$0xff]
      %v441 = vld [vmem:[%s332 + $0x2b8] sm:$0xf]
      %v442 = vld [vmem:[%s332 + $0x2bc] sm:$0xff]
      %v443 = vld [vmem:[%s332 + $0x2c4] sm:$0xff]
      %v444 = vld [vmem:[%s332 + $0x2cc] sm:$0xff]
      %v445 = vld [vmem:[%s332 + $0x2d4] sm:$0xf]
      %v446 = vld [vmem:[%s332 + $0x2d8] sm:$0xff]
      %v447 = vld [vmem:[%s332 + $0x2e0] sm:$0xff]
      %v448 = vld [vmem:[%s332 + $0x2e8] sm:$0xff]
      %v449 = vld [vmem:[%s332 + $0x2f0] sm:$0xf]
      %v450 = vld [vmem:[%s332 + $0x2f4] sm:$0xff]
      %v451 = vld [vmem:[%s332 + $0x2fc] sm:$0xff]
      %v452 = vld [vmem:[%s332 + $0x304] sm:$0xff]
      %v453 = vld [vmem:[%s332 + $0x30c] sm:$0xf]
      %v454 = vld [vmem:[%s332 + $0x310] sm:$0xff]
      %v455 = vld [vmem:[%s332 + $0x318] sm:$0xff]
      %v456 = vld [vmem:[%s332 + $0x320] sm:$0xff]
      %v457 = vld [vmem:[%s332 + $0x328] sm:$0xf]
      %v458 = vld [vmem:[%s332 + $0x32c] sm:$0xff]
      %v459 = vld [vmem:[%s332 + $0x334] sm:$0xff]
      %v460 = vld [vmem:[%s332 + $0x33c] sm:$0xff]
      %v461 = vld [vmem:[%s332 + $0x344] sm:$0xf]
      %v462 = vld [vmem:[%s332 + $0x348] sm:$0xff]
      %v463 = vld [vmem:[%s332 + $0x350] sm:$0xff]
      %v464 = vld [vmem:[%s332 + $0x358] sm:$0xff]
      %v465 = vld [vmem:[%s332 + $0x360] sm:$0xf]
      %v466 = vld [vmem:[%s332 + $0x364] sm:$0xff]
      %v467 = vld [vmem:[%s332 + $0x36c] sm:$0xff]
      %v468 = vld [vmem:[%s332 + $0x374] sm:$0xff]
      %v469 = vld [vmem:[%s332 + $0x37c] sm:$0xf]
      %v470 = vld [vmem:[%s332 + $0x380] sm:$0xff]
      %v471 = vld [vmem:[%s332 + $0x388] sm:$0xff]
      %v472 = vld [vmem:[%s332 + $0x390] sm:$0xff]
      %v473 = vld [vmem:[%s332 + $0x398] sm:$0xf]
      %v474 = vld [vmem:[%s332 + $0x39c] sm:$0xff]
      %v475 = vld [vmem:[%s332 + $0x3a4] sm:$0xff]
      %v476 = vld [vmem:[%s332 + $0x3ac] sm:$0xff]
      %v477 = vld [vmem:[%s332 + $0x3b4] sm:$0xf]
      %v478 = vld [vmem:[%s332 + $0x3b8] sm:$0xff]
      %v479 = vld [vmem:[%s332 + $0x3c0] sm:$0xff]
      %v480 = vld [vmem:[%s332 + $0x3c8] sm:$0xff]
      %v481 = vld [vmem:[%s332 + $0x3d0] sm:$0xf]
      %v482 = vld [vmem:[%s332 + $0x3d4] sm:$0xff]
      %v483 = vld [vmem:[%s332 + $0x3dc] sm:$0xff]
      %v484 = vld [vmem:[%s332 + $0x3e4] sm:$0xff]
      %v485 = vld [vmem:[%s332 + $0x3ec] sm:$0xf]
      %v486 = vld [vmem:[%s332 + $0x3f0] sm:$0xff]
      %v487 = vld [vmem:[%s332 + $0x3f8] sm:$0xff]
      %v488 = vld [vmem:[%s332 + $0x400] sm:$0xff]
      %v489 = vld [vmem:[%s332 + $0x408] sm:$0xf]
      %v490 = vld [vmem:[%s332 + $0x40c] sm:$0xff]
      %v491 = vld [vmem:[%s332 + $0x414] sm:$0xff]
      %v492 = vld [vmem:[%s332 + $0x41c] sm:$0xff]
      %v493 = vld [vmem:[%s332 + $0x424] sm:$0xf]
      %v494 = vld [vmem:[%s332 + $0x428] sm:$0xff]
      %v495 = vld [vmem:[%s332 + $0x430] sm:$0xff]
      %v496 = vld [vmem:[%s332 + $0x438] sm:$0xff]
      %v497 = vld [vmem:[%s332 + $0x440] sm:$0xf]
      %v498 = vld [vmem:[%s332 + $0x444] sm:$0xff]
      %v499 = vld [vmem:[%s332 + $0x44c] sm:$0xff]
      %v500 = vld [vmem:[%s332 + $0x454] sm:$0xff]
      %v501 = vld [vmem:[%s332 + $0x45c] sm:$0xf]
      %v502 = vld [vmem:[%s332 + $0x460] sm:$0xff]
      %v503 = vld [vmem:[%s332 + $0x468] sm:$0xff]
      %v504 = vld [vmem:[%s332 + $0x470] sm:$0xff]
      %v505 = vld [vmem:[%s332 + $0x478] sm:$0xf]
      %v506 = vld [vmem:[%s332 + $0x47c] sm:$0xff]
      %v507 = vld [vmem:[%s332 + $0x484] sm:$0xff]
      %v508 = vld [vmem:[%s332 + $0x48c] sm:$0xff]
      %v509 = vld [vmem:[%s332 + $0x494] sm:$0xf]
      %v510 = vld [vmem:[%s332 + $0x498] sm:$0xff]
      %v511 = vld [vmem:[%s332 + $0x4a0] sm:$0xff]
      %v512 = vld [vmem:[%s332 + $0x4a8] sm:$0xff]
      %v513 = vld [vmem:[%s332 + $0x4b0] sm:$0xf]
      %v514 = vld [vmem:[%s332 + $0x4b4] sm:$0xff]
      %v515 = vld [vmem:[%s332 + $0x4bc] sm:$0xff]
      %v516 = vld [vmem:[%s332 + $0x4c4] sm:$0xff]
      %v517 = vld [vmem:[%s332 + $0x4cc] sm:$0xf]
      %v518 = vld [vmem:[%s332 + $0x4d0] sm:$0xff]
      %v519 = vld [vmem:[%s332 + $0x4d8] sm:$0xff]
      %v520 = vld [vmem:[%s332 + $0x4e0] sm:$0xff]
      %v521 = vld [vmem:[%s332 + $0x4e8] sm:$0xf]
      %v522 = vld [vmem:[%s332 + $0x4ec] sm:$0xff]
      %v523 = vld [vmem:[%s332 + $0x4f4] sm:$0xff]
      %v524 = vld [vmem:[%s332 + $0x4fc] sm:$0xff]
      %v525 = vld [vmem:[%s332 + $0x504] sm:$0xf]
      %v526 = vld [vmem:[%s332 + $0x508] sm:$0xff]
      %v527 = vld [vmem:[%s332 + $0x510] sm:$0xff]
      %v528 = vld [vmem:[%s332 + $0x518] sm:$0xff]
      %v529 = vld [vmem:[%s332 + $0x520] sm:$0xf]
      %v530 = vld [vmem:[%s332 + $0x524] sm:$0xff]
      %v531 = vld [vmem:[%s332 + $0x52c] sm:$0xff]
      %v532 = vld [vmem:[%s332 + $0x534] sm:$0xff]
      %v533 = vld [vmem:[%s332 + $0x53c] sm:$0xf]
      %v534 = vld [vmem:[%s332 + $0x540] sm:$0xff]
      %v535 = vld [vmem:[%s332 + $0x548] sm:$0xff]
      %v536 = vld [vmem:[%s332 + $0x550] sm:$0xff]
      %v537 = vld [vmem:[%s332 + $0x558] sm:$0xf]
      %v538 = vld [vmem:[%s332 + $0x55c] sm:$0xff]
      %v539 = vld [vmem:[%s332 + $0x564] sm:$0xff]
      %v540 = vld [vmem:[%s332 + $0x56c] sm:$0xff]
      %v541 = vld [vmem:[%s332 + $0x574] sm:$0xf]
      %v542 = vld [vmem:[%s332 + $0x578] sm:$0xff]
      %v543 = vld [vmem:[%s332 + $0x580] sm:$0xff]
      %v544 = vld [vmem:[%s332 + $0x588] sm:$0xff]
      %v545 = vld [vmem:[%s332 + $0x590] sm:$0xf]
      %v546 = vld [vmem:[%s332 + $0x594] sm:$0xff]
      %v547 = vld [vmem:[%s332 + $0x59c] sm:$0xff]
      %v548 = vld [vmem:[%s332 + $0x5a4] sm:$0xff]
      %v549 = vld [vmem:[%s332 + $0x5ac] sm:$0xf]
      %v550 = vld [vmem:[%s332 + $0x5b0] sm:$0xff]
      %v551 = vld [vmem:[%s332 + $0x5b8] sm:$0xff]
      %v552 = vld [vmem:[%s332 + $0x5c0] sm:$0xff]
      %v553 = vld [vmem:[%s332 + $0x5c8] sm:$0xf]
      %v554 = vld [vmem:[%s332 + $0x5cc] sm:$0xff]
      %v555 = vld [vmem:[%s332 + $0x5d4] sm:$0xff]
      %v556 = vld [vmem:[%s332 + $0x5dc] sm:$0xff]
      %v557 = vld [vmem:[%s332 + $0x5e4] sm:$0xf]
      %v558 = vld [vmem:[%s332 + $0x5e8] sm:$0xff]
      %v559 = vld [vmem:[%s332 + $0x5f0] sm:$0xff]
      %v560 = vld [vmem:[%s332 + $0x5f8] sm:$0xff]
      %v561 = vld [vmem:[%s332 + $0x600] sm:$0xf]
      %v562 = vld [vmem:[%s332 + $0x604] sm:$0xff]
      %v563 = vld [vmem:[%s332 + $0x60c] sm:$0xff]
      %v564 = vld [vmem:[%s332 + $0x614] sm:$0xff]
      %v565 = vld [vmem:[%s332 + $0x61c] sm:$0xf]
      %v566 = vld [vmem:[%s332 + $0x620] sm:$0xff]
      %v567 = vld [vmem:[%s332 + $0x628] sm:$0xff]
      %v568 = vld [vmem:[%s332 + $0x630] sm:$0xff]
      %v569 = vld [vmem:[%s332 + $0x638] sm:$0xf]
      %v570 = vld [vmem:[%s332 + $0x63c] sm:$0xff]
      %v571 = vld [vmem:[%s332 + $0x644] sm:$0xff]
      %v572 = vld [vmem:[%s332 + $0x64c] sm:$0xff]
      %v573 = vld [vmem:[%s332 + $0x654] sm:$0xf]
      %v574 = vld [vmem:[%s332 + $0x658] sm:$0xff]
      %v575 = vld [vmem:[%s332 + $0x660] sm:$0xff]
      %v576 = vld [vmem:[%s332 + $0x668] sm:$0xff]
      %v577 = vld [vmem:[%s332 + $0x670] sm:$0xf]
      %v578 = vld [vmem:[%s332 + $0x674] sm:$0xff]
      %v579 = vld [vmem:[%s332 + $0x67c] sm:$0xff]
      %v580 = vld [vmem:[%s332 + $0x684] sm:$0xff]
      %v581 = vld [vmem:[%s332 + $0x68c] sm:$0xf]
      %v582 = vld [vmem:[%s332 + $0x690] sm:$0xff]
      %v583 = vld [vmem:[%s332 + $0x698] sm:$0xff]
      %v584 = vld [vmem:[%s332 + $0x6a0] sm:$0xff]
      %v585 = vld [vmem:[%s332 + $0x6a8] sm:$0xf]
      %v586 = vld [vmem:[%s332 + $0x6ac] sm:$0xff]
      %v587 = vld [vmem:[%s332 + $0x6b4] sm:$0xff]
      %v588 = vld [vmem:[%s332 + $0x6bc] sm:$0xff]
      %v589 = vld [vmem:[%s332 + $0x6c4] sm:$0xf]
      %v590 = vld [vmem:[%s332 + $0x6c8] sm:$0xff]
      %v591 = vld [vmem:[%s332 + $0x6d0] sm:$0xff]
      %v592 = vld [vmem:[%s332 + $0x6d8] sm:$0xff]
      %v593 = vld [vmem:[%s332 + $0x6e0] sm:$0xf]
      %v594 = vld [vmem:[%s332 + $0x6e4] sm:$0xff]
      %v595 = vld [vmem:[%s332 + $0x6ec] sm:$0xff]
      %v596 = vld [vmem:[%s332 + $0x6f4] sm:$0xff]
      %v597 = vld [vmem:[%s332 + $0x6fc] sm:$0xf]
      %v598 = vld [vmem:[%s1] sm:$0xff]
      %v599 = vld [vmem:[%s1 + $0x8] sm:$0xff]
      %v600 = vld [vmem:[%s1 + $0x10] sm:$0xff]
      %v601 = vld [vmem:[%s1 + $0x18] sm:$0xff]
      %v602 = vld [vmem:[%s1 + $0x20] sm:$0xff]
      %v603 = vld [vmem:[%s1 + $0x28] sm:$0xff]
      %v604 = vld [vmem:[%s1 + $0x30] sm:$0xff]
      %v605 = vld [vmem:[%s1 + $0x38] sm:$0xff]
      %v606 = vld [vmem:[%s1 + $0x40] sm:$0xff]
      %v607 = vld [vmem:[%s1 + $0x48] sm:$0xff]
      %v608 = vld [vmem:[%s1 + $0x50] sm:$0xff]
      %v609 = vld [vmem:[%s1 + $0x58] sm:$0xff]
      %v610 = vld [vmem:[%s1 + $0x60] sm:$0xff]
      %v611 = vld [vmem:[%s1 + $0x68] sm:$0xff]
      %v612 = vld [vmem:[%s1 + $0x70] sm:$0xff]
      %v613 = vld [vmem:[%s1 + $0x78] sm:$0xff]
      %v614 = vld [vmem:[%s1 + $0x80] sm:$0xff]
      %v615 = vld [vmem:[%s1 + $0x88] sm:$0xff]
      %v616 = vld [vmem:[%s1 + $0x90] sm:$0xff]
      %v617 = vld [vmem:[%s1 + $0x98] sm:$0xff]
      %v618 = vld [vmem:[%s1 + $0xa0] sm:$0xff]
      %v619 = vld [vmem:[%s1 + $0xa8] sm:$0xff]
      %v620 = vld [vmem:[%s1 + $0xb0] sm:$0xff]
      %v621 = vld [vmem:[%s1 + $0xb8] sm:$0xff]
      %v622 = vld [vmem:[%s1 + $0xc0] sm:$0xff]
      %v623 = vld [vmem:[%s1 + $0xc8] sm:$0xff]
      %v624 = vld [vmem:[%s1 + $0xd0] sm:$0xff]
      %v625 = vld [vmem:[%s1 + $0xd8] sm:$0xff]
      %v626 = vld [vmem:[%s1 + $0xe0] sm:$0xff]
      %v627 = vld [vmem:[%s1 + $0xe8] sm:$0xff]
      %v628 = vld [vmem:[%s1 + $0xf0] sm:$0xff]
      %v629 = vld [vmem:[%s1 + $0xf8] sm:$0xff]
      %v630 = vld [vmem:[%s1 + $0x100] sm:$0xff]
      %v631 = vld [vmem:[%s1 + $0x108] sm:$0xff]
      %v632 = vld [vmem:[%s1 + $0x110] sm:$0xff]
      %v633 = vld [vmem:[%s1 + $0x118] sm:$0xff]
      %v634 = vld [vmem:[%s1 + $0x120] sm:$0xff]
      %v635 = vld [vmem:[%s1 + $0x128] sm:$0xff]
      %v636 = vld [vmem:[%s1 + $0x130] sm:$0xff]
      %v637 = vld [vmem:[%s1 + $0x138] sm:$0xff]
      %v638 = vld [vmem:[%s1 + $0x140] sm:$0xff]
      %v639 = vld [vmem:[%s1 + $0x148] sm:$0xff]
      %v640 = vld [vmem:[%s1 + $0x150] sm:$0xff]
      %v641 = vld [vmem:[%s1 + $0x158] sm:$0xff]
      %v642 = vld [vmem:[%s1 + $0x160] sm:$0xff]
      %v643 = vld [vmem:[%s1 + $0x168] sm:$0xff]
      %v644 = vld [vmem:[%s1 + $0x170] sm:$0xff]
      %v645 = vld [vmem:[%s1 + $0x178] sm:$0xff]
      %v646 = vld [vmem:[%s1 + $0x180] sm:$0xff]
      %v647 = vld [vmem:[%s1 + $0x188] sm:$0xff]
      %v648 = vld [vmem:[%s1 + $0x190] sm:$0xff]
      %v649 = vld [vmem:[%s1 + $0x198] sm:$0xff]
      %v650 = vld [vmem:[%s1 + $0x1a0] sm:$0xff]
      %v651 = vld [vmem:[%s1 + $0x1a8] sm:$0xff]
      %v652 = vld [vmem:[%s1 + $0x1b0] sm:$0xff]
      %v653 = vld [vmem:[%s1 + $0x1b8] sm:$0xff]
      %v654 = vld [vmem:[%s1 + $0x1c0] sm:$0xff]
      %v655 = vld [vmem:[%s1 + $0x1c8] sm:$0xff]
      %v656 = vld [vmem:[%s1 + $0x1d0] sm:$0xff]
      %v657 = vld [vmem:[%s1 + $0x1d8] sm:$0xff]
      %v658 = vld [vmem:[%s1 + $0x1e0] sm:$0xff]
      %v659 = vld [vmem:[%s1 + $0x1e8] sm:$0xff]
      %v660 = vld [vmem:[%s1 + $0x1f0] sm:$0xff]
      %v661 = vld [vmem:[%s1 + $0x1f8] sm:$0xff]
      %v662 = vld [vmem:[%s1 + $0x200] sm:$0xff]
      %v663 = vld [vmem:[%s1 + $0x208] sm:$0xff]
      %v664 = vld [vmem:[%s1 + $0x210] sm:$0xff]
      %v665 = vld [vmem:[%s1 + $0x218] sm:$0xff]
      %v666 = vld [vmem:[%s1 + $0x220] sm:$0xff]
      %v667 = vld [vmem:[%s1 + $0x228] sm:$0xff]
      %v668 = vld [vmem:[%s1 + $0x230] sm:$0xff]
      %v669 = vld [vmem:[%s1 + $0x238] sm:$0xff]
      %v670 = vld [vmem:[%s1 + $0x240] sm:$0xff]
      %v671 = vld [vmem:[%s1 + $0x248] sm:$0xff]
      %v672 = vld [vmem:[%s1 + $0x250] sm:$0xff]
      %v673 = vld [vmem:[%s1 + $0x258] sm:$0xff]
      %v674 = vld [vmem:[%s1 + $0x260] sm:$0xff]
      %v675 = vld [vmem:[%s1 + $0x268] sm:$0xff]
      %v676 = vld [vmem:[%s1 + $0x270] sm:$0xff]
      %v677 = vld [vmem:[%s1 + $0x278] sm:$0xff]
      %v678 = vld [vmem:[%s1 + $0x280] sm:$0xff]
      %v679 = vld [vmem:[%s1 + $0x288] sm:$0xff]
      %v680 = vld [vmem:[%s1 + $0x290] sm:$0xff]
      %v681 = vld [vmem:[%s1 + $0x298] sm:$0xff]
      %v682 = vld [vmem:[%s1 + $0x2a0] sm:$0xff]
      %v683 = vld [vmem:[%s1 + $0x2a8] sm:$0xff]
      %v684 = vld [vmem:[%s1 + $0x2b0] sm:$0xff]
      %v685 = vld [vmem:[%s1 + $0x2b8] sm:$0xff]
      %v686 = vld [vmem:[%s1 + $0x2c0] sm:$0xff]
      %v687 = vld [vmem:[%s1 + $0x2c8] sm:$0xff]
      %v688 = vld [vmem:[%s1 + $0x2d0] sm:$0xff]
      %v689 = vld [vmem:[%s1 + $0x2d8] sm:$0xff]
      %v690 = vld [vmem:[%s1 + $0x2e0] sm:$0xff]
      %v691 = vld [vmem:[%s1 + $0x2e8] sm:$0xff]
      %v692 = vld [vmem:[%s1 + $0x2f0] sm:$0xff]
      %v693 = vld [vmem:[%s1 + $0x2f8] sm:$0xff]
      %v694 = vld [vmem:[%s1 + $0x300] sm:$0xff]
      %v695 = vld [vmem:[%s1 + $0x308] sm:$0xff]
      %v696 = vld [vmem:[%s8] sm:$0x3]
      %v698 = vlaneseq
      %v699 = vshrl.u32 %v698, 7
      %v700 = vsub.s32 0, %v699
      %v701 = vrot.slane %v696, %v700
      %v702 = vlaneseq
      %v703 = vshrl.u32 %v702, 7
      %v704 = vsub.s32 1, %v703
      %v705 = vrot.slane %v696, %v704
      %v964 = vunpack.c.l.b16 %v342
      %v965 = vunpack.c.h.b16 %v342
      %v966 = vunpack.c.l.b16 %v343
      %v967 = vunpack.c.h.b16 %v343
      %v968 = vunpack.c.l.b16 %v344
      %v969 = vunpack.c.h.b16 %v344
      %v970 = vunpack.c.l.b16 %v345
      %v971 = vunpack.c.l.b16 %v346
      %v972 = vunpack.c.h.b16 %v346
      %v973 = vunpack.c.l.b16 %v347
      %v974 = vunpack.c.h.b16 %v347
      %v975 = vunpack.c.l.b16 %v348
      %v976 = vunpack.c.h.b16 %v348
      %v977 = vunpack.c.l.b16 %v349
      %v978 = vunpack.c.l.b16 %v350
      %v979 = vunpack.c.h.b16 %v350
      %v980 = vunpack.c.l.b16 %v351
      %v981 = vunpack.c.h.b16 %v351
      %v982 = vunpack.c.l.b16 %v352
      %v983 = vunpack.c.h.b16 %v352
      %v984 = vunpack.c.l.b16 %v353
      %v985 = vunpack.c.l.b16 %v354
      %v986 = vunpack.c.h.b16 %v354
      %v987 = vunpack.c.l.b16 %v355
      %v988 = vunpack.c.h.b16 %v355
      %v989 = vunpack.c.l.b16 %v356
      %v990 = vunpack.c.h.b16 %v356
      %v991 = vunpack.c.l.b16 %v357
      %v992 = vunpack.c.l.b16 %v358
      %v993 = vunpack.c.h.b16 %v358
      %v994 = vunpack.c.l.b16 %v359
      %v995 = vunpack.c.h.b16 %v359
      %v996 = vunpack.c.l.b16 %v360
      %v997 = vunpack.c.h.b16 %v360
      %v998 = vunpack.c.l.b16 %v361
      %v999 = vunpack.c.l.b16 %v362
      %v1000 = vunpack.c.h.b16 %v362
      %v1001 = vunpack.c.l.b16 %v363
      %v1002 = vunpack.c.h.b16 %v363
      %v1003 = vunpack.c.l.b16 %v364
      %v1004 = vunpack.c.h.b16 %v364
      %v1005 = vunpack.c.l.b16 %v365
      %v1006 = vunpack.c.l.b16 %v366
      %v1007 = vunpack.c.h.b16 %v366
      %v1008 = vunpack.c.l.b16 %v367
      %v1009 = vunpack.c.h.b16 %v367
      %v1010 = vunpack.c.l.b16 %v368
      %v1011 = vunpack.c.h.b16 %v368
      %v1012 = vunpack.c.l.b16 %v369
      %v1013 = vunpack.c.l.b16 %v370
      %v1014 = vunpack.c.h.b16 %v370
      %v1015 = vunpack.c.l.b16 %v371
      %v1016 = vunpack.c.h.b16 %v371
      %v1017 = vunpack.c.l.b16 %v372
      %v1018 = vunpack.c.h.b16 %v372
      %v1019 = vunpack.c.l.b16 %v373
      %v1020 = vunpack.c.l.b16 %v374
      %v1021 = vunpack.c.h.b16 %v374
      %v1022 = vunpack.c.l.b16 %v375
      %v1023 = vunpack.c.h.b16 %v375
      %v1024 = vunpack.c.l.b16 %v376
      %v1025 = vunpack.c.h.b16 %v376
      %v1026 = vunpack.c.l.b16 %v377
      %v1027 = vunpack.c.l.b16 %v378
      %v1028 = vunpack.c.h.b16 %v378
      %v1029 = vunpack.c.l.b16 %v379
      %v1030 = vunpack.c.h.b16 %v379
      %v1031 = vunpack.c.l.b16 %v380
      %v1032 = vunpack.c.h.b16 %v380
      %v1033 = vunpack.c.l.b16 %v381
      %v1034 = vunpack.c.l.b16 %v382
      %v1035 = vunpack.c.h.b16 %v382
      %v1036 = vunpack.c.l.b16 %v383
      %v1037 = vunpack.c.h.b16 %v383
      %v1038 = vunpack.c.l.b16 %v384
      %v1039 = vunpack.c.h.b16 %v384
      %v1040 = vunpack.c.l.b16 %v385
      %v1041 = vunpack.c.l.b16 %v386
      %v1042 = vunpack.c.h.b16 %v386
      %v1043 = vunpack.c.l.b16 %v387
      %v1044 = vunpack.c.h.b16 %v387
      %v1045 = vunpack.c.l.b16 %v388
      %v1046 = vunpack.c.h.b16 %v388
      %v1047 = vunpack.c.l.b16 %v389
      %v1048 = vunpack.c.l.b16 %v390
      %v1049 = vunpack.c.h.b16 %v390
      %v1050 = vunpack.c.l.b16 %v391
      %v1051 = vunpack.c.h.b16 %v391
      %v1052 = vunpack.c.l.b16 %v392
      %v1053 = vunpack.c.h.b16 %v392
      %v1054 = vunpack.c.l.b16 %v393
      %v1055 = vunpack.c.l.b16 %v394
      %v1056 = vunpack.c.h.b16 %v394
      %v1057 = vunpack.c.l.b16 %v395
      %v1058 = vunpack.c.h.b16 %v395
      %v1059 = vunpack.c.l.b16 %v396
      %v1060 = vunpack.c.h.b16 %v396
      %v1061 = vunpack.c.l.b16 %v397
      %v1062 = vunpack.c.l.b16 %v398
      %v1063 = vunpack.c.h.b16 %v398
      %v1064 = vunpack.c.l.b16 %v399
      %v1065 = vunpack.c.h.b16 %v399
      %v1066 = vunpack.c.l.b16 %v400
      %v1067 = vunpack.c.h.b16 %v400
      %v1068 = vunpack.c.l.b16 %v401
      %v1069 = vunpack.c.l.b16 %v402
      %v1070 = vunpack.c.h.b16 %v402
      %v1071 = vunpack.c.l.b16 %v403
      %v1072 = vunpack.c.h.b16 %v403
      %v1073 = vunpack.c.l.b16 %v404
      %v1074 = vunpack.c.h.b16 %v404
      %v1075 = vunpack.c.l.b16 %v405
      %v1076 = vunpack.c.l.b16 %v406
      %v1077 = vunpack.c.h.b16 %v406
      %v1078 = vunpack.c.l.b16 %v407
      %v1079 = vunpack.c.h.b16 %v407
      %v1080 = vunpack.c.l.b16 %v408
      %v1081 = vunpack.c.h.b16 %v408
      %v1082 = vunpack.c.l.b16 %v409
      %v1083 = vunpack.c.l.b16 %v410
      %v1084 = vunpack.c.h.b16 %v410
      %v1085 = vunpack.c.l.b16 %v411
      %v1086 = vunpack.c.h.b16 %v411
      %v1087 = vunpack.c.l.b16 %v412
      %v1088 = vunpack.c.h.b16 %v412
      %v1089 = vunpack.c.l.b16 %v413
      %v1090 = vunpack.c.l.b16 %v414
      %v1091 = vunpack.c.h.b16 %v414
      %v1092 = vunpack.c.l.b16 %v415
      %v1093 = vunpack.c.h.b16 %v415
      %v1094 = vunpack.c.l.b16 %v416
      %v1095 = vunpack.c.h.b16 %v416
      %v1096 = vunpack.c.l.b16 %v417
      %v1097 = vunpack.c.l.b16 %v418
      %v1098 = vunpack.c.h.b16 %v418
      %v1099 = vunpack.c.l.b16 %v419
      %v1100 = vunpack.c.h.b16 %v419
      %v1101 = vunpack.c.l.b16 %v420
      %v1102 = vunpack.c.h.b16 %v420
      %v1103 = vunpack.c.l.b16 %v421
      %v1104 = vunpack.c.l.b16 %v422
      %v1105 = vunpack.c.h.b16 %v422
      %v1106 = vunpack.c.l.b16 %v423
      %v1107 = vunpack.c.h.b16 %v423
      %v1108 = vunpack.c.l.b16 %v424
      %v1109 = vunpack.c.h.b16 %v424
      %v1110 = vunpack.c.l.b16 %v425
      %v1111 = vunpack.c.l.b16 %v426
      %v1112 = vunpack.c.h.b16 %v426
      %v1113 = vunpack.c.l.b16 %v427
      %v1114 = vunpack.c.h.b16 %v427
      %v1115 = vunpack.c.l.b16 %v428
      %v1116 = vunpack.c.h.b16 %v428
      %v1117 = vunpack.c.l.b16 %v429
      %v1118 = vunpack.c.l.b16 %v430
      %v1119 = vunpack.c.h.b16 %v430
      %v1120 = vunpack.c.l.b16 %v431
      %v1121 = vunpack.c.h.b16 %v431
      %v1122 = vunpack.c.l.b16 %v432
      %v1123 = vunpack.c.h.b16 %v432
      %v1124 = vunpack.c.l.b16 %v433
      %v1125 = vunpack.c.l.b16 %v434
      %v1126 = vunpack.c.h.b16 %v434
      %v1127 = vunpack.c.l.b16 %v435
      %v1128 = vunpack.c.h.b16 %v435
      %v1129 = vunpack.c.l.b16 %v436
      %v1130 = vunpack.c.h.b16 %v436
      %v1131 = vunpack.c.l.b16 %v437
      %v1132 = vunpack.c.l.b16 %v438
      %v1133 = vunpack.c.h.b16 %v438
      %v1134 = vunpack.c.l.b16 %v439
      %v1135 = vunpack.c.h.b16 %v439
      %v1136 = vunpack.c.l.b16 %v440
      %v1137 = vunpack.c.h.b16 %v440
      %v1138 = vunpack.c.l.b16 %v441
      %v1139 = vunpack.c.l.b16 %v442
      %v1140 = vunpack.c.h.b16 %v442
      %v1141 = vunpack.c.l.b16 %v443
      %v1142 = vunpack.c.h.b16 %v443
      %v1143 = vunpack.c.l.b16 %v444
      %v1144 = vunpack.c.h.b16 %v444
      %v1145 = vunpack.c.l.b16 %v445
      %v1146 = vunpack.c.l.b16 %v446
      %v1147 = vunpack.c.h.b16 %v446
      %v1148 = vunpack.c.l.b16 %v447
      %v1149 = vunpack.c.h.b16 %v447
      %v1150 = vunpack.c.l.b16 %v448
      %v1151 = vunpack.c.h.b16 %v448
      %v1152 = vunpack.c.l.b16 %v449
      %v1153 = vunpack.c.l.b16 %v450
      %v1154 = vunpack.c.h.b16 %v450
      %v1155 = vunpack.c.l.b16 %v451
      %v1156 = vunpack.c.h.b16 %v451
      %v1157 = vunpack.c.l.b16 %v452
      %v1158 = vunpack.c.h.b16 %v452
      %v1159 = vunpack.c.l.b16 %v453
      %v1160 = vunpack.c.l.b16 %v454
      %v1161 = vunpack.c.h.b16 %v454
      %v1162 = vunpack.c.l.b16 %v455
      %v1163 = vunpack.c.h.b16 %v455
      %v1164 = vunpack.c.l.b16 %v456
      %v1165 = vunpack.c.h.b16 %v456
      %v1166 = vunpack.c.l.b16 %v457
      %v1167 = vunpack.c.l.b16 %v458
      %v1168 = vunpack.c.h.b16 %v458
      %v1169 = vunpack.c.l.b16 %v459
      %v1170 = vunpack.c.h.b16 %v459
      %v1171 = vunpack.c.l.b16 %v460
      %v1172 = vunpack.c.h.b16 %v460
      %v1173 = vunpack.c.l.b16 %v461
      %v1174 = vunpack.c.l.b16 %v462
      %v1175 = vunpack.c.h.b16 %v462
      %v1176 = vunpack.c.l.b16 %v463
      %v1177 = vunpack.c.h.b16 %v463
      %v1178 = vunpack.c.l.b16 %v464
      %v1179 = vunpack.c.h.b16 %v464
      %v1180 = vunpack.c.l.b16 %v465
      %v1181 = vunpack.c.l.b16 %v466
      %v1182 = vunpack.c.h.b16 %v466
      %v1183 = vunpack.c.l.b16 %v467
      %v1184 = vunpack.c.h.b16 %v467
      %v1185 = vunpack.c.l.b16 %v468
      %v1186 = vunpack.c.h.b16 %v468
      %v1187 = vunpack.c.l.b16 %v469
      %v1188 = vunpack.c.l.b16 %v470
      %v1189 = vunpack.c.h.b16 %v470
      %v1190 = vunpack.c.l.b16 %v471
      %v1191 = vunpack.c.h.b16 %v471
      %v1192 = vunpack.c.l.b16 %v472
      %v1193 = vunpack.c.h.b16 %v472
      %v1194 = vunpack.c.l.b16 %v473
      %v1195 = vunpack.c.l.b16 %v474
      %v1196 = vunpack.c.h.b16 %v474
      %v1197 = vunpack.c.l.b16 %v475
      %v1198 = vunpack.c.h.b16 %v475
      %v1199 = vunpack.c.l.b16 %v476
      %v1200 = vunpack.c.h.b16 %v476
      %v1201 = vunpack.c.l.b16 %v477
      %v1202 = vunpack.c.l.b16 %v478
      %v1203 = vunpack.c.h.b16 %v478
      %v1204 = vunpack.c.l.b16 %v479
      %v1205 = vunpack.c.h.b16 %v479
      %v1206 = vunpack.c.l.b16 %v480
      %v1207 = vunpack.c.h.b16 %v480
      %v1208 = vunpack.c.l.b16 %v481
      %v1209 = vunpack.c.l.b16 %v482
      %v1210 = vunpack.c.h.b16 %v482
      %v1211 = vunpack.c.l.b16 %v483
      %v1212 = vunpack.c.h.b16 %v483
      %v1213 = vunpack.c.l.b16 %v484
      %v1214 = vunpack.c.h.b16 %v484
      %v1215 = vunpack.c.l.b16 %v485
      %v1216 = vunpack.c.l.b16 %v486
      %v1217 = vunpack.c.h.b16 %v486
      %v1218 = vunpack.c.l.b16 %v487
      %v1219 = vunpack.c.h.b16 %v487
      %v1220 = vunpack.c.l.b16 %v488
      %v1221 = vunpack.c.h.b16 %v488
      %v1222 = vunpack.c.l.b16 %v489
      %v1223 = vunpack.c.l.b16 %v490
      %v1224 = vunpack.c.h.b16 %v490
      %v1225 = vunpack.c.l.b16 %v491
      %v1226 = vunpack.c.h.b16 %v491
      %v1227 = vunpack.c.l.b16 %v492
      %v1228 = vunpack.c.h.b16 %v492
      %v1229 = vunpack.c.l.b16 %v493
      %v1230 = vunpack.c.l.b16 %v494
      %v1231 = vunpack.c.h.b16 %v494
      %v1232 = vunpack.c.l.b16 %v495
      %v1233 = vunpack.c.h.b16 %v495
      %v1234 = vunpack.c.l.b16 %v496
      %v1235 = vunpack.c.h.b16 %v496
      %v1236 = vunpack.c.l.b16 %v497
      %v1237 = vunpack.c.l.b16 %v498
      %v1238 = vunpack.c.h.b16 %v498
      %v1239 = vunpack.c.l.b16 %v499
      %v1240 = vunpack.c.h.b16 %v499
      %v1241 = vunpack.c.l.b16 %v500
      %v1242 = vunpack.c.h.b16 %v500
      %v1243 = vunpack.c.l.b16 %v501
      %v1244 = vunpack.c.l.b16 %v502
      %v1245 = vunpack.c.h.b16 %v502
      %v1246 = vunpack.c.l.b16 %v503
      %v1247 = vunpack.c.h.b16 %v503
      %v1248 = vunpack.c.l.b16 %v504
      %v1249 = vunpack.c.h.b16 %v504
      %v1250 = vunpack.c.l.b16 %v505
      %v1251 = vunpack.c.l.b16 %v506
      %v1252 = vunpack.c.h.b16 %v506
      %v1253 = vunpack.c.l.b16 %v507
      %v1254 = vunpack.c.h.b16 %v507
      %v1255 = vunpack.c.l.b16 %v508
      %v1256 = vunpack.c.h.b16 %v508
      %v1257 = vunpack.c.l.b16 %v509
      %v1258 = vunpack.c.l.b16 %v510
      %v1259 = vunpack.c.h.b16 %v510
      %v1260 = vunpack.c.l.b16 %v511
      %v1261 = vunpack.c.h.b16 %v511
      %v1262 = vunpack.c.l.b16 %v512
      %v1263 = vunpack.c.h.b16 %v512
      %v1264 = vunpack.c.l.b16 %v513
      %v1265 = vunpack.c.l.b16 %v514
      %v1266 = vunpack.c.h.b16 %v514
      %v1267 = vunpack.c.l.b16 %v515
      %v1268 = vunpack.c.h.b16 %v515
      %v1269 = vunpack.c.l.b16 %v516
      %v1270 = vunpack.c.h.b16 %v516
      %v1271 = vunpack.c.l.b16 %v517
      %v1272 = vunpack.c.l.b16 %v518
      %v1273 = vunpack.c.h.b16 %v518
      %v1274 = vunpack.c.l.b16 %v519
      %v1275 = vunpack.c.h.b16 %v519
      %v1276 = vunpack.c.l.b16 %v520
      %v1277 = vunpack.c.h.b16 %v520
      %v1278 = vunpack.c.l.b16 %v521
      %v1279 = vunpack.c.l.b16 %v522
      %v1280 = vunpack.c.h.b16 %v522
      %v1281 = vunpack.c.l.b16 %v523
      %v1282 = vunpack.c.h.b16 %v523
      %v1283 = vunpack.c.l.b16 %v524
      %v1284 = vunpack.c.h.b16 %v524
      %v1285 = vunpack.c.l.b16 %v525
      %v1286 = vunpack.c.l.b16 %v526
      %v1287 = vunpack.c.h.b16 %v526
      %v1288 = vunpack.c.l.b16 %v527
      %v1289 = vunpack.c.h.b16 %v527
      %v1290 = vunpack.c.l.b16 %v528
      %v1291 = vunpack.c.h.b16 %v528
      %v1292 = vunpack.c.l.b16 %v529
      %v1293 = vunpack.c.l.b16 %v530
      %v1294 = vunpack.c.h.b16 %v530
      %v1295 = vunpack.c.l.b16 %v531
      %v1296 = vunpack.c.h.b16 %v531
      %v1297 = vunpack.c.l.b16 %v532
      %v1298 = vunpack.c.h.b16 %v532
      %v1299 = vunpack.c.l.b16 %v533
      %v1300 = vunpack.c.l.b16 %v534
      %v1301 = vunpack.c.h.b16 %v534
      %v1302 = vunpack.c.l.b16 %v535
      %v1303 = vunpack.c.h.b16 %v535
      %v1304 = vunpack.c.l.b16 %v536
      %v1305 = vunpack.c.h.b16 %v536
      %v1306 = vunpack.c.l.b16 %v537
      %v1307 = vunpack.c.l.b16 %v538
      %v1308 = vunpack.c.h.b16 %v538
      %v1309 = vunpack.c.l.b16 %v539
      %v1310 = vunpack.c.h.b16 %v539
      %v1311 = vunpack.c.l.b16 %v540
      %v1312 = vunpack.c.h.b16 %v540
      %v1313 = vunpack.c.l.b16 %v541
      %v1314 = vunpack.c.l.b16 %v542
      %v1315 = vunpack.c.h.b16 %v542
      %v1316 = vunpack.c.l.b16 %v543
      %v1317 = vunpack.c.h.b16 %v543
      %v1318 = vunpack.c.l.b16 %v544
      %v1319 = vunpack.c.h.b16 %v544
      %v1320 = vunpack.c.l.b16 %v545
      %v1321 = vunpack.c.l.b16 %v546
      %v1322 = vunpack.c.h.b16 %v546
      %v1323 = vunpack.c.l.b16 %v547
      %v1324 = vunpack.c.h.b16 %v547
      %v1325 = vunpack.c.l.b16 %v548
      %v1326 = vunpack.c.h.b16 %v548
      %v1327 = vunpack.c.l.b16 %v549
      %v1328 = vunpack.c.l.b16 %v550
      %v1329 = vunpack.c.h.b16 %v550
      %v1330 = vunpack.c.l.b16 %v551
      %v1331 = vunpack.c.h.b16 %v551
      %v1332 = vunpack.c.l.b16 %v552
      %v1333 = vunpack.c.h.b16 %v552
      %v1334 = vunpack.c.l.b16 %v553
      %v1335 = vunpack.c.l.b16 %v554
      %v1336 = vunpack.c.h.b16 %v554
      %v1337 = vunpack.c.l.b16 %v555
      %v1338 = vunpack.c.h.b16 %v555
      %v1339 = vunpack.c.l.b16 %v556
      %v1340 = vunpack.c.h.b16 %v556
      %v1341 = vunpack.c.l.b16 %v557
      %v1342 = vunpack.c.l.b16 %v558
      %v1343 = vunpack.c.h.b16 %v558
      %v1344 = vunpack.c.l.b16 %v559
      %v1345 = vunpack.c.h.b16 %v559
      %v1346 = vunpack.c.l.b16 %v560
      %v1347 = vunpack.c.h.b16 %v560
      %v1348 = vunpack.c.l.b16 %v561
      %v1349 = vunpack.c.l.b16 %v562
      %v1350 = vunpack.c.h.b16 %v562
      %v1351 = vunpack.c.l.b16 %v563
      %v1352 = vunpack.c.h.b16 %v563
      %v1353 = vunpack.c.l.b16 %v564
      %v1354 = vunpack.c.h.b16 %v564
      %v1355 = vunpack.c.l.b16 %v565
      %v1356 = vunpack.c.l.b16 %v566
      %v1357 = vunpack.c.h.b16 %v566
      %v1358 = vunpack.c.l.b16 %v567
      %v1359 = vunpack.c.h.b16 %v567
      %v1360 = vunpack.c.l.b16 %v568
      %v1361 = vunpack.c.h.b16 %v568
      %v1362 = vunpack.c.l.b16 %v569
      %v1363 = vunpack.c.l.b16 %v570
      %v1364 = vunpack.c.h.b16 %v570
      %v1365 = vunpack.c.l.b16 %v571
      %v1366 = vunpack.c.h.b16 %v571
      %v1367 = vunpack.c.l.b16 %v572
      %v1368 = vunpack.c.h.b16 %v572
      %v1369 = vunpack.c.l.b16 %v573
      %v1370 = vunpack.c.l.b16 %v574
      %v1371 = vunpack.c.h.b16 %v574
      %v1372 = vunpack.c.l.b16 %v575
      %v1373 = vunpack.c.h.b16 %v575
      %v1374 = vunpack.c.l.b16 %v576
      %v1375 = vunpack.c.h.b16 %v576
      %v1376 = vunpack.c.l.b16 %v577
      %v1377 = vunpack.c.l.b16 %v578
      %v1378 = vunpack.c.h.b16 %v578
      %v1379 = vunpack.c.l.b16 %v579
      %v1380 = vunpack.c.h.b16 %v579
      %v1381 = vunpack.c.l.b16 %v580
      %v1382 = vunpack.c.h.b16 %v580
      %v1383 = vunpack.c.l.b16 %v581
      %v1384 = vunpack.c.l.b16 %v582
      %v1385 = vunpack.c.h.b16 %v582
      %v1386 = vunpack.c.l.b16 %v583
      %v1387 = vunpack.c.h.b16 %v583
      %v1388 = vunpack.c.l.b16 %v584
      %v1389 = vunpack.c.h.b16 %v584
      %v1390 = vunpack.c.l.b16 %v585
      %v1391 = vunpack.c.l.b16 %v586
      %v1392 = vunpack.c.h.b16 %v586
      %v1393 = vunpack.c.l.b16 %v587
      %v1394 = vunpack.c.h.b16 %v587
      %v1395 = vunpack.c.l.b16 %v588
      %v1396 = vunpack.c.h.b16 %v588
      %v1397 = vunpack.c.l.b16 %v589
      %v1398 = vunpack.c.l.b16 %v590
      %v1399 = vunpack.c.h.b16 %v590
      %v1400 = vunpack.c.l.b16 %v591
      %v1401 = vunpack.c.h.b16 %v591
      %v1402 = vunpack.c.l.b16 %v592
      %v1403 = vunpack.c.h.b16 %v592
      %v1404 = vunpack.c.l.b16 %v593
      %v1405 = vunpack.c.l.b16 %v594
      %v1406 = vunpack.c.h.b16 %v594
      %v1407 = vunpack.c.l.b16 %v595
      %v1408 = vunpack.c.h.b16 %v595
      %v1409 = vunpack.c.l.b16 %v596
      %v1410 = vunpack.c.h.b16 %v596
      %v1411 = vunpack.c.l.b16 %v597
      %v1412 = vpack.c.b16 %v971, %v964
      %v1413 = vpack.c.b16 %v972, %v965
      %v1414 = vpack.c.b16 %v973, %v966
      %v1415 = vpack.c.b16 %v974, %v967
      %v1416 = vpack.c.b16 %v975, %v968
      %v1417 = vpack.c.b16 %v976, %v969
      %v1418 = vpack.c.b16 %v977, %v970
      %v1419 = vpack.c.b16 %v985, %v978
      %v1420 = vpack.c.b16 %v986, %v979
      %v1421 = vpack.c.b16 %v987, %v980
      %v1422 = vpack.c.b16 %v988, %v981
      %v1423 = vpack.c.b16 %v989, %v982
      %v1424 = vpack.c.b16 %v990, %v983
      %v1425 = vpack.c.b16 %v991, %v984
      %v1426 = vpack.c.b16 %v999, %v992
      %v1427 = vpack.c.b16 %v1000, %v993
      %v1428 = vpack.c.b16 %v1001, %v994
      %v1429 = vpack.c.b16 %v1002, %v995
      %v1430 = vpack.c.b16 %v1003, %v996
      %v1431 = vpack.c.b16 %v1004, %v997
      %v1432 = vpack.c.b16 %v1005, %v998
      %v1433 = vpack.c.b16 %v1013, %v1006
      %v1434 = vpack.c.b16 %v1014, %v1007
      %v1435 = vpack.c.b16 %v1015, %v1008
      %v1436 = vpack.c.b16 %v1016, %v1009
      %v1437 = vpack.c.b16 %v1017, %v1010
      %v1438 = vpack.c.b16 %v1018, %v1011
      %v1439 = vpack.c.b16 %v1019, %v1012
      %v1440 = vpack.c.b16 %v1027, %v1020
      %v1441 = vpack.c.b16 %v1028, %v1021
      %v1442 = vpack.c.b16 %v1029, %v1022
      %v1443 = vpack.c.b16 %v1030, %v1023
      %v1444 = vpack.c.b16 %v1031, %v1024
      %v1445 = vpack.c.b16 %v1032, %v1025
      %v1446 = vpack.c.b16 %v1033, %v1026
      %v1447 = vpack.c.b16 %v1041, %v1034
      %v1448 = vpack.c.b16 %v1042, %v1035
      %v1449 = vpack.c.b16 %v1043, %v1036
      %v1450 = vpack.c.b16 %v1044, %v1037
      %v1451 = vpack.c.b16 %v1045, %v1038
      %v1452 = vpack.c.b16 %v1046, %v1039
      %v1453 = vpack.c.b16 %v1047, %v1040
      %v1454 = vpack.c.b16 %v1055, %v1048
      %v1455 = vpack.c.b16 %v1056, %v1049
      %v1456 = vpack.c.b16 %v1057, %v1050
      %v1457 = vpack.c.b16 %v1058, %v1051
      %v1458 = vpack.c.b16 %v1059, %v1052
      %v1459 = vpack.c.b16 %v1060, %v1053
      %v1460 = vpack.c.b16 %v1061, %v1054
      %v1461 = vpack.c.b16 %v1069, %v1062
      %v1462 = vpack.c.b16 %v1070, %v1063
      %v1463 = vpack.c.b16 %v1071, %v1064
      %v1464 = vpack.c.b16 %v1072, %v1065
      %v1465 = vpack.c.b16 %v1073, %v1066
      %v1466 = vpack.c.b16 %v1074, %v1067
      %v1467 = vpack.c.b16 %v1075, %v1068
      %v1468 = vpack.c.b16 %v1083, %v1076
      %v1469 = vpack.c.b16 %v1084, %v1077
      %v1470 = vpack.c.b16 %v1085, %v1078
      %v1471 = vpack.c.b16 %v1086, %v1079
      %v1472 = vpack.c.b16 %v1087, %v1080
      %v1473 = vpack.c.b16 %v1088, %v1081
      %v1474 = vpack.c.b16 %v1089, %v1082
      %v1475 = vpack.c.b16 %v1097, %v1090
      %v1476 = vpack.c.b16 %v1098, %v1091
      %v1477 = vpack.c.b16 %v1099, %v1092
      %v1478 = vpack.c.b16 %v1100, %v1093
      %v1479 = vpack.c.b16 %v1101, %v1094
      %v1480 = vpack.c.b16 %v1102, %v1095
      %v1481 = vpack.c.b16 %v1103, %v1096
      %v1482 = vpack.c.b16 %v1111, %v1104
      %v1483 = vpack.c.b16 %v1112, %v1105
      %v1484 = vpack.c.b16 %v1113, %v1106
      %v1485 = vpack.c.b16 %v1114, %v1107
      %v1486 = vpack.c.b16 %v1115, %v1108
      %v1487 = vpack.c.b16 %v1116, %v1109
      %v1488 = vpack.c.b16 %v1117, %v1110
      %v1489 = vpack.c.b16 %v1125, %v1118
      %v1490 = vpack.c.b16 %v1126, %v1119
      %v1491 = vpack.c.b16 %v1127, %v1120
      %v1492 = vpack.c.b16 %v1128, %v1121
      %v1493 = vpack.c.b16 %v1129, %v1122
      %v1494 = vpack.c.b16 %v1130, %v1123
      %v1495 = vpack.c.b16 %v1131, %v1124
      %v1496 = vpack.c.b16 %v1139, %v1132
      %v1497 = vpack.c.b16 %v1140, %v1133
      %v1498 = vpack.c.b16 %v1141, %v1134
      %v1499 = vpack.c.b16 %v1142, %v1135
      %v1500 = vpack.c.b16 %v1143, %v1136
      %v1501 = vpack.c.b16 %v1144, %v1137
      %v1502 = vpack.c.b16 %v1145, %v1138
      %v1503 = vpack.c.b16 %v1153, %v1146
      %v1504 = vpack.c.b16 %v1154, %v1147
      %v1505 = vpack.c.b16 %v1155, %v1148
      %v1506 = vpack.c.b16 %v1156, %v1149
      %v1507 = vpack.c.b16 %v1157, %v1150
      %v1508 = vpack.c.b16 %v1158, %v1151
      %v1509 = vpack.c.b16 %v1159, %v1152
      %v1510 = vpack.c.b16 %v1167, %v1160
      %v1511 = vpack.c.b16 %v1168, %v1161
      %v1512 = vpack.c.b16 %v1169, %v1162
      %v1513 = vpack.c.b16 %v1170, %v1163
      %v1514 = vpack.c.b16 %v1171, %v1164
      %v1515 = vpack.c.b16 %v1172, %v1165
      %v1516 = vpack.c.b16 %v1173, %v1166
      %v1517 = vpack.c.b16 %v1181, %v1174
      %v1518 = vpack.c.b16 %v1182, %v1175
      %v1519 = vpack.c.b16 %v1183, %v1176
      %v1520 = vpack.c.b16 %v1184, %v1177
      %v1521 = vpack.c.b16 %v1185, %v1178
      %v1522 = vpack.c.b16 %v1186, %v1179
      %v1523 = vpack.c.b16 %v1187, %v1180
      %v1524 = vpack.c.b16 %v1195, %v1188
      %v1525 = vpack.c.b16 %v1196, %v1189
      %v1526 = vpack.c.b16 %v1197, %v1190
      %v1527 = vpack.c.b16 %v1198, %v1191
      %v1528 = vpack.c.b16 %v1199, %v1192
      %v1529 = vpack.c.b16 %v1200, %v1193
      %v1530 = vpack.c.b16 %v1201, %v1194
      %v1531 = vpack.c.b16 %v1209, %v1202
      %v1532 = vpack.c.b16 %v1210, %v1203
      %v1533 = vpack.c.b16 %v1211, %v1204
      %v1534 = vpack.c.b16 %v1212, %v1205
      %v1535 = vpack.c.b16 %v1213, %v1206
      %v1536 = vpack.c.b16 %v1214, %v1207
      %v1537 = vpack.c.b16 %v1215, %v1208
      %v1538 = vpack.c.b16 %v1223, %v1216
      %v1539 = vpack.c.b16 %v1224, %v1217
      %v1540 = vpack.c.b16 %v1225, %v1218
      %v1541 = vpack.c.b16 %v1226, %v1219
      %v1542 = vpack.c.b16 %v1227, %v1220
      %v1543 = vpack.c.b16 %v1228, %v1221
      %v1544 = vpack.c.b16 %v1229, %v1222
      %v1545 = vpack.c.b16 %v1237, %v1230
      %v1546 = vpack.c.b16 %v1238, %v1231
      %v1547 = vpack.c.b16 %v1239, %v1232
      %v1548 = vpack.c.b16 %v1240, %v1233
      %v1549 = vpack.c.b16 %v1241, %v1234
      %v1550 = vpack.c.b16 %v1242, %v1235
      %v1551 = vpack.c.b16 %v1243, %v1236
      %v1552 = vpack.c.b16 %v1251, %v1244
      %v1553 = vpack.c.b16 %v1252, %v1245
      %v1554 = vpack.c.b16 %v1253, %v1246
      %v1555 = vpack.c.b16 %v1254, %v1247
      %v1556 = vpack.c.b16 %v1255, %v1248
      %v1557 = vpack.c.b16 %v1256, %v1249
      %v1558 = vpack.c.b16 %v1257, %v1250
      %v1559 = vpack.c.b16 %v1265, %v1258
      %v1560 = vpack.c.b16 %v1266, %v1259
      %v1561 = vpack.c.b16 %v1267, %v1260
      %v1562 = vpack.c.b16 %v1268, %v1261
      %v1563 = vpack.c.b16 %v1269, %v1262
      %v1564 = vpack.c.b16 %v1270, %v1263
      %v1565 = vpack.c.b16 %v1271, %v1264
      %v1566 = vpack.c.b16 %v1279, %v1272
      %v1567 = vpack.c.b16 %v1280, %v1273
      %v1568 = vpack.c.b16 %v1281, %v1274
      %v1569 = vpack.c.b16 %v1282, %v1275
      %v1570 = vpack.c.b16 %v1283, %v1276
      %v1571 = vpack.c.b16 %v1284, %v1277
      %v1572 = vpack.c.b16 %v1285, %v1278
      %v1573 = vpack.c.b16 %v1293, %v1286
      %v1574 = vpack.c.b16 %v1294, %v1287
      %v1575 = vpack.c.b16 %v1295, %v1288
      %v1576 = vpack.c.b16 %v1296, %v1289
      %v1577 = vpack.c.b16 %v1297, %v1290
      %v1578 = vpack.c.b16 %v1298, %v1291
      %v1579 = vpack.c.b16 %v1299, %v1292
      %v1580 = vpack.c.b16 %v1307, %v1300
      %v1581 = vpack.c.b16 %v1308, %v1301
      %v1582 = vpack.c.b16 %v1309, %v1302
      %v1583 = vpack.c.b16 %v1310, %v1303
      %v1584 = vpack.c.b16 %v1311, %v1304
      %v1585 = vpack.c.b16 %v1312, %v1305
      %v1586 = vpack.c.b16 %v1313, %v1306
      %v1587 = vpack.c.b16 %v1321, %v1314
      %v1588 = vpack.c.b16 %v1322, %v1315
      %v1589 = vpack.c.b16 %v1323, %v1316
      %v1590 = vpack.c.b16 %v1324, %v1317
      %v1591 = vpack.c.b16 %v1325, %v1318
      %v1592 = vpack.c.b16 %v1326, %v1319
      %v1593 = vpack.c.b16 %v1327, %v1320
      %v1594 = vpack.c.b16 %v1335, %v1328
      %v1595 = vpack.c.b16 %v1336, %v1329
      %v1596 = vpack.c.b16 %v1337, %v1330
      %v1597 = vpack.c.b16 %v1338, %v1331
      %v1598 = vpack.c.b16 %v1339, %v1332
      %v1599 = vpack.c.b16 %v1340, %v1333
      %v1600 = vpack.c.b16 %v1341, %v1334
      %v1601 = vpack.c.b16 %v1349, %v1342
      %v1602 = vpack.c.b16 %v1350, %v1343
      %v1603 = vpack.c.b16 %v1351, %v1344
      %v1604 = vpack.c.b16 %v1352, %v1345
      %v1605 = vpack.c.b16 %v1353, %v1346
      %v1606 = vpack.c.b16 %v1354, %v1347
      %v1607 = vpack.c.b16 %v1355, %v1348
      %v1608 = vpack.c.b16 %v1363, %v1356
      %v1609 = vpack.c.b16 %v1364, %v1357
      %v1610 = vpack.c.b16 %v1365, %v1358
      %v1611 = vpack.c.b16 %v1366, %v1359
      %v1612 = vpack.c.b16 %v1367, %v1360
      %v1613 = vpack.c.b16 %v1368, %v1361
      %v1614 = vpack.c.b16 %v1369, %v1362
      %v1615 = vpack.c.b16 %v1377, %v1370
      %v1616 = vpack.c.b16 %v1378, %v1371
      %v1617 = vpack.c.b16 %v1379, %v1372
      %v1618 = vpack.c.b16 %v1380, %v1373
      %v1619 = vpack.c.b16 %v1381, %v1374
      %v1620 = vpack.c.b16 %v1382, %v1375
      %v1621 = vpack.c.b16 %v1383, %v1376
      %v1622 = vpack.c.b16 %v1391, %v1384
      %v1623 = vpack.c.b16 %v1392, %v1385
      %v1624 = vpack.c.b16 %v1393, %v1386
      %v1625 = vpack.c.b16 %v1394, %v1387
      %v1626 = vpack.c.b16 %v1395, %v1388
      %v1627 = vpack.c.b16 %v1396, %v1389
      %v1628 = vpack.c.b16 %v1397, %v1390
      %v1629 = vpack.c.b16 %v1405, %v1398
      %v1630 = vpack.c.b16 %v1406, %v1399
      %v1631 = vpack.c.b16 %v1407, %v1400
      %v1632 = vpack.c.b16 %v1408, %v1401
      %v1633 = vpack.c.b16 %v1409, %v1402
      %v1634 = vpack.c.b16 %v1410, %v1403
      %v1635 = vpack.c.b16 %v1411, %v1404
      %v1926 = vunpack.c.l.b16 %v598
      %v1927 = vunpack.c.h.b16 %v598
      %v1928 = vunpack.c.l.b16 %v599
      %v1929 = vunpack.c.h.b16 %v599
      %v1930 = vunpack.c.l.b16 %v600
      %v1931 = vunpack.c.h.b16 %v600
      %v1932 = vunpack.c.l.b16 %v601
      %v1933 = vunpack.c.h.b16 %v601
      %v1934 = vunpack.c.l.b16 %v602
      %v1935 = vunpack.c.h.b16 %v602
      %v1936 = vunpack.c.l.b16 %v603
      %v1937 = vunpack.c.h.b16 %v603
      %v1938 = vunpack.c.l.b16 %v604
      %v1939 = vunpack.c.h.b16 %v604
      %v1940 = vunpack.c.l.b16 %v605
      %v1941 = vunpack.c.h.b16 %v605
      %v1942 = vunpack.c.l.b16 %v606
      %v1943 = vunpack.c.h.b16 %v606
      %v1944 = vunpack.c.l.b16 %v607
      %v1945 = vunpack.c.h.b16 %v607
      %v1946 = vunpack.c.l.b16 %v608
      %v1947 = vunpack.c.h.b16 %v608
      %v1948 = vunpack.c.l.b16 %v609
      %v1949 = vunpack.c.h.b16 %v609
      %v1950 = vunpack.c.l.b16 %v610
      %v1951 = vunpack.c.h.b16 %v610
      %v1952 = vunpack.c.l.b16 %v611
      %v1953 = vunpack.c.h.b16 %v611
      %v1954 = vunpack.c.l.b16 %v612
      %v1955 = vunpack.c.h.b16 %v612
      %v1956 = vunpack.c.l.b16 %v613
      %v1957 = vunpack.c.h.b16 %v613
      %v1958 = vunpack.c.l.b16 %v614
      %v1959 = vunpack.c.h.b16 %v614
      %v1960 = vunpack.c.l.b16 %v615
      %v1961 = vunpack.c.h.b16 %v615
      %v1962 = vunpack.c.l.b16 %v616
      %v1963 = vunpack.c.h.b16 %v616
      %v1964 = vunpack.c.l.b16 %v617
      %v1965 = vunpack.c.h.b16 %v617
      %v1966 = vunpack.c.l.b16 %v618
      %v1967 = vunpack.c.h.b16 %v618
      %v1968 = vunpack.c.l.b16 %v619
      %v1969 = vunpack.c.h.b16 %v619
      %v1970 = vunpack.c.l.b16 %v620
      %v1971 = vunpack.c.h.b16 %v620
      %v1972 = vunpack.c.l.b16 %v621
      %v1973 = vunpack.c.h.b16 %v621
      %v1974 = vunpack.c.l.b16 %v622
      %v1975 = vunpack.c.h.b16 %v622
      %v1976 = vunpack.c.l.b16 %v623
      %v1977 = vunpack.c.h.b16 %v623
      %v1978 = vunpack.c.l.b16 %v624
      %v1979 = vunpack.c.h.b16 %v624
      %v1980 = vunpack.c.l.b16 %v625
      %v1981 = vunpack.c.h.b16 %v625
      %v1982 = vunpack.c.l.b16 %v626
      %v1983 = vunpack.c.h.b16 %v626
      %v1984 = vunpack.c.l.b16 %v627
      %v1985 = vunpack.c.h.b16 %v627
      %v1986 = vunpack.c.l.b16 %v628
      %v1987 = vunpack.c.h.b16 %v628
      %v1988 = vunpack.c.l.b16 %v629
      %v1989 = vunpack.c.h.b16 %v629
      %v1990 = vunpack.c.l.b16 %v630
      %v1991 = vunpack.c.h.b16 %v630
      %v1992 = vunpack.c.l.b16 %v631
      %v1993 = vunpack.c.h.b16 %v631
      %v1994 = vunpack.c.l.b16 %v632
      %v1995 = vunpack.c.h.b16 %v632
      %v1996 = vunpack.c.l.b16 %v633
      %v1997 = vunpack.c.h.b16 %v633
      %v1998 = vunpack.c.l.b16 %v634
      %v1999 = vunpack.c.h.b16 %v634
      %v2000 = vunpack.c.l.b16 %v635
      %v2001 = vunpack.c.h.b16 %v635
      %v2002 = vunpack.c.l.b16 %v636
      %v2003 = vunpack.c.h.b16 %v636
      %v2004 = vunpack.c.l.b16 %v637
      %v2005 = vunpack.c.h.b16 %v637
      %v2006 = vunpack.c.l.b16 %v638
      %v2007 = vunpack.c.h.b16 %v638
      %v2008 = vunpack.c.l.b16 %v639
      %v2009 = vunpack.c.h.b16 %v639
      %v2010 = vunpack.c.l.b16 %v640
      %v2011 = vunpack.c.h.b16 %v640
      %v2012 = vunpack.c.l.b16 %v641
      %v2013 = vunpack.c.h.b16 %v641
      %v2014 = vunpack.c.l.b16 %v642
      %v2015 = vunpack.c.h.b16 %v642
      %v2016 = vunpack.c.l.b16 %v643
      %v2017 = vunpack.c.h.b16 %v643
      %v2018 = vunpack.c.l.b16 %v644
      %v2019 = vunpack.c.h.b16 %v644
      %v2020 = vunpack.c.l.b16 %v645
      %v2021 = vunpack.c.h.b16 %v645
      %v2022 = vunpack.c.l.b16 %v646
      %v2023 = vunpack.c.h.b16 %v646
      %v2024 = vunpack.c.l.b16 %v647
      %v2025 = vunpack.c.h.b16 %v647
      %v2026 = vunpack.c.l.b16 %v648
      %v2027 = vunpack.c.h.b16 %v648
      %v2028 = vunpack.c.l.b16 %v649
      %v2029 = vunpack.c.h.b16 %v649
      %v2030 = vunpack.c.l.b16 %v650
      %v2031 = vunpack.c.h.b16 %v650
      %v2032 = vunpack.c.l.b16 %v651
      %v2033 = vunpack.c.h.b16 %v651
      %v2034 = vunpack.c.l.b16 %v652
      %v2035 = vunpack.c.h.b16 %v652
      %v2036 = vunpack.c.l.b16 %v653
      %v2037 = vunpack.c.h.b16 %v653
      %v2038 = vunpack.c.l.b16 %v654
      %v2039 = vunpack.c.h.b16 %v654
      %v2040 = vunpack.c.l.b16 %v655
      %v2041 = vunpack.c.h.b16 %v655
      %v2042 = vunpack.c.l.b16 %v656
      %v2043 = vunpack.c.h.b16 %v656
      %v2044 = vunpack.c.l.b16 %v657
      %v2045 = vunpack.c.h.b16 %v657
      %v2046 = vunpack.c.l.b16 %v658
      %v2047 = vunpack.c.h.b16 %v658
      %v2048 = vunpack.c.l.b16 %v659
      %v2049 = vunpack.c.h.b16 %v659
      %v2050 = vunpack.c.l.b16 %v660
      %v2051 = vunpack.c.h.b16 %v660
      %v2052 = vunpack.c.l.b16 %v661
      %v2053 = vunpack.c.h.b16 %v661
      %v2054 = vunpack.c.l.b16 %v662
      %v2055 = vunpack.c.h.b16 %v662
      %v2056 = vunpack.c.l.b16 %v663
      %v2057 = vunpack.c.h.b16 %v663
      %v2058 = vunpack.c.l.b16 %v664
      %v2059 = vunpack.c.h.b16 %v664
      %v2060 = vunpack.c.l.b16 %v665
      %v2061 = vunpack.c.h.b16 %v665
      %v2062 = vunpack.c.l.b16 %v666
      %v2063 = vunpack.c.h.b16 %v666
      %v2064 = vunpack.c.l.b16 %v667
      %v2065 = vunpack.c.h.b16 %v667
      %v2066 = vunpack.c.l.b16 %v668
      %v2067 = vunpack.c.h.b16 %v668
      %v2068 = vunpack.c.l.b16 %v669
      %v2069 = vunpack.c.h.b16 %v669
      %v2070 = vunpack.c.l.b16 %v670
      %v2071 = vunpack.c.h.b16 %v670
      %v2072 = vunpack.c.l.b16 %v671
      %v2073 = vunpack.c.h.b16 %v671
      %v2074 = vunpack.c.l.b16 %v672
      %v2075 = vunpack.c.h.b16 %v672
      %v2076 = vunpack.c.l.b16 %v673
      %v2077 = vunpack.c.h.b16 %v673
      %v2078 = vunpack.c.l.b16 %v674
      %v2079 = vunpack.c.h.b16 %v674
      %v2080 = vunpack.c.l.b16 %v675
      %v2081 = vunpack.c.h.b16 %v675
      %v2082 = vunpack.c.l.b16 %v676
      %v2083 = vunpack.c.h.b16 %v676
      %v2084 = vunpack.c.l.b16 %v677
      %v2085 = vunpack.c.h.b16 %v677
      %v2086 = vunpack.c.l.b16 %v678
      %v2087 = vunpack.c.h.b16 %v678
      %v2088 = vunpack.c.l.b16 %v679
      %v2089 = vunpack.c.h.b16 %v679
      %v2090 = vunpack.c.l.b16 %v680
      %v2091 = vunpack.c.h.b16 %v680
      %v2092 = vunpack.c.l.b16 %v681
      %v2093 = vunpack.c.h.b16 %v681
      %v2094 = vunpack.c.l.b16 %v682
      %v2095 = vunpack.c.h.b16 %v682
      %v2096 = vunpack.c.l.b16 %v683
      %v2097 = vunpack.c.h.b16 %v683
      %v2098 = vunpack.c.l.b16 %v684
      %v2099 = vunpack.c.h.b16 %v684
      %v2100 = vunpack.c.l.b16 %v685
      %v2101 = vunpack.c.h.b16 %v685
      %v2102 = vunpack.c.l.b16 %v686
      %v2103 = vunpack.c.h.b16 %v686
      %v2104 = vunpack.c.l.b16 %v687
      %v2105 = vunpack.c.h.b16 %v687
      %v2106 = vunpack.c.l.b16 %v688
      %v2107 = vunpack.c.h.b16 %v688
      %v2108 = vunpack.c.l.b16 %v689
      %v2109 = vunpack.c.h.b16 %v689
      %v2110 = vunpack.c.l.b16 %v690
      %v2111 = vunpack.c.h.b16 %v690
      %v2112 = vunpack.c.l.b16 %v691
      %v2113 = vunpack.c.h.b16 %v691
      %v2114 = vunpack.c.l.b16 %v692
      %v2115 = vunpack.c.h.b16 %v692
      %v2116 = vunpack.c.l.b16 %v693
      %v2117 = vunpack.c.h.b16 %v693
      %v2118 = vunpack.c.l.b16 %v694
      %v2119 = vunpack.c.h.b16 %v694
      %v2120 = vunpack.c.l.b16 %v695
      %v2121 = vunpack.c.h.b16 %v695
      %v2122 = vpack.c.b16 %v1928, %v1926
      %v2123 = vpack.c.b16 %v1929, %v1927
      %v2124 = vpack.c.b16 %v1932, %v1930
      %v2125 = vpack.c.b16 %v1933, %v1931
      %v2126 = vpack.c.b16 %v1936, %v1934
      %v2127 = vpack.c.b16 %v1937, %v1935
      %v2128 = vpack.c.b16 %v1940, %v1938
      %v2129 = vpack.c.b16 %v1941, %v1939
      %v2130 = vpack.c.b16 %v1944, %v1942
      %v2131 = vpack.c.b16 %v1945, %v1943
      %v2132 = vpack.c.b16 %v1948, %v1946
      %v2133 = vpack.c.b16 %v1949, %v1947
      %v2134 = vpack.c.b16 %v1952, %v1950
      %v2135 = vpack.c.b16 %v1953, %v1951
      %v2136 = vpack.c.b16 %v1956, %v1954
      %v2137 = vpack.c.b16 %v1957, %v1955
      %v2138 = vpack.c.b16 %v1960, %v1958
      %v2139 = vpack.c.b16 %v1961, %v1959
      %v2140 = vpack.c.b16 %v1964, %v1962
      %v2141 = vpack.c.b16 %v1965, %v1963
      %v2142 = vpack.c.b16 %v1968, %v1966
      %v2143 = vpack.c.b16 %v1969, %v1967
      %v2144 = vpack.c.b16 %v1972, %v1970
      %v2145 = vpack.c.b16 %v1973, %v1971
      %v2146 = vpack.c.b16 %v1976, %v1974
      %v2147 = vpack.c.b16 %v1977, %v1975
      %v2148 = vpack.c.b16 %v1980, %v1978
      %v2149 = vpack.c.b16 %v1981, %v1979
      %v2150 = vpack.c.b16 %v1984, %v1982
      %v2151 = vpack.c.b16 %v1985, %v1983
      %v2152 = vpack.c.b16 %v1988, %v1986
      %v2153 = vpack.c.b16 %v1989, %v1987
      %v2154 = vpack.c.b16 %v1992, %v1990
      %v2155 = vpack.c.b16 %v1993, %v1991
      %v2156 = vpack.c.b16 %v1996, %v1994
      %v2157 = vpack.c.b16 %v1997, %v1995
      %v2158 = vpack.c.b16 %v2000, %v1998
      %v2159 = vpack.c.b16 %v2001, %v1999
      %v2160 = vpack.c.b16 %v2004, %v2002
      %v2161 = vpack.c.b16 %v2005, %v2003
      %v2162 = vpack.c.b16 %v2008, %v2006
      %v2163 = vpack.c.b16 %v2009, %v2007
      %v2164 = vpack.c.b16 %v2012, %v2010
      %v2165 = vpack.c.b16 %v2013, %v2011
      %v2166 = vpack.c.b16 %v2016, %v2014
      %v2167 = vpack.c.b16 %v2017, %v2015
      %v2168 = vpack.c.b16 %v2020, %v2018
      %v2169 = vpack.c.b16 %v2021, %v2019
      %v2170 = vpack.c.b16 %v2024, %v2022
      %v2171 = vpack.c.b16 %v2025, %v2023
      %v2172 = vpack.c.b16 %v2028, %v2026
      %v2173 = vpack.c.b16 %v2029, %v2027
      %v2174 = vpack.c.b16 %v2032, %v2030
      %v2175 = vpack.c.b16 %v2033, %v2031
      %v2176 = vpack.c.b16 %v2036, %v2034
      %v2177 = vpack.c.b16 %v2037, %v2035
      %v2178 = vpack.c.b16 %v2040, %v2038
      %v2179 = vpack.c.b16 %v2041, %v2039
      %v2180 = vpack.c.b16 %v2044, %v2042
      %v2181 = vpack.c.b16 %v2045, %v2043
      %v2182 = vpack.c.b16 %v2048, %v2046
      %v2183 = vpack.c.b16 %v2049, %v2047
      %v2184 = vpack.c.b16 %v2052, %v2050
      %v2185 = vpack.c.b16 %v2053, %v2051
      %v2186 = vpack.c.b16 %v2056, %v2054
      %v2187 = vpack.c.b16 %v2057, %v2055
      %v2188 = vpack.c.b16 %v2060, %v2058
      %v2189 = vpack.c.b16 %v2061, %v2059
      %v2190 = vpack.c.b16 %v2064, %v2062
      %v2191 = vpack.c.b16 %v2065, %v2063
      %v2192 = vpack.c.b16 %v2068, %v2066
      %v2193 = vpack.c.b16 %v2069, %v2067
      %v2194 = vpack.c.b16 %v2072, %v2070
      %v2195 = vpack.c.b16 %v2073, %v2071
      %v2196 = vpack.c.b16 %v2076, %v2074
      %v2197 = vpack.c.b16 %v2077, %v2075
      %v2198 = vpack.c.b16 %v2080, %v2078
      %v2199 = vpack.c.b16 %v2081, %v2079
      %v2200 = vpack.c.b16 %v2084, %v2082
      %v2201 = vpack.c.b16 %v2085, %v2083
      %v2202 = vpack.c.b16 %v2088, %v2086
      %v2203 = vpack.c.b16 %v2089, %v2087
      %v2204 = vpack.c.b16 %v2092, %v2090
      %v2205 = vpack.c.b16 %v2093, %v2091
      %v2206 = vpack.c.b16 %v2096, %v2094
      %v2207 = vpack.c.b16 %v2097, %v2095
      %v2208 = vpack.c.b16 %v2100, %v2098
      %v2209 = vpack.c.b16 %v2101, %v2099
      %v2210 = vpack.c.b16 %v2104, %v2102
      %v2211 = vpack.c.b16 %v2105, %v2103
      %v2212 = vpack.c.b16 %v2108, %v2106
      %v2213 = vpack.c.b16 %v2109, %v2107
      %v2214 = vpack.c.b16 %v2112, %v2110
      %v2215 = vpack.c.b16 %v2113, %v2111
      %v2216 = vpack.c.b16 %v2116, %v2114
      %v2217 = vpack.c.b16 %v2117, %v2115
      %v2218 = vpack.c.b16 %v2120, %v2118
      %v2219 = vpack.c.b16 %v2121, %v2119
      %vm2318 = vcmask 130048
      %v2320 = vsel %vm2318, %v1418, 0
      %v2323 = vsel %vm2318, %v1425, 0
      %v2326 = vsel %vm2318, %v1432, 0
      %v2329 = vsel %vm2318, %v1439, 0
      %v2332 = vsel %vm2318, %v1446, 0
      %v2335 = vsel %vm2318, %v1453, 0
      %v2338 = vsel %vm2318, %v1460, 0
      %v2341 = vsel %vm2318, %v1467, 0
      %v2344 = vsel %vm2318, %v1474, 0
      %v2347 = vsel %vm2318, %v1481, 0
      %v2350 = vsel %vm2318, %v1488, 0
      %v2353 = vsel %vm2318, %v1495, 0
      %v2356 = vsel %vm2318, %v1502, 0
      %v2359 = vsel %vm2318, %v1509, 0
      %v2362 = vsel %vm2318, %v1516, 0
      %v2365 = vsel %vm2318, %v1523, 0
      %v2368 = vsel %vm2318, %v1530, 0
      %v2371 = vsel %vm2318, %v1537, 0
      %v2374 = vsel %vm2318, %v1544, 0
      %v2377 = vsel %vm2318, %v1551, 0
      %v2380 = vsel %vm2318, %v1558, 0
      %v2383 = vsel %vm2318, %v1565, 0
      %v2386 = vsel %vm2318, %v1572, 0
      %v2389 = vsel %vm2318, %v1579, 0
      %v2392 = vsel %vm2318, %v1586, 0
      %v2395 = vsel %vm2318, %v1593, 0
      %v2398 = vsel %vm2318, %v1600, 0
      %v2401 = vsel %vm2318, %v1607, 0
      %v2404 = vsel %vm2318, %v1614, 0
      %v2407 = vsel %vm2318, %v1621, 0
      %v2410 = vsel %vm2318, %v1628, 0
      %v2413 = vsel %vm2318, %v1635, 0
      %2415 = vmatprep.subr.bf16.mxu0 %v2137
      %2416 = vmatpush1.bf16.msra.mxu0 %v2136
      %2417 = vmatprep.subr.bf16.mxu0 %v2135
      %2418 = vmatpush1.bf16.msra.mxu0 %v2134
      %2419 = vmatprep.subr.bf16.mxu0 %v2133
      %2420 = vmatpush1.bf16.msra.mxu0 %v2132
      %2421 = vmatprep.subr.bf16.mxu0 %v2131
      %2422 = vmatpush1.bf16.msra.mxu0 %v2130
      %2423 = vmatprep.subr.bf16.mxu0 %v2129
      %2424 = vmatpush1.bf16.msra.mxu0 %v2128
      %2425 = vmatprep.subr.bf16.mxu0 %v2127
      %2426 = vmatpush1.bf16.msra.mxu0 %v2126
      %2427 = vmatprep.subr.bf16.mxu0 %v2125
      %2428 = vmatpush1.bf16.msra.mxu0 %v2124
      %2429 = vmatprep.subr.bf16.mxu0 %v2123
      %2430 = vmatpush1.bf16.msra.mxu0 %v2122
      %2431 = vmatprep.subr.bf16.mxu0 %v2153
      %2432 = vmatpush2.bf16.msra.mxu0 %v2152
      %2433 = vmatprep.subr.bf16.mxu0 %v2151
      %2434 = vmatpush2.bf16.msra.mxu0 %v2150
      %2435 = vmatprep.subr.bf16.mxu0 %v2149
      %2436 = vmatpush2.bf16.msra.mxu0 %v2148
      %2437 = vmatprep.subr.bf16.mxu0 %v2147
      %2438 = vmatpush2.bf16.msra.mxu0 %v2146
      %2439 = vmatprep.subr.bf16.mxu0 %v2145
      %2440 = vmatpush2.bf16.msra.mxu0 %v2144
      %2441 = vmatprep.subr.bf16.mxu0 %v2143
      %2442 = vmatpush2.bf16.msra.mxu0 %v2142
      %2443 = vmatprep.subr.bf16.mxu0 %v2141
      %2444 = vmatpush2.bf16.msra.mxu0 %v2140
      %2445 = vmatprep.subr.bf16.mxu0 %v2139
      %2446 = vmatpush2.bf16.msra.mxu0 %v2138
      %2447 = vmatprep.mubr.bf16.mxu0 %v1413
      %2448 = vmatmul.mubr.bf16.gmra.mxu0 %v1412
      %v2449 = vpop.f32.mrf.mxu0
      %v2450 = vadd.f32 %v701, %v2449
      %v2451 = vpop.f32.mrf.mxu0
      %v2452 = vadd.f32 %v705, %v2451
      %v2453 = vpop.f32.mrf.mxu0
      %v2454 = vadd.f32 %v701, %v2453
      %v2455 = vpop.f32.mrf.mxu0
      %v2456 = vadd.f32 %v705, %v2455
      %2457 = vmatprep.mubr.bf16.mxu0 %v1420
      %2458 = vmatmul.mubr.bf16.gmra.mxu0 %v1419
      %v2459 = vpop.f32.mrf.mxu0
      %v2460 = vadd.f32 %v701, %v2459
      %v2461 = vpop.f32.mrf.mxu0
      %v2462 = vadd.f32 %v705, %v2461
      %v2463 = vpop.f32.mrf.mxu0
      %v2464 = vadd.f32 %v701, %v2463
      %v2465 = vpop.f32.mrf.mxu0
      %v2466 = vadd.f32 %v705, %v2465
      %2467 = vmatprep.mubr.bf16.mxu0 %v1427
      %2468 = vmatmul.mubr.bf16.gmra.mxu0 %v1426
      %v2469 = vpop.f32.mrf.mxu0
      %v2470 = vadd.f32 %v701, %v2469
      %v2471 = vpop.f32.mrf.mxu0
      %v2472 = vadd.f32 %v705, %v2471
      %v2473 = vpop.f32.mrf.mxu0
      %v2474 = vadd.f32 %v701, %v2473
      %v2475 = vpop.f32.mrf.mxu0
      %v2476 = vadd.f32 %v705, %v2475
      %2477 = vmatprep.mubr.bf16.mxu0 %v1434
      %2478 = vmatmul.mubr.bf16.gmra.mxu0 %v1433
      %v2479 = vpop.f32.mrf.mxu0
      %v2480 = vadd.f32 %v701, %v2479
      %v2481 = vpop.f32.mrf.mxu0
      %v2482 = vadd.f32 %v705, %v2481
      %v2483 = vpop.f32.mrf.mxu0
      %v2484 = vadd.f32 %v701, %v2483
      %v2485 = vpop.f32.mrf.mxu0
      %v2486 = vadd.f32 %v705, %v2485
      %2487 = vmatprep.mubr.bf16.mxu0 %v1441
      %2488 = vmatmul.mubr.bf16.gmra.mxu0 %v1440
      %v2489 = vpop.f32.mrf.mxu0
      %v2490 = vadd.f32 %v701, %v2489
      %v2491 = vpop.f32.mrf.mxu0
      %v2492 = vadd.f32 %v705, %v2491
      %v2493 = vpop.f32.mrf.mxu0
      %v2494 = vadd.f32 %v701, %v2493
      %v2495 = vpop.f32.mrf.mxu0
      %v2496 = vadd.f32 %v705, %v2495
      %2497 = vmatprep.mubr.bf16.mxu0 %v1448
      %2498 = vmatmul.mubr.bf16.gmra.mxu0 %v1447
      %v2499 = vpop.f32.mrf.mxu0
      %v2500 = vadd.f32 %v701, %v2499
      %v2501 = vpop.f32.mrf.mxu0
      %v2502 = vadd.f32 %v705, %v2501
      %v2503 = vpop.f32.mrf.mxu0
      %v2504 = vadd.f32 %v701, %v2503
      %v2505 = vpop.f32.mrf.mxu0
      %v2506 = vadd.f32 %v705, %v2505
      %2507 = vmatprep.mubr.bf16.mxu0 %v1455
      %2508 = vmatmul.mubr.bf16.gmra.mxu0 %v1454
      %v2509 = vpop.f32.mrf.mxu0
      %v2510 = vadd.f32 %v701, %v2509
      %v2511 = vpop.f32.mrf.mxu0
      %v2512 = vadd.f32 %v705, %v2511
      %v2513 = vpop.f32.mrf.mxu0
      %v2514 = vadd.f32 %v701, %v2513
      %v2515 = vpop.f32.mrf.mxu0
      %v2516 = vadd.f32 %v705, %v2515
      %2517 = vmatprep.mubr.bf16.mxu0 %v1462
      %2518 = vmatmul.mubr.bf16.gmra.mxu0 %v1461
      %v2519 = vpop.f32.mrf.mxu0
      %v2520 = vadd.f32 %v701, %v2519
      %v2521 = vpop.f32.mrf.mxu0
      %v2522 = vadd.f32 %v705, %v2521
      %v2523 = vpop.f32.mrf.mxu0
      %v2524 = vadd.f32 %v701, %v2523
      %v2525 = vpop.f32.mrf.mxu0
      %v2526 = vadd.f32 %v705, %v2525
      %2527 = vmatprep.mubr.bf16.mxu0 %v1469
      %2528 = vmatmul.mubr.bf16.gmra.mxu0 %v1468
      %v2529 = vpop.f32.mrf.mxu0
      %v2530 = vadd.f32 %v701, %v2529
      %v2531 = vpop.f32.mrf.mxu0
      %v2532 = vadd.f32 %v705, %v2531
      %v2533 = vpop.f32.mrf.mxu0
      %v2534 = vadd.f32 %v701, %v2533
      %v2535 = vpop.f32.mrf.mxu0
      %v2536 = vadd.f32 %v705, %v2535
      %2537 = vmatprep.mubr.bf16.mxu0 %v1476
      %2538 = vmatmul.mubr.bf16.gmra.mxu0 %v1475
      %v2539 = vpop.f32.mrf.mxu0
      %v2540 = vadd.f32 %v701, %v2539
      %v2541 = vpop.f32.mrf.mxu0
      %v2542 = vadd.f32 %v705, %v2541
      %v2543 = vpop.f32.mrf.mxu0
      %v2544 = vadd.f32 %v701, %v2543
      %v2545 = vpop.f32.mrf.mxu0
      %v2546 = vadd.f32 %v705, %v2545
      %2547 = vmatprep.mubr.bf16.mxu0 %v1483
      %2548 = vmatmul.mubr.bf16.gmra.mxu0 %v1482
      %v2549 = vpop.f32.mrf.mxu0
      %v2550 = vadd.f32 %v701, %v2549
      %v2551 = vpop.f32.mrf.mxu0
      %v2552 = vadd.f32 %v705, %v2551
      %v2553 = vpop.f32.mrf.mxu0
      %v2554 = vadd.f32 %v701, %v2553
      %v2555 = vpop.f32.mrf.mxu0
      %v2556 = vadd.f32 %v705, %v2555
      %2557 = vmatprep.mubr.bf16.mxu0 %v1490
      %2558 = vmatmul.mubr.bf16.gmra.mxu0 %v1489
      %v2559 = vpop.f32.mrf.mxu0
      %v2560 = vadd.f32 %v701, %v2559
      %v2561 = vpop.f32.mrf.mxu0
      %v2562 = vadd.f32 %v705, %v2561
      %v2563 = vpop.f32.mrf.mxu0
      %v2564 = vadd.f32 %v701, %v2563
      %v2565 = vpop.f32.mrf.mxu0
      %v2566 = vadd.f32 %v705, %v2565
      %2567 = vmatprep.mubr.bf16.mxu0 %v1497
      %2568 = vmatmul.mubr.bf16.gmra.mxu0 %v1496
      %v2569 = vpop.f32.mrf.mxu0
      %v2570 = vadd.f32 %v701, %v2569
      %v2571 = vpop.f32.mrf.mxu0
      %v2572 = vadd.f32 %v705, %v2571
      %v2573 = vpop.f32.mrf.mxu0
      %v2574 = vadd.f32 %v701, %v2573
      %v2575 = vpop.f32.mrf.mxu0
      %v2576 = vadd.f32 %v705, %v2575
      %2577 = vmatprep.mubr.bf16.mxu0 %v1504
      %2578 = vmatmul.mubr.bf16.gmra.mxu0 %v1503
      %v2579 = vpop.f32.mrf.mxu0
      %v2580 = vadd.f32 %v701, %v2579
      %v2581 = vpop.f32.mrf.mxu0
      %v2582 = vadd.f32 %v705, %v2581
      %v2583 = vpop.f32.mrf.mxu0
      %v2584 = vadd.f32 %v701, %v2583
      %v2585 = vpop.f32.mrf.mxu0
      %v2586 = vadd.f32 %v705, %v2585
      %2587 = vmatprep.mubr.bf16.mxu0 %v1511
      %2588 = vmatmul.mubr.bf16.gmra.mxu0 %v1510
      %v2589 = vpop.f32.mrf.mxu0
      %v2590 = vadd.f32 %v701, %v2589
      %v2591 = vpop.f32.mrf.mxu0
      %v2592 = vadd.f32 %v705, %v2591
      %v2593 = vpop.f32.mrf.mxu0
      %v2594 = vadd.f32 %v701, %v2593
      %v2595 = vpop.f32.mrf.mxu0
      %v2596 = vadd.f32 %v705, %v2595
      %2597 = vmatprep.mubr.bf16.mxu0 %v1518
      %2598 = vmatmul.mubr.bf16.gmra.mxu0 %v1517
      %v2599 = vpop.f32.mrf.mxu0
      %v2600 = vadd.f32 %v701, %v2599
      %v2601 = vpop.f32.mrf.mxu0
      %v2602 = vadd.f32 %v705, %v2601
      %v2603 = vpop.f32.mrf.mxu0
      %v2604 = vadd.f32 %v701, %v2603
      %v2605 = vpop.f32.mrf.mxu0
      %v2606 = vadd.f32 %v705, %v2605
      %2607 = vmatprep.mubr.bf16.mxu0 %v1525
      %2608 = vmatmul.mubr.bf16.gmra.mxu0 %v1524
      %v2609 = vpop.f32.mrf.mxu0
      %v2610 = vadd.f32 %v701, %v2609
      %v2611 = vpop.f32.mrf.mxu0
      %v2612 = vadd.f32 %v705, %v2611
      %v2613 = vpop.f32.mrf.mxu0
      %v2614 = vadd.f32 %v701, %v2613
      %v2615 = vpop.f32.mrf.mxu0
      %v2616 = vadd.f32 %v705, %v2615
      %2617 = vmatprep.mubr.bf16.mxu0 %v1532
      %2618 = vmatmul.mubr.bf16.gmra.mxu0 %v1531
      %v2619 = vpop.f32.mrf.mxu0
      %v2620 = vadd.f32 %v701, %v2619
      %v2621 = vpop.f32.mrf.mxu0
      %v2622 = vadd.f32 %v705, %v2621
      %v2623 = vpop.f32.mrf.mxu0
      %v2624 = vadd.f32 %v701, %v2623
      %v2625 = vpop.f32.mrf.mxu0
      %v2626 = vadd.f32 %v705, %v2625
      %2627 = vmatprep.mubr.bf16.mxu0 %v1539
      %2628 = vmatmul.mubr.bf16.gmra.mxu0 %v1538
      %v2629 = vpop.f32.mrf.mxu0
      %v2630 = vadd.f32 %v701, %v2629
      %v2631 = vpop.f32.mrf.mxu0
      %v2632 = vadd.f32 %v705, %v2631
      %v2633 = vpop.f32.mrf.mxu0
      %v2634 = vadd.f32 %v701, %v2633
      %v2635 = vpop.f32.mrf.mxu0
      %v2636 = vadd.f32 %v705, %v2635
      %2637 = vmatprep.mubr.bf16.mxu0 %v1546
      %2638 = vmatmul.mubr.bf16.gmra.mxu0 %v1545
      %v2639 = vpop.f32.mrf.mxu0
      %v2640 = vadd.f32 %v701, %v2639
      %v2641 = vpop.f32.mrf.mxu0
      %v2642 = vadd.f32 %v705, %v2641
      %v2643 = vpop.f32.mrf.mxu0
      %v2644 = vadd.f32 %v701, %v2643
      %v2645 = vpop.f32.mrf.mxu0
      %v2646 = vadd.f32 %v705, %v2645
      %2647 = vmatprep.mubr.bf16.mxu0 %v1553
      %2648 = vmatmul.mubr.bf16.gmra.mxu0 %v1552
      %v2649 = vpop.f32.mrf.mxu0
      %v2650 = vadd.f32 %v701, %v2649
      %v2651 = vpop.f32.mrf.mxu0
      %v2652 = vadd.f32 %v705, %v2651
      %v2653 = vpop.f32.mrf.mxu0
      %v2654 = vadd.f32 %v701, %v2653
      %v2655 = vpop.f32.mrf.mxu0
      %v2656 = vadd.f32 %v705, %v2655
      %2657 = vmatprep.mubr.bf16.mxu0 %v1560
      %2658 = vmatmul.mubr.bf16.gmra.mxu0 %v1559
      %v2659 = vpop.f32.mrf.mxu0
      %v2660 = vadd.f32 %v701, %v2659
      %v2661 = vpop.f32.mrf.mxu0
      %v2662 = vadd.f32 %v705, %v2661
      %v2663 = vpop.f32.mrf.mxu0
      %v2664 = vadd.f32 %v701, %v2663
      %v2665 = vpop.f32.mrf.mxu0
      %v2666 = vadd.f32 %v705, %v2665
      %2667 = vmatprep.mubr.bf16.mxu0 %v1567
      %2668 = vmatmul.mubr.bf16.gmra.mxu0 %v1566
      %v2669 = vpop.f32.mrf.mxu0
      %v2670 = vadd.f32 %v701, %v2669
      %v2671 = vpop.f32.mrf.mxu0
      %v2672 = vadd.f32 %v705, %v2671
      %v2673 = vpop.f32.mrf.mxu0
      %v2674 = vadd.f32 %v701, %v2673
      %v2675 = vpop.f32.mrf.mxu0
      %v2676 = vadd.f32 %v705, %v2675
      %2677 = vmatprep.mubr.bf16.mxu0 %v1574
      %2678 = vmatmul.mubr.bf16.gmra.mxu0 %v1573
      %v2679 = vpop.f32.mrf.mxu0
      %v2680 = vadd.f32 %v701, %v2679
      %v2681 = vpop.f32.mrf.mxu0
      %v2682 = vadd.f32 %v705, %v2681
      %v2683 = vpop.f32.mrf.mxu0
      %v2684 = vadd.f32 %v701, %v2683
      %v2685 = vpop.f32.mrf.mxu0
      %v2686 = vadd.f32 %v705, %v2685
      %2687 = vmatprep.mubr.bf16.mxu0 %v1581
      %2688 = vmatmul.mubr.bf16.gmra.mxu0 %v1580
      %v2689 = vpop.f32.mrf.mxu0
      %v2690 = vadd.f32 %v701, %v2689
      %v2691 = vpop.f32.mrf.mxu0
      %v2692 = vadd.f32 %v705, %v2691
      %v2693 = vpop.f32.mrf.mxu0
      %v2694 = vadd.f32 %v701, %v2693
      %v2695 = vpop.f32.mrf.mxu0
      %v2696 = vadd.f32 %v705, %v2695
      %2697 = vmatprep.mubr.bf16.mxu0 %v1588
      %2698 = vmatmul.mubr.bf16.gmra.mxu0 %v1587
      %v2699 = vpop.f32.mrf.mxu0
      %v2700 = vadd.f32 %v701, %v2699
      %v2701 = vpop.f32.mrf.mxu0
      %v2702 = vadd.f32 %v705, %v2701
      %v2703 = vpop.f32.mrf.mxu0
      %v2704 = vadd.f32 %v701, %v2703
      %v2705 = vpop.f32.mrf.mxu0
      %v2706 = vadd.f32 %v705, %v2705
      %2707 = vmatprep.mubr.bf16.mxu0 %v1595
      %2708 = vmatmul.mubr.bf16.gmra.mxu0 %v1594
      %v2709 = vpop.f32.mrf.mxu0
      %v2710 = vadd.f32 %v701, %v2709
      %v2711 = vpop.f32.mrf.mxu0
      %v2712 = vadd.f32 %v705, %v2711
      %v2713 = vpop.f32.mrf.mxu0
      %v2714 = vadd.f32 %v701, %v2713
      %v2715 = vpop.f32.mrf.mxu0
      %v2716 = vadd.f32 %v705, %v2715
      %2717 = vmatprep.mubr.bf16.mxu0 %v1602
      %2718 = vmatmul.mubr.bf16.gmra.mxu0 %v1601
      %v2719 = vpop.f32.mrf.mxu0
      %v2720 = vadd.f32 %v701, %v2719
      %v2721 = vpop.f32.mrf.mxu0
      %v2722 = vadd.f32 %v705, %v2721
      %v2723 = vpop.f32.mrf.mxu0
      %v2724 = vadd.f32 %v701, %v2723
      %v2725 = vpop.f32.mrf.mxu0
      %v2726 = vadd.f32 %v705, %v2725
      %2727 = vmatprep.mubr.bf16.mxu0 %v1609
      %2728 = vmatmul.mubr.bf16.gmra.mxu0 %v1608
      %v2729 = vpop.f32.mrf.mxu0
      %v2730 = vadd.f32 %v701, %v2729
      %v2731 = vpop.f32.mrf.mxu0
      %v2732 = vadd.f32 %v705, %v2731
      %v2733 = vpop.f32.mrf.mxu0
      %v2734 = vadd.f32 %v701, %v2733
      %v2735 = vpop.f32.mrf.mxu0
      %v2736 = vadd.f32 %v705, %v2735
      %2737 = vmatprep.mubr.bf16.mxu0 %v1616
      %2738 = vmatmul.mubr.bf16.gmra.mxu0 %v1615
      %v2739 = vpop.f32.mrf.mxu0
      %v2740 = vadd.f32 %v701, %v2739
      %v2741 = vpop.f32.mrf.mxu0
      %v2742 = vadd.f32 %v705, %v2741
      %v2743 = vpop.f32.mrf.mxu0
      %v2744 = vadd.f32 %v701, %v2743
      %v2745 = vpop.f32.mrf.mxu0
      %v2746 = vadd.f32 %v705, %v2745
      %2747 = vmatprep.mubr.bf16.mxu0 %v1623
      %2748 = vmatmul.mubr.bf16.gmra.mxu0 %v1622
      %v2749 = vpop.f32.mrf.mxu0
      %v2750 = vadd.f32 %v701, %v2749
      %v2751 = vpop.f32.mrf.mxu0
      %v2752 = vadd.f32 %v705, %v2751
      %v2753 = vpop.f32.mrf.mxu0
      %v2754 = vadd.f32 %v701, %v2753
      %v2755 = vpop.f32.mrf.mxu0
      %v2756 = vadd.f32 %v705, %v2755
      %2757 = vmatprep.mubr.bf16.mxu0 %v1630
      %2758 = vmatmul.mubr.bf16.gmra.mxu0 %v1629
      %v2759 = vpop.f32.mrf.mxu0
      %v2760 = vadd.f32 %v701, %v2759
      %v2761 = vpop.f32.mrf.mxu0
      %v2762 = vadd.f32 %v705, %v2761
      %v2763 = vpop.f32.mrf.mxu0
      %v2764 = vadd.f32 %v701, %v2763
      %v2765 = vpop.f32.mrf.mxu0
      %v2766 = vadd.f32 %v705, %v2765
      %2767 = vdwg.mxu0
      %2768 = vmatprep.subr.bf16.mxu0 %v2169
      %2769 = vmatpush1.bf16.msra.mxu0 %v2168
      %2770 = vmatprep.subr.bf16.mxu0 %v2167
      %2771 = vmatpush1.bf16.msra.mxu0 %v2166
      %2772 = vmatprep.subr.bf16.mxu0 %v2165
      %2773 = vmatpush1.bf16.msra.mxu0 %v2164
      %2774 = vmatprep.subr.bf16.mxu0 %v2163
      %2775 = vmatpush1.bf16.msra.mxu0 %v2162
      %2776 = vmatprep.subr.bf16.mxu0 %v2161
      %2777 = vmatpush1.bf16.msra.mxu0 %v2160
      %2778 = vmatprep.subr.bf16.mxu0 %v2159
      %2779 = vmatpush1.bf16.msra.mxu0 %v2158
      %2780 = vmatprep.subr.bf16.mxu0 %v2157
      %2781 = vmatpush1.bf16.msra.mxu0 %v2156
      %2782 = vmatprep.subr.bf16.mxu0 %v2155
      %2783 = vmatpush1.bf16.msra.mxu0 %v2154
      %2784 = vmatprep.subr.bf16.mxu0 %v2185
      %2785 = vmatpush2.bf16.msra.mxu0 %v2184
      %2786 = vmatprep.subr.bf16.mxu0 %v2183
      %2787 = vmatpush2.bf16.msra.mxu0 %v2182
      %2788 = vmatprep.subr.bf16.mxu0 %v2181
      %2789 = vmatpush2.bf16.msra.mxu0 %v2180
      %2790 = vmatprep.subr.bf16.mxu0 %v2179
      %2791 = vmatpush2.bf16.msra.mxu0 %v2178
      %2792 = vmatprep.subr.bf16.mxu0 %v2177
      %2793 = vmatpush2.bf16.msra.mxu0 %v2176
      %2794 = vmatprep.subr.bf16.mxu0 %v2175
      %2795 = vmatpush2.bf16.msra.mxu0 %v2174
      %2796 = vmatprep.subr.bf16.mxu0 %v2173
      %2797 = vmatpush2.bf16.msra.mxu0 %v2172
      %2798 = vmatprep.subr.bf16.mxu0 %v2171
      %2799 = vmatpush2.bf16.msra.mxu0 %v2170
      %2800 = vmatprep.mubr.bf16.mxu0 %v1415
      %2801 = vmatmul.mubr.bf16.gmra.mxu0 %v1414
      %v2802 = vpop.f32.mrf.mxu0
      %v2803 = vadd.f32 %v2450, %v2802
      %v2804 = vpop.f32.mrf.mxu0
      %v2805 = vadd.f32 %v2452, %v2804
      %v2806 = vpop.f32.mrf.mxu0
      %v2807 = vadd.f32 %v2454, %v2806
      %v2808 = vpop.f32.mrf.mxu0
      %v2809 = vadd.f32 %v2456, %v2808
      %2810 = vmatprep.mubr.bf16.mxu0 %v1422
      %2811 = vmatmul.mubr.bf16.gmra.mxu0 %v1421
      %v2812 = vpop.f32.mrf.mxu0
      %v2813 = vadd.f32 %v2460, %v2812
      %v2814 = vpop.f32.mrf.mxu0
      %v2815 = vadd.f32 %v2462, %v2814
      %v2816 = vpop.f32.mrf.mxu0
      %v2817 = vadd.f32 %v2464, %v2816
      %v2818 = vpop.f32.mrf.mxu0
      %v2819 = vadd.f32 %v2466, %v2818
      %2820 = vmatprep.mubr.bf16.mxu0 %v1429
      %2821 = vmatmul.mubr.bf16.gmra.mxu0 %v1428
      %v2822 = vpop.f32.mrf.mxu0
      %v2823 = vadd.f32 %v2470, %v2822
      %v2824 = vpop.f32.mrf.mxu0
      %v2825 = vadd.f32 %v2472, %v2824
      %v2826 = vpop.f32.mrf.mxu0
      %v2827 = vadd.f32 %v2474, %v2826
      %v2828 = vpop.f32.mrf.mxu0
      %v2829 = vadd.f32 %v2476, %v2828
      %2830 = vmatprep.mubr.bf16.mxu0 %v1436
      %2831 = vmatmul.mubr.bf16.gmra.mxu0 %v1435
      %v2832 = vpop.f32.mrf.mxu0
      %v2833 = vadd.f32 %v2480, %v2832
      %v2834 = vpop.f32.mrf.mxu0
      %v2835 = vadd.f32 %v2482, %v2834
      %v2836 = vpop.f32.mrf.mxu0
      %v2837 = vadd.f32 %v2484, %v2836
      %v2838 = vpop.f32.mrf.mxu0
      %v2839 = vadd.f32 %v2486, %v2838
      %2840 = vmatprep.mubr.bf16.mxu0 %v1443
      %2841 = vmatmul.mubr.bf16.gmra.mxu0 %v1442
      %v2842 = vpop.f32.mrf.mxu0
      %v2843 = vadd.f32 %v2490, %v2842
      %v2844 = vpop.f32.mrf.mxu0
      %v2845 = vadd.f32 %v2492, %v2844
      %v2846 = vpop.f32.mrf.mxu0
      %v2847 = vadd.f32 %v2494, %v2846
      %v2848 = vpop.f32.mrf.mxu0
      %v2849 = vadd.f32 %v2496, %v2848
      %2850 = vmatprep.mubr.bf16.mxu0 %v1450
      %2851 = vmatmul.mubr.bf16.gmra.mxu0 %v1449
      %v2852 = vpop.f32.mrf.mxu0
      %v2853 = vadd.f32 %v2500, %v2852
      %v2854 = vpop.f32.mrf.mxu0
      %v2855 = vadd.f32 %v2502, %v2854
      %v2856 = vpop.f32.mrf.mxu0
      %v2857 = vadd.f32 %v2504, %v2856
      %v2858 = vpop.f32.mrf.mxu0
      %v2859 = vadd.f32 %v2506, %v2858
      %2860 = vmatprep.mubr.bf16.mxu0 %v1457
      %2861 = vmatmul.mubr.bf16.gmra.mxu0 %v1456
      %v2862 = vpop.f32.mrf.mxu0
      %v2863 = vadd.f32 %v2510, %v2862
      %v2864 = vpop.f32.mrf.mxu0
      %v2865 = vadd.f32 %v2512, %v2864
      %v2866 = vpop.f32.mrf.mxu0
      %v2867 = vadd.f32 %v2514, %v2866
      %v2868 = vpop.f32.mrf.mxu0
      %v2869 = vadd.f32 %v2516, %v2868
      %2870 = vmatprep.mubr.bf16.mxu0 %v1464
      %2871 = vmatmul.mubr.bf16.gmra.mxu0 %v1463
      %v2872 = vpop.f32.mrf.mxu0
      %v2873 = vadd.f32 %v2520, %v2872
      %v2874 = vpop.f32.mrf.mxu0
      %v2875 = vadd.f32 %v2522, %v2874
      %v2876 = vpop.f32.mrf.mxu0
      %v2877 = vadd.f32 %v2524, %v2876
      %v2878 = vpop.f32.mrf.mxu0
      %v2879 = vadd.f32 %v2526, %v2878
      %2880 = vmatprep.mubr.bf16.mxu0 %v1471
      %2881 = vmatmul.mubr.bf16.gmra.mxu0 %v1470
      %v2882 = vpop.f32.mrf.mxu0
      %v2883 = vadd.f32 %v2530, %v2882
      %v2884 = vpop.f32.mrf.mxu0
      %v2885 = vadd.f32 %v2532, %v2884
      %v2886 = vpop.f32.mrf.mxu0
      %v2887 = vadd.f32 %v2534, %v2886
      %v2888 = vpop.f32.mrf.mxu0
      %v2889 = vadd.f32 %v2536, %v2888
      %2890 = vmatprep.mubr.bf16.mxu0 %v1478
      %2891 = vmatmul.mubr.bf16.gmra.mxu0 %v1477
      %v2892 = vpop.f32.mrf.mxu0
      %v2893 = vadd.f32 %v2540, %v2892
      %v2894 = vpop.f32.mrf.mxu0
      %v2895 = vadd.f32 %v2542, %v2894
      %v2896 = vpop.f32.mrf.mxu0
      %v2897 = vadd.f32 %v2544, %v2896
      %v2898 = vpop.f32.mrf.mxu0
      %v2899 = vadd.f32 %v2546, %v2898
      %2900 = vmatprep.mubr.bf16.mxu0 %v1485
      %2901 = vmatmul.mubr.bf16.gmra.mxu0 %v1484
      %v2902 = vpop.f32.mrf.mxu0
      %v2903 = vadd.f32 %v2550, %v2902
      %v2904 = vpop.f32.mrf.mxu0
      %v2905 = vadd.f32 %v2552, %v2904
      %v2906 = vpop.f32.mrf.mxu0
      %v2907 = vadd.f32 %v2554, %v2906
      %v2908 = vpop.f32.mrf.mxu0
      %v2909 = vadd.f32 %v2556, %v2908
      %2910 = vmatprep.mubr.bf16.mxu0 %v1492
      %2911 = vmatmul.mubr.bf16.gmra.mxu0 %v1491
      %v2912 = vpop.f32.mrf.mxu0
      %v2913 = vadd.f32 %v2560, %v2912
      %v2914 = vpop.f32.mrf.mxu0
      %v2915 = vadd.f32 %v2562, %v2914
      %v2916 = vpop.f32.mrf.mxu0
      %v2917 = vadd.f32 %v2564, %v2916
      %v2918 = vpop.f32.mrf.mxu0
      %v2919 = vadd.f32 %v2566, %v2918
      %2920 = vmatprep.mubr.bf16.mxu0 %v1499
      %2921 = vmatmul.mubr.bf16.gmra.mxu0 %v1498
      %v2922 = vpop.f32.mrf.mxu0
      %v2923 = vadd.f32 %v2570, %v2922
      %v2924 = vpop.f32.mrf.mxu0
      %v2925 = vadd.f32 %v2572, %v2924
      %v2926 = vpop.f32.mrf.mxu0
      %v2927 = vadd.f32 %v2574, %v2926
      %v2928 = vpop.f32.mrf.mxu0
      %v2929 = vadd.f32 %v2576, %v2928
      %2930 = vmatprep.mubr.bf16.mxu0 %v1506
      %2931 = vmatmul.mubr.bf16.gmra.mxu0 %v1505
      %v2932 = vpop.f32.mrf.mxu0
      %v2933 = vadd.f32 %v2580, %v2932
      %v2934 = vpop.f32.mrf.mxu0
      %v2935 = vadd.f32 %v2582, %v2934
      %v2936 = vpop.f32.mrf.mxu0
      %v2937 = vadd.f32 %v2584, %v2936
      %v2938 = vpop.f32.mrf.mxu0
      %v2939 = vadd.f32 %v2586, %v2938
      %2940 = vmatprep.mubr.bf16.mxu0 %v1513
      %2941 = vmatmul.mubr.bf16.gmra.mxu0 %v1512
      %v2942 = vpop.f32.mrf.mxu0
      %v2943 = vadd.f32 %v2590, %v2942
      %v2944 = vpop.f32.mrf.mxu0
      %v2945 = vadd.f32 %v2592, %v2944
      %v2946 = vpop.f32.mrf.mxu0
      %v2947 = vadd.f32 %v2594, %v2946
      %v2948 = vpop.f32.mrf.mxu0
      %v2949 = vadd.f32 %v2596, %v2948
      %2950 = vmatprep.mubr.bf16.mxu0 %v1520
      %2951 = vmatmul.mubr.bf16.gmra.mxu0 %v1519
      %v2952 = vpop.f32.mrf.mxu0
      %v2953 = vadd.f32 %v2600, %v2952
      %v2954 = vpop.f32.mrf.mxu0
      %v2955 = vadd.f32 %v2602, %v2954
      %v2956 = vpop.f32.mrf.mxu0
      %v2957 = vadd.f32 %v2604, %v2956
      %v2958 = vpop.f32.mrf.mxu0
      %v2959 = vadd.f32 %v2606, %v2958
      %2960 = vmatprep.mubr.bf16.mxu0 %v1527
      %2961 = vmatmul.mubr.bf16.gmra.mxu0 %v1526
      %v2962 = vpop.f32.mrf.mxu0
      %v2963 = vadd.f32 %v2610, %v2962
      %v2964 = vpop.f32.mrf.mxu0
      %v2965 = vadd.f32 %v2612, %v2964
      %v2966 = vpop.f32.mrf.mxu0
      %v2967 = vadd.f32 %v2614, %v2966
      %v2968 = vpop.f32.mrf.mxu0
      %v2969 = vadd.f32 %v2616, %v2968
      %2970 = vmatprep.mubr.bf16.mxu0 %v1534
      %2971 = vmatmul.mubr.bf16.gmra.mxu0 %v1533
      %v2972 = vpop.f32.mrf.mxu0
      %v2973 = vadd.f32 %v2620, %v2972
      %v2974 = vpop.f32.mrf.mxu0
      %v2975 = vadd.f32 %v2622, %v2974
      %v2976 = vpop.f32.mrf.mxu0
      %v2977 = vadd.f32 %v2624, %v2976
      %v2978 = vpop.f32.mrf.mxu0
      %v2979 = vadd.f32 %v2626, %v2978
      %2980 = vmatprep.mubr.bf16.mxu0 %v1541
      %2981 = vmatmul.mubr.bf16.gmra.mxu0 %v1540
      %v2982 = vpop.f32.mrf.mxu0
      %v2983 = vadd.f32 %v2630, %v2982
      %v2984 = vpop.f32.mrf.mxu0
      %v2985 = vadd.f32 %v2632, %v2984
      %v2986 = vpop.f32.mrf.mxu0
      %v2987 = vadd.f32 %v2634, %v2986
      %v2988 = vpop.f32.mrf.mxu0
      %v2989 = vadd.f32 %v2636, %v2988
      %2990 = vmatprep.mubr.bf16.mxu0 %v1548
      %2991 = vmatmul.mubr.bf16.gmra.mxu0 %v1547
      %v2992 = vpop.f32.mrf.mxu0
      %v2993 = vadd.f32 %v2640, %v2992
      %v2994 = vpop.f32.mrf.mxu0
      %v2995 = vadd.f32 %v2642, %v2994
      %v2996 = vpop.f32.mrf.mxu0
      %v2997 = vadd.f32 %v2644, %v2996
      %v2998 = vpop.f32.mrf.mxu0
      %v2999 = vadd.f32 %v2646, %v2998
      %3000 = vmatprep.mubr.bf16.mxu0 %v1555
      %3001 = vmatmul.mubr.bf16.gmra.mxu0 %v1554
      %v3002 = vpop.f32.mrf.mxu0
      %v3003 = vadd.f32 %v2650, %v3002
      %v3004 = vpop.f32.mrf.mxu0
      %v3005 = vadd.f32 %v2652, %v3004
      %v3006 = vpop.f32.mrf.mxu0
      %v3007 = vadd.f32 %v2654, %v3006
      %v3008 = vpop.f32.mrf.mxu0
      %v3009 = vadd.f32 %v2656, %v3008
      %3010 = vmatprep.mubr.bf16.mxu0 %v1562
      %3011 = vmatmul.mubr.bf16.gmra.mxu0 %v1561
      %v3012 = vpop.f32.mrf.mxu0
      %v3013 = vadd.f32 %v2660, %v3012
      %v3014 = vpop.f32.mrf.mxu0
      %v3015 = vadd.f32 %v2662, %v3014
      %v3016 = vpop.f32.mrf.mxu0
      %v3017 = vadd.f32 %v2664, %v3016
      %v3018 = vpop.f32.mrf.mxu0
      %v3019 = vadd.f32 %v2666, %v3018
      %3020 = vmatprep.mubr.bf16.mxu0 %v1569
      %3021 = vmatmul.mubr.bf16.gmra.mxu0 %v1568
      %v3022 = vpop.f32.mrf.mxu0
      %v3023 = vadd.f32 %v2670, %v3022
      %v3024 = vpop.f32.mrf.mxu0
      %v3025 = vadd.f32 %v2672, %v3024
      %v3026 = vpop.f32.mrf.mxu0
      %v3027 = vadd.f32 %v2674, %v3026
      %v3028 = vpop.f32.mrf.mxu0
      %v3029 = vadd.f32 %v2676, %v3028
      %3030 = vmatprep.mubr.bf16.mxu0 %v1576
      %3031 = vmatmul.mubr.bf16.gmra.mxu0 %v1575
      %v3032 = vpop.f32.mrf.mxu0
      %v3033 = vadd.f32 %v2680, %v3032
      %v3034 = vpop.f32.mrf.mxu0
      %v3035 = vadd.f32 %v2682, %v3034
      %v3036 = vpop.f32.mrf.mxu0
      %v3037 = vadd.f32 %v2684, %v3036
      %v3038 = vpop.f32.mrf.mxu0
      %v3039 = vadd.f32 %v2686, %v3038
      %3040 = vmatprep.mubr.bf16.mxu0 %v1583
      %3041 = vmatmul.mubr.bf16.gmra.mxu0 %v1582
      %v3042 = vpop.f32.mrf.mxu0
      %v3043 = vadd.f32 %v2690, %v3042
      %v3044 = vpop.f32.mrf.mxu0
      %v3045 = vadd.f32 %v2692, %v3044
      %v3046 = vpop.f32.mrf.mxu0
      %v3047 = vadd.f32 %v2694, %v3046
      %v3048 = vpop.f32.mrf.mxu0
      %v3049 = vadd.f32 %v2696, %v3048
      %3050 = vmatprep.mubr.bf16.mxu0 %v1590
      %3051 = vmatmul.mubr.bf16.gmra.mxu0 %v1589
      %v3052 = vpop.f32.mrf.mxu0
      %v3053 = vadd.f32 %v2700, %v3052
      %v3054 = vpop.f32.mrf.mxu0
      %v3055 = vadd.f32 %v2702, %v3054
      %v3056 = vpop.f32.mrf.mxu0
      %v3057 = vadd.f32 %v2704, %v3056
      %v3058 = vpop.f32.mrf.mxu0
      %v3059 = vadd.f32 %v2706, %v3058
      %3060 = vmatprep.mubr.bf16.mxu0 %v1597
      %3061 = vmatmul.mubr.bf16.gmra.mxu0 %v1596
      %v3062 = vpop.f32.mrf.mxu0
      %v3063 = vadd.f32 %v2710, %v3062
      %v3064 = vpop.f32.mrf.mxu0
      %v3065 = vadd.f32 %v2712, %v3064
      %v3066 = vpop.f32.mrf.mxu0
      %v3067 = vadd.f32 %v2714, %v3066
      %v3068 = vpop.f32.mrf.mxu0
      %v3069 = vadd.f32 %v2716, %v3068
      %3070 = vmatprep.mubr.bf16.mxu0 %v1604
      %3071 = vmatmul.mubr.bf16.gmra.mxu0 %v1603
      %v3072 = vpop.f32.mrf.mxu0
      %v3073 = vadd.f32 %v2720, %v3072
      %v3074 = vpop.f32.mrf.mxu0
      %v3075 = vadd.f32 %v2722, %v3074
      %v3076 = vpop.f32.mrf.mxu0
      %v3077 = vadd.f32 %v2724, %v3076
      %v3078 = vpop.f32.mrf.mxu0
      %v3079 = vadd.f32 %v2726, %v3078
      %3080 = vmatprep.mubr.bf16.mxu0 %v1611
      %3081 = vmatmul.mubr.bf16.gmra.mxu0 %v1610
      %v3082 = vpop.f32.mrf.mxu0
      %v3083 = vadd.f32 %v2730, %v3082
      %v3084 = vpop.f32.mrf.mxu0
      %v3085 = vadd.f32 %v2732, %v3084
      %v3086 = vpop.f32.mrf.mxu0
      %v3087 = vadd.f32 %v2734, %v3086
      %v3088 = vpop.f32.mrf.mxu0
      %v3089 = vadd.f32 %v2736, %v3088
      %3090 = vmatprep.mubr.bf16.mxu0 %v1618
      %3091 = vmatmul.mubr.bf16.gmra.mxu0 %v1617
      %v3092 = vpop.f32.mrf.mxu0
      %v3093 = vadd.f32 %v2740, %v3092
      %v3094 = vpop.f32.mrf.mxu0
      %v3095 = vadd.f32 %v2742, %v3094
      %v3096 = vpop.f32.mrf.mxu0
      %v3097 = vadd.f32 %v2744, %v3096
      %v3098 = vpop.f32.mrf.mxu0
      %v3099 = vadd.f32 %v2746, %v3098
      %3100 = vmatprep.mubr.bf16.mxu0 %v1625
      %3101 = vmatmul.mubr.bf16.gmra.mxu0 %v1624
      %v3102 = vpop.f32.mrf.mxu0
      %v3103 = vadd.f32 %v2750, %v3102
      %v3104 = vpop.f32.mrf.mxu0
      %v3105 = vadd.f32 %v2752, %v3104
      %v3106 = vpop.f32.mrf.mxu0
      %v3107 = vadd.f32 %v2754, %v3106
      %v3108 = vpop.f32.mrf.mxu0
      %v3109 = vadd.f32 %v2756, %v3108
      %3110 = vmatprep.mubr.bf16.mxu0 %v1632
      %3111 = vmatmul.mubr.bf16.gmra.mxu0 %v1631
      %v3112 = vpop.f32.mrf.mxu0
      %v3113 = vadd.f32 %v2760, %v3112
      %v3114 = vpop.f32.mrf.mxu0
      %v3115 = vadd.f32 %v2762, %v3114
      %v3116 = vpop.f32.mrf.mxu0
      %v3117 = vadd.f32 %v2764, %v3116
      %v3118 = vpop.f32.mrf.mxu0
      %v3119 = vadd.f32 %v2766, %v3118
      %3120 = vdwg.mxu0
      %3121 = vmatprep.subr.bf16.mxu0 %v2201
      %3122 = vmatpush1.bf16.msra.mxu0 %v2200
      %3123 = vmatprep.subr.bf16.mxu0 %v2199
      %3124 = vmatpush1.bf16.msra.mxu0 %v2198
      %3125 = vmatprep.subr.bf16.mxu0 %v2197
      %3126 = vmatpush1.bf16.msra.mxu0 %v2196
      %3127 = vmatprep.subr.bf16.mxu0 %v2195
      %3128 = vmatpush1.bf16.msra.mxu0 %v2194
      %3129 = vmatprep.subr.bf16.mxu0 %v2193
      %3130 = vmatpush1.bf16.msra.mxu0 %v2192
      %3131 = vmatprep.subr.bf16.mxu0 %v2191
      %3132 = vmatpush1.bf16.msra.mxu0 %v2190
      %3133 = vmatprep.subr.bf16.mxu0 %v2189
      %3134 = vmatpush1.bf16.msra.mxu0 %v2188
      %3135 = vmatprep.subr.bf16.mxu0 %v2187
      %3136 = vmatpush1.bf16.msra.mxu0 %v2186
      %3137 = vmatprep.subr.bf16.mxu0 %v2217
      %3138 = vmatpush2.bf16.msra.mxu0 %v2216
      %3139 = vmatprep.subr.bf16.mxu0 %v2215
      %3140 = vmatpush2.bf16.msra.mxu0 %v2214
      %3141 = vmatprep.subr.bf16.mxu0 %v2213
      %3142 = vmatpush2.bf16.msra.mxu0 %v2212
      %3143 = vmatprep.subr.bf16.mxu0 %v2211
      %3144 = vmatpush2.bf16.msra.mxu0 %v2210
      %3145 = vmatprep.subr.bf16.mxu0 %v2209
      %3146 = vmatpush2.bf16.msra.mxu0 %v2208
      %3147 = vmatprep.subr.bf16.mxu0 %v2207
      %3148 = vmatpush2.bf16.msra.mxu0 %v2206
      %3149 = vmatprep.subr.bf16.mxu0 %v2205
      %3150 = vmatpush2.bf16.msra.mxu0 %v2204
      %3151 = vmatprep.subr.bf16.mxu0 %v2203
      %3152 = vmatpush2.bf16.msra.mxu0 %v2202
      %3153 = vmatprep.mubr.bf16.mxu0 %v1417
      %3154 = vmatmul.mubr.bf16.gmra.mxu0 %v1416
      %v3155 = vpop.f32.mrf.mxu0
      %v3156 = vadd.f32 %v2803, %v3155
      %v3157 = vpop.f32.mrf.mxu0
      %v3158 = vadd.f32 %v2805, %v3157
      %v3159 = vpop.f32.mrf.mxu0
      %v3160 = vadd.f32 %v2807, %v3159
      %v3161 = vpop.f32.mrf.mxu0
      %v3162 = vadd.f32 %v2809, %v3161
      %3163 = vmatprep.mubr.bf16.mxu0 %v1424
      %3164 = vmatmul.mubr.bf16.gmra.mxu0 %v1423
      %v3165 = vpop.f32.mrf.mxu0
      %v3166 = vadd.f32 %v2813, %v3165
      %v3167 = vpop.f32.mrf.mxu0
      %v3168 = vadd.f32 %v2815, %v3167
      %v3169 = vpop.f32.mrf.mxu0
      %v3170 = vadd.f32 %v2817, %v3169
      %v3171 = vpop.f32.mrf.mxu0
      %v3172 = vadd.f32 %v2819, %v3171
      %3173 = vmatprep.mubr.bf16.mxu0 %v1431
      %3174 = vmatmul.mubr.bf16.gmra.mxu0 %v1430
      %v3175 = vpop.f32.mrf.mxu0
      %v3176 = vadd.f32 %v2823, %v3175
      %v3177 = vpop.f32.mrf.mxu0
      %v3178 = vadd.f32 %v2825, %v3177
      %v3179 = vpop.f32.mrf.mxu0
      %v3180 = vadd.f32 %v2827, %v3179
      %v3181 = vpop.f32.mrf.mxu0
      %v3182 = vadd.f32 %v2829, %v3181
      %3183 = vmatprep.mubr.bf16.mxu0 %v1438
      %3184 = vmatmul.mubr.bf16.gmra.mxu0 %v1437
      %v3185 = vpop.f32.mrf.mxu0
      %v3186 = vadd.f32 %v2833, %v3185
      %v3187 = vpop.f32.mrf.mxu0
      %v3188 = vadd.f32 %v2835, %v3187
      %v3189 = vpop.f32.mrf.mxu0
      %v3190 = vadd.f32 %v2837, %v3189
      %v3191 = vpop.f32.mrf.mxu0
      %v3192 = vadd.f32 %v2839, %v3191
      %3193 = vmatprep.mubr.bf16.mxu0 %v1445
      %3194 = vmatmul.mubr.bf16.gmra.mxu0 %v1444
      %v3195 = vpop.f32.mrf.mxu0
      %v3196 = vadd.f32 %v2843, %v3195
      %v3197 = vpop.f32.mrf.mxu0
      %v3198 = vadd.f32 %v2845, %v3197
      %v3199 = vpop.f32.mrf.mxu0
      %v3200 = vadd.f32 %v2847, %v3199
      %v3201 = vpop.f32.mrf.mxu0
      %v3202 = vadd.f32 %v2849, %v3201
      %3203 = vmatprep.mubr.bf16.mxu0 %v1452
      %3204 = vmatmul.mubr.bf16.gmra.mxu0 %v1451
      %v3205 = vpop.f32.mrf.mxu0
      %v3206 = vadd.f32 %v2853, %v3205
      %v3207 = vpop.f32.mrf.mxu0
      %v3208 = vadd.f32 %v2855, %v3207
      %v3209 = vpop.f32.mrf.mxu0
      %v3210 = vadd.f32 %v2857, %v3209
      %v3211 = vpop.f32.mrf.mxu0
      %v3212 = vadd.f32 %v2859, %v3211
      %3213 = vmatprep.mubr.bf16.mxu0 %v1459
      %3214 = vmatmul.mubr.bf16.gmra.mxu0 %v1458
      %v3215 = vpop.f32.mrf.mxu0
      %v3216 = vadd.f32 %v2863, %v3215
      %v3217 = vpop.f32.mrf.mxu0
      %v3218 = vadd.f32 %v2865, %v3217
      %v3219 = vpop.f32.mrf.mxu0
      %v3220 = vadd.f32 %v2867, %v3219
      %v3221 = vpop.f32.mrf.mxu0
      %v3222 = vadd.f32 %v2869, %v3221
      %3223 = vmatprep.mubr.bf16.mxu0 %v1466
      %3224 = vmatmul.mubr.bf16.gmra.mxu0 %v1465
      %v3225 = vpop.f32.mrf.mxu0
      %v3226 = vadd.f32 %v2873, %v3225
      %v3227 = vpop.f32.mrf.mxu0
      %v3228 = vadd.f32 %v2875, %v3227
      %v3229 = vpop.f32.mrf.mxu0
      %v3230 = vadd.f32 %v2877, %v3229
      %v3231 = vpop.f32.mrf.mxu0
      %v3232 = vadd.f32 %v2879, %v3231
      %3233 = vmatprep.mubr.bf16.mxu0 %v1473
      %3234 = vmatmul.mubr.bf16.gmra.mxu0 %v1472
      %v3235 = vpop.f32.mrf.mxu0
      %v3236 = vadd.f32 %v2883, %v3235
      %v3237 = vpop.f32.mrf.mxu0
      %v3238 = vadd.f32 %v2885, %v3237
      %v3239 = vpop.f32.mrf.mxu0
      %v3240 = vadd.f32 %v2887, %v3239
      %v3241 = vpop.f32.mrf.mxu0
      %v3242 = vadd.f32 %v2889, %v3241
      %3243 = vmatprep.mubr.bf16.mxu0 %v1480
      %3244 = vmatmul.mubr.bf16.gmra.mxu0 %v1479
      %v3245 = vpop.f32.mrf.mxu0
      %v3246 = vadd.f32 %v2893, %v3245
      %v3247 = vpop.f32.mrf.mxu0
      %v3248 = vadd.f32 %v2895, %v3247
      %v3249 = vpop.f32.mrf.mxu0
      %v3250 = vadd.f32 %v2897, %v3249
      %v3251 = vpop.f32.mrf.mxu0
      %v3252 = vadd.f32 %v2899, %v3251
      %3253 = vmatprep.mubr.bf16.mxu0 %v1487
      %3254 = vmatmul.mubr.bf16.gmra.mxu0 %v1486
      %v3255 = vpop.f32.mrf.mxu0
      %v3256 = vadd.f32 %v2903, %v3255
      %v3257 = vpop.f32.mrf.mxu0
      %v3258 = vadd.f32 %v2905, %v3257
      %v3259 = vpop.f32.mrf.mxu0
      %v3260 = vadd.f32 %v2907, %v3259
      %v3261 = vpop.f32.mrf.mxu0
      %v3262 = vadd.f32 %v2909, %v3261
      %3263 = vmatprep.mubr.bf16.mxu0 %v1494
      %3264 = vmatmul.mubr.bf16.gmra.mxu0 %v1493
      %v3265 = vpop.f32.mrf.mxu0
      %v3266 = vadd.f32 %v2913, %v3265
      %v3267 = vpop.f32.mrf.mxu0
      %v3268 = vadd.f32 %v2915, %v3267
      %v3269 = vpop.f32.mrf.mxu0
      %v3270 = vadd.f32 %v2917, %v3269
      %v3271 = vpop.f32.mrf.mxu0
      %v3272 = vadd.f32 %v2919, %v3271
      %3273 = vmatprep.mubr.bf16.mxu0 %v1501
      %3274 = vmatmul.mubr.bf16.gmra.mxu0 %v1500
      %v3275 = vpop.f32.mrf.mxu0
      %v3276 = vadd.f32 %v2923, %v3275
      %v3277 = vpop.f32.mrf.mxu0
      %v3278 = vadd.f32 %v2925, %v3277
      %v3279 = vpop.f32.mrf.mxu0
      %v3280 = vadd.f32 %v2927, %v3279
      %v3281 = vpop.f32.mrf.mxu0
      %v3282 = vadd.f32 %v2929, %v3281
      %3283 = vmatprep.mubr.bf16.mxu0 %v1508
      %3284 = vmatmul.mubr.bf16.gmra.mxu0 %v1507
      %v3285 = vpop.f32.mrf.mxu0
      %v3286 = vadd.f32 %v2933, %v3285
      %v3287 = vpop.f32.mrf.mxu0
      %v3288 = vadd.f32 %v2935, %v3287
      %v3289 = vpop.f32.mrf.mxu0
      %v3290 = vadd.f32 %v2937, %v3289
      %v3291 = vpop.f32.mrf.mxu0
      %v3292 = vadd.f32 %v2939, %v3291
      %3293 = vmatprep.mubr.bf16.mxu0 %v1515
      %3294 = vmatmul.mubr.bf16.gmra.mxu0 %v1514
      %v3295 = vpop.f32.mrf.mxu0
      %v3296 = vadd.f32 %v2943, %v3295
      %v3297 = vpop.f32.mrf.mxu0
      %v3298 = vadd.f32 %v2945, %v3297
      %v3299 = vpop.f32.mrf.mxu0
      %v3300 = vadd.f32 %v2947, %v3299
      %v3301 = vpop.f32.mrf.mxu0
      %v3302 = vadd.f32 %v2949, %v3301
      %3303 = vmatprep.mubr.bf16.mxu0 %v1522
      %3304 = vmatmul.mubr.bf16.gmra.mxu0 %v1521
      %v3305 = vpop.f32.mrf.mxu0
      %v3306 = vadd.f32 %v2953, %v3305
      %v3307 = vpop.f32.mrf.mxu0
      %v3308 = vadd.f32 %v2955, %v3307
      %v3309 = vpop.f32.mrf.mxu0
      %v3310 = vadd.f32 %v2957, %v3309
      %v3311 = vpop.f32.mrf.mxu0
      %v3312 = vadd.f32 %v2959, %v3311
      %3313 = vmatprep.mubr.bf16.mxu0 %v1529
      %3314 = vmatmul.mubr.bf16.gmra.mxu0 %v1528
      %v3315 = vpop.f32.mrf.mxu0
      %v3316 = vadd.f32 %v2963, %v3315
      %v3317 = vpop.f32.mrf.mxu0
      %v3318 = vadd.f32 %v2965, %v3317
      %v3319 = vpop.f32.mrf.mxu0
      %v3320 = vadd.f32 %v2967, %v3319
      %v3321 = vpop.f32.mrf.mxu0
      %v3322 = vadd.f32 %v2969, %v3321
      %3323 = vmatprep.mubr.bf16.mxu0 %v1536
      %3324 = vmatmul.mubr.bf16.gmra.mxu0 %v1535
      %v3325 = vpop.f32.mrf.mxu0
      %v3326 = vadd.f32 %v2973, %v3325
      %v3327 = vpop.f32.mrf.mxu0
      %v3328 = vadd.f32 %v2975, %v3327
      %v3329 = vpop.f32.mrf.mxu0
      %v3330 = vadd.f32 %v2977, %v3329
      %v3331 = vpop.f32.mrf.mxu0
      %v3332 = vadd.f32 %v2979, %v3331
      %3333 = vmatprep.mubr.bf16.mxu0 %v1543
      %3334 = vmatmul.mubr.bf16.gmra.mxu0 %v1542
      %v3335 = vpop.f32.mrf.mxu0
      %v3336 = vadd.f32 %v2983, %v3335
      %v3337 = vpop.f32.mrf.mxu0
      %v3338 = vadd.f32 %v2985, %v3337
      %v3339 = vpop.f32.mrf.mxu0
      %v3340 = vadd.f32 %v2987, %v3339
      %v3341 = vpop.f32.mrf.mxu0
      %v3342 = vadd.f32 %v2989, %v3341
      %3343 = vmatprep.mubr.bf16.mxu0 %v1550
      %3344 = vmatmul.mubr.bf16.gmra.mxu0 %v1549
      %v3345 = vpop.f32.mrf.mxu0
      %v3346 = vadd.f32 %v2993, %v3345
      %v3347 = vpop.f32.mrf.mxu0
      %v3348 = vadd.f32 %v2995, %v3347
      %v3349 = vpop.f32.mrf.mxu0
      %v3350 = vadd.f32 %v2997, %v3349
      %v3351 = vpop.f32.mrf.mxu0
      %v3352 = vadd.f32 %v2999, %v3351
      %3353 = vmatprep.mubr.bf16.mxu0 %v1557
      %3354 = vmatmul.mubr.bf16.gmra.mxu0 %v1556
      %v3355 = vpop.f32.mrf.mxu0
      %v3356 = vadd.f32 %v3003, %v3355
      %v3357 = vpop.f32.mrf.mxu0
      %v3358 = vadd.f32 %v3005, %v3357
      %v3359 = vpop.f32.mrf.mxu0
      %v3360 = vadd.f32 %v3007, %v3359
      %v3361 = vpop.f32.mrf.mxu0
      %v3362 = vadd.f32 %v3009, %v3361
      %3363 = vmatprep.mubr.bf16.mxu0 %v1564
      %3364 = vmatmul.mubr.bf16.gmra.mxu0 %v1563
      %v3365 = vpop.f32.mrf.mxu0
      %v3366 = vadd.f32 %v3013, %v3365
      %v3367 = vpop.f32.mrf.mxu0
      %v3368 = vadd.f32 %v3015, %v3367
      %v3369 = vpop.f32.mrf.mxu0
      %v3370 = vadd.f32 %v3017, %v3369
      %v3371 = vpop.f32.mrf.mxu0
      %v3372 = vadd.f32 %v3019, %v3371
      %3373 = vmatprep.mubr.bf16.mxu0 %v1571
      %3374 = vmatmul.mubr.bf16.gmra.mxu0 %v1570
      %v3375 = vpop.f32.mrf.mxu0
      %v3376 = vadd.f32 %v3023, %v3375
      %v3377 = vpop.f32.mrf.mxu0
      %v3378 = vadd.f32 %v3025, %v3377
      %v3379 = vpop.f32.mrf.mxu0
      %v3380 = vadd.f32 %v3027, %v3379
      %v3381 = vpop.f32.mrf.mxu0
      %v3382 = vadd.f32 %v3029, %v3381
      %3383 = vmatprep.mubr.bf16.mxu0 %v1578
      %3384 = vmatmul.mubr.bf16.gmra.mxu0 %v1577
      %v3385 = vpop.f32.mrf.mxu0
      %v3386 = vadd.f32 %v3033, %v3385
      %v3387 = vpop.f32.mrf.mxu0
      %v3388 = vadd.f32 %v3035, %v3387
      %v3389 = vpop.f32.mrf.mxu0
      %v3390 = vadd.f32 %v3037, %v3389
      %v3391 = vpop.f32.mrf.mxu0
      %v3392 = vadd.f32 %v3039, %v3391
      %3393 = vmatprep.mubr.bf16.mxu0 %v1585
      %3394 = vmatmul.mubr.bf16.gmra.mxu0 %v1584
      %v3395 = vpop.f32.mrf.mxu0
      %v3396 = vadd.f32 %v3043, %v3395
      %v3397 = vpop.f32.mrf.mxu0
      %v3398 = vadd.f32 %v3045, %v3397
      %v3399 = vpop.f32.mrf.mxu0
      %v3400 = vadd.f32 %v3047, %v3399
      %v3401 = vpop.f32.mrf.mxu0
      %v3402 = vadd.f32 %v3049, %v3401
      %3403 = vmatprep.mubr.bf16.mxu0 %v1592
      %3404 = vmatmul.mubr.bf16.gmra.mxu0 %v1591
      %v3405 = vpop.f32.mrf.mxu0
      %v3406 = vadd.f32 %v3053, %v3405
      %v3407 = vpop.f32.mrf.mxu0
      %v3408 = vadd.f32 %v3055, %v3407
      %v3409 = vpop.f32.mrf.mxu0
      %v3410 = vadd.f32 %v3057, %v3409
      %v3411 = vpop.f32.mrf.mxu0
      %v3412 = vadd.f32 %v3059, %v3411
      %3413 = vmatprep.mubr.bf16.mxu0 %v1599
      %3414 = vmatmul.mubr.bf16.gmra.mxu0 %v1598
      %v3415 = vpop.f32.mrf.mxu0
      %v3416 = vadd.f32 %v3063, %v3415
      %v3417 = vpop.f32.mrf.mxu0
      %v3418 = vadd.f32 %v3065, %v3417
      %v3419 = vpop.f32.mrf.mxu0
      %v3420 = vadd.f32 %v3067, %v3419
      %v3421 = vpop.f32.mrf.mxu0
      %v3422 = vadd.f32 %v3069, %v3421
      %3423 = vmatprep.mubr.bf16.mxu0 %v1606
      %3424 = vmatmul.mubr.bf16.gmra.mxu0 %v1605
      %v3425 = vpop.f32.mrf.mxu0
      %v3426 = vadd.f32 %v3073, %v3425
      %v3427 = vpop.f32.mrf.mxu0
      %v3428 = vadd.f32 %v3075, %v3427
      %v3429 = vpop.f32.mrf.mxu0
      %v3430 = vadd.f32 %v3077, %v3429
      %v3431 = vpop.f32.mrf.mxu0
      %v3432 = vadd.f32 %v3079, %v3431
      %3433 = vmatprep.mubr.bf16.mxu0 %v1613
      %3434 = vmatmul.mubr.bf16.gmra.mxu0 %v1612
      %v3435 = vpop.f32.mrf.mxu0
      %v3436 = vadd.f32 %v3083, %v3435
      %v3437 = vpop.f32.mrf.mxu0
      %v3438 = vadd.f32 %v3085, %v3437
      %v3439 = vpop.f32.mrf.mxu0
      %v3440 = vadd.f32 %v3087, %v3439
      %v3441 = vpop.f32.mrf.mxu0
      %v3442 = vadd.f32 %v3089, %v3441
      %3443 = vmatprep.mubr.bf16.mxu0 %v1620
      %3444 = vmatmul.mubr.bf16.gmra.mxu0 %v1619
      %v3445 = vpop.f32.mrf.mxu0
      %v3446 = vadd.f32 %v3093, %v3445
      %v3447 = vpop.f32.mrf.mxu0
      %v3448 = vadd.f32 %v3095, %v3447
      %v3449 = vpop.f32.mrf.mxu0
      %v3450 = vadd.f32 %v3097, %v3449
      %v3451 = vpop.f32.mrf.mxu0
      %v3452 = vadd.f32 %v3099, %v3451
      %3453 = vmatprep.mubr.bf16.mxu0 %v1627
      %3454 = vmatmul.mubr.bf16.gmra.mxu0 %v1626
      %v3455 = vpop.f32.mrf.mxu0
      %v3456 = vadd.f32 %v3103, %v3455
      %v3457 = vpop.f32.mrf.mxu0
      %v3458 = vadd.f32 %v3105, %v3457
      %v3459 = vpop.f32.mrf.mxu0
      %v3460 = vadd.f32 %v3107, %v3459
      %v3461 = vpop.f32.mrf.mxu0
      %v3462 = vadd.f32 %v3109, %v3461
      %3463 = vmatprep.mubr.bf16.mxu0 %v1634
      %3464 = vmatmul.mubr.bf16.gmra.mxu0 %v1633
      %v3465 = vpop.f32.mrf.mxu0
      %v3466 = vadd.f32 %v3113, %v3465
      %v3467 = vpop.f32.mrf.mxu0
      %v3468 = vadd.f32 %v3115, %v3467
      %v3469 = vpop.f32.mrf.mxu0
      %v3470 = vadd.f32 %v3117, %v3469
      %v3471 = vpop.f32.mrf.mxu0
      %v3472 = vadd.f32 %v3119, %v3471
      %3473 = vdwg.mxu0
      %3474 = vmatprep.subr.bf16.mxu0 0
      %3475 = vmatpush1.bf16.msra.mxu0 0
      %3476 = vmatprep.subr.bf16.mxu0 0
      %3477 = vmatpush1.bf16.msra.mxu0 0
      %3478 = vmatprep.subr.bf16.mxu0 0
      %3479 = vmatpush1.bf16.msra.mxu0 0
      %3480 = vmatprep.subr.bf16.mxu0 0
      %3481 = vmatpush1.bf16.msra.mxu0 0
      %3482 = vmatprep.subr.bf16.mxu0 0
      %3483 = vmatpush1.bf16.msra.mxu0 0
      %3484 = vmatprep.subr.bf16.mxu0 0
      %3485 = vmatpush1.bf16.msra.mxu0 0
      %3486 = vmatprep.subr.bf16.mxu0 0
      %3487 = vmatpush1.bf16.msra.mxu0 0
      %3488 = vmatprep.subr.bf16.mxu0 %v2219
      %3489 = vmatpush1.bf16.msra.mxu0 %v2218
      %3490 = vmatprep.subr.bf16.mxu0 0
      %3491 = vmatpush2.bf16.msra.mxu0 0
      %3492 = vmatprep.subr.bf16.mxu0 0
      %3493 = vmatpush2.bf16.msra.mxu0 0
      %3494 = vmatprep.subr.bf16.mxu0 0
      %3495 = vmatpush2.bf16.msra.mxu0 0
      %3496 = vmatprep.subr.bf16.mxu0 0
      %3497 = vmatpush2.bf16.msra.mxu0 0
      %3498 = vmatprep.subr.bf16.mxu0 0
      %3499 = vmatpush2.bf16.msra.mxu0 0
      %3500 = vmatprep.subr.bf16.mxu0 0
      %3501 = vmatpush2.bf16.msra.mxu0 0
      %3502 = vmatprep.subr.bf16.mxu0 0
      %3503 = vmatpush2.bf16.msra.mxu0 0
      %3504 = vmatprep.subr.bf16.mxu0 0
      %3505 = vmatpush2.bf16.msra.mxu0 0
      %3506 = vmatprep.mubr.bf16.mxu0 0
      %3507 = vmatmul.mubr.bf16.gmra.mxu0 %v2320
      %v3508 = vpop.f32.mrf.mxu0
      %v3509 = vadd.f32 %v3156, %v3508
      %v3510 = vpop.f32.mrf.mxu0
      %v3511 = vadd.f32 %v3158, %v3510
      %v3512 = vpop.f32.mrf.mxu0
      %v3513 = vadd.f32 %v3160, %v3512
      %v3514 = vpop.f32.mrf.mxu0
      %v3515 = vadd.f32 %v3162, %v3514
      %3516 = vmatprep.mubr.bf16.mxu0 0
      %3517 = vmatmul.mubr.bf16.gmra.mxu0 %v2323
      %v3518 = vpop.f32.mrf.mxu0
      %v3519 = vadd.f32 %v3166, %v3518
      %v3520 = vpop.f32.mrf.mxu0
      %v3521 = vadd.f32 %v3168, %v3520
      %v3522 = vpop.f32.mrf.mxu0
      %v3523 = vadd.f32 %v3170, %v3522
      %v3524 = vpop.f32.mrf.mxu0
      %v3525 = vadd.f32 %v3172, %v3524
      %3526 = vmatprep.mubr.bf16.mxu0 0
      %3527 = vmatmul.mubr.bf16.gmra.mxu0 %v2326
      %v3528 = vpop.f32.mrf.mxu0
      %v3529 = vadd.f32 %v3176, %v3528
      %v3530 = vpop.f32.mrf.mxu0
      %v3531 = vadd.f32 %v3178, %v3530
      %v3532 = vpop.f32.mrf.mxu0
      %v3533 = vadd.f32 %v3180, %v3532
      %v3534 = vpop.f32.mrf.mxu0
      %v3535 = vadd.f32 %v3182, %v3534
      %3536 = vmatprep.mubr.bf16.mxu0 0
      %3537 = vmatmul.mubr.bf16.gmra.mxu0 %v2329
      %v3538 = vpop.f32.mrf.mxu0
      %v3539 = vadd.f32 %v3186, %v3538
      %v3540 = vpop.f32.mrf.mxu0
      %v3541 = vadd.f32 %v3188, %v3540
      %v3542 = vpop.f32.mrf.mxu0
      %v3543 = vadd.f32 %v3190, %v3542
      %v3544 = vpop.f32.mrf.mxu0
      %v3545 = vadd.f32 %v3192, %v3544
      %3546 = vmatprep.mubr.bf16.mxu0 0
      %3547 = vmatmul.mubr.bf16.gmra.mxu0 %v2332
      %v3548 = vpop.f32.mrf.mxu0
      %v3549 = vadd.f32 %v3196, %v3548
      %v3550 = vpop.f32.mrf.mxu0
      %v3551 = vadd.f32 %v3198, %v3550
      %v3552 = vpop.f32.mrf.mxu0
      %v3553 = vadd.f32 %v3200, %v3552
      %v3554 = vpop.f32.mrf.mxu0
      %v3555 = vadd.f32 %v3202, %v3554
      %3556 = vmatprep.mubr.bf16.mxu0 0
      %3557 = vmatmul.mubr.bf16.gmra.mxu0 %v2335
      %v3558 = vpop.f32.mrf.mxu0
      %v3559 = vadd.f32 %v3206, %v3558
      %v3560 = vpop.f32.mrf.mxu0
      %v3561 = vadd.f32 %v3208, %v3560
      %v3562 = vpop.f32.mrf.mxu0
      %v3563 = vadd.f32 %v3210, %v3562
      %v3564 = vpop.f32.mrf.mxu0
      %v3565 = vadd.f32 %v3212, %v3564
      %3566 = vmatprep.mubr.bf16.mxu0 0
      %3567 = vmatmul.mubr.bf16.gmra.mxu0 %v2338
      %v3568 = vpop.f32.mrf.mxu0
      %v3569 = vadd.f32 %v3216, %v3568
      %v3570 = vpop.f32.mrf.mxu0
      %v3571 = vadd.f32 %v3218, %v3570
      %v3572 = vpop.f32.mrf.mxu0
      %v3573 = vadd.f32 %v3220, %v3572
      %v3574 = vpop.f32.mrf.mxu0
      %v3575 = vadd.f32 %v3222, %v3574
      %3576 = vmatprep.mubr.bf16.mxu0 0
      %3577 = vmatmul.mubr.bf16.gmra.mxu0 %v2341
      %v3578 = vpop.f32.mrf.mxu0
      %v3579 = vadd.f32 %v3226, %v3578
      %v3580 = vpop.f32.mrf.mxu0
      %v3581 = vadd.f32 %v3228, %v3580
      %v3582 = vpop.f32.mrf.mxu0
      %v3583 = vadd.f32 %v3230, %v3582
      %v3584 = vpop.f32.mrf.mxu0
      %v3585 = vadd.f32 %v3232, %v3584
      %3586 = vmatprep.mubr.bf16.mxu0 0
      %3587 = vmatmul.mubr.bf16.gmra.mxu0 %v2344
      %v3588 = vpop.f32.mrf.mxu0
      %v3589 = vadd.f32 %v3236, %v3588
      %v3590 = vpop.f32.mrf.mxu0
      %v3591 = vadd.f32 %v3238, %v3590
      %v3592 = vpop.f32.mrf.mxu0
      %v3593 = vadd.f32 %v3240, %v3592
      %v3594 = vpop.f32.mrf.mxu0
      %v3595 = vadd.f32 %v3242, %v3594
      %3596 = vmatprep.mubr.bf16.mxu0 0
      %3597 = vmatmul.mubr.bf16.gmra.mxu0 %v2347
      %v3598 = vpop.f32.mrf.mxu0
      %v3599 = vadd.f32 %v3246, %v3598
      %v3600 = vpop.f32.mrf.mxu0
      %v3601 = vadd.f32 %v3248, %v3600
      %v3602 = vpop.f32.mrf.mxu0
      %v3603 = vadd.f32 %v3250, %v3602
      %v3604 = vpop.f32.mrf.mxu0
      %v3605 = vadd.f32 %v3252, %v3604
      %3606 = vmatprep.mubr.bf16.mxu0 0
      %3607 = vmatmul.mubr.bf16.gmra.mxu0 %v2350
      %v3608 = vpop.f32.mrf.mxu0
      %v3609 = vadd.f32 %v3256, %v3608
      %v3610 = vpop.f32.mrf.mxu0
      %v3611 = vadd.f32 %v3258, %v3610
      %v3612 = vpop.f32.mrf.mxu0
      %v3613 = vadd.f32 %v3260, %v3612
      %v3614 = vpop.f32.mrf.mxu0
      %v3615 = vadd.f32 %v3262, %v3614
      %3616 = vmatprep.mubr.bf16.mxu0 0
      %3617 = vmatmul.mubr.bf16.gmra.mxu0 %v2353
      %v3618 = vpop.f32.mrf.mxu0
      %v3619 = vadd.f32 %v3266, %v3618
      %v3620 = vpop.f32.mrf.mxu0
      %v3621 = vadd.f32 %v3268, %v3620
      %v3622 = vpop.f32.mrf.mxu0
      %v3623 = vadd.f32 %v3270, %v3622
      %v3624 = vpop.f32.mrf.mxu0
      %v3625 = vadd.f32 %v3272, %v3624
      %3626 = vmatprep.mubr.bf16.mxu0 0
      %3627 = vmatmul.mubr.bf16.gmra.mxu0 %v2356
      %v3628 = vpop.f32.mrf.mxu0
      %v3629 = vadd.f32 %v3276, %v3628
      %v3630 = vpop.f32.mrf.mxu0
      %v3631 = vadd.f32 %v3278, %v3630
      %v3632 = vpop.f32.mrf.mxu0
      %v3633 = vadd.f32 %v3280, %v3632
      %v3634 = vpop.f32.mrf.mxu0
      %v3635 = vadd.f32 %v3282, %v3634
      %3636 = vmatprep.mubr.bf16.mxu0 0
      %3637 = vmatmul.mubr.bf16.gmra.mxu0 %v2359
      %v3638 = vpop.f32.mrf.mxu0
      %v3639 = vadd.f32 %v3286, %v3638
      %v3640 = vpop.f32.mrf.mxu0
      %v3641 = vadd.f32 %v3288, %v3640
      %v3642 = vpop.f32.mrf.mxu0
      %v3643 = vadd.f32 %v3290, %v3642
      %v3644 = vpop.f32.mrf.mxu0
      %v3645 = vadd.f32 %v3292, %v3644
      %3646 = vmatprep.mubr.bf16.mxu0 0
      %3647 = vmatmul.mubr.bf16.gmra.mxu0 %v2362
      %v3648 = vpop.f32.mrf.mxu0
      %v3649 = vadd.f32 %v3296, %v3648
      %v3650 = vpop.f32.mrf.mxu0
      %v3651 = vadd.f32 %v3298, %v3650
      %v3652 = vpop.f32.mrf.mxu0
      %v3653 = vadd.f32 %v3300, %v3652
      %v3654 = vpop.f32.mrf.mxu0
      %v3655 = vadd.f32 %v3302, %v3654
      %3656 = vmatprep.mubr.bf16.mxu0 0
      %3657 = vmatmul.mubr.bf16.gmra.mxu0 %v2365
      %v3658 = vpop.f32.mrf.mxu0
      %v3659 = vadd.f32 %v3306, %v3658
      %v3660 = vpop.f32.mrf.mxu0
      %v3661 = vadd.f32 %v3308, %v3660
      %v3662 = vpop.f32.mrf.mxu0
      %v3663 = vadd.f32 %v3310, %v3662
      %v3664 = vpop.f32.mrf.mxu0
      %v3665 = vadd.f32 %v3312, %v3664
      %3666 = vmatprep.mubr.bf16.mxu0 0
      %3667 = vmatmul.mubr.bf16.gmra.mxu0 %v2368
      %v3668 = vpop.f32.mrf.mxu0
      %v3669 = vadd.f32 %v3316, %v3668
      %v3670 = vpop.f32.mrf.mxu0
      %v3671 = vadd.f32 %v3318, %v3670
      %v3672 = vpop.f32.mrf.mxu0
      %v3673 = vadd.f32 %v3320, %v3672
      %v3674 = vpop.f32.mrf.mxu0
      %v3675 = vadd.f32 %v3322, %v3674
      %3676 = vmatprep.mubr.bf16.mxu0 0
      %3677 = vmatmul.mubr.bf16.gmra.mxu0 %v2371
      %v3678 = vpop.f32.mrf.mxu0
      %v3679 = vadd.f32 %v3326, %v3678
      %v3680 = vpop.f32.mrf.mxu0
      %v3681 = vadd.f32 %v3328, %v3680
      %v3682 = vpop.f32.mrf.mxu0
      %v3683 = vadd.f32 %v3330, %v3682
      %v3684 = vpop.f32.mrf.mxu0
      %v3685 = vadd.f32 %v3332, %v3684
      %3686 = vmatprep.mubr.bf16.mxu0 0
      %3687 = vmatmul.mubr.bf16.gmra.mxu0 %v2374
      %v3688 = vpop.f32.mrf.mxu0
      %v3689 = vadd.f32 %v3336, %v3688
      %v3690 = vpop.f32.mrf.mxu0
      %v3691 = vadd.f32 %v3338, %v3690
      %v3692 = vpop.f32.mrf.mxu0
      %v3693 = vadd.f32 %v3340, %v3692
      %v3694 = vpop.f32.mrf.mxu0
      %v3695 = vadd.f32 %v3342, %v3694
      %3696 = vmatprep.mubr.bf16.mxu0 0
      %3697 = vmatmul.mubr.bf16.gmra.mxu0 %v2377
      %v3698 = vpop.f32.mrf.mxu0
      %v3699 = vadd.f32 %v3346, %v3698
      %v3700 = vpop.f32.mrf.mxu0
      %v3701 = vadd.f32 %v3348, %v3700
      %v3702 = vpop.f32.mrf.mxu0
      %v3703 = vadd.f32 %v3350, %v3702
      %v3704 = vpop.f32.mrf.mxu0
      %v3705 = vadd.f32 %v3352, %v3704
      %3706 = vmatprep.mubr.bf16.mxu0 0
      %3707 = vmatmul.mubr.bf16.gmra.mxu0 %v2380
      %v3708 = vpop.f32.mrf.mxu0
      %v3709 = vadd.f32 %v3356, %v3708
      %v3710 = vpop.f32.mrf.mxu0
      %v3711 = vadd.f32 %v3358, %v3710
      %v3712 = vpop.f32.mrf.mxu0
      %v3713 = vadd.f32 %v3360, %v3712
      %v3714 = vpop.f32.mrf.mxu0
      %v3715 = vadd.f32 %v3362, %v3714
      %3716 = vmatprep.mubr.bf16.mxu0 0
      %3717 = vmatmul.mubr.bf16.gmra.mxu0 %v2383
      %v3718 = vpop.f32.mrf.mxu0
      %v3719 = vadd.f32 %v3366, %v3718
      %v3720 = vpop.f32.mrf.mxu0
      %v3721 = vadd.f32 %v3368, %v3720
      %v3722 = vpop.f32.mrf.mxu0
      %v3723 = vadd.f32 %v3370, %v3722
      %v3724 = vpop.f32.mrf.mxu0
      %v3725 = vadd.f32 %v3372, %v3724
      %3726 = vmatprep.mubr.bf16.mxu0 0
      %3727 = vmatmul.mubr.bf16.gmra.mxu0 %v2386
      %v3728 = vpop.f32.mrf.mxu0
      %v3729 = vadd.f32 %v3376, %v3728
      %v3730 = vpop.f32.mrf.mxu0
      %v3731 = vadd.f32 %v3378, %v3730
      %v3732 = vpop.f32.mrf.mxu0
      %v3733 = vadd.f32 %v3380, %v3732
      %v3734 = vpop.f32.mrf.mxu0
      %v3735 = vadd.f32 %v3382, %v3734
      %3736 = vmatprep.mubr.bf16.mxu0 0
      %3737 = vmatmul.mubr.bf16.gmra.mxu0 %v2389
      %v3738 = vpop.f32.mrf.mxu0
      %v3739 = vadd.f32 %v3386, %v3738
      %v3740 = vpop.f32.mrf.mxu0
      %v3741 = vadd.f32 %v3388, %v3740
      %v3742 = vpop.f32.mrf.mxu0
      %v3743 = vadd.f32 %v3390, %v3742
      %v3744 = vpop.f32.mrf.mxu0
      %v3745 = vadd.f32 %v3392, %v3744
      %3746 = vmatprep.mubr.bf16.mxu0 0
      %3747 = vmatmul.mubr.bf16.gmra.mxu0 %v2392
      %v3748 = vpop.f32.mrf.mxu0
      %v3749 = vadd.f32 %v3396, %v3748
      %v3750 = vpop.f32.mrf.mxu0
      %v3751 = vadd.f32 %v3398, %v3750
      %v3752 = vpop.f32.mrf.mxu0
      %v3753 = vadd.f32 %v3400, %v3752
      %v3754 = vpop.f32.mrf.mxu0
      %v3755 = vadd.f32 %v3402, %v3754
      %3756 = vmatprep.mubr.bf16.mxu0 0
      %3757 = vmatmul.mubr.bf16.gmra.mxu0 %v2395
      %v3758 = vpop.f32.mrf.mxu0
      %v3759 = vadd.f32 %v3406, %v3758
      %v3760 = vpop.f32.mrf.mxu0
      %v3761 = vadd.f32 %v3408, %v3760
      %v3762 = vpop.f32.mrf.mxu0
      %v3763 = vadd.f32 %v3410, %v3762
      %v3764 = vpop.f32.mrf.mxu0
      %v3765 = vadd.f32 %v3412, %v3764
      %3766 = vmatprep.mubr.bf16.mxu0 0
      %3767 = vmatmul.mubr.bf16.gmra.mxu0 %v2398
      %v3768 = vpop.f32.mrf.mxu0
      %v3769 = vadd.f32 %v3416, %v3768
      %v3770 = vpop.f32.mrf.mxu0
      %v3771 = vadd.f32 %v3418, %v3770
      %v3772 = vpop.f32.mrf.mxu0
      %v3773 = vadd.f32 %v3420, %v3772
      %v3774 = vpop.f32.mrf.mxu0
      %v3775 = vadd.f32 %v3422, %v3774
      %3776 = vmatprep.mubr.bf16.mxu0 0
      %3777 = vmatmul.mubr.bf16.gmra.mxu0 %v2401
      %v3778 = vpop.f32.mrf.mxu0
      %v3779 = vadd.f32 %v3426, %v3778
      %v3780 = vpop.f32.mrf.mxu0
      %v3781 = vadd.f32 %v3428, %v3780
      %v3782 = vpop.f32.mrf.mxu0
      %v3783 = vadd.f32 %v3430, %v3782
      %v3784 = vpop.f32.mrf.mxu0
      %v3785 = vadd.f32 %v3432, %v3784
      %3786 = vmatprep.mubr.bf16.mxu0 0
      %3787 = vmatmul.mubr.bf16.gmra.mxu0 %v2404
      %v3788 = vpop.f32.mrf.mxu0
      %v3789 = vadd.f32 %v3436, %v3788
      %v3790 = vpop.f32.mrf.mxu0
      %v3791 = vadd.f32 %v3438, %v3790
      %v3792 = vpop.f32.mrf.mxu0
      %v3793 = vadd.f32 %v3440, %v3792
      %v3794 = vpop.f32.mrf.mxu0
      %v3795 = vadd.f32 %v3442, %v3794
      %3796 = vmatprep.mubr.bf16.mxu0 0
      %3797 = vmatmul.mubr.bf16.gmra.mxu0 %v2407
      %v3798 = vpop.f32.mrf.mxu0
      %v3799 = vadd.f32 %v3446, %v3798
      %v3800 = vpop.f32.mrf.mxu0
      %v3801 = vadd.f32 %v3448, %v3800
      %v3802 = vpop.f32.mrf.mxu0
      %v3803 = vadd.f32 %v3450, %v3802
      %v3804 = vpop.f32.mrf.mxu0
      %v3805 = vadd.f32 %v3452, %v3804
      %3806 = vmatprep.mubr.bf16.mxu0 0
      %3807 = vmatmul.mubr.bf16.gmra.mxu0 %v2410
      %v3808 = vpop.f32.mrf.mxu0
      %v3809 = vadd.f32 %v3456, %v3808
      %v3810 = vpop.f32.mrf.mxu0
      %v3811 = vadd.f32 %v3458, %v3810
      %v3812 = vpop.f32.mrf.mxu0
      %v3813 = vadd.f32 %v3460, %v3812
      %v3814 = vpop.f32.mrf.mxu0
      %v3815 = vadd.f32 %v3462, %v3814
      %3816 = vmatprep.mubr.bf16.mxu0 0
      %3817 = vmatmul.mubr.bf16.gmra.mxu0 %v2413
      %v3818 = vpop.f32.mrf.mxu0
      %v3819 = vadd.f32 %v3466, %v3818
      %v3820 = vpop.f32.mrf.mxu0
      %v3821 = vadd.f32 %v3468, %v3820
      %v3822 = vpop.f32.mrf.mxu0
      %v3823 = vadd.f32 %v3470, %v3822
      %v3824 = vpop.f32.mrf.mxu0
      %v3825 = vadd.f32 %v3472, %v3824
      %3826 = vdwg.mxu0
      %v3827 = vmax.f32 %v3509, 0.0
      %v3828 = vmax.f32 %v3511, 0.0
      %v3829 = vmax.f32 %v3513, 0.0
      %v3830 = vmax.f32 %v3515, 0.0
      %v3831 = vmax.f32 %v3519, 0.0
      %v3832 = vmax.f32 %v3521, 0.0
      %v3833 = vmax.f32 %v3523, 0.0
      %v3834 = vmax.f32 %v3525, 0.0
      %v3835 = vmax.f32 %v3529, 0.0
      %v3836 = vmax.f32 %v3531, 0.0
      %v3837 = vmax.f32 %v3533, 0.0
      %v3838 = vmax.f32 %v3535, 0.0
      %v3839 = vmax.f32 %v3539, 0.0
      %v3840 = vmax.f32 %v3541, 0.0
      %v3841 = vmax.f32 %v3543, 0.0
      %v3842 = vmax.f32 %v3545, 0.0
      %v3843 = vmax.f32 %v3549, 0.0
      %v3844 = vmax.f32 %v3551, 0.0
      %v3845 = vmax.f32 %v3553, 0.0
      %v3846 = vmax.f32 %v3555, 0.0
      %v3847 = vmax.f32 %v3559, 0.0
      %v3848 = vmax.f32 %v3561, 0.0
      %v3849 = vmax.f32 %v3563, 0.0
      %v3850 = vmax.f32 %v3565, 0.0
      %v3851 = vmax.f32 %v3569, 0.0
      %v3852 = vmax.f32 %v3571, 0.0
      %v3853 = vmax.f32 %v3573, 0.0
      %v3854 = vmax.f32 %v3575, 0.0
      %v3855 = vmax.f32 %v3579, 0.0
      %v3856 = vmax.f32 %v3581, 0.0
      %v3857 = vmax.f32 %v3583, 0.0
      %v3858 = vmax.f32 %v3585, 0.0
      %v3859 = vmax.f32 %v3589, 0.0
      %v3860 = vmax.f32 %v3591, 0.0
      %v3861 = vmax.f32 %v3593, 0.0
      %v3862 = vmax.f32 %v3595, 0.0
      %v3863 = vmax.f32 %v3599, 0.0
      %v3864 = vmax.f32 %v3601, 0.0
      %v3865 = vmax.f32 %v3603, 0.0
      %v3866 = vmax.f32 %v3605, 0.0
      %v3867 = vmax.f32 %v3609, 0.0
      %v3868 = vmax.f32 %v3611, 0.0
      %v3869 = vmax.f32 %v3613, 0.0
      %v3870 = vmax.f32 %v3615, 0.0
      %v3871 = vmax.f32 %v3619, 0.0
      %v3872 = vmax.f32 %v3621, 0.0
      %v3873 = vmax.f32 %v3623, 0.0
      %v3874 = vmax.f32 %v3625, 0.0
      %v3875 = vmax.f32 %v3629, 0.0
      %v3876 = vmax.f32 %v3631, 0.0
      %v3877 = vmax.f32 %v3633, 0.0
      %v3878 = vmax.f32 %v3635, 0.0
      %v3879 = vmax.f32 %v3639, 0.0
      %v3880 = vmax.f32 %v3641, 0.0
      %v3881 = vmax.f32 %v3643, 0.0
      %v3882 = vmax.f32 %v3645, 0.0
      %v3883 = vmax.f32 %v3649, 0.0
      %v3884 = vmax.f32 %v3651, 0.0
      %v3885 = vmax.f32 %v3653, 0.0
      %v3886 = vmax.f32 %v3655, 0.0
      %v3887 = vmax.f32 %v3659, 0.0
      %v3888 = vmax.f32 %v3661, 0.0
      %v3889 = vmax.f32 %v3663, 0.0
      %v3890 = vmax.f32 %v3665, 0.0
      %v3891 = vmax.f32 %v3669, 0.0
      %v3892 = vmax.f32 %v3671, 0.0
      %v3893 = vmax.f32 %v3673, 0.0
      %v3894 = vmax.f32 %v3675, 0.0
      %v3895 = vmax.f32 %v3679, 0.0
      %v3896 = vmax.f32 %v3681, 0.0
      %v3897 = vmax.f32 %v3683, 0.0
      %v3898 = vmax.f32 %v3685, 0.0
      %v3899 = vmax.f32 %v3689, 0.0
      %v3900 = vmax.f32 %v3691, 0.0
      %v3901 = vmax.f32 %v3693, 0.0
      %v3902 = vmax.f32 %v3695, 0.0
      %v3903 = vmax.f32 %v3699, 0.0
      %v3904 = vmax.f32 %v3701, 0.0
      %v3905 = vmax.f32 %v3703, 0.0
      %v3906 = vmax.f32 %v3705, 0.0
      %v3907 = vmax.f32 %v3709, 0.0
      %v3908 = vmax.f32 %v3711, 0.0
      %v3909 = vmax.f32 %v3713, 0.0
      %v3910 = vmax.f32 %v3715, 0.0
      %v3911 = vmax.f32 %v3719, 0.0
      %v3912 = vmax.f32 %v3721, 0.0
      %v3913 = vmax.f32 %v3723, 0.0
      %v3914 = vmax.f32 %v3725, 0.0
      %v3915 = vmax.f32 %v3729, 0.0
      %v3916 = vmax.f32 %v3731, 0.0
      %v3917 = vmax.f32 %v3733, 0.0
      %v3918 = vmax.f32 %v3735, 0.0
      %v3919 = vmax.f32 %v3739, 0.0
      %v3920 = vmax.f32 %v3741, 0.0
      %v3921 = vmax.f32 %v3743, 0.0
      %v3922 = vmax.f32 %v3745, 0.0
      %v3923 = vmax.f32 %v3749, 0.0
      %v3924 = vmax.f32 %v3751, 0.0
      %v3925 = vmax.f32 %v3753, 0.0
      %v3926 = vmax.f32 %v3755, 0.0
      %v3927 = vmax.f32 %v3759, 0.0
      %v3928 = vmax.f32 %v3761, 0.0
      %v3929 = vmax.f32 %v3763, 0.0
      %v3930 = vmax.f32 %v3765, 0.0
      %v3931 = vmax.f32 %v3769, 0.0
      %v3932 = vmax.f32 %v3771, 0.0
      %v3933 = vmax.f32 %v3773, 0.0
      %v3934 = vmax.f32 %v3775, 0.0
      %v3935 = vmax.f32 %v3779, 0.0
      %v3936 = vmax.f32 %v3781, 0.0
      %v3937 = vmax.f32 %v3783, 0.0
      %v3938 = vmax.f32 %v3785, 0.0
      %v3939 = vmax.f32 %v3789, 0.0
      %v3940 = vmax.f32 %v3791, 0.0
      %v3941 = vmax.f32 %v3793, 0.0
      %v3942 = vmax.f32 %v3795, 0.0
      %v3943 = vmax.f32 %v3799, 0.0
      %v3944 = vmax.f32 %v3801, 0.0
      %v3945 = vmax.f32 %v3803, 0.0
      %v3946 = vmax.f32 %v3805, 0.0
      %v3947 = vmax.f32 %v3809, 0.0
      %v3948 = vmax.f32 %v3811, 0.0
      %v3949 = vmax.f32 %v3813, 0.0
      %v3950 = vmax.f32 %v3815, 0.0
      %v3951 = vmax.f32 %v3819, 0.0
      %v3952 = vmax.f32 %v3821, 0.0
      %v3953 = vmax.f32 %v3823, 0.0
      %v3954 = vmax.f32 %v3825, 0.0
      %v3955 = vpack.c.bf16 %v3829, %v3827
      %v3956 = vpack.c.bf16 %v3830, %v3828
      %v3957 = vpack.c.bf16 %v3833, %v3831
      %v3958 = vpack.c.bf16 %v3834, %v3832
      %v3959 = vpack.c.bf16 %v3837, %v3835
      %v3960 = vpack.c.bf16 %v3838, %v3836
      %v3961 = vpack.c.bf16 %v3841, %v3839
      %v3962 = vpack.c.bf16 %v3842, %v3840
      %v3963 = vpack.c.bf16 %v3845, %v3843
      %v3964 = vpack.c.bf16 %v3846, %v3844
      %v3965 = vpack.c.bf16 %v3849, %v3847
      %v3966 = vpack.c.bf16 %v3850, %v3848
      %v3967 = vpack.c.bf16 %v3853, %v3851
      %v3968 = vpack.c.bf16 %v3854, %v3852
      %v3969 = vpack.c.bf16 %v3857, %v3855
      %v3970 = vpack.c.bf16 %v3858, %v3856
      %v3971 = vpack.c.bf16 %v3861, %v3859
      %v3972 = vpack.c.bf16 %v3862, %v3860
      %v3973 = vpack.c.bf16 %v3865, %v3863
      %v3974 = vpack.c.bf16 %v3866, %v3864
      %v3975 = vpack.c.bf16 %v3869, %v3867
      %v3976 = vpack.c.bf16 %v3870, %v3868
      %v3977 = vpack.c.bf16 %v3873, %v3871
      %v3978 = vpack.c.bf16 %v3874, %v3872
      %v3979 = vpack.c.bf16 %v3877, %v3875
      %v3980 = vpack.c.bf16 %v3878, %v3876
      %v3981 = vpack.c.bf16 %v3881, %v3879
      %v3982 = vpack.c.bf16 %v3882, %v3880
      %v3983 = vpack.c.bf16 %v3885, %v3883
      %v3984 = vpack.c.bf16 %v3886, %v3884
      %v3985 = vpack.c.bf16 %v3889, %v3887
      %v3986 = vpack.c.bf16 %v3890, %v3888
      %v3987 = vpack.c.bf16 %v3893, %v3891
      %v3988 = vpack.c.bf16 %v3894, %v3892
      %v3989 = vpack.c.bf16 %v3897, %v3895
      %v3990 = vpack.c.bf16 %v3898, %v3896
      %v3991 = vpack.c.bf16 %v3901, %v3899
      %v3992 = vpack.c.bf16 %v3902, %v3900
      %v3993 = vpack.c.bf16 %v3905, %v3903
      %v3994 = vpack.c.bf16 %v3906, %v3904
      %v3995 = vpack.c.bf16 %v3909, %v3907
      %v3996 = vpack.c.bf16 %v3910, %v3908
      %v3997 = vpack.c.bf16 %v3913, %v3911
      %v3998 = vpack.c.bf16 %v3914, %v3912
      %v3999 = vpack.c.bf16 %v3917, %v3915
      %v4000 = vpack.c.bf16 %v3918, %v3916
      %v4001 = vpack.c.bf16 %v3921, %v3919
      %v4002 = vpack.c.bf16 %v3922, %v3920
      %v4003 = vpack.c.bf16 %v3925, %v3923
      %v4004 = vpack.c.bf16 %v3926, %v3924
      %v4005 = vpack.c.bf16 %v3929, %v3927
      %v4006 = vpack.c.bf16 %v3930, %v3928
      %v4007 = vpack.c.bf16 %v3933, %v3931
      %v4008 = vpack.c.bf16 %v3934, %v3932
      %v4009 = vpack.c.bf16 %v3937, %v3935
      %v4010 = vpack.c.bf16 %v3938, %v3936
      %v4011 = vpack.c.bf16 %v3941, %v3939
      %v4012 = vpack.c.bf16 %v3942, %v3940
      %v4013 = vpack.c.bf16 %v3945, %v3943
      %v4014 = vpack.c.bf16 %v3946, %v3944
      %v4015 = vpack.c.bf16 %v3949, %v3947
      %v4016 = vpack.c.bf16 %v3950, %v3948
      %v4017 = vpack.c.bf16 %v3953, %v3951
      %v4018 = vpack.c.bf16 %v3954, %v3952
      %v4019 = vld [vmem:[%s2] sm:$0xf]
      %v4020 = vld [vmem:[%s2 + $0x4] sm:$0xf]
      %v4021 = vld [vmem:[%s2 + $0x8] sm:$0xf]
      %v4022 = vld [vmem:[%s2 + $0xc] sm:$0xf]
      %v4023 = vld [vmem:[%s2 + $0x10] sm:$0xf]
      %v4024 = vld [vmem:[%s2 + $0x14] sm:$0xf]
      %v4025 = vld [vmem:[%s2 + $0x18] sm:$0xf]
      %v4026 = vld [vmem:[%s2 + $0x1c] sm:$0xf]
      %v4027 = vld [vmem:[%s2 + $0x20] sm:$0xf]
      %v4028 = vld [vmem:[%s2 + $0x24] sm:$0xf]
      %v4029 = vld [vmem:[%s2 + $0x28] sm:$0xf]
      %v4030 = vld [vmem:[%s2 + $0x2c] sm:$0xf]
      %v4031 = vld [vmem:[%s2 + $0x30] sm:$0xf]
      %v4032 = vld [vmem:[%s2 + $0x34] sm:$0xf]
      %v4033 = vld [vmem:[%s2 + $0x38] sm:$0xf]
      %v4034 = vld [vmem:[%s2 + $0x3c] sm:$0xf]
      %v4035 = vld [vmem:[%s2 + $0x40] sm:$0xf]
      %v4036 = vld [vmem:[%s2 + $0x44] sm:$0xf]
      %v4037 = vld [vmem:[%s2 + $0x48] sm:$0xf]
      %v4038 = vld [vmem:[%s2 + $0x4c] sm:$0xf]
      %v4039 = vld [vmem:[%s2 + $0x50] sm:$0xf]
      %v4040 = vld [vmem:[%s2 + $0x54] sm:$0xf]
      %v4041 = vld [vmem:[%s2 + $0x58] sm:$0xf]
      %v4042 = vld [vmem:[%s2 + $0x5c] sm:$0xf]
      %v4043 = vld [vmem:[%s2 + $0x60] sm:$0xf]
      %v4044 = vld [vmem:[%s2 + $0x64] sm:$0xf]
      %v4045 = vld [vmem:[%s2 + $0x68] sm:$0xf]
      %v4046 = vld [vmem:[%s2 + $0x6c] sm:$0xf]
      %v4047 = vld [vmem:[%s2 + $0x70] sm:$0xf]
      %v4048 = vld [vmem:[%s2 + $0x74] sm:$0xf]
      %v4049 = vld [vmem:[%s2 + $0x78] sm:$0xf]
      %v4050 = vld [vmem:[%s2 + $0x7c] sm:$0xf]
      %v4051 = vld [vmem:[%s8 + $0x2] sm:$0x1]
      %v4053 = vlaneseq
      %v4054 = vshrl.u32 %v4053, 7
      %v4055 = vsub.s32 0, %v4054
      %v4056 = vrot.slane %v4051, %v4055
      %v4090 = vunpack.c.l.b16 %v4019
      %v4091 = vunpack.c.l.b16 %v4020
      %v4092 = vunpack.c.l.b16 %v4021
      %v4093 = vunpack.c.l.b16 %v4022
      %v4094 = vunpack.c.l.b16 %v4023
      %v4095 = vunpack.c.l.b16 %v4024
      %v4096 = vunpack.c.l.b16 %v4025
      %v4097 = vunpack.c.l.b16 %v4026
      %v4098 = vunpack.c.l.b16 %v4027
      %v4099 = vunpack.c.l.b16 %v4028
      %v4100 = vunpack.c.l.b16 %v4029
      %v4101 = vunpack.c.l.b16 %v4030
      %v4102 = vunpack.c.l.b16 %v4031
      %v4103 = vunpack.c.l.b16 %v4032
      %v4104 = vunpack.c.l.b16 %v4033
      %v4105 = vunpack.c.l.b16 %v4034
      %v4106 = vunpack.c.l.b16 %v4035
      %v4107 = vunpack.c.l.b16 %v4036
      %v4108 = vunpack.c.l.b16 %v4037
      %v4109 = vunpack.c.l.b16 %v4038
      %v4110 = vunpack.c.l.b16 %v4039
      %v4111 = vunpack.c.l.b16 %v4040
      %v4112 = vunpack.c.l.b16 %v4041
      %v4113 = vunpack.c.l.b16 %v4042
      %v4114 = vunpack.c.l.b16 %v4043
      %v4115 = vunpack.c.l.b16 %v4044
      %v4116 = vunpack.c.l.b16 %v4045
      %v4117 = vunpack.c.l.b16 %v4046
      %v4118 = vunpack.c.l.b16 %v4047
      %v4119 = vunpack.c.l.b16 %v4048
      %v4120 = vunpack.c.l.b16 %v4049
      %v4121 = vunpack.c.l.b16 %v4050
      %v4122 = vpack.c.b16 %v4091, %v4090
      %v4123 = vpack.c.b16 %v4093, %v4092
      %v4124 = vpack.c.b16 %v4095, %v4094
      %v4125 = vpack.c.b16 %v4097, %v4096
      %v4126 = vpack.c.b16 %v4099, %v4098
      %v4127 = vpack.c.b16 %v4101, %v4100
      %v4128 = vpack.c.b16 %v4103, %v4102
      %v4129 = vpack.c.b16 %v4105, %v4104
      %v4130 = vpack.c.b16 %v4107, %v4106
      %v4131 = vpack.c.b16 %v4109, %v4108
      %v4132 = vpack.c.b16 %v4111, %v4110
      %v4133 = vpack.c.b16 %v4113, %v4112
      %v4134 = vpack.c.b16 %v4115, %v4114
      %v4135 = vpack.c.b16 %v4117, %v4116
      %v4136 = vpack.c.b16 %v4119, %v4118
      %v4137 = vpack.c.b16 %v4121, %v4120
      %4154 = vmatprep.subr.bf16.mxu0 0
      %4155 = vmatpush1.bf16.msra.mxu0 %v4129
      %4156 = vmatprep.subr.bf16.mxu0 0
      %4157 = vmatpush1.bf16.msra.mxu0 %v4128
      %4158 = vmatprep.subr.bf16.mxu0 0
      %4159 = vmatpush1.bf16.msra.mxu0 %v4127
      %4160 = vmatprep.subr.bf16.mxu0 0
      %4161 = vmatpush1.bf16.msra.mxu0 %v4126
      %4162 = vmatprep.subr.bf16.mxu0 0
      %4163 = vmatpush1.bf16.msra.mxu0 %v4125
      %4164 = vmatprep.subr.bf16.mxu0 0
      %4165 = vmatpush1.bf16.msra.mxu0 %v4124
      %4166 = vmatprep.subr.bf16.mxu0 0
      %4167 = vmatpush1.bf16.msra.mxu0 %v4123
      %4168 = vmatprep.subr.bf16.mxu0 0
      %4169 = vmatpush1.bf16.msra.mxu0 %v4122
      %4170 = vmatprep.subr.bf16.mxu0 0
      %4171 = vmatpush2.bf16.msra.mxu0 %v4137
      %4172 = vmatprep.subr.bf16.mxu0 0
      %4173 = vmatpush2.bf16.msra.mxu0 %v4136
      %4174 = vmatprep.subr.bf16.mxu0 0
      %4175 = vmatpush2.bf16.msra.mxu0 %v4135
      %4176 = vmatprep.subr.bf16.mxu0 0
      %4177 = vmatpush2.bf16.msra.mxu0 %v4134
      %4178 = vmatprep.subr.bf16.mxu0 0
      %4179 = vmatpush2.bf16.msra.mxu0 %v4133
      %4180 = vmatprep.subr.bf16.mxu0 0
      %4181 = vmatpush2.bf16.msra.mxu0 %v4132
      %4182 = vmatprep.subr.bf16.mxu0 0
      %4183 = vmatpush2.bf16.msra.mxu0 %v4131
      %4184 = vmatprep.subr.bf16.mxu0 0
      %4185 = vmatpush2.bf16.msra.mxu0 %v4130
      %4186 = vmatprep.mubr.bf16.mxu0 %v3956
      %4187 = vmatmul.mubr.bf16.gmra.mxu0 %v3955
      %v4188 = vpop.f32.mrf.mxu0
      %v4189 = vadd.f32 %v4056, %v4188
      %v4190 = vpop.f32.mrf.mxu0
      %v4191 = vpop.f32.mrf.mxu0
      %v4192 = vadd.f32 %v4056, %v4191
      %v4193 = vpop.f32.mrf.mxu0
      %4194 = vmatprep.mubr.bf16.mxu0 %v3958
      %4195 = vmatmul.mubr.bf16.gmra.mxu0 %v3957
      %v4196 = vpop.f32.mrf.mxu0
      %v4197 = vadd.f32 %v4056, %v4196
      %v4198 = vpop.f32.mrf.mxu0
      %v4199 = vpop.f32.mrf.mxu0
      %v4200 = vadd.f32 %v4056, %v4199
      %v4201 = vpop.f32.mrf.mxu0
      %4202 = vmatprep.mubr.bf16.mxu0 %v3960
      %4203 = vmatmul.mubr.bf16.gmra.mxu0 %v3959
      %v4204 = vpop.f32.mrf.mxu0
      %v4205 = vadd.f32 %v4056, %v4204
      %v4206 = vpop.f32.mrf.mxu0
      %v4207 = vpop.f32.mrf.mxu0
      %v4208 = vadd.f32 %v4056, %v4207
      %v4209 = vpop.f32.mrf.mxu0
      %4210 = vmatprep.mubr.bf16.mxu0 %v3962
      %4211 = vmatmul.mubr.bf16.gmra.mxu0 %v3961
      %v4212 = vpop.f32.mrf.mxu0
      %v4213 = vadd.f32 %v4056, %v4212
      %v4214 = vpop.f32.mrf.mxu0
      %v4215 = vpop.f32.mrf.mxu0
      %v4216 = vadd.f32 %v4056, %v4215
      %v4217 = vpop.f32.mrf.mxu0
      %4218 = vmatprep.mubr.bf16.mxu0 %v3964
      %4219 = vmatmul.mubr.bf16.gmra.mxu0 %v3963
      %v4220 = vpop.f32.mrf.mxu0
      %v4221 = vadd.f32 %v4056, %v4220
      %v4222 = vpop.f32.mrf.mxu0
      %v4223 = vpop.f32.mrf.mxu0
      %v4224 = vadd.f32 %v4056, %v4223
      %v4225 = vpop.f32.mrf.mxu0
      %4226 = vmatprep.mubr.bf16.mxu0 %v3966
      %4227 = vmatmul.mubr.bf16.gmra.mxu0 %v3965
      %v4228 = vpop.f32.mrf.mxu0
      %v4229 = vadd.f32 %v4056, %v4228
      %v4230 = vpop.f32.mrf.mxu0
      %v4231 = vpop.f32.mrf.mxu0
      %v4232 = vadd.f32 %v4056, %v4231
      %v4233 = vpop.f32.mrf.mxu0
      %4234 = vmatprep.mubr.bf16.mxu0 %v3968
      %4235 = vmatmul.mubr.bf16.gmra.mxu0 %v3967
      %v4236 = vpop.f32.mrf.mxu0
      %v4237 = vadd.f32 %v4056, %v4236
      %v4238 = vpop.f32.mrf.mxu0
      %v4239 = vpop.f32.mrf.mxu0
      %v4240 = vadd.f32 %v4056, %v4239
      %v4241 = vpop.f32.mrf.mxu0
      %4242 = vmatprep.mubr.bf16.mxu0 %v3970
      %4243 = vmatmul.mubr.bf16.gmra.mxu0 %v3969
      %v4244 = vpop.f32.mrf.mxu0
      %v4245 = vadd.f32 %v4056, %v4244
      %v4246 = vpop.f32.mrf.mxu0
      %v4247 = vpop.f32.mrf.mxu0
      %v4248 = vadd.f32 %v4056, %v4247
      %v4249 = vpop.f32.mrf.mxu0
      %4250 = vmatprep.mubr.bf16.mxu0 %v3972
      %4251 = vmatmul.mubr.bf16.gmra.mxu0 %v3971
      %v4252 = vpop.f32.mrf.mxu0
      %v4253 = vadd.f32 %v4056, %v4252
      %v4254 = vpop.f32.mrf.mxu0
      %v4255 = vpop.f32.mrf.mxu0
      %v4256 = vadd.f32 %v4056, %v4255
      %v4257 = vpop.f32.mrf.mxu0
      %4258 = vmatprep.mubr.bf16.mxu0 %v3974
      %4259 = vmatmul.mubr.bf16.gmra.mxu0 %v3973
      %v4260 = vpop.f32.mrf.mxu0
      %v4261 = vadd.f32 %v4056, %v4260
      %v4262 = vpop.f32.mrf.mxu0
      %v4263 = vpop.f32.mrf.mxu0
      %v4264 = vadd.f32 %v4056, %v4263
      %v4265 = vpop.f32.mrf.mxu0
      %4266 = vmatprep.mubr.bf16.mxu0 %v3976
      %4267 = vmatmul.mubr.bf16.gmra.mxu0 %v3975
      %v4268 = vpop.f32.mrf.mxu0
      %v4269 = vadd.f32 %v4056, %v4268
      %v4270 = vpop.f32.mrf.mxu0
      %v4271 = vpop.f32.mrf.mxu0
      %v4272 = vadd.f32 %v4056, %v4271
      %v4273 = vpop.f32.mrf.mxu0
      %4274 = vmatprep.mubr.bf16.mxu0 %v3978
      %4275 = vmatmul.mubr.bf16.gmra.mxu0 %v3977
      %v4276 = vpop.f32.mrf.mxu0
      %v4277 = vadd.f32 %v4056, %v4276
      %v4278 = vpop.f32.mrf.mxu0
      %v4279 = vpop.f32.mrf.mxu0
      %v4280 = vadd.f32 %v4056, %v4279
      %v4281 = vpop.f32.mrf.mxu0
      %4282 = vmatprep.mubr.bf16.mxu0 %v3980
      %4283 = vmatmul.mubr.bf16.gmra.mxu0 %v3979
      %v4284 = vpop.f32.mrf.mxu0
      %v4285 = vadd.f32 %v4056, %v4284
      %v4286 = vpop.f32.mrf.mxu0
      %v4287 = vpop.f32.mrf.mxu0
      %v4288 = vadd.f32 %v4056, %v4287
      %v4289 = vpop.f32.mrf.mxu0
      %4290 = vmatprep.mubr.bf16.mxu0 %v3982
      %4291 = vmatmul.mubr.bf16.gmra.mxu0 %v3981
      %v4292 = vpop.f32.mrf.mxu0
      %v4293 = vadd.f32 %v4056, %v4292
      %v4294 = vpop.f32.mrf.mxu0
      %v4295 = vpop.f32.mrf.mxu0
      %v4296 = vadd.f32 %v4056, %v4295
      %v4297 = vpop.f32.mrf.mxu0
      %4298 = vmatprep.mubr.bf16.mxu0 %v3984
      %4299 = vmatmul.mubr.bf16.gmra.mxu0 %v3983
      %v4300 = vpop.f32.mrf.mxu0
      %v4301 = vadd.f32 %v4056, %v4300
      %v4302 = vpop.f32.mrf.mxu0
      %v4303 = vpop.f32.mrf.mxu0
      %v4304 = vadd.f32 %v4056, %v4303
      %v4305 = vpop.f32.mrf.mxu0
      %4306 = vmatprep.mubr.bf16.mxu0 %v3986
      %4307 = vmatmul.mubr.bf16.gmra.mxu0 %v3985
      %v4308 = vpop.f32.mrf.mxu0
      %v4309 = vadd.f32 %v4056, %v4308
      %v4310 = vpop.f32.mrf.mxu0
      %v4311 = vpop.f32.mrf.mxu0
      %v4312 = vadd.f32 %v4056, %v4311
      %v4313 = vpop.f32.mrf.mxu0
      %4314 = vmatprep.mubr.bf16.mxu0 %v3988
      %4315 = vmatmul.mubr.bf16.gmra.mxu0 %v3987
      %v4316 = vpop.f32.mrf.mxu0
      %v4317 = vadd.f32 %v4056, %v4316
      %v4318 = vpop.f32.mrf.mxu0
      %v4319 = vpop.f32.mrf.mxu0
      %v4320 = vadd.f32 %v4056, %v4319
      %v4321 = vpop.f32.mrf.mxu0
      %4322 = vmatprep.mubr.bf16.mxu0 %v3990
      %4323 = vmatmul.mubr.bf16.gmra.mxu0 %v3989
      %v4324 = vpop.f32.mrf.mxu0
      %v4325 = vadd.f32 %v4056, %v4324
      %v4326 = vpop.f32.mrf.mxu0
      %v4327 = vpop.f32.mrf.mxu0
      %v4328 = vadd.f32 %v4056, %v4327
      %v4329 = vpop.f32.mrf.mxu0
      %4330 = vmatprep.mubr.bf16.mxu0 %v3992
      %4331 = vmatmul.mubr.bf16.gmra.mxu0 %v3991
      %v4332 = vpop.f32.mrf.mxu0
      %v4333 = vadd.f32 %v4056, %v4332
      %v4334 = vpop.f32.mrf.mxu0
      %v4335 = vpop.f32.mrf.mxu0
      %v4336 = vadd.f32 %v4056, %v4335
      %v4337 = vpop.f32.mrf.mxu0
      %4338 = vmatprep.mubr.bf16.mxu0 %v3994
      %4339 = vmatmul.mubr.bf16.gmra.mxu0 %v3993
      %v4340 = vpop.f32.mrf.mxu0
      %v4341 = vadd.f32 %v4056, %v4340
      %v4342 = vpop.f32.mrf.mxu0
      %v4343 = vpop.f32.mrf.mxu0
      %v4344 = vadd.f32 %v4056, %v4343
      %v4345 = vpop.f32.mrf.mxu0
      %4346 = vmatprep.mubr.bf16.mxu0 %v3996
      %4347 = vmatmul.mubr.bf16.gmra.mxu0 %v3995
      %v4348 = vpop.f32.mrf.mxu0
      %v4349 = vadd.f32 %v4056, %v4348
      %v4350 = vpop.f32.mrf.mxu0
      %v4351 = vpop.f32.mrf.mxu0
      %v4352 = vadd.f32 %v4056, %v4351
      %v4353 = vpop.f32.mrf.mxu0
      %4354 = vmatprep.mubr.bf16.mxu0 %v3998
      %4355 = vmatmul.mubr.bf16.gmra.mxu0 %v3997
      %v4356 = vpop.f32.mrf.mxu0
      %v4357 = vadd.f32 %v4056, %v4356
      %v4358 = vpop.f32.mrf.mxu0
      %v4359 = vpop.f32.mrf.mxu0
      %v4360 = vadd.f32 %v4056, %v4359
      %v4361 = vpop.f32.mrf.mxu0
      %4362 = vmatprep.mubr.bf16.mxu0 %v4000
      %4363 = vmatmul.mubr.bf16.gmra.mxu0 %v3999
      %v4364 = vpop.f32.mrf.mxu0
      %v4365 = vadd.f32 %v4056, %v4364
      %v4366 = vpop.f32.mrf.mxu0
      %v4367 = vpop.f32.mrf.mxu0
      %v4368 = vadd.f32 %v4056, %v4367
      %v4369 = vpop.f32.mrf.mxu0
      %4370 = vmatprep.mubr.bf16.mxu0 %v4002
      %4371 = vmatmul.mubr.bf16.gmra.mxu0 %v4001
      %v4372 = vpop.f32.mrf.mxu0
      %v4373 = vadd.f32 %v4056, %v4372
      %v4374 = vpop.f32.mrf.mxu0
      %v4375 = vpop.f32.mrf.mxu0
      %v4376 = vadd.f32 %v4056, %v4375
      %v4377 = vpop.f32.mrf.mxu0
      %4378 = vmatprep.mubr.bf16.mxu0 %v4004
      %4379 = vmatmul.mubr.bf16.gmra.mxu0 %v4003
      %v4380 = vpop.f32.mrf.mxu0
      %v4381 = vadd.f32 %v4056, %v4380
      %v4382 = vpop.f32.mrf.mxu0
      %v4383 = vpop.f32.mrf.mxu0
      %v4384 = vadd.f32 %v4056, %v4383
      %v4385 = vpop.f32.mrf.mxu0
      %4386 = vmatprep.mubr.bf16.mxu0 %v4006
      %4387 = vmatmul.mubr.bf16.gmra.mxu0 %v4005
      %v4388 = vpop.f32.mrf.mxu0
      %v4389 = vadd.f32 %v4056, %v4388
      %v4390 = vpop.f32.mrf.mxu0
      %v4391 = vpop.f32.mrf.mxu0
      %v4392 = vadd.f32 %v4056, %v4391
      %v4393 = vpop.f32.mrf.mxu0
      %4394 = vmatprep.mubr.bf16.mxu0 %v4008
      %4395 = vmatmul.mubr.bf16.gmra.mxu0 %v4007
      %v4396 = vpop.f32.mrf.mxu0
      %v4397 = vadd.f32 %v4056, %v4396
      %v4398 = vpop.f32.mrf.mxu0
      %v4399 = vpop.f32.mrf.mxu0
      %v4400 = vadd.f32 %v4056, %v4399
      %v4401 = vpop.f32.mrf.mxu0
      %4402 = vmatprep.mubr.bf16.mxu0 %v4010
      %4403 = vmatmul.mubr.bf16.gmra.mxu0 %v4009
      %v4404 = vpop.f32.mrf.mxu0
      %v4405 = vadd.f32 %v4056, %v4404
      %v4406 = vpop.f32.mrf.mxu0
      %v4407 = vpop.f32.mrf.mxu0
      %v4408 = vadd.f32 %v4056, %v4407
      %v4409 = vpop.f32.mrf.mxu0
      %4410 = vmatprep.mubr.bf16.mxu0 %v4012
      %4411 = vmatmul.mubr.bf16.gmra.mxu0 %v4011
      %v4412 = vpop.f32.mrf.mxu0
      %v4413 = vadd.f32 %v4056, %v4412
      %v4414 = vpop.f32.mrf.mxu0
      %v4415 = vpop.f32.mrf.mxu0
      %v4416 = vadd.f32 %v4056, %v4415
      %v4417 = vpop.f32.mrf.mxu0
      %4418 = vmatprep.mubr.bf16.mxu0 %v4014
      %4419 = vmatmul.mubr.bf16.gmra.mxu0 %v4013
      %v4420 = vpop.f32.mrf.mxu0
      %v4421 = vadd.f32 %v4056, %v4420
      %v4422 = vpop.f32.mrf.mxu0
      %v4423 = vpop.f32.mrf.mxu0
      %v4424 = vadd.f32 %v4056, %v4423
      %v4425 = vpop.f32.mrf.mxu0
      %4426 = vmatprep.mubr.bf16.mxu0 %v4016
      %4427 = vmatmul.mubr.bf16.gmra.mxu0 %v4015
      %v4428 = vpop.f32.mrf.mxu0
      %v4429 = vadd.f32 %v4056, %v4428
      %v4430 = vpop.f32.mrf.mxu0
      %v4431 = vpop.f32.mrf.mxu0
      %v4432 = vadd.f32 %v4056, %v4431
      %v4433 = vpop.f32.mrf.mxu0
      %4434 = vmatprep.mubr.bf16.mxu0 %v4018
      %4435 = vmatmul.mubr.bf16.gmra.mxu0 %v4017
      %v4436 = vpop.f32.mrf.mxu0
      %v4437 = vadd.f32 %v4056, %v4436
      %v4438 = vpop.f32.mrf.mxu0
      %v4439 = vpop.f32.mrf.mxu0
      %v4440 = vadd.f32 %v4056, %v4439
      %v4441 = vpop.f32.mrf.mxu0
      %4442 = vdwg.mxu0
      %v4443 = vmax.f32 %v4189, 0.0
      %v4444 = vmax.f32 %v4192, 0.0
      %v4445 = vmax.f32 %v4197, 0.0
      %v4446 = vmax.f32 %v4200, 0.0
      %v4447 = vmax.f32 %v4205, 0.0
      %v4448 = vmax.f32 %v4208, 0.0
      %v4449 = vmax.f32 %v4213, 0.0
      %v4450 = vmax.f32 %v4216, 0.0
      %v4451 = vmax.f32 %v4221, 0.0
      %v4452 = vmax.f32 %v4224, 0.0
      %v4453 = vmax.f32 %v4229, 0.0
      %v4454 = vmax.f32 %v4232, 0.0
      %v4455 = vmax.f32 %v4237, 0.0
      %v4456 = vmax.f32 %v4240, 0.0
      %v4457 = vmax.f32 %v4245, 0.0
      %v4458 = vmax.f32 %v4248, 0.0
      %v4459 = vmax.f32 %v4253, 0.0
      %v4460 = vmax.f32 %v4256, 0.0
      %v4461 = vmax.f32 %v4261, 0.0
      %v4462 = vmax.f32 %v4264, 0.0
      %v4463 = vmax.f32 %v4269, 0.0
      %v4464 = vmax.f32 %v4272, 0.0
      %v4465 = vmax.f32 %v4277, 0.0
      %v4466 = vmax.f32 %v4280, 0.0
      %v4467 = vmax.f32 %v4285, 0.0
      %v4468 = vmax.f32 %v4288, 0.0
      %v4469 = vmax.f32 %v4293, 0.0
      %v4470 = vmax.f32 %v4296, 0.0
      %v4471 = vmax.f32 %v4301, 0.0
      %v4472 = vmax.f32 %v4304, 0.0
      %v4473 = vmax.f32 %v4309, 0.0
      %v4474 = vmax.f32 %v4312, 0.0
      %v4475 = vmax.f32 %v4317, 0.0
      %v4476 = vmax.f32 %v4320, 0.0
      %v4477 = vmax.f32 %v4325, 0.0
      %v4478 = vmax.f32 %v4328, 0.0
      %v4479 = vmax.f32 %v4333, 0.0
      %v4480 = vmax.f32 %v4336, 0.0
      %v4481 = vmax.f32 %v4341, 0.0
      %v4482 = vmax.f32 %v4344, 0.0
      %v4483 = vmax.f32 %v4349, 0.0
      %v4484 = vmax.f32 %v4352, 0.0
      %v4485 = vmax.f32 %v4357, 0.0
      %v4486 = vmax.f32 %v4360, 0.0
      %v4487 = vmax.f32 %v4365, 0.0
      %v4488 = vmax.f32 %v4368, 0.0
      %v4489 = vmax.f32 %v4373, 0.0
      %v4490 = vmax.f32 %v4376, 0.0
      %v4491 = vmax.f32 %v4381, 0.0
      %v4492 = vmax.f32 %v4384, 0.0
      %v4493 = vmax.f32 %v4389, 0.0
      %v4494 = vmax.f32 %v4392, 0.0
      %v4495 = vmax.f32 %v4397, 0.0
      %v4496 = vmax.f32 %v4400, 0.0
      %v4497 = vmax.f32 %v4405, 0.0
      %v4498 = vmax.f32 %v4408, 0.0
      %v4499 = vmax.f32 %v4413, 0.0
      %v4500 = vmax.f32 %v4416, 0.0
      %v4501 = vmax.f32 %v4421, 0.0
      %v4502 = vmax.f32 %v4424, 0.0
      %v4503 = vmax.f32 %v4429, 0.0
      %v4504 = vmax.f32 %v4432, 0.0
      %v4505 = vmax.f32 %v4437, 0.0
      %v4506 = vmax.f32 %v4440, 0.0
      %v4507 = vpack.c.bf16 %v4444, %v4443
      %v4508 = vpack.c.bf16 %v4446, %v4445
      %v4509 = vpack.c.bf16 %v4448, %v4447
      %v4510 = vpack.c.bf16 %v4450, %v4449
      %v4511 = vpack.c.bf16 %v4452, %v4451
      %v4512 = vpack.c.bf16 %v4454, %v4453
      %v4513 = vpack.c.bf16 %v4456, %v4455
      %v4514 = vpack.c.bf16 %v4458, %v4457
      %v4515 = vpack.c.bf16 %v4460, %v4459
      %v4516 = vpack.c.bf16 %v4462, %v4461
      %v4517 = vpack.c.bf16 %v4464, %v4463
      %v4518 = vpack.c.bf16 %v4466, %v4465
      %v4519 = vpack.c.bf16 %v4468, %v4467
      %v4520 = vpack.c.bf16 %v4470, %v4469
      %v4521 = vpack.c.bf16 %v4472, %v4471
      %v4522 = vpack.c.bf16 %v4474, %v4473
      %v4523 = vpack.c.bf16 %v4476, %v4475
      %v4524 = vpack.c.bf16 %v4478, %v4477
      %v4525 = vpack.c.bf16 %v4480, %v4479
      %v4526 = vpack.c.bf16 %v4482, %v4481
      %v4527 = vpack.c.bf16 %v4484, %v4483
      %v4528 = vpack.c.bf16 %v4486, %v4485
      %v4529 = vpack.c.bf16 %v4488, %v4487
      %v4530 = vpack.c.bf16 %v4490, %v4489
      %v4531 = vpack.c.bf16 %v4492, %v4491
      %v4532 = vpack.c.bf16 %v4494, %v4493
      %v4533 = vpack.c.bf16 %v4496, %v4495
      %v4534 = vpack.c.bf16 %v4498, %v4497
      %v4535 = vpack.c.bf16 %v4500, %v4499
      %v4536 = vpack.c.bf16 %v4502, %v4501
      %v4537 = vpack.c.bf16 %v4504, %v4503
      %v4538 = vpack.c.bf16 %v4506, %v4505
      %v4539 = vld [vmem:[%s3] sm:$0xf]
      %v4540 = vld [vmem:[%s3 + $0x4] sm:$0xf]
      %v4541 = vld [vmem:[%s3 + $0x8] sm:$0xf]
      %v4542 = vld [vmem:[%s3 + $0xc] sm:$0xf]
      %v4543 = vld [vmem:[%s3 + $0x10] sm:$0xf]
      %v4544 = vld [vmem:[%s3 + $0x14] sm:$0xf]
      %v4545 = vld [vmem:[%s3 + $0x18] sm:$0xf]
      %v4546 = vld [vmem:[%s3 + $0x1c] sm:$0xf]
      %v4547 = vld [vmem:[%s3 + $0x20] sm:$0xf]
      %v4548 = vld [vmem:[%s3 + $0x24] sm:$0xf]
      %v4549 = vld [vmem:[%s3 + $0x28] sm:$0xf]
      %v4550 = vld [vmem:[%s3 + $0x2c] sm:$0xf]
      %v4551 = vld [vmem:[%s3 + $0x30] sm:$0xf]
      %v4552 = vld [vmem:[%s3 + $0x34] sm:$0xf]
      %v4553 = vld [vmem:[%s3 + $0x38] sm:$0xf]
      %v4554 = vld [vmem:[%s3 + $0x3c] sm:$0xf]
      %v4555 = vld [vmem:[%s8 + $0x3] sm:$0x1]
      %v4557 = vlaneseq
      %v4558 = vshrl.u32 %v4557, 7
      %v4559 = vsub.s32 0, %v4558
      %v4560 = vrot.slane %v4555, %v4559
      %v4578 = vunpack.c.l.b16 %v4539
      %v4579 = vunpack.c.l.b16 %v4540
      %v4580 = vunpack.c.l.b16 %v4541
      %v4581 = vunpack.c.l.b16 %v4542
      %v4582 = vunpack.c.l.b16 %v4543
      %v4583 = vunpack.c.l.b16 %v4544
      %v4584 = vunpack.c.l.b16 %v4545
      %v4585 = vunpack.c.l.b16 %v4546
      %v4586 = vunpack.c.l.b16 %v4547
      %v4587 = vunpack.c.l.b16 %v4548
      %v4588 = vunpack.c.l.b16 %v4549
      %v4589 = vunpack.c.l.b16 %v4550
      %v4590 = vunpack.c.l.b16 %v4551
      %v4591 = vunpack.c.l.b16 %v4552
      %v4592 = vunpack.c.l.b16 %v4553
      %v4593 = vunpack.c.l.b16 %v4554
      %v4594 = vpack.c.b16 %v4579, %v4578
      %v4595 = vpack.c.b16 %v4581, %v4580
      %v4596 = vpack.c.b16 %v4583, %v4582
      %v4597 = vpack.c.b16 %v4585, %v4584
      %v4598 = vpack.c.b16 %v4587, %v4586
      %v4599 = vpack.c.b16 %v4589, %v4588
      %v4600 = vpack.c.b16 %v4591, %v4590
      %v4601 = vpack.c.b16 %v4593, %v4592
      %4610 = vmatprep.subr.bf16.mxu0 0
      %4611 = vmatpush1.bf16.msra.mxu0 %v4601
      %4612 = vmatprep.subr.bf16.mxu0 0
      %4613 = vmatpush1.bf16.msra.mxu0 %v4600
      %4614 = vmatprep.subr.bf16.mxu0 0
      %4615 = vmatpush1.bf16.msra.mxu0 %v4599
      %4616 = vmatprep.subr.bf16.mxu0 0
      %4617 = vmatpush1.bf16.msra.mxu0 %v4598
      %4618 = vmatprep.subr.bf16.mxu0 0
      %4619 = vmatpush1.bf16.msra.mxu0 %v4597
      %4620 = vmatprep.subr.bf16.mxu0 0
      %4621 = vmatpush1.bf16.msra.mxu0 %v4596
      %4622 = vmatprep.subr.bf16.mxu0 0
      %4623 = vmatpush1.bf16.msra.mxu0 %v4595
      %4624 = vmatprep.subr.bf16.mxu0 0
      %4625 = vmatpush1.bf16.msra.mxu0 %v4594
      %4626 = vmatprep.subr.bf16.mxu0 0
      %4627 = vmatpush2.bf16.msra.mxu0 0
      %4628 = vmatprep.subr.bf16.mxu0 0
      %4629 = vmatpush2.bf16.msra.mxu0 0
      %4630 = vmatprep.subr.bf16.mxu0 0
      %4631 = vmatpush2.bf16.msra.mxu0 0
      %4632 = vmatprep.subr.bf16.mxu0 0
      %4633 = vmatpush2.bf16.msra.mxu0 0
      %4634 = vmatprep.subr.bf16.mxu0 0
      %4635 = vmatpush2.bf16.msra.mxu0 0
      %4636 = vmatprep.subr.bf16.mxu0 0
      %4637 = vmatpush2.bf16.msra.mxu0 0
      %4638 = vmatprep.subr.bf16.mxu0 0
      %4639 = vmatpush2.bf16.msra.mxu0 0
      %4640 = vmatprep.subr.bf16.mxu0 0
      %4641 = vmatpush2.bf16.msra.mxu0 0
      %4642 = vmatprep.mubr.bf16.mxu0 0
      %4643 = vmatmul.mubr.bf16.gmra.mxu0 %v4507
      %v4644 = vpop.f32.mrf.mxu0
      %v4645 = vadd.f32 %v4560, %v4644
      %v4646 = vpop.f32.mrf.mxu0
      %v4647 = vpop.f32.mrf.mxu0
      %v4648 = vadd.f32 %v4560, %v4647
      %v4649 = vpop.f32.mrf.mxu0
      %4650 = vmatprep.mubr.bf16.mxu0 0
      %4651 = vmatmul.mubr.bf16.gmra.mxu0 %v4508
      %v4652 = vpop.f32.mrf.mxu0
      %v4653 = vadd.f32 %v4560, %v4652
      %v4654 = vpop.f32.mrf.mxu0
      %v4655 = vpop.f32.mrf.mxu0
      %v4656 = vadd.f32 %v4560, %v4655
      %v4657 = vpop.f32.mrf.mxu0
      %4658 = vmatprep.mubr.bf16.mxu0 0
      %4659 = vmatmul.mubr.bf16.gmra.mxu0 %v4509
      %v4660 = vpop.f32.mrf.mxu0
      %v4661 = vadd.f32 %v4560, %v4660
      %v4662 = vpop.f32.mrf.mxu0
      %v4663 = vpop.f32.mrf.mxu0
      %v4664 = vadd.f32 %v4560, %v4663
      %v4665 = vpop.f32.mrf.mxu0
      %4666 = vmatprep.mubr.bf16.mxu0 0
      %4667 = vmatmul.mubr.bf16.gmra.mxu0 %v4510
      %v4668 = vpop.f32.mrf.mxu0
      %v4669 = vadd.f32 %v4560, %v4668
      %v4670 = vpop.f32.mrf.mxu0
      %v4671 = vpop.f32.mrf.mxu0
      %v4672 = vadd.f32 %v4560, %v4671
      %v4673 = vpop.f32.mrf.mxu0
      %4674 = vmatprep.mubr.bf16.mxu0 0
      %4675 = vmatmul.mubr.bf16.gmra.mxu0 %v4511
      %v4676 = vpop.f32.mrf.mxu0
      %v4677 = vadd.f32 %v4560, %v4676
      %v4678 = vpop.f32.mrf.mxu0
      %v4679 = vpop.f32.mrf.mxu0
      %v4680 = vadd.f32 %v4560, %v4679
      %v4681 = vpop.f32.mrf.mxu0
      %4682 = vmatprep.mubr.bf16.mxu0 0
      %4683 = vmatmul.mubr.bf16.gmra.mxu0 %v4512
      %v4684 = vpop.f32.mrf.mxu0
      %v4685 = vadd.f32 %v4560, %v4684
      %v4686 = vpop.f32.mrf.mxu0
      %v4687 = vpop.f32.mrf.mxu0
      %v4688 = vadd.f32 %v4560, %v4687
      %v4689 = vpop.f32.mrf.mxu0
      %4690 = vmatprep.mubr.bf16.mxu0 0
      %4691 = vmatmul.mubr.bf16.gmra.mxu0 %v4513
      %v4692 = vpop.f32.mrf.mxu0
      %v4693 = vadd.f32 %v4560, %v4692
      %v4694 = vpop.f32.mrf.mxu0
      %v4695 = vpop.f32.mrf.mxu0
      %v4696 = vadd.f32 %v4560, %v4695
      %v4697 = vpop.f32.mrf.mxu0
      %4698 = vmatprep.mubr.bf16.mxu0 0
      %4699 = vmatmul.mubr.bf16.gmra.mxu0 %v4514
      %v4700 = vpop.f32.mrf.mxu0
      %v4701 = vadd.f32 %v4560, %v4700
      %v4702 = vpop.f32.mrf.mxu0
      %v4703 = vpop.f32.mrf.mxu0
      %v4704 = vadd.f32 %v4560, %v4703
      %v4705 = vpop.f32.mrf.mxu0
      %4706 = vmatprep.mubr.bf16.mxu0 0
      %4707 = vmatmul.mubr.bf16.gmra.mxu0 %v4515
      %v4708 = vpop.f32.mrf.mxu0
      %v4709 = vadd.f32 %v4560, %v4708
      %v4710 = vpop.f32.mrf.mxu0
      %v4711 = vpop.f32.mrf.mxu0
      %v4712 = vadd.f32 %v4560, %v4711
      %v4713 = vpop.f32.mrf.mxu0
      %4714 = vmatprep.mubr.bf16.mxu0 0
      %4715 = vmatmul.mubr.bf16.gmra.mxu0 %v4516
      %v4716 = vpop.f32.mrf.mxu0
      %v4717 = vadd.f32 %v4560, %v4716
      %v4718 = vpop.f32.mrf.mxu0
      %v4719 = vpop.f32.mrf.mxu0
      %v4720 = vadd.f32 %v4560, %v4719
      %v4721 = vpop.f32.mrf.mxu0
      %4722 = vmatprep.mubr.bf16.mxu0 0
      %4723 = vmatmul.mubr.bf16.gmra.mxu0 %v4517
      %v4724 = vpop.f32.mrf.mxu0
      %v4725 = vadd.f32 %v4560, %v4724
      %v4726 = vpop.f32.mrf.mxu0
      %v4727 = vpop.f32.mrf.mxu0
      %v4728 = vadd.f32 %v4560, %v4727
      %v4729 = vpop.f32.mrf.mxu0
      %4730 = vmatprep.mubr.bf16.mxu0 0
      %4731 = vmatmul.mubr.bf16.gmra.mxu0 %v4518
      %v4732 = vpop.f32.mrf.mxu0
      %v4733 = vadd.f32 %v4560, %v4732
      %v4734 = vpop.f32.mrf.mxu0
      %v4735 = vpop.f32.mrf.mxu0
      %v4736 = vadd.f32 %v4560, %v4735
      %v4737 = vpop.f32.mrf.mxu0
      %4738 = vmatprep.mubr.bf16.mxu0 0
      %4739 = vmatmul.mubr.bf16.gmra.mxu0 %v4519
      %v4740 = vpop.f32.mrf.mxu0
      %v4741 = vadd.f32 %v4560, %v4740
      %v4742 = vpop.f32.mrf.mxu0
      %v4743 = vpop.f32.mrf.mxu0
      %v4744 = vadd.f32 %v4560, %v4743
      %v4745 = vpop.f32.mrf.mxu0
      %4746 = vmatprep.mubr.bf16.mxu0 0
      %4747 = vmatmul.mubr.bf16.gmra.mxu0 %v4520
      %v4748 = vpop.f32.mrf.mxu0
      %v4749 = vadd.f32 %v4560, %v4748
      %v4750 = vpop.f32.mrf.mxu0
      %v4751 = vpop.f32.mrf.mxu0
      %v4752 = vadd.f32 %v4560, %v4751
      %v4753 = vpop.f32.mrf.mxu0
      %4754 = vmatprep.mubr.bf16.mxu0 0
      %4755 = vmatmul.mubr.bf16.gmra.mxu0 %v4521
      %v4756 = vpop.f32.mrf.mxu0
      %v4757 = vadd.f32 %v4560, %v4756
      %v4758 = vpop.f32.mrf.mxu0
      %v4759 = vpop.f32.mrf.mxu0
      %v4760 = vadd.f32 %v4560, %v4759
      %v4761 = vpop.f32.mrf.mxu0
      %4762 = vmatprep.mubr.bf16.mxu0 0
      %4763 = vmatmul.mubr.bf16.gmra.mxu0 %v4522
      %v4764 = vpop.f32.mrf.mxu0
      %v4765 = vadd.f32 %v4560, %v4764
      %v4766 = vpop.f32.mrf.mxu0
      %v4767 = vpop.f32.mrf.mxu0
      %v4768 = vadd.f32 %v4560, %v4767
      %v4769 = vpop.f32.mrf.mxu0
      %4770 = vmatprep.mubr.bf16.mxu0 0
      %4771 = vmatmul.mubr.bf16.gmra.mxu0 %v4523
      %v4772 = vpop.f32.mrf.mxu0
      %v4773 = vadd.f32 %v4560, %v4772
      %v4774 = vpop.f32.mrf.mxu0
      %v4775 = vpop.f32.mrf.mxu0
      %v4776 = vadd.f32 %v4560, %v4775
      %v4777 = vpop.f32.mrf.mxu0
      %4778 = vmatprep.mubr.bf16.mxu0 0
      %4779 = vmatmul.mubr.bf16.gmra.mxu0 %v4524
      %v4780 = vpop.f32.mrf.mxu0
      %v4781 = vadd.f32 %v4560, %v4780
      %v4782 = vpop.f32.mrf.mxu0
      %v4783 = vpop.f32.mrf.mxu0
      %v4784 = vadd.f32 %v4560, %v4783
      %v4785 = vpop.f32.mrf.mxu0
      %4786 = vmatprep.mubr.bf16.mxu0 0
      %4787 = vmatmul.mubr.bf16.gmra.mxu0 %v4525
      %v4788 = vpop.f32.mrf.mxu0
      %v4789 = vadd.f32 %v4560, %v4788
      %v4790 = vpop.f32.mrf.mxu0
      %v4791 = vpop.f32.mrf.mxu0
      %v4792 = vadd.f32 %v4560, %v4791
      %v4793 = vpop.f32.mrf.mxu0
      %4794 = vmatprep.mubr.bf16.mxu0 0
      %4795 = vmatmul.mubr.bf16.gmra.mxu0 %v4526
      %v4796 = vpop.f32.mrf.mxu0
      %v4797 = vadd.f32 %v4560, %v4796
      %v4798 = vpop.f32.mrf.mxu0
      %v4799 = vpop.f32.mrf.mxu0
      %v4800 = vadd.f32 %v4560, %v4799
      %v4801 = vpop.f32.mrf.mxu0
      %4802 = vmatprep.mubr.bf16.mxu0 0
      %4803 = vmatmul.mubr.bf16.gmra.mxu0 %v4527
      %v4804 = vpop.f32.mrf.mxu0
      %v4805 = vadd.f32 %v4560, %v4804
      %v4806 = vpop.f32.mrf.mxu0
      %v4807 = vpop.f32.mrf.mxu0
      %v4808 = vadd.f32 %v4560, %v4807
      %v4809 = vpop.f32.mrf.mxu0
      %4810 = vmatprep.mubr.bf16.mxu0 0
      %4811 = vmatmul.mubr.bf16.gmra.mxu0 %v4528
      %v4812 = vpop.f32.mrf.mxu0
      %v4813 = vadd.f32 %v4560, %v4812
      %v4814 = vpop.f32.mrf.mxu0
      %v4815 = vpop.f32.mrf.mxu0
      %v4816 = vadd.f32 %v4560, %v4815
      %v4817 = vpop.f32.mrf.mxu0
      %4818 = vmatprep.mubr.bf16.mxu0 0
      %4819 = vmatmul.mubr.bf16.gmra.mxu0 %v4529
      %v4820 = vpop.f32.mrf.mxu0
      %v4821 = vadd.f32 %v4560, %v4820
      %v4822 = vpop.f32.mrf.mxu0
      %v4823 = vpop.f32.mrf.mxu0
      %v4824 = vadd.f32 %v4560, %v4823
      %v4825 = vpop.f32.mrf.mxu0
      %4826 = vmatprep.mubr.bf16.mxu0 0
      %4827 = vmatmul.mubr.bf16.gmra.mxu0 %v4530
      %v4828 = vpop.f32.mrf.mxu0
      %v4829 = vadd.f32 %v4560, %v4828
      %v4830 = vpop.f32.mrf.mxu0
      %v4831 = vpop.f32.mrf.mxu0
      %v4832 = vadd.f32 %v4560, %v4831
      %v4833 = vpop.f32.mrf.mxu0
      %4834 = vmatprep.mubr.bf16.mxu0 0
      %4835 = vmatmul.mubr.bf16.gmra.mxu0 %v4531
      %v4836 = vpop.f32.mrf.mxu0
      %v4837 = vadd.f32 %v4560, %v4836
      %v4838 = vpop.f32.mrf.mxu0
      %v4839 = vpop.f32.mrf.mxu0
      %v4840 = vadd.f32 %v4560, %v4839
      %v4841 = vpop.f32.mrf.mxu0
      %4842 = vmatprep.mubr.bf16.mxu0 0
      %4843 = vmatmul.mubr.bf16.gmra.mxu0 %v4532
      %v4844 = vpop.f32.mrf.mxu0
      %v4845 = vadd.f32 %v4560, %v4844
      %v4846 = vpop.f32.mrf.mxu0
      %v4847 = vpop.f32.mrf.mxu0
      %v4848 = vadd.f32 %v4560, %v4847
      %v4849 = vpop.f32.mrf.mxu0
      %4850 = vmatprep.mubr.bf16.mxu0 0
      %4851 = vmatmul.mubr.bf16.gmra.mxu0 %v4533
      %v4852 = vpop.f32.mrf.mxu0
      %v4853 = vadd.f32 %v4560, %v4852
      %v4854 = vpop.f32.mrf.mxu0
      %v4855 = vpop.f32.mrf.mxu0
      %v4856 = vadd.f32 %v4560, %v4855
      %v4857 = vpop.f32.mrf.mxu0
      %4858 = vmatprep.mubr.bf16.mxu0 0
      %4859 = vmatmul.mubr.bf16.gmra.mxu0 %v4534
      %v4860 = vpop.f32.mrf.mxu0
      %v4861 = vadd.f32 %v4560, %v4860
      %v4862 = vpop.f32.mrf.mxu0
      %v4863 = vpop.f32.mrf.mxu0
      %v4864 = vadd.f32 %v4560, %v4863
      %v4865 = vpop.f32.mrf.mxu0
      %4866 = vmatprep.mubr.bf16.mxu0 0
      %4867 = vmatmul.mubr.bf16.gmra.mxu0 %v4535
      %v4868 = vpop.f32.mrf.mxu0
      %v4869 = vadd.f32 %v4560, %v4868
      %v4870 = vpop.f32.mrf.mxu0
      %v4871 = vpop.f32.mrf.mxu0
      %v4872 = vadd.f32 %v4560, %v4871
      %v4873 = vpop.f32.mrf.mxu0
      %4874 = vmatprep.mubr.bf16.mxu0 0
      %4875 = vmatmul.mubr.bf16.gmra.mxu0 %v4536
      %v4876 = vpop.f32.mrf.mxu0
      %v4877 = vadd.f32 %v4560, %v4876
      %v4878 = vpop.f32.mrf.mxu0
      %v4879 = vpop.f32.mrf.mxu0
      %v4880 = vadd.f32 %v4560, %v4879
      %v4881 = vpop.f32.mrf.mxu0
      %4882 = vmatprep.mubr.bf16.mxu0 0
      %4883 = vmatmul.mubr.bf16.gmra.mxu0 %v4537
      %v4884 = vpop.f32.mrf.mxu0
      %v4885 = vadd.f32 %v4560, %v4884
      %v4886 = vpop.f32.mrf.mxu0
      %v4887 = vpop.f32.mrf.mxu0
      %v4888 = vadd.f32 %v4560, %v4887
      %v4889 = vpop.f32.mrf.mxu0
      %4890 = vmatprep.mubr.bf16.mxu0 0
      %4891 = vmatmul.mubr.bf16.gmra.mxu0 %v4538
      %v4892 = vpop.f32.mrf.mxu0
      %v4893 = vadd.f32 %v4560, %v4892
      %v4894 = vpop.f32.mrf.mxu0
      %v4895 = vpop.f32.mrf.mxu0
      %v4896 = vadd.f32 %v4560, %v4895
      %v4897 = vpop.f32.mrf.mxu0
      %4898 = vdwg.mxu0
      %v4899 = vmax.f32 %v4645, 0.0
      %v4900 = vmax.f32 %v4648, 0.0
      %v4901 = vmax.f32 %v4653, 0.0
      %v4902 = vmax.f32 %v4656, 0.0
      %v4903 = vmax.f32 %v4661, 0.0
      %v4904 = vmax.f32 %v4664, 0.0
      %v4905 = vmax.f32 %v4669, 0.0
      %v4906 = vmax.f32 %v4672, 0.0
      %v4907 = vmax.f32 %v4677, 0.0
      %v4908 = vmax.f32 %v4680, 0.0
      %v4909 = vmax.f32 %v4685, 0.0
      %v4910 = vmax.f32 %v4688, 0.0
      %v4911 = vmax.f32 %v4693, 0.0
      %v4912 = vmax.f32 %v4696, 0.0
      %v4913 = vmax.f32 %v4701, 0.0
      %v4914 = vmax.f32 %v4704, 0.0
      %v4915 = vmax.f32 %v4709, 0.0
      %v4916 = vmax.f32 %v4712, 0.0
      %v4917 = vmax.f32 %v4717, 0.0
      %v4918 = vmax.f32 %v4720, 0.0
      %v4919 = vmax.f32 %v4725, 0.0
      %v4920 = vmax.f32 %v4728, 0.0
      %v4921 = vmax.f32 %v4733, 0.0
      %v4922 = vmax.f32 %v4736, 0.0
      %v4923 = vmax.f32 %v4741, 0.0
      %v4924 = vmax.f32 %v4744, 0.0
      %v4925 = vmax.f32 %v4749, 0.0
      %v4926 = vmax.f32 %v4752, 0.0
      %v4927 = vmax.f32 %v4757, 0.0
      %v4928 = vmax.f32 %v4760, 0.0
      %v4929 = vmax.f32 %v4765, 0.0
      %v4930 = vmax.f32 %v4768, 0.0
      %v4931 = vmax.f32 %v4773, 0.0
      %v4932 = vmax.f32 %v4776, 0.0
      %v4933 = vmax.f32 %v4781, 0.0
      %v4934 = vmax.f32 %v4784, 0.0
      %v4935 = vmax.f32 %v4789, 0.0
      %v4936 = vmax.f32 %v4792, 0.0
      %v4937 = vmax.f32 %v4797, 0.0
      %v4938 = vmax.f32 %v4800, 0.0
      %v4939 = vmax.f32 %v4805, 0.0
      %v4940 = vmax.f32 %v4808, 0.0
      %v4941 = vmax.f32 %v4813, 0.0
      %v4942 = vmax.f32 %v4816, 0.0
      %v4943 = vmax.f32 %v4821, 0.0
      %v4944 = vmax.f32 %v4824, 0.0
      %v4945 = vmax.f32 %v4829, 0.0
      %v4946 = vmax.f32 %v4832, 0.0
      %v4947 = vmax.f32 %v4837, 0.0
      %v4948 = vmax.f32 %v4840, 0.0
      %v4949 = vmax.f32 %v4845, 0.0
      %v4950 = vmax.f32 %v4848, 0.0
      %v4951 = vmax.f32 %v4853, 0.0
      %v4952 = vmax.f32 %v4856, 0.0
      %v4953 = vmax.f32 %v4861, 0.0
      %v4954 = vmax.f32 %v4864, 0.0
      %v4955 = vmax.f32 %v4869, 0.0
      %v4956 = vmax.f32 %v4872, 0.0
      %v4957 = vmax.f32 %v4877, 0.0
      %v4958 = vmax.f32 %v4880, 0.0
      %v4959 = vmax.f32 %v4885, 0.0
      %v4960 = vmax.f32 %v4888, 0.0
      %v4961 = vmax.f32 %v4893, 0.0
      %v4962 = vmax.f32 %v4896, 0.0
      %v4963 = vpack.c.bf16 %v4900, %v4899
      %v4964 = vpack.c.bf16 %v4902, %v4901
      %v4965 = vpack.c.bf16 %v4904, %v4903
      %v4966 = vpack.c.bf16 %v4906, %v4905
      %v4967 = vpack.c.bf16 %v4908, %v4907
      %v4968 = vpack.c.bf16 %v4910, %v4909
      %v4969 = vpack.c.bf16 %v4912, %v4911
      %v4970 = vpack.c.bf16 %v4914, %v4913
      %v4971 = vpack.c.bf16 %v4916, %v4915
      %v4972 = vpack.c.bf16 %v4918, %v4917
      %v4973 = vpack.c.bf16 %v4920, %v4919
      %v4974 = vpack.c.bf16 %v4922, %v4921
      %v4975 = vpack.c.bf16 %v4924, %v4923
      %v4976 = vpack.c.bf16 %v4926, %v4925
      %v4977 = vpack.c.bf16 %v4928, %v4927
      %v4978 = vpack.c.bf16 %v4930, %v4929
      %v4979 = vpack.c.bf16 %v4932, %v4931
      %v4980 = vpack.c.bf16 %v4934, %v4933
      %v4981 = vpack.c.bf16 %v4936, %v4935
      %v4982 = vpack.c.bf16 %v4938, %v4937
      %v4983 = vpack.c.bf16 %v4940, %v4939
      %v4984 = vpack.c.bf16 %v4942, %v4941
      %v4985 = vpack.c.bf16 %v4944, %v4943
      %v4986 = vpack.c.bf16 %v4946, %v4945
      %v4987 = vpack.c.bf16 %v4948, %v4947
      %v4988 = vpack.c.bf16 %v4950, %v4949
      %v4989 = vpack.c.bf16 %v4952, %v4951
      %v4990 = vpack.c.bf16 %v4954, %v4953
      %v4991 = vpack.c.bf16 %v4956, %v4955
      %v4992 = vpack.c.bf16 %v4958, %v4957
      %v4993 = vpack.c.bf16 %v4960, %v4959
      %v4994 = vpack.c.bf16 %v4962, %v4961
      %v4995 = vld [vmem:[%s4] sm:$0xf]
      %v4996 = vld [vmem:[%s4 + $0x4] sm:$0xf]
      %v4997 = vld [vmem:[%s4 + $0x8] sm:$0xf]
      %v4998 = vld [vmem:[%s4 + $0xc] sm:$0xf]
      %v4999 = vld [vmem:[%s4 + $0x10] sm:$0xf]
      %v5000 = vld [vmem:[%s4 + $0x14] sm:$0xf]
      %v5001 = vld [vmem:[%s4 + $0x18] sm:$0xf]
      %v5002 = vld [vmem:[%s4 + $0x1c] sm:$0xf]
      %v5003 = vld [vmem:[%s8 + $0x4] sm:$0x1]
      %v5005 = vlaneseq
      %v5006 = vshrl.u32 %v5005, 7
      %v5007 = vsub.s32 0, %v5006
      %v5008 = vrot.slane %v5003, %v5007
      %v5018 = vunpack.c.l.b16 %v4995
      %v5019 = vunpack.c.l.b16 %v4996
      %v5020 = vunpack.c.l.b16 %v4997
      %v5021 = vunpack.c.l.b16 %v4998
      %v5022 = vunpack.c.l.b16 %v4999
      %v5023 = vunpack.c.l.b16 %v5000
      %v5024 = vunpack.c.l.b16 %v5001
      %v5025 = vunpack.c.l.b16 %v5002
      %v5026 = vpack.c.b16 %v5019, %v5018
      %v5027 = vpack.c.b16 %v5021, %v5020
      %v5028 = vpack.c.b16 %v5023, %v5022
      %v5029 = vpack.c.b16 %v5025, %v5024
      %vm5034 = vcmask 523264
      %v5036 = vsel %vm5034, %v4963, 0
      %v5039 = vsel %vm5034, %v4964, 0
      %v5042 = vsel %vm5034, %v4965, 0
      %v5045 = vsel %vm5034, %v4966, 0
      %v5048 = vsel %vm5034, %v4967, 0
      %v5051 = vsel %vm5034, %v4968, 0
      %v5054 = vsel %vm5034, %v4969, 0
      %v5057 = vsel %vm5034, %v4970, 0
      %v5060 = vsel %vm5034, %v4971, 0
      %v5063 = vsel %vm5034, %v4972, 0
      %v5066 = vsel %vm5034, %v4973, 0
      %v5069 = vsel %vm5034, %v4974, 0
      %v5072 = vsel %vm5034, %v4975, 0
      %v5075 = vsel %vm5034, %v4976, 0
      %v5078 = vsel %vm5034, %v4977, 0
      %v5081 = vsel %vm5034, %v4978, 0
      %v5084 = vsel %vm5034, %v4979, 0
      %v5087 = vsel %vm5034, %v4980, 0
      %v5090 = vsel %vm5034, %v4981, 0
      %v5093 = vsel %vm5034, %v4982, 0
      %v5096 = vsel %vm5034, %v4983, 0
      %v5099 = vsel %vm5034, %v4984, 0
      %v5102 = vsel %vm5034, %v4985, 0
      %v5105 = vsel %vm5034, %v4986, 0
      %v5108 = vsel %vm5034, %v4987, 0
      %v5111 = vsel %vm5034, %v4988, 0
      %v5114 = vsel %vm5034, %v4989, 0
      %v5117 = vsel %vm5034, %v4990, 0
      %v5120 = vsel %vm5034, %v4991, 0
      %v5123 = vsel %vm5034, %v4992, 0
      %v5126 = vsel %vm5034, %v4993, 0
      %v5129 = vsel %vm5034, %v4994, 0
      %5131 = vmatprep.subr.bf16.mxu0 0
      %5132 = vmatpush1.bf16.msra.mxu0 0
      %5133 = vmatprep.subr.bf16.mxu0 0
      %5134 = vmatpush1.bf16.msra.mxu0 0
      %5135 = vmatprep.subr.bf16.mxu0 0
      %5136 = vmatpush1.bf16.msra.mxu0 0
      %5137 = vmatprep.subr.bf16.mxu0 0
      %5138 = vmatpush1.bf16.msra.mxu0 0
      %5139 = vmatprep.subr.bf16.mxu0 0
      %5140 = vmatpush1.bf16.msra.mxu0 %v5029
      %5141 = vmatprep.subr.bf16.mxu0 0
      %5142 = vmatpush1.bf16.msra.mxu0 %v5028
      %5143 = vmatprep.subr.bf16.mxu0 0
      %5144 = vmatpush1.bf16.msra.mxu0 %v5027
      %5145 = vmatprep.subr.bf16.mxu0 0
      %5146 = vmatpush1.bf16.msra.mxu0 %v5026
      %5147 = vmatprep.subr.bf16.mxu0 0
      %5148 = vmatpush2.bf16.msra.mxu0 0
      %5149 = vmatprep.subr.bf16.mxu0 0
      %5150 = vmatpush2.bf16.msra.mxu0 0
      %5151 = vmatprep.subr.bf16.mxu0 0
      %5152 = vmatpush2.bf16.msra.mxu0 0
      %5153 = vmatprep.subr.bf16.mxu0 0
      %5154 = vmatpush2.bf16.msra.mxu0 0
      %5155 = vmatprep.subr.bf16.mxu0 0
      %5156 = vmatpush2.bf16.msra.mxu0 0
      %5157 = vmatprep.subr.bf16.mxu0 0
      %5158 = vmatpush2.bf16.msra.mxu0 0
      %5159 = vmatprep.subr.bf16.mxu0 0
      %5160 = vmatpush2.bf16.msra.mxu0 0
      %5161 = vmatprep.subr.bf16.mxu0 0
      %5162 = vmatpush2.bf16.msra.mxu0 0
      %5163 = vmatprep.mubr.bf16.mxu0 0
      %5164 = vmatmul.mubr.bf16.gmra.mxu0 %v5036
      %v5165 = vpop.f32.mrf.mxu0
      %v5166 = vadd.f32 %v5008, %v5165
      %v5167 = vpop.f32.mrf.mxu0
      %v5168 = vpop.f32.mrf.mxu0
      %v5169 = vadd.f32 %v5008, %v5168
      %v5170 = vpop.f32.mrf.mxu0
      %5171 = vmatprep.mubr.bf16.mxu0 0
      %5172 = vmatmul.mubr.bf16.gmra.mxu0 %v5039
      %v5173 = vpop.f32.mrf.mxu0
      %v5174 = vadd.f32 %v5008, %v5173
      %v5175 = vpop.f32.mrf.mxu0
      %v5176 = vpop.f32.mrf.mxu0
      %v5177 = vadd.f32 %v5008, %v5176
      %v5178 = vpop.f32.mrf.mxu0
      %5179 = vmatprep.mubr.bf16.mxu0 0
      %5180 = vmatmul.mubr.bf16.gmra.mxu0 %v5042
      %v5181 = vpop.f32.mrf.mxu0
      %v5182 = vadd.f32 %v5008, %v5181
      %v5183 = vpop.f32.mrf.mxu0
      %v5184 = vpop.f32.mrf.mxu0
      %v5185 = vadd.f32 %v5008, %v5184
      %v5186 = vpop.f32.mrf.mxu0
      %5187 = vmatprep.mubr.bf16.mxu0 0
      %5188 = vmatmul.mubr.bf16.gmra.mxu0 %v5045
      %v5189 = vpop.f32.mrf.mxu0
      %v5190 = vadd.f32 %v5008, %v5189
      %v5191 = vpop.f32.mrf.mxu0
      %v5192 = vpop.f32.mrf.mxu0
      %v5193 = vadd.f32 %v5008, %v5192
      %v5194 = vpop.f32.mrf.mxu0
      %5195 = vmatprep.mubr.bf16.mxu0 0
      %5196 = vmatmul.mubr.bf16.gmra.mxu0 %v5048
      %v5197 = vpop.f32.mrf.mxu0
      %v5198 = vadd.f32 %v5008, %v5197
      %v5199 = vpop.f32.mrf.mxu0
      %v5200 = vpop.f32.mrf.mxu0
      %v5201 = vadd.f32 %v5008, %v5200
      %v5202 = vpop.f32.mrf.mxu0
      %5203 = vmatprep.mubr.bf16.mxu0 0
      %5204 = vmatmul.mubr.bf16.gmra.mxu0 %v5051
      %v5205 = vpop.f32.mrf.mxu0
      %v5206 = vadd.f32 %v5008, %v5205
      %v5207 = vpop.f32.mrf.mxu0
      %v5208 = vpop.f32.mrf.mxu0
      %v5209 = vadd.f32 %v5008, %v5208
      %v5210 = vpop.f32.mrf.mxu0
      %5211 = vmatprep.mubr.bf16.mxu0 0
      %5212 = vmatmul.mubr.bf16.gmra.mxu0 %v5054
      %v5213 = vpop.f32.mrf.mxu0
      %v5214 = vadd.f32 %v5008, %v5213
      %v5215 = vpop.f32.mrf.mxu0
      %v5216 = vpop.f32.mrf.mxu0
      %v5217 = vadd.f32 %v5008, %v5216
      %v5218 = vpop.f32.mrf.mxu0
      %5219 = vmatprep.mubr.bf16.mxu0 0
      %5220 = vmatmul.mubr.bf16.gmra.mxu0 %v5057
      %v5221 = vpop.f32.mrf.mxu0
      %v5222 = vadd.f32 %v5008, %v5221
      %v5223 = vpop.f32.mrf.mxu0
      %v5224 = vpop.f32.mrf.mxu0
      %v5225 = vadd.f32 %v5008, %v5224
      %v5226 = vpop.f32.mrf.mxu0
      %5227 = vmatprep.mubr.bf16.mxu0 0
      %5228 = vmatmul.mubr.bf16.gmra.mxu0 %v5060
      %v5229 = vpop.f32.mrf.mxu0
      %v5230 = vadd.f32 %v5008, %v5229
      %v5231 = vpop.f32.mrf.mxu0
      %v5232 = vpop.f32.mrf.mxu0
      %v5233 = vadd.f32 %v5008, %v5232
      %v5234 = vpop.f32.mrf.mxu0
      %5235 = vmatprep.mubr.bf16.mxu0 0
      %5236 = vmatmul.mubr.bf16.gmra.mxu0 %v5063
      %v5237 = vpop.f32.mrf.mxu0
      %v5238 = vadd.f32 %v5008, %v5237
      %v5239 = vpop.f32.mrf.mxu0
      %v5240 = vpop.f32.mrf.mxu0
      %v5241 = vadd.f32 %v5008, %v5240
      %v5242 = vpop.f32.mrf.mxu0
      %5243 = vmatprep.mubr.bf16.mxu0 0
      %5244 = vmatmul.mubr.bf16.gmra.mxu0 %v5066
      %v5245 = vpop.f32.mrf.mxu0
      %v5246 = vadd.f32 %v5008, %v5245
      %v5247 = vpop.f32.mrf.mxu0
      %v5248 = vpop.f32.mrf.mxu0
      %v5249 = vadd.f32 %v5008, %v5248
      %v5250 = vpop.f32.mrf.mxu0
      %5251 = vmatprep.mubr.bf16.mxu0 0
      %5252 = vmatmul.mubr.bf16.gmra.mxu0 %v5069
      %v5253 = vpop.f32.mrf.mxu0
      %v5254 = vadd.f32 %v5008, %v5253
      %v5255 = vpop.f32.mrf.mxu0
      %v5256 = vpop.f32.mrf.mxu0
      %v5257 = vadd.f32 %v5008, %v5256
      %v5258 = vpop.f32.mrf.mxu0
      %5259 = vmatprep.mubr.bf16.mxu0 0
      %5260 = vmatmul.mubr.bf16.gmra.mxu0 %v5072
      %v5261 = vpop.f32.mrf.mxu0
      %v5262 = vadd.f32 %v5008, %v5261
      %v5263 = vpop.f32.mrf.mxu0
      %v5264 = vpop.f32.mrf.mxu0
      %v5265 = vadd.f32 %v5008, %v5264
      %v5266 = vpop.f32.mrf.mxu0
      %5267 = vmatprep.mubr.bf16.mxu0 0
      %5268 = vmatmul.mubr.bf16.gmra.mxu0 %v5075
      %v5269 = vpop.f32.mrf.mxu0
      %v5270 = vadd.f32 %v5008, %v5269
      %v5271 = vpop.f32.mrf.mxu0
      %v5272 = vpop.f32.mrf.mxu0
      %v5273 = vadd.f32 %v5008, %v5272
      %v5274 = vpop.f32.mrf.mxu0
      %5275 = vmatprep.mubr.bf16.mxu0 0
      %5276 = vmatmul.mubr.bf16.gmra.mxu0 %v5078
      %v5277 = vpop.f32.mrf.mxu0
      %v5278 = vadd.f32 %v5008, %v5277
      %v5279 = vpop.f32.mrf.mxu0
      %v5280 = vpop.f32.mrf.mxu0
      %v5281 = vadd.f32 %v5008, %v5280
      %v5282 = vpop.f32.mrf.mxu0
      %5283 = vmatprep.mubr.bf16.mxu0 0
      %5284 = vmatmul.mubr.bf16.gmra.mxu0 %v5081
      %v5285 = vpop.f32.mrf.mxu0
      %v5286 = vadd.f32 %v5008, %v5285
      %v5287 = vpop.f32.mrf.mxu0
      %v5288 = vpop.f32.mrf.mxu0
      %v5289 = vadd.f32 %v5008, %v5288
      %v5290 = vpop.f32.mrf.mxu0
      %5291 = vmatprep.mubr.bf16.mxu0 0
      %5292 = vmatmul.mubr.bf16.gmra.mxu0 %v5084
      %v5293 = vpop.f32.mrf.mxu0
      %v5294 = vadd.f32 %v5008, %v5293
      %v5295 = vpop.f32.mrf.mxu0
      %v5296 = vpop.f32.mrf.mxu0
      %v5297 = vadd.f32 %v5008, %v5296
      %v5298 = vpop.f32.mrf.mxu0
      %5299 = vmatprep.mubr.bf16.mxu0 0
      %5300 = vmatmul.mubr.bf16.gmra.mxu0 %v5087
      %v5301 = vpop.f32.mrf.mxu0
      %v5302 = vadd.f32 %v5008, %v5301
      %v5303 = vpop.f32.mrf.mxu0
      %v5304 = vpop.f32.mrf.mxu0
      %v5305 = vadd.f32 %v5008, %v5304
      %v5306 = vpop.f32.mrf.mxu0
      %5307 = vmatprep.mubr.bf16.mxu0 0
      %5308 = vmatmul.mubr.bf16.gmra.mxu0 %v5090
      %v5309 = vpop.f32.mrf.mxu0
      %v5310 = vadd.f32 %v5008, %v5309
      %v5311 = vpop.f32.mrf.mxu0
      %v5312 = vpop.f32.mrf.mxu0
      %v5313 = vadd.f32 %v5008, %v5312
      %v5314 = vpop.f32.mrf.mxu0
      %5315 = vmatprep.mubr.bf16.mxu0 0
      %5316 = vmatmul.mubr.bf16.gmra.mxu0 %v5093
      %v5317 = vpop.f32.mrf.mxu0
      %v5318 = vadd.f32 %v5008, %v5317
      %v5319 = vpop.f32.mrf.mxu0
      %v5320 = vpop.f32.mrf.mxu0
      %v5321 = vadd.f32 %v5008, %v5320
      %v5322 = vpop.f32.mrf.mxu0
      %5323 = vmatprep.mubr.bf16.mxu0 0
      %5324 = vmatmul.mubr.bf16.gmra.mxu0 %v5096
      %v5325 = vpop.f32.mrf.mxu0
      %v5326 = vadd.f32 %v5008, %v5325
      %v5327 = vpop.f32.mrf.mxu0
      %v5328 = vpop.f32.mrf.mxu0
      %v5329 = vadd.f32 %v5008, %v5328
      %v5330 = vpop.f32.mrf.mxu0
      %5331 = vmatprep.mubr.bf16.mxu0 0
      %5332 = vmatmul.mubr.bf16.gmra.mxu0 %v5099
      %v5333 = vpop.f32.mrf.mxu0
      %v5334 = vadd.f32 %v5008, %v5333
      %v5335 = vpop.f32.mrf.mxu0
      %v5336 = vpop.f32.mrf.mxu0
      %v5337 = vadd.f32 %v5008, %v5336
      %v5338 = vpop.f32.mrf.mxu0
      %5339 = vmatprep.mubr.bf16.mxu0 0
      %5340 = vmatmul.mubr.bf16.gmra.mxu0 %v5102
      %v5341 = vpop.f32.mrf.mxu0
      %v5342 = vadd.f32 %v5008, %v5341
      %v5343 = vpop.f32.mrf.mxu0
      %v5344 = vpop.f32.mrf.mxu0
      %v5345 = vadd.f32 %v5008, %v5344
      %v5346 = vpop.f32.mrf.mxu0
      %5347 = vmatprep.mubr.bf16.mxu0 0
      %5348 = vmatmul.mubr.bf16.gmra.mxu0 %v5105
      %v5349 = vpop.f32.mrf.mxu0
      %v5350 = vadd.f32 %v5008, %v5349
      %v5351 = vpop.f32.mrf.mxu0
      %v5352 = vpop.f32.mrf.mxu0
      %v5353 = vadd.f32 %v5008, %v5352
      %v5354 = vpop.f32.mrf.mxu0
      %5355 = vmatprep.mubr.bf16.mxu0 0
      %5356 = vmatmul.mubr.bf16.gmra.mxu0 %v5108
      %v5357 = vpop.f32.mrf.mxu0
      %v5358 = vadd.f32 %v5008, %v5357
      %v5359 = vpop.f32.mrf.mxu0
      %v5360 = vpop.f32.mrf.mxu0
      %v5361 = vadd.f32 %v5008, %v5360
      %v5362 = vpop.f32.mrf.mxu0
      %5363 = vmatprep.mubr.bf16.mxu0 0
      %5364 = vmatmul.mubr.bf16.gmra.mxu0 %v5111
      %v5365 = vpop.f32.mrf.mxu0
      %v5366 = vadd.f32 %v5008, %v5365
      %v5367 = vpop.f32.mrf.mxu0
      %v5368 = vpop.f32.mrf.mxu0
      %v5369 = vadd.f32 %v5008, %v5368
      %v5370 = vpop.f32.mrf.mxu0
      %5371 = vmatprep.mubr.bf16.mxu0 0
      %5372 = vmatmul.mubr.bf16.gmra.mxu0 %v5114
      %v5373 = vpop.f32.mrf.mxu0
      %v5374 = vadd.f32 %v5008, %v5373
      %v5375 = vpop.f32.mrf.mxu0
      %v5376 = vpop.f32.mrf.mxu0
      %v5377 = vadd.f32 %v5008, %v5376
      %v5378 = vpop.f32.mrf.mxu0
      %5379 = vmatprep.mubr.bf16.mxu0 0
      %5380 = vmatmul.mubr.bf16.gmra.mxu0 %v5117
      %v5381 = vpop.f32.mrf.mxu0
      %v5382 = vadd.f32 %v5008, %v5381
      %v5383 = vpop.f32.mrf.mxu0
      %v5384 = vpop.f32.mrf.mxu0
      %v5385 = vadd.f32 %v5008, %v5384
      %v5386 = vpop.f32.mrf.mxu0
      %5387 = vmatprep.mubr.bf16.mxu0 0
      %5388 = vmatmul.mubr.bf16.gmra.mxu0 %v5120
      %v5389 = vpop.f32.mrf.mxu0
      %v5390 = vadd.f32 %v5008, %v5389
      %v5391 = vpop.f32.mrf.mxu0
      %v5392 = vpop.f32.mrf.mxu0
      %v5393 = vadd.f32 %v5008, %v5392
      %v5394 = vpop.f32.mrf.mxu0
      %5395 = vmatprep.mubr.bf16.mxu0 0
      %5396 = vmatmul.mubr.bf16.gmra.mxu0 %v5123
      %v5397 = vpop.f32.mrf.mxu0
      %v5398 = vadd.f32 %v5008, %v5397
      %v5399 = vpop.f32.mrf.mxu0
      %v5400 = vpop.f32.mrf.mxu0
      %v5401 = vadd.f32 %v5008, %v5400
      %v5402 = vpop.f32.mrf.mxu0
      %5403 = vmatprep.mubr.bf16.mxu0 0
      %5404 = vmatmul.mubr.bf16.gmra.mxu0 %v5126
      %v5405 = vpop.f32.mrf.mxu0
      %v5406 = vadd.f32 %v5008, %v5405
      %v5407 = vpop.f32.mrf.mxu0
      %v5408 = vpop.f32.mrf.mxu0
      %v5409 = vadd.f32 %v5008, %v5408
      %v5410 = vpop.f32.mrf.mxu0
      %5411 = vmatprep.mubr.bf16.mxu0 0
      %5412 = vmatmul.mubr.bf16.gmra.mxu0 %v5129
      %v5413 = vpop.f32.mrf.mxu0
      %v5414 = vadd.f32 %v5008, %v5413
      %v5415 = vpop.f32.mrf.mxu0
      %v5416 = vpop.f32.mrf.mxu0
      %v5417 = vadd.f32 %v5008, %v5416
      %v5418 = vpop.f32.mrf.mxu0
      %5419 = vdwg.mxu0
      %v5420 = vmax.f32 %v5166, 0.0
      %v5421 = vmax.f32 %v5169, 0.0
      %v5422 = vmax.f32 %v5174, 0.0
      %v5423 = vmax.f32 %v5177, 0.0
      %v5424 = vmax.f32 %v5182, 0.0
      %v5425 = vmax.f32 %v5185, 0.0
      %v5426 = vmax.f32 %v5190, 0.0
      %v5427 = vmax.f32 %v5193, 0.0
      %v5428 = vmax.f32 %v5198, 0.0
      %v5429 = vmax.f32 %v5201, 0.0
      %v5430 = vmax.f32 %v5206, 0.0
      %v5431 = vmax.f32 %v5209, 0.0
      %v5432 = vmax.f32 %v5214, 0.0
      %v5433 = vmax.f32 %v5217, 0.0
      %v5434 = vmax.f32 %v5222, 0.0
      %v5435 = vmax.f32 %v5225, 0.0
      %v5436 = vmax.f32 %v5230, 0.0
      %v5437 = vmax.f32 %v5233, 0.0
      %v5438 = vmax.f32 %v5238, 0.0
      %v5439 = vmax.f32 %v5241, 0.0
      %v5440 = vmax.f32 %v5246, 0.0
      %v5441 = vmax.f32 %v5249, 0.0
      %v5442 = vmax.f32 %v5254, 0.0
      %v5443 = vmax.f32 %v5257, 0.0
      %v5444 = vmax.f32 %v5262, 0.0
      %v5445 = vmax.f32 %v5265, 0.0
      %v5446 = vmax.f32 %v5270, 0.0
      %v5447 = vmax.f32 %v5273, 0.0
      %v5448 = vmax.f32 %v5278, 0.0
      %v5449 = vmax.f32 %v5281, 0.0
      %v5450 = vmax.f32 %v5286, 0.0
      %v5451 = vmax.f32 %v5289, 0.0
      %v5452 = vmax.f32 %v5294, 0.0
      %v5453 = vmax.f32 %v5297, 0.0
      %v5454 = vmax.f32 %v5302, 0.0
      %v5455 = vmax.f32 %v5305, 0.0
      %v5456 = vmax.f32 %v5310, 0.0
      %v5457 = vmax.f32 %v5313, 0.0
      %v5458 = vmax.f32 %v5318, 0.0
      %v5459 = vmax.f32 %v5321, 0.0
      %v5460 = vmax.f32 %v5326, 0.0
      %v5461 = vmax.f32 %v5329, 0.0
      %v5462 = vmax.f32 %v5334, 0.0
      %v5463 = vmax.f32 %v5337, 0.0
      %v5464 = vmax.f32 %v5342, 0.0
      %v5465 = vmax.f32 %v5345, 0.0
      %v5466 = vmax.f32 %v5350, 0.0
      %v5467 = vmax.f32 %v5353, 0.0
      %v5468 = vmax.f32 %v5358, 0.0
      %v5469 = vmax.f32 %v5361, 0.0
      %v5470 = vmax.f32 %v5366, 0.0
      %v5471 = vmax.f32 %v5369, 0.0
      %v5472 = vmax.f32 %v5374, 0.0
      %v5473 = vmax.f32 %v5377, 0.0
      %v5474 = vmax.f32 %v5382, 0.0
      %v5475 = vmax.f32 %v5385, 0.0
      %v5476 = vmax.f32 %v5390, 0.0
      %v5477 = vmax.f32 %v5393, 0.0
      %v5478 = vmax.f32 %v5398, 0.0
      %v5479 = vmax.f32 %v5401, 0.0
      %v5480 = vmax.f32 %v5406, 0.0
      %v5481 = vmax.f32 %v5409, 0.0
      %v5482 = vmax.f32 %v5414, 0.0
      %v5483 = vmax.f32 %v5417, 0.0
      %v5484 = vpack.c.bf16 %v5421, %v5420
      %v5485 = vpack.c.bf16 %v5423, %v5422
      %v5486 = vpack.c.bf16 %v5425, %v5424
      %v5487 = vpack.c.bf16 %v5427, %v5426
      %v5488 = vpack.c.bf16 %v5429, %v5428
      %v5489 = vpack.c.bf16 %v5431, %v5430
      %v5490 = vpack.c.bf16 %v5433, %v5432
      %v5491 = vpack.c.bf16 %v5435, %v5434
      %v5492 = vpack.c.bf16 %v5437, %v5436
      %v5493 = vpack.c.bf16 %v5439, %v5438
      %v5494 = vpack.c.bf16 %v5441, %v5440
      %v5495 = vpack.c.bf16 %v5443, %v5442
      %v5496 = vpack.c.bf16 %v5445, %v5444
      %v5497 = vpack.c.bf16 %v5447, %v5446
      %v5498 = vpack.c.bf16 %v5449, %v5448
      %v5499 = vpack.c.bf16 %v5451, %v5450
      %v5500 = vpack.c.bf16 %v5453, %v5452
      %v5501 = vpack.c.bf16 %v5455, %v5454
      %v5502 = vpack.c.bf16 %v5457, %v5456
      %v5503 = vpack.c.bf16 %v5459, %v5458
      %v5504 = vpack.c.bf16 %v5461, %v5460
      %v5505 = vpack.c.bf16 %v5463, %v5462
      %v5506 = vpack.c.bf16 %v5465, %v5464
      %v5507 = vpack.c.bf16 %v5467, %v5466
      %v5508 = vpack.c.bf16 %v5469, %v5468
      %v5509 = vpack.c.bf16 %v5471, %v5470
      %v5510 = vpack.c.bf16 %v5473, %v5472
      %v5511 = vpack.c.bf16 %v5475, %v5474
      %v5512 = vpack.c.bf16 %v5477, %v5476
      %v5513 = vpack.c.bf16 %v5479, %v5478
      %v5514 = vpack.c.bf16 %v5481, %v5480
      %v5515 = vpack.c.bf16 %v5483, %v5482
      %v5516 = vld [vmem:[%s5] sm:$0xf]
      %v5517 = vld [vmem:[%s5 + $0x4] sm:$0xf]
      %v5518 = vld [vmem:[%s5 + $0x8] sm:$0xf]
      %v5519 = vld [vmem:[%s5 + $0xc] sm:$0xf]
      %v5520 = vld [vmem:[%s5 + $0x10] sm:$0xf]
      %v5521 = vld [vmem:[%s5 + $0x14] sm:$0xf]
      %v5522 = vld [vmem:[%s5 + $0x18] sm:$0xf]
      %v5523 = vld [vmem:[%s5 + $0x1c] sm:$0xf]
      %v5524 = vld [vmem:[%s8 + $0x5] sm:$0x1]
      %v5526 = vlaneseq
      %v5527 = vshrl.u32 %v5526, 7
      %v5528 = vsub.s32 0, %v5527
      %v5529 = vrot.slane %v5524, %v5528
      %v5539 = vunpack.c.l.b16 %v5516
      %v5540 = vunpack.c.l.b16 %v5517
      %v5541 = vunpack.c.l.b16 %v5518
      %v5542 = vunpack.c.l.b16 %v5519
      %v5543 = vunpack.c.l.b16 %v5520
      %v5544 = vunpack.c.l.b16 %v5521
      %v5545 = vunpack.c.l.b16 %v5522
      %v5546 = vunpack.c.l.b16 %v5523
      %v5547 = vpack.c.b16 %v5540, %v5539
      %v5548 = vpack.c.b16 %v5542, %v5541
      %v5549 = vpack.c.b16 %v5544, %v5543
      %v5550 = vpack.c.b16 %v5546, %v5545
      %v5556 = vsel %vm5034, %v5484, 0
      %v5559 = vsel %vm5034, %v5485, 0
      %v5562 = vsel %vm5034, %v5486, 0
      %v5565 = vsel %vm5034, %v5487, 0
      %v5568 = vsel %vm5034, %v5488, 0
      %v5571 = vsel %vm5034, %v5489, 0
      %v5574 = vsel %vm5034, %v5490, 0
      %v5577 = vsel %vm5034, %v5491, 0
      %v5580 = vsel %vm5034, %v5492, 0
      %v5583 = vsel %vm5034, %v5493, 0
      %v5586 = vsel %vm5034, %v5494, 0
      %v5589 = vsel %vm5034, %v5495, 0
      %v5592 = vsel %vm5034, %v5496, 0
      %v5595 = vsel %vm5034, %v5497, 0
      %v5598 = vsel %vm5034, %v5498, 0
      %v5601 = vsel %vm5034, %v5499, 0
      %v5604 = vsel %vm5034, %v5500, 0
      %v5607 = vsel %vm5034, %v5501, 0
      %v5610 = vsel %vm5034, %v5502, 0
      %v5613 = vsel %vm5034, %v5503, 0
      %v5616 = vsel %vm5034, %v5504, 0
      %v5619 = vsel %vm5034, %v5505, 0
      %v5622 = vsel %vm5034, %v5506, 0
      %v5625 = vsel %vm5034, %v5507, 0
      %v5628 = vsel %vm5034, %v5508, 0
      %v5631 = vsel %vm5034, %v5509, 0
      %v5634 = vsel %vm5034, %v5510, 0
      %v5637 = vsel %vm5034, %v5511, 0
      %v5640 = vsel %vm5034, %v5512, 0
      %v5643 = vsel %vm5034, %v5513, 0
      %v5646 = vsel %vm5034, %v5514, 0
      %v5649 = vsel %vm5034, %v5515, 0
      %5651 = vmatprep.subr.bf16.mxu0 0
      %5652 = vmatpush1.bf16.msra.mxu0 0
      %5653 = vmatprep.subr.bf16.mxu0 0
      %5654 = vmatpush1.bf16.msra.mxu0 0
      %5655 = vmatprep.subr.bf16.mxu0 0
      %5656 = vmatpush1.bf16.msra.mxu0 0
      %5657 = vmatprep.subr.bf16.mxu0 0
      %5658 = vmatpush1.bf16.msra.mxu0 0
      %5659 = vmatprep.subr.bf16.mxu0 0
      %5660 = vmatpush1.bf16.msra.mxu0 %v5550
      %5661 = vmatprep.subr.bf16.mxu0 0
      %5662 = vmatpush1.bf16.msra.mxu0 %v5549
      %5663 = vmatprep.subr.bf16.mxu0 0
      %5664 = vmatpush1.bf16.msra.mxu0 %v5548
      %5665 = vmatprep.subr.bf16.mxu0 0
      %5666 = vmatpush1.bf16.msra.mxu0 %v5547
      %5667 = vmatprep.subr.bf16.mxu0 0
      %5668 = vmatpush2.bf16.msra.mxu0 0
      %5669 = vmatprep.subr.bf16.mxu0 0
      %5670 = vmatpush2.bf16.msra.mxu0 0
      %5671 = vmatprep.subr.bf16.mxu0 0
      %5672 = vmatpush2.bf16.msra.mxu0 0
      %5673 = vmatprep.subr.bf16.mxu0 0
      %5674 = vmatpush2.bf16.msra.mxu0 0
      %5675 = vmatprep.subr.bf16.mxu0 0
      %5676 = vmatpush2.bf16.msra.mxu0 0
      %5677 = vmatprep.subr.bf16.mxu0 0
      %5678 = vmatpush2.bf16.msra.mxu0 0
      %5679 = vmatprep.subr.bf16.mxu0 0
      %5680 = vmatpush2.bf16.msra.mxu0 0
      %5681 = vmatprep.subr.bf16.mxu0 0
      %5682 = vmatpush2.bf16.msra.mxu0 0
      %5683 = vmatprep.mubr.bf16.mxu0 0
      %5684 = vmatmul.mubr.bf16.gmra.mxu0 %v5556
      %v5685 = vpop.f32.mrf.mxu0
      %v5686 = vadd.f32 %v5529, %v5685
      %v5687 = vpop.f32.mrf.mxu0
      %v5688 = vpop.f32.mrf.mxu0
      %v5689 = vadd.f32 %v5529, %v5688
      %v5690 = vpop.f32.mrf.mxu0
      %5691 = vmatprep.mubr.bf16.mxu0 0
      %5692 = vmatmul.mubr.bf16.gmra.mxu0 %v5559
      %v5693 = vpop.f32.mrf.mxu0
      %v5694 = vadd.f32 %v5529, %v5693
      %v5695 = vpop.f32.mrf.mxu0
      %v5696 = vpop.f32.mrf.mxu0
      %v5697 = vadd.f32 %v5529, %v5696
      %v5698 = vpop.f32.mrf.mxu0
      %5699 = vmatprep.mubr.bf16.mxu0 0
      %5700 = vmatmul.mubr.bf16.gmra.mxu0 %v5562
      %v5701 = vpop.f32.mrf.mxu0
      %v5702 = vadd.f32 %v5529, %v5701
      %v5703 = vpop.f32.mrf.mxu0
      %v5704 = vpop.f32.mrf.mxu0
      %v5705 = vadd.f32 %v5529, %v5704
      %v5706 = vpop.f32.mrf.mxu0
      %5707 = vmatprep.mubr.bf16.mxu0 0
      %5708 = vmatmul.mubr.bf16.gmra.mxu0 %v5565
      %v5709 = vpop.f32.mrf.mxu0
      %v5710 = vadd.f32 %v5529, %v5709
      %v5711 = vpop.f32.mrf.mxu0
      %v5712 = vpop.f32.mrf.mxu0
      %v5713 = vadd.f32 %v5529, %v5712
      %v5714 = vpop.f32.mrf.mxu0
      %5715 = vmatprep.mubr.bf16.mxu0 0
      %5716 = vmatmul.mubr.bf16.gmra.mxu0 %v5568
      %v5717 = vpop.f32.mrf.mxu0
      %v5718 = vadd.f32 %v5529, %v5717
      %v5719 = vpop.f32.mrf.mxu0
      %v5720 = vpop.f32.mrf.mxu0
      %v5721 = vadd.f32 %v5529, %v5720
      %v5722 = vpop.f32.mrf.mxu0
      %5723 = vmatprep.mubr.bf16.mxu0 0
      %5724 = vmatmul.mubr.bf16.gmra.mxu0 %v5571
      %v5725 = vpop.f32.mrf.mxu0
      %v5726 = vadd.f32 %v5529, %v5725
      %v5727 = vpop.f32.mrf.mxu0
      %v5728 = vpop.f32.mrf.mxu0
      %v5729 = vadd.f32 %v5529, %v5728
      %v5730 = vpop.f32.mrf.mxu0
      %5731 = vmatprep.mubr.bf16.mxu0 0
      %5732 = vmatmul.mubr.bf16.gmra.mxu0 %v5574
      %v5733 = vpop.f32.mrf.mxu0
      %v5734 = vadd.f32 %v5529, %v5733
      %v5735 = vpop.f32.mrf.mxu0
      %v5736 = vpop.f32.mrf.mxu0
      %v5737 = vadd.f32 %v5529, %v5736
      %v5738 = vpop.f32.mrf.mxu0
      %5739 = vmatprep.mubr.bf16.mxu0 0
      %5740 = vmatmul.mubr.bf16.gmra.mxu0 %v5577
      %v5741 = vpop.f32.mrf.mxu0
      %v5742 = vadd.f32 %v5529, %v5741
      %v5743 = vpop.f32.mrf.mxu0
      %v5744 = vpop.f32.mrf.mxu0
      %v5745 = vadd.f32 %v5529, %v5744
      %v5746 = vpop.f32.mrf.mxu0
      %5747 = vmatprep.mubr.bf16.mxu0 0
      %5748 = vmatmul.mubr.bf16.gmra.mxu0 %v5580
      %v5749 = vpop.f32.mrf.mxu0
      %v5750 = vadd.f32 %v5529, %v5749
      %v5751 = vpop.f32.mrf.mxu0
      %v5752 = vpop.f32.mrf.mxu0
      %v5753 = vadd.f32 %v5529, %v5752
      %v5754 = vpop.f32.mrf.mxu0
      %5755 = vmatprep.mubr.bf16.mxu0 0
      %5756 = vmatmul.mubr.bf16.gmra.mxu0 %v5583
      %v5757 = vpop.f32.mrf.mxu0
      %v5758 = vadd.f32 %v5529, %v5757
      %v5759 = vpop.f32.mrf.mxu0
      %v5760 = vpop.f32.mrf.mxu0
      %v5761 = vadd.f32 %v5529, %v5760
      %v5762 = vpop.f32.mrf.mxu0
      %5763 = vmatprep.mubr.bf16.mxu0 0
      %5764 = vmatmul.mubr.bf16.gmra.mxu0 %v5586
      %v5765 = vpop.f32.mrf.mxu0
      %v5766 = vadd.f32 %v5529, %v5765
      %v5767 = vpop.f32.mrf.mxu0
      %v5768 = vpop.f32.mrf.mxu0
      %v5769 = vadd.f32 %v5529, %v5768
      %v5770 = vpop.f32.mrf.mxu0
      %5771 = vmatprep.mubr.bf16.mxu0 0
      %5772 = vmatmul.mubr.bf16.gmra.mxu0 %v5589
      %v5773 = vpop.f32.mrf.mxu0
      %v5774 = vadd.f32 %v5529, %v5773
      %v5775 = vpop.f32.mrf.mxu0
      %v5776 = vpop.f32.mrf.mxu0
      %v5777 = vadd.f32 %v5529, %v5776
      %v5778 = vpop.f32.mrf.mxu0
      %5779 = vmatprep.mubr.bf16.mxu0 0
      %5780 = vmatmul.mubr.bf16.gmra.mxu0 %v5592
      %v5781 = vpop.f32.mrf.mxu0
      %v5782 = vadd.f32 %v5529, %v5781
      %v5783 = vpop.f32.mrf.mxu0
      %v5784 = vpop.f32.mrf.mxu0
      %v5785 = vadd.f32 %v5529, %v5784
      %v5786 = vpop.f32.mrf.mxu0
      %5787 = vmatprep.mubr.bf16.mxu0 0
      %5788 = vmatmul.mubr.bf16.gmra.mxu0 %v5595
      %v5789 = vpop.f32.mrf.mxu0
      %v5790 = vadd.f32 %v5529, %v5789
      %v5791 = vpop.f32.mrf.mxu0
      %v5792 = vpop.f32.mrf.mxu0
      %v5793 = vadd.f32 %v5529, %v5792
      %v5794 = vpop.f32.mrf.mxu0
      %5795 = vmatprep.mubr.bf16.mxu0 0
      %5796 = vmatmul.mubr.bf16.gmra.mxu0 %v5598
      %v5797 = vpop.f32.mrf.mxu0
      %v5798 = vadd.f32 %v5529, %v5797
      %v5799 = vpop.f32.mrf.mxu0
      %v5800 = vpop.f32.mrf.mxu0
      %v5801 = vadd.f32 %v5529, %v5800
      %v5802 = vpop.f32.mrf.mxu0
      %5803 = vmatprep.mubr.bf16.mxu0 0
      %5804 = vmatmul.mubr.bf16.gmra.mxu0 %v5601
      %v5805 = vpop.f32.mrf.mxu0
      %v5806 = vadd.f32 %v5529, %v5805
      %v5807 = vpop.f32.mrf.mxu0
      %v5808 = vpop.f32.mrf.mxu0
      %v5809 = vadd.f32 %v5529, %v5808
      %v5810 = vpop.f32.mrf.mxu0
      %5811 = vmatprep.mubr.bf16.mxu0 0
      %5812 = vmatmul.mubr.bf16.gmra.mxu0 %v5604
      %v5813 = vpop.f32.mrf.mxu0
      %v5814 = vadd.f32 %v5529, %v5813
      %v5815 = vpop.f32.mrf.mxu0
      %v5816 = vpop.f32.mrf.mxu0
      %v5817 = vadd.f32 %v5529, %v5816
      %v5818 = vpop.f32.mrf.mxu0
      %5819 = vmatprep.mubr.bf16.mxu0 0
      %5820 = vmatmul.mubr.bf16.gmra.mxu0 %v5607
      %v5821 = vpop.f32.mrf.mxu0
      %v5822 = vadd.f32 %v5529, %v5821
      %v5823 = vpop.f32.mrf.mxu0
      %v5824 = vpop.f32.mrf.mxu0
      %v5825 = vadd.f32 %v5529, %v5824
      %v5826 = vpop.f32.mrf.mxu0
      %5827 = vmatprep.mubr.bf16.mxu0 0
      %5828 = vmatmul.mubr.bf16.gmra.mxu0 %v5610
      %v5829 = vpop.f32.mrf.mxu0
      %v5830 = vadd.f32 %v5529, %v5829
      %v5831 = vpop.f32.mrf.mxu0
      %v5832 = vpop.f32.mrf.mxu0
      %v5833 = vadd.f32 %v5529, %v5832
      %v5834 = vpop.f32.mrf.mxu0
      %5835 = vmatprep.mubr.bf16.mxu0 0
      %5836 = vmatmul.mubr.bf16.gmra.mxu0 %v5613
      %v5837 = vpop.f32.mrf.mxu0
      %v5838 = vadd.f32 %v5529, %v5837
      %v5839 = vpop.f32.mrf.mxu0
      %v5840 = vpop.f32.mrf.mxu0
      %v5841 = vadd.f32 %v5529, %v5840
      %v5842 = vpop.f32.mrf.mxu0
      %5843 = vmatprep.mubr.bf16.mxu0 0
      %5844 = vmatmul.mubr.bf16.gmra.mxu0 %v5616
      %v5845 = vpop.f32.mrf.mxu0
      %v5846 = vadd.f32 %v5529, %v5845
      %v5847 = vpop.f32.mrf.mxu0
      %v5848 = vpop.f32.mrf.mxu0
      %v5849 = vadd.f32 %v5529, %v5848
      %v5850 = vpop.f32.mrf.mxu0
      %5851 = vmatprep.mubr.bf16.mxu0 0
      %5852 = vmatmul.mubr.bf16.gmra.mxu0 %v5619
      %v5853 = vpop.f32.mrf.mxu0
      %v5854 = vadd.f32 %v5529, %v5853
      %v5855 = vpop.f32.mrf.mxu0
      %v5856 = vpop.f32.mrf.mxu0
      %v5857 = vadd.f32 %v5529, %v5856
      %v5858 = vpop.f32.mrf.mxu0
      %5859 = vmatprep.mubr.bf16.mxu0 0
      %5860 = vmatmul.mubr.bf16.gmra.mxu0 %v5622
      %v5861 = vpop.f32.mrf.mxu0
      %v5862 = vadd.f32 %v5529, %v5861
      %v5863 = vpop.f32.mrf.mxu0
      %v5864 = vpop.f32.mrf.mxu0
      %v5865 = vadd.f32 %v5529, %v5864
      %v5866 = vpop.f32.mrf.mxu0
      %5867 = vmatprep.mubr.bf16.mxu0 0
      %5868 = vmatmul.mubr.bf16.gmra.mxu0 %v5625
      %v5869 = vpop.f32.mrf.mxu0
      %v5870 = vadd.f32 %v5529, %v5869
      %v5871 = vpop.f32.mrf.mxu0
      %v5872 = vpop.f32.mrf.mxu0
      %v5873 = vadd.f32 %v5529, %v5872
      %v5874 = vpop.f32.mrf.mxu0
      %5875 = vmatprep.mubr.bf16.mxu0 0
      %5876 = vmatmul.mubr.bf16.gmra.mxu0 %v5628
      %v5877 = vpop.f32.mrf.mxu0
      %v5878 = vadd.f32 %v5529, %v5877
      %v5879 = vpop.f32.mrf.mxu0
      %v5880 = vpop.f32.mrf.mxu0
      %v5881 = vadd.f32 %v5529, %v5880
      %v5882 = vpop.f32.mrf.mxu0
      %5883 = vmatprep.mubr.bf16.mxu0 0
      %5884 = vmatmul.mubr.bf16.gmra.mxu0 %v5631
      %v5885 = vpop.f32.mrf.mxu0
      %v5886 = vadd.f32 %v5529, %v5885
      %v5887 = vpop.f32.mrf.mxu0
      %v5888 = vpop.f32.mrf.mxu0
      %v5889 = vadd.f32 %v5529, %v5888
      %v5890 = vpop.f32.mrf.mxu0
      %5891 = vmatprep.mubr.bf16.mxu0 0
      %5892 = vmatmul.mubr.bf16.gmra.mxu0 %v5634
      %v5893 = vpop.f32.mrf.mxu0
      %v5894 = vadd.f32 %v5529, %v5893
      %v5895 = vpop.f32.mrf.mxu0
      %v5896 = vpop.f32.mrf.mxu0
      %v5897 = vadd.f32 %v5529, %v5896
      %v5898 = vpop.f32.mrf.mxu0
      %5899 = vmatprep.mubr.bf16.mxu0 0
      %5900 = vmatmul.mubr.bf16.gmra.mxu0 %v5637
      %v5901 = vpop.f32.mrf.mxu0
      %v5902 = vadd.f32 %v5529, %v5901
      %v5903 = vpop.f32.mrf.mxu0
      %v5904 = vpop.f32.mrf.mxu0
      %v5905 = vadd.f32 %v5529, %v5904
      %v5906 = vpop.f32.mrf.mxu0
      %5907 = vmatprep.mubr.bf16.mxu0 0
      %5908 = vmatmul.mubr.bf16.gmra.mxu0 %v5640
      %v5909 = vpop.f32.mrf.mxu0
      %v5910 = vadd.f32 %v5529, %v5909
      %v5911 = vpop.f32.mrf.mxu0
      %v5912 = vpop.f32.mrf.mxu0
      %v5913 = vadd.f32 %v5529, %v5912
      %v5914 = vpop.f32.mrf.mxu0
      %5915 = vmatprep.mubr.bf16.mxu0 0
      %5916 = vmatmul.mubr.bf16.gmra.mxu0 %v5643
      %v5917 = vpop.f32.mrf.mxu0
      %v5918 = vadd.f32 %v5529, %v5917
      %v5919 = vpop.f32.mrf.mxu0
      %v5920 = vpop.f32.mrf.mxu0
      %v5921 = vadd.f32 %v5529, %v5920
      %v5922 = vpop.f32.mrf.mxu0
      %5923 = vmatprep.mubr.bf16.mxu0 0
      %5924 = vmatmul.mubr.bf16.gmra.mxu0 %v5646
      %v5925 = vpop.f32.mrf.mxu0
      %v5926 = vadd.f32 %v5529, %v5925
      %v5927 = vpop.f32.mrf.mxu0
      %v5928 = vpop.f32.mrf.mxu0
      %v5929 = vadd.f32 %v5529, %v5928
      %v5930 = vpop.f32.mrf.mxu0
      %5931 = vmatprep.mubr.bf16.mxu0 0
      %5932 = vmatmul.mubr.bf16.gmra.mxu0 %v5649
      %v5933 = vpop.f32.mrf.mxu0
      %v5934 = vadd.f32 %v5529, %v5933
      %v5935 = vpop.f32.mrf.mxu0
      %v5936 = vpop.f32.mrf.mxu0
      %v5937 = vadd.f32 %v5529, %v5936
      %v5938 = vpop.f32.mrf.mxu0
      %5939 = vdwg.mxu0
      %v5940 = vmax.f32 %v5686, 0.0
      %v5941 = vmax.f32 %v5689, 0.0
      %v5942 = vmax.f32 %v5694, 0.0
      %v5943 = vmax.f32 %v5697, 0.0
      %v5944 = vmax.f32 %v5702, 0.0
      %v5945 = vmax.f32 %v5705, 0.0
      %v5946 = vmax.f32 %v5710, 0.0
      %v5947 = vmax.f32 %v5713, 0.0
      %v5948 = vmax.f32 %v5718, 0.0
      %v5949 = vmax.f32 %v5721, 0.0
      %v5950 = vmax.f32 %v5726, 0.0
      %v5951 = vmax.f32 %v5729, 0.0
      %v5952 = vmax.f32 %v5734, 0.0
      %v5953 = vmax.f32 %v5737, 0.0
      %v5954 = vmax.f32 %v5742, 0.0
      %v5955 = vmax.f32 %v5745, 0.0
      %v5956 = vmax.f32 %v5750, 0.0
      %v5957 = vmax.f32 %v5753, 0.0
      %v5958 = vmax.f32 %v5758, 0.0
      %v5959 = vmax.f32 %v5761, 0.0
      %v5960 = vmax.f32 %v5766, 0.0
      %v5961 = vmax.f32 %v5769, 0.0
      %v5962 = vmax.f32 %v5774, 0.0
      %v5963 = vmax.f32 %v5777, 0.0
      %v5964 = vmax.f32 %v5782, 0.0
      %v5965 = vmax.f32 %v5785, 0.0
      %v5966 = vmax.f32 %v5790, 0.0
      %v5967 = vmax.f32 %v5793, 0.0
      %v5968 = vmax.f32 %v5798, 0.0
      %v5969 = vmax.f32 %v5801, 0.0
      %v5970 = vmax.f32 %v5806, 0.0
      %v5971 = vmax.f32 %v5809, 0.0
      %v5972 = vmax.f32 %v5814, 0.0
      %v5973 = vmax.f32 %v5817, 0.0
      %v5974 = vmax.f32 %v5822, 0.0
      %v5975 = vmax.f32 %v5825, 0.0
      %v5976 = vmax.f32 %v5830, 0.0
      %v5977 = vmax.f32 %v5833, 0.0
      %v5978 = vmax.f32 %v5838, 0.0
      %v5979 = vmax.f32 %v5841, 0.0
      %v5980 = vmax.f32 %v5846, 0.0
      %v5981 = vmax.f32 %v5849, 0.0
      %v5982 = vmax.f32 %v5854, 0.0
      %v5983 = vmax.f32 %v5857, 0.0
      %v5984 = vmax.f32 %v5862, 0.0
      %v5985 = vmax.f32 %v5865, 0.0
      %v5986 = vmax.f32 %v5870, 0.0
      %v5987 = vmax.f32 %v5873, 0.0
      %v5988 = vmax.f32 %v5878, 0.0
      %v5989 = vmax.f32 %v5881, 0.0
      %v5990 = vmax.f32 %v5886, 0.0
      %v5991 = vmax.f32 %v5889, 0.0
      %v5992 = vmax.f32 %v5894, 0.0
      %v5993 = vmax.f32 %v5897, 0.0
      %v5994 = vmax.f32 %v5902, 0.0
      %v5995 = vmax.f32 %v5905, 0.0
      %v5996 = vmax.f32 %v5910, 0.0
      %v5997 = vmax.f32 %v5913, 0.0
      %v5998 = vmax.f32 %v5918, 0.0
      %v5999 = vmax.f32 %v5921, 0.0
      %v6000 = vmax.f32 %v5926, 0.0
      %v6001 = vmax.f32 %v5929, 0.0
      %v6002 = vmax.f32 %v5934, 0.0
      %v6003 = vmax.f32 %v5937, 0.0
      %v6004 = vpack.c.bf16 %v5941, %v5940
      %v6005 = vpack.c.bf16 %v5943, %v5942
      %v6006 = vpack.c.bf16 %v5945, %v5944
      %v6007 = vpack.c.bf16 %v5947, %v5946
      %v6008 = vpack.c.bf16 %v5949, %v5948
      %v6009 = vpack.c.bf16 %v5951, %v5950
      %v6010 = vpack.c.bf16 %v5953, %v5952
      %v6011 = vpack.c.bf16 %v5955, %v5954
      %v6012 = vpack.c.bf16 %v5957, %v5956
      %v6013 = vpack.c.bf16 %v5959, %v5958
      %v6014 = vpack.c.bf16 %v5961, %v5960
      %v6015 = vpack.c.bf16 %v5963, %v5962
      %v6016 = vpack.c.bf16 %v5965, %v5964
      %v6017 = vpack.c.bf16 %v5967, %v5966
      %v6018 = vpack.c.bf16 %v5969, %v5968
      %v6019 = vpack.c.bf16 %v5971, %v5970
      %v6020 = vpack.c.bf16 %v5973, %v5972
      %v6021 = vpack.c.bf16 %v5975, %v5974
      %v6022 = vpack.c.bf16 %v5977, %v5976
      %v6023 = vpack.c.bf16 %v5979, %v5978
      %v6024 = vpack.c.bf16 %v5981, %v5980
      %v6025 = vpack.c.bf16 %v5983, %v5982
      %v6026 = vpack.c.bf16 %v5985, %v5984
      %v6027 = vpack.c.bf16 %v5987, %v5986
      %v6028 = vpack.c.bf16 %v5989, %v5988
      %v6029 = vpack.c.bf16 %v5991, %v5990
      %v6030 = vpack.c.bf16 %v5993, %v5992
      %v6031 = vpack.c.bf16 %v5995, %v5994
      %v6032 = vpack.c.bf16 %v5997, %v5996
      %v6033 = vpack.c.bf16 %v5999, %v5998
      %v6034 = vpack.c.bf16 %v6001, %v6000
      %v6035 = vpack.c.bf16 %v6003, %v6002
      %v6036 = vld [vmem:[%s6] sm:$0xff]
      %v6037 = vld [vmem:[%s6 + $0x8] sm:$0xff]
      %v6038 = vld [vmem:[%s6 + $0x10] sm:$0xff]
      %v6039 = vld [vmem:[%s6 + $0x18] sm:$0xff]
      %v6040 = vld [vmem:[%s6 + $0x20] sm:$0xff]
      %v6041 = vld [vmem:[%s6 + $0x28] sm:$0xff]
      %v6042 = vld [vmem:[%s6 + $0x30] sm:$0xff]
      %v6043 = vld [vmem:[%s6 + $0x38] sm:$0xff]
      %v6044 = vld [vmem:[%s6 + $0x40] sm:$0xff]
      %v6045 = vld [vmem:[%s6 + $0x48] sm:$0xff]
      %v6046 = vld [vmem:[%s6 + $0x50] sm:$0xff]
      %v6047 = vld [vmem:[%s6 + $0x58] sm:$0xff]
      %v6048 = vld [vmem:[%s6 + $0x60] sm:$0xff]
      %v6049 = vld [vmem:[%s6 + $0x68] sm:$0xff]
      %v6050 = vld [vmem:[%s6 + $0x70] sm:$0xff]
      %v6051 = vld [vmem:[%s6 + $0x78] sm:$0xff]
      %v6052 = vld [vmem:[%s8 + $0x6] sm:$0x3]
      %v6054 = vlaneseq
      %v6055 = vshrl.u32 %v6054, 7
      %v6056 = vsub.s32 0, %v6055
      %v6057 = vrot.slane %v6052, %v6056
      %v6058 = vlaneseq
      %v6059 = vshrl.u32 %v6058, 7
      %v6060 = vsub.s32 1, %v6059
      %v6061 = vrot.slane %v6052, %v6060
      %v6080 = vunpack.c.l.b16 %v6036
      %v6081 = vunpack.c.h.b16 %v6036
      %v6082 = vunpack.c.l.b16 %v6037
      %v6083 = vunpack.c.h.b16 %v6037
      %v6084 = vunpack.c.l.b16 %v6038
      %v6085 = vunpack.c.h.b16 %v6038
      %v6086 = vunpack.c.l.b16 %v6039
      %v6087 = vunpack.c.h.b16 %v6039
      %v6088 = vunpack.c.l.b16 %v6040
      %v6089 = vunpack.c.h.b16 %v6040
      %v6090 = vunpack.c.l.b16 %v6041
      %v6091 = vunpack.c.h.b16 %v6041
      %v6092 = vunpack.c.l.b16 %v6042
      %v6093 = vunpack.c.h.b16 %v6042
      %v6094 = vunpack.c.l.b16 %v6043
      %v6095 = vunpack.c.h.b16 %v6043
      %v6096 = vunpack.c.l.b16 %v6044
      %v6097 = vunpack.c.h.b16 %v6044
      %v6098 = vunpack.c.l.b16 %v6045
      %v6099 = vunpack.c.h.b16 %v6045
      %v6100 = vunpack.c.l.b16 %v6046
      %v6101 = vunpack.c.h.b16 %v6046
      %v6102 = vunpack.c.l.b16 %v6047
      %v6103 = vunpack.c.h.b16 %v6047
      %v6104 = vunpack.c.l.b16 %v6048
      %v6105 = vunpack.c.h.b16 %v6048
      %v6106 = vunpack.c.l.b16 %v6049
      %v6107 = vunpack.c.h.b16 %v6049
      %v6108 = vunpack.c.l.b16 %v6050
      %v6109 = vunpack.c.h.b16 %v6050
      %v6110 = vunpack.c.l.b16 %v6051
      %v6111 = vunpack.c.h.b16 %v6051
      %v6112 = vpack.c.b16 %v6082, %v6080
      %v6113 = vpack.c.b16 %v6083, %v6081
      %v6114 = vpack.c.b16 %v6086, %v6084
      %v6115 = vpack.c.b16 %v6087, %v6085
      %v6116 = vpack.c.b16 %v6090, %v6088
      %v6117 = vpack.c.b16 %v6091, %v6089
      %v6118 = vpack.c.b16 %v6094, %v6092
      %v6119 = vpack.c.b16 %v6095, %v6093
      %v6120 = vpack.c.b16 %v6098, %v6096
      %v6121 = vpack.c.b16 %v6099, %v6097
      %v6122 = vpack.c.b16 %v6102, %v6100
      %v6123 = vpack.c.b16 %v6103, %v6101
      %v6124 = vpack.c.b16 %v6106, %v6104
      %v6125 = vpack.c.b16 %v6107, %v6105
      %v6126 = vpack.c.b16 %v6110, %v6108
      %v6127 = vpack.c.b16 %v6111, %v6109
      %6144 = vmatprep.subr.bf16.mxu0 %v6127
      %6145 = vmatpush1.bf16.msra.mxu0 %v6126
      %6146 = vmatprep.subr.bf16.mxu0 %v6125
      %6147 = vmatpush1.bf16.msra.mxu0 %v6124
      %6148 = vmatprep.subr.bf16.mxu0 %v6123
      %6149 = vmatpush1.bf16.msra.mxu0 %v6122
      %6150 = vmatprep.subr.bf16.mxu0 %v6121
      %6151 = vmatpush1.bf16.msra.mxu0 %v6120
      %6152 = vmatprep.subr.bf16.mxu0 %v6119
      %6153 = vmatpush1.bf16.msra.mxu0 %v6118
      %6154 = vmatprep.subr.bf16.mxu0 %v6117
      %6155 = vmatpush1.bf16.msra.mxu0 %v6116
      %6156 = vmatprep.subr.bf16.mxu0 %v6115
      %6157 = vmatpush1.bf16.msra.mxu0 %v6114
      %6158 = vmatprep.subr.bf16.mxu0 %v6113
      %6159 = vmatpush1.bf16.msra.mxu0 %v6112
      %6160 = vmatprep.subr.bf16.mxu0 0
      %6161 = vmatpush2.bf16.msra.mxu0 0
      %6162 = vmatprep.subr.bf16.mxu0 0
      %6163 = vmatpush2.bf16.msra.mxu0 0
      %6164 = vmatprep.subr.bf16.mxu0 0
      %6165 = vmatpush2.bf16.msra.mxu0 0
      %6166 = vmatprep.subr.bf16.mxu0 0
      %6167 = vmatpush2.bf16.msra.mxu0 0
      %6168 = vmatprep.subr.bf16.mxu0 0
      %6169 = vmatpush2.bf16.msra.mxu0 0
      %6170 = vmatprep.subr.bf16.mxu0 0
      %6171 = vmatpush2.bf16.msra.mxu0 0
      %6172 = vmatprep.subr.bf16.mxu0 0
      %6173 = vmatpush2.bf16.msra.mxu0 0
      %6174 = vmatprep.subr.bf16.mxu0 0
      %6175 = vmatpush2.bf16.msra.mxu0 0
      %6176 = vmatprep.mubr.bf16.mxu0 0
      %6177 = vmatmul.mubr.bf16.gmra.mxu0 %v6004
      %v6178 = vpop.f32.mrf.mxu0
      %v6179 = vadd.f32 %v6057, %v6178
      %v6180 = vpop.f32.mrf.mxu0
      %v6181 = vadd.f32 %v6061, %v6180
      %v6182 = vpop.f32.mrf.mxu0
      %v6183 = vadd.f32 %v6057, %v6182
      %v6184 = vpop.f32.mrf.mxu0
      %v6185 = vadd.f32 %v6061, %v6184
      %6186 = vmatprep.mubr.bf16.mxu0 0
      %6187 = vmatmul.mubr.bf16.gmra.mxu0 %v6005
      %v6188 = vpop.f32.mrf.mxu0
      %v6189 = vadd.f32 %v6057, %v6188
      %v6190 = vpop.f32.mrf.mxu0
      %v6191 = vadd.f32 %v6061, %v6190
      %v6192 = vpop.f32.mrf.mxu0
      %v6193 = vadd.f32 %v6057, %v6192
      %v6194 = vpop.f32.mrf.mxu0
      %v6195 = vadd.f32 %v6061, %v6194
      %6196 = vmatprep.mubr.bf16.mxu0 0
      %6197 = vmatmul.mubr.bf16.gmra.mxu0 %v6006
      %v6198 = vpop.f32.mrf.mxu0
      %v6199 = vadd.f32 %v6057, %v6198
      %v6200 = vpop.f32.mrf.mxu0
      %v6201 = vadd.f32 %v6061, %v6200
      %v6202 = vpop.f32.mrf.mxu0
      %v6203 = vadd.f32 %v6057, %v6202
      %v6204 = vpop.f32.mrf.mxu0
      %v6205 = vadd.f32 %v6061, %v6204
      %6206 = vmatprep.mubr.bf16.mxu0 0
      %6207 = vmatmul.mubr.bf16.gmra.mxu0 %v6007
      %v6208 = vpop.f32.mrf.mxu0
      %v6209 = vadd.f32 %v6057, %v6208
      %v6210 = vpop.f32.mrf.mxu0
      %v6211 = vadd.f32 %v6061, %v6210
      %v6212 = vpop.f32.mrf.mxu0
      %v6213 = vadd.f32 %v6057, %v6212
      %v6214 = vpop.f32.mrf.mxu0
      %v6215 = vadd.f32 %v6061, %v6214
      %6216 = vmatprep.mubr.bf16.mxu0 0
      %6217 = vmatmul.mubr.bf16.gmra.mxu0 %v6008
      %v6218 = vpop.f32.mrf.mxu0
      %v6219 = vadd.f32 %v6057, %v6218
      %v6220 = vpop.f32.mrf.mxu0
      %v6221 = vadd.f32 %v6061, %v6220
      %v6222 = vpop.f32.mrf.mxu0
      %v6223 = vadd.f32 %v6057, %v6222
      %v6224 = vpop.f32.mrf.mxu0
      %v6225 = vadd.f32 %v6061, %v6224
      %6226 = vmatprep.mubr.bf16.mxu0 0
      %6227 = vmatmul.mubr.bf16.gmra.mxu0 %v6009
      %v6228 = vpop.f32.mrf.mxu0
      %v6229 = vadd.f32 %v6057, %v6228
      %v6230 = vpop.f32.mrf.mxu0
      %v6231 = vadd.f32 %v6061, %v6230
      %v6232 = vpop.f32.mrf.mxu0
      %v6233 = vadd.f32 %v6057, %v6232
      %v6234 = vpop.f32.mrf.mxu0
      %v6235 = vadd.f32 %v6061, %v6234
      %6236 = vmatprep.mubr.bf16.mxu0 0
      %6237 = vmatmul.mubr.bf16.gmra.mxu0 %v6010
      %v6238 = vpop.f32.mrf.mxu0
      %v6239 = vadd.f32 %v6057, %v6238
      %v6240 = vpop.f32.mrf.mxu0
      %v6241 = vadd.f32 %v6061, %v6240
      %v6242 = vpop.f32.mrf.mxu0
      %v6243 = vadd.f32 %v6057, %v6242
      %v6244 = vpop.f32.mrf.mxu0
      %v6245 = vadd.f32 %v6061, %v6244
      %6246 = vmatprep.mubr.bf16.mxu0 0
      %6247 = vmatmul.mubr.bf16.gmra.mxu0 %v6011
      %v6248 = vpop.f32.mrf.mxu0
      %v6249 = vadd.f32 %v6057, %v6248
      %v6250 = vpop.f32.mrf.mxu0
      %v6251 = vadd.f32 %v6061, %v6250
      %v6252 = vpop.f32.mrf.mxu0
      %v6253 = vadd.f32 %v6057, %v6252
      %v6254 = vpop.f32.mrf.mxu0
      %v6255 = vadd.f32 %v6061, %v6254
      %6256 = vmatprep.mubr.bf16.mxu0 0
      %6257 = vmatmul.mubr.bf16.gmra.mxu0 %v6012
      %v6258 = vpop.f32.mrf.mxu0
      %v6259 = vadd.f32 %v6057, %v6258
      %v6260 = vpop.f32.mrf.mxu0
      %v6261 = vadd.f32 %v6061, %v6260
      %v6262 = vpop.f32.mrf.mxu0
      %v6263 = vadd.f32 %v6057, %v6262
      %v6264 = vpop.f32.mrf.mxu0
      %v6265 = vadd.f32 %v6061, %v6264
      %6266 = vmatprep.mubr.bf16.mxu0 0
      %6267 = vmatmul.mubr.bf16.gmra.mxu0 %v6013
      %v6268 = vpop.f32.mrf.mxu0
      %v6269 = vadd.f32 %v6057, %v6268
      %v6270 = vpop.f32.mrf.mxu0
      %v6271 = vadd.f32 %v6061, %v6270
      %v6272 = vpop.f32.mrf.mxu0
      %v6273 = vadd.f32 %v6057, %v6272
      %v6274 = vpop.f32.mrf.mxu0
      %v6275 = vadd.f32 %v6061, %v6274
      %6276 = vmatprep.mubr.bf16.mxu0 0
      %6277 = vmatmul.mubr.bf16.gmra.mxu0 %v6014
      %v6278 = vpop.f32.mrf.mxu0
      %v6279 = vadd.f32 %v6057, %v6278
      %v6280 = vpop.f32.mrf.mxu0
      %v6281 = vadd.f32 %v6061, %v6280
      %v6282 = vpop.f32.mrf.mxu0
      %v6283 = vadd.f32 %v6057, %v6282
      %v6284 = vpop.f32.mrf.mxu0
      %v6285 = vadd.f32 %v6061, %v6284
      %6286 = vmatprep.mubr.bf16.mxu0 0
      %6287 = vmatmul.mubr.bf16.gmra.mxu0 %v6015
      %v6288 = vpop.f32.mrf.mxu0
      %v6289 = vadd.f32 %v6057, %v6288
      %v6290 = vpop.f32.mrf.mxu0
      %v6291 = vadd.f32 %v6061, %v6290
      %v6292 = vpop.f32.mrf.mxu0
      %v6293 = vadd.f32 %v6057, %v6292
      %v6294 = vpop.f32.mrf.mxu0
      %v6295 = vadd.f32 %v6061, %v6294
      %6296 = vmatprep.mubr.bf16.mxu0 0
      %6297 = vmatmul.mubr.bf16.gmra.mxu0 %v6016
      %v6298 = vpop.f32.mrf.mxu0
      %v6299 = vadd.f32 %v6057, %v6298
      %v6300 = vpop.f32.mrf.mxu0
      %v6301 = vadd.f32 %v6061, %v6300
      %v6302 = vpop.f32.mrf.mxu0
      %v6303 = vadd.f32 %v6057, %v6302
      %v6304 = vpop.f32.mrf.mxu0
      %v6305 = vadd.f32 %v6061, %v6304
      %6306 = vmatprep.mubr.bf16.mxu0 0
      %6307 = vmatmul.mubr.bf16.gmra.mxu0 %v6017
      %v6308 = vpop.f32.mrf.mxu0
      %v6309 = vadd.f32 %v6057, %v6308
      %v6310 = vpop.f32.mrf.mxu0
      %v6311 = vadd.f32 %v6061, %v6310
      %v6312 = vpop.f32.mrf.mxu0
      %v6313 = vadd.f32 %v6057, %v6312
      %v6314 = vpop.f32.mrf.mxu0
      %v6315 = vadd.f32 %v6061, %v6314
      %6316 = vmatprep.mubr.bf16.mxu0 0
      %6317 = vmatmul.mubr.bf16.gmra.mxu0 %v6018
      %v6318 = vpop.f32.mrf.mxu0
      %v6319 = vadd.f32 %v6057, %v6318
      %v6320 = vpop.f32.mrf.mxu0
      %v6321 = vadd.f32 %v6061, %v6320
      %v6322 = vpop.f32.mrf.mxu0
      %v6323 = vadd.f32 %v6057, %v6322
      %v6324 = vpop.f32.mrf.mxu0
      %v6325 = vadd.f32 %v6061, %v6324
      %6326 = vmatprep.mubr.bf16.mxu0 0
      %6327 = vmatmul.mubr.bf16.gmra.mxu0 %v6019
      %v6328 = vpop.f32.mrf.mxu0
      %v6329 = vadd.f32 %v6057, %v6328
      %v6330 = vpop.f32.mrf.mxu0
      %v6331 = vadd.f32 %v6061, %v6330
      %v6332 = vpop.f32.mrf.mxu0
      %v6333 = vadd.f32 %v6057, %v6332
      %v6334 = vpop.f32.mrf.mxu0
      %v6335 = vadd.f32 %v6061, %v6334
      %6336 = vmatprep.mubr.bf16.mxu0 0
      %6337 = vmatmul.mubr.bf16.gmra.mxu0 %v6020
      %v6338 = vpop.f32.mrf.mxu0
      %v6339 = vadd.f32 %v6057, %v6338
      %v6340 = vpop.f32.mrf.mxu0
      %v6341 = vadd.f32 %v6061, %v6340
      %v6342 = vpop.f32.mrf.mxu0
      %v6343 = vadd.f32 %v6057, %v6342
      %v6344 = vpop.f32.mrf.mxu0
      %v6345 = vadd.f32 %v6061, %v6344
      %6346 = vmatprep.mubr.bf16.mxu0 0
      %6347 = vmatmul.mubr.bf16.gmra.mxu0 %v6021
      %v6348 = vpop.f32.mrf.mxu0
      %v6349 = vadd.f32 %v6057, %v6348
      %v6350 = vpop.f32.mrf.mxu0
      %v6351 = vadd.f32 %v6061, %v6350
      %v6352 = vpop.f32.mrf.mxu0
      %v6353 = vadd.f32 %v6057, %v6352
      %v6354 = vpop.f32.mrf.mxu0
      %v6355 = vadd.f32 %v6061, %v6354
      %6356 = vmatprep.mubr.bf16.mxu0 0
      %6357 = vmatmul.mubr.bf16.gmra.mxu0 %v6022
      %v6358 = vpop.f32.mrf.mxu0
      %v6359 = vadd.f32 %v6057, %v6358
      %v6360 = vpop.f32.mrf.mxu0
      %v6361 = vadd.f32 %v6061, %v6360
      %v6362 = vpop.f32.mrf.mxu0
      %v6363 = vadd.f32 %v6057, %v6362
      %v6364 = vpop.f32.mrf.mxu0
      %v6365 = vadd.f32 %v6061, %v6364
      %6366 = vmatprep.mubr.bf16.mxu0 0
      %6367 = vmatmul.mubr.bf16.gmra.mxu0 %v6023
      %v6368 = vpop.f32.mrf.mxu0
      %v6369 = vadd.f32 %v6057, %v6368
      %v6370 = vpop.f32.mrf.mxu0
      %v6371 = vadd.f32 %v6061, %v6370
      %v6372 = vpop.f32.mrf.mxu0
      %v6373 = vadd.f32 %v6057, %v6372
      %v6374 = vpop.f32.mrf.mxu0
      %v6375 = vadd.f32 %v6061, %v6374
      %6376 = vmatprep.mubr.bf16.mxu0 0
      %6377 = vmatmul.mubr.bf16.gmra.mxu0 %v6024
      %v6378 = vpop.f32.mrf.mxu0
      %v6379 = vadd.f32 %v6057, %v6378
      %v6380 = vpop.f32.mrf.mxu0
      %v6381 = vadd.f32 %v6061, %v6380
      %v6382 = vpop.f32.mrf.mxu0
      %v6383 = vadd.f32 %v6057, %v6382
      %v6384 = vpop.f32.mrf.mxu0
      %v6385 = vadd.f32 %v6061, %v6384
      %6386 = vmatprep.mubr.bf16.mxu0 0
      %6387 = vmatmul.mubr.bf16.gmra.mxu0 %v6025
      %v6388 = vpop.f32.mrf.mxu0
      %v6389 = vadd.f32 %v6057, %v6388
      %v6390 = vpop.f32.mrf.mxu0
      %v6391 = vadd.f32 %v6061, %v6390
      %v6392 = vpop.f32.mrf.mxu0
      %v6393 = vadd.f32 %v6057, %v6392
      %v6394 = vpop.f32.mrf.mxu0
      %v6395 = vadd.f32 %v6061, %v6394
      %6396 = vmatprep.mubr.bf16.mxu0 0
      %6397 = vmatmul.mubr.bf16.gmra.mxu0 %v6026
      %v6398 = vpop.f32.mrf.mxu0
      %v6399 = vadd.f32 %v6057, %v6398
      %v6400 = vpop.f32.mrf.mxu0
      %v6401 = vadd.f32 %v6061, %v6400
      %v6402 = vpop.f32.mrf.mxu0
      %v6403 = vadd.f32 %v6057, %v6402
      %v6404 = vpop.f32.mrf.mxu0
      %v6405 = vadd.f32 %v6061, %v6404
      %6406 = vmatprep.mubr.bf16.mxu0 0
      %6407 = vmatmul.mubr.bf16.gmra.mxu0 %v6027
      %v6408 = vpop.f32.mrf.mxu0
      %v6409 = vadd.f32 %v6057, %v6408
      %v6410 = vpop.f32.mrf.mxu0
      %v6411 = vadd.f32 %v6061, %v6410
      %v6412 = vpop.f32.mrf.mxu0
      %v6413 = vadd.f32 %v6057, %v6412
      %v6414 = vpop.f32.mrf.mxu0
      %v6415 = vadd.f32 %v6061, %v6414
      %6416 = vmatprep.mubr.bf16.mxu0 0
      %6417 = vmatmul.mubr.bf16.gmra.mxu0 %v6028
      %v6418 = vpop.f32.mrf.mxu0
      %v6419 = vadd.f32 %v6057, %v6418
      %v6420 = vpop.f32.mrf.mxu0
      %v6421 = vadd.f32 %v6061, %v6420
      %v6422 = vpop.f32.mrf.mxu0
      %v6423 = vadd.f32 %v6057, %v6422
      %v6424 = vpop.f32.mrf.mxu0
      %v6425 = vadd.f32 %v6061, %v6424
      %6426 = vmatprep.mubr.bf16.mxu0 0
      %6427 = vmatmul.mubr.bf16.gmra.mxu0 %v6029
      %v6428 = vpop.f32.mrf.mxu0
      %v6429 = vadd.f32 %v6057, %v6428
      %v6430 = vpop.f32.mrf.mxu0
      %v6431 = vadd.f32 %v6061, %v6430
      %v6432 = vpop.f32.mrf.mxu0
      %v6433 = vadd.f32 %v6057, %v6432
      %v6434 = vpop.f32.mrf.mxu0
      %v6435 = vadd.f32 %v6061, %v6434
      %6436 = vmatprep.mubr.bf16.mxu0 0
      %6437 = vmatmul.mubr.bf16.gmra.mxu0 %v6030
      %v6438 = vpop.f32.mrf.mxu0
      %v6439 = vadd.f32 %v6057, %v6438
      %v6440 = vpop.f32.mrf.mxu0
      %v6441 = vadd.f32 %v6061, %v6440
      %v6442 = vpop.f32.mrf.mxu0
      %v6443 = vadd.f32 %v6057, %v6442
      %v6444 = vpop.f32.mrf.mxu0
      %v6445 = vadd.f32 %v6061, %v6444
      %6446 = vmatprep.mubr.bf16.mxu0 0
      %6447 = vmatmul.mubr.bf16.gmra.mxu0 %v6031
      %v6448 = vpop.f32.mrf.mxu0
      %v6449 = vadd.f32 %v6057, %v6448
      %v6450 = vpop.f32.mrf.mxu0
      %v6451 = vadd.f32 %v6061, %v6450
      %v6452 = vpop.f32.mrf.mxu0
      %v6453 = vadd.f32 %v6057, %v6452
      %v6454 = vpop.f32.mrf.mxu0
      %v6455 = vadd.f32 %v6061, %v6454
      %6456 = vmatprep.mubr.bf16.mxu0 0
      %6457 = vmatmul.mubr.bf16.gmra.mxu0 %v6032
      %v6458 = vpop.f32.mrf.mxu0
      %v6459 = vadd.f32 %v6057, %v6458
      %v6460 = vpop.f32.mrf.mxu0
      %v6461 = vadd.f32 %v6061, %v6460
      %v6462 = vpop.f32.mrf.mxu0
      %v6463 = vadd.f32 %v6057, %v6462
      %v6464 = vpop.f32.mrf.mxu0
      %v6465 = vadd.f32 %v6061, %v6464
      %6466 = vmatprep.mubr.bf16.mxu0 0
      %6467 = vmatmul.mubr.bf16.gmra.mxu0 %v6033
      %v6468 = vpop.f32.mrf.mxu0
      %v6469 = vadd.f32 %v6057, %v6468
      %v6470 = vpop.f32.mrf.mxu0
      %v6471 = vadd.f32 %v6061, %v6470
      %v6472 = vpop.f32.mrf.mxu0
      %v6473 = vadd.f32 %v6057, %v6472
      %v6474 = vpop.f32.mrf.mxu0
      %v6475 = vadd.f32 %v6061, %v6474
      %6476 = vmatprep.mubr.bf16.mxu0 0
      %6477 = vmatmul.mubr.bf16.gmra.mxu0 %v6034
      %v6478 = vpop.f32.mrf.mxu0
      %v6479 = vadd.f32 %v6057, %v6478
      %v6480 = vpop.f32.mrf.mxu0
      %v6481 = vadd.f32 %v6061, %v6480
      %v6482 = vpop.f32.mrf.mxu0
      %v6483 = vadd.f32 %v6057, %v6482
      %v6484 = vpop.f32.mrf.mxu0
      %v6485 = vadd.f32 %v6061, %v6484
      %6486 = vmatprep.mubr.bf16.mxu0 0
      %6487 = vmatmul.mubr.bf16.gmra.mxu0 %v6035
      %v6488 = vpop.f32.mrf.mxu0
      %v6489 = vadd.f32 %v6057, %v6488
      %v6490 = vpop.f32.mrf.mxu0
      %v6491 = vadd.f32 %v6061, %v6490
      %v6492 = vpop.f32.mrf.mxu0
      %v6493 = vadd.f32 %v6057, %v6492
      %v6494 = vpop.f32.mrf.mxu0
      %v6495 = vadd.f32 %v6061, %v6494
      %6496 = vdwg.mxu0
      %v6497 = vmax.f32 %v6179, 0.0
      %v6498 = vmax.f32 %v6181, 0.0
      %v6499 = vmax.f32 %v6183, 0.0
      %v6500 = vmax.f32 %v6185, 0.0
      %v6501 = vmax.f32 %v6189, 0.0
      %v6502 = vmax.f32 %v6191, 0.0
      %v6503 = vmax.f32 %v6193, 0.0
      %v6504 = vmax.f32 %v6195, 0.0
      %v6505 = vmax.f32 %v6199, 0.0
      %v6506 = vmax.f32 %v6201, 0.0
      %v6507 = vmax.f32 %v6203, 0.0
      %v6508 = vmax.f32 %v6205, 0.0
      %v6509 = vmax.f32 %v6209, 0.0
      %v6510 = vmax.f32 %v6211, 0.0
      %v6511 = vmax.f32 %v6213, 0.0
      %v6512 = vmax.f32 %v6215, 0.0
      %v6513 = vmax.f32 %v6219, 0.0
      %v6514 = vmax.f32 %v6221, 0.0
      %v6515 = vmax.f32 %v6223, 0.0
      %v6516 = vmax.f32 %v6225, 0.0
      %v6517 = vmax.f32 %v6229, 0.0
      %v6518 = vmax.f32 %v6231, 0.0
      %v6519 = vmax.f32 %v6233, 0.0
      %v6520 = vmax.f32 %v6235, 0.0
      %v6521 = vmax.f32 %v6239, 0.0
      %v6522 = vmax.f32 %v6241, 0.0
      %v6523 = vmax.f32 %v6243, 0.0
      %v6524 = vmax.f32 %v6245, 0.0
      %v6525 = vmax.f32 %v6249, 0.0
      %v6526 = vmax.f32 %v6251, 0.0
      %v6527 = vmax.f32 %v6253, 0.0
      %v6528 = vmax.f32 %v6255, 0.0
      %v6529 = vmax.f32 %v6259, 0.0
      %v6530 = vmax.f32 %v6261, 0.0
      %v6531 = vmax.f32 %v6263, 0.0
      %v6532 = vmax.f32 %v6265, 0.0
      %v6533 = vmax.f32 %v6269, 0.0
      %v6534 = vmax.f32 %v6271, 0.0
      %v6535 = vmax.f32 %v6273, 0.0
      %v6536 = vmax.f32 %v6275, 0.0
      %v6537 = vmax.f32 %v6279, 0.0
      %v6538 = vmax.f32 %v6281, 0.0
      %v6539 = vmax.f32 %v6283, 0.0
      %v6540 = vmax.f32 %v6285, 0.0
      %v6541 = vmax.f32 %v6289, 0.0
      %v6542 = vmax.f32 %v6291, 0.0
      %v6543 = vmax.f32 %v6293, 0.0
      %v6544 = vmax.f32 %v6295, 0.0
      %v6545 = vmax.f32 %v6299, 0.0
      %v6546 = vmax.f32 %v6301, 0.0
      %v6547 = vmax.f32 %v6303, 0.0
      %v6548 = vmax.f32 %v6305, 0.0
      %v6549 = vmax.f32 %v6309, 0.0
      %v6550 = vmax.f32 %v6311, 0.0
      %v6551 = vmax.f32 %v6313, 0.0
      %v6552 = vmax.f32 %v6315, 0.0
      %v6553 = vmax.f32 %v6319, 0.0
      %v6554 = vmax.f32 %v6321, 0.0
      %v6555 = vmax.f32 %v6323, 0.0
      %v6556 = vmax.f32 %v6325, 0.0
      %v6557 = vmax.f32 %v6329, 0.0
      %v6558 = vmax.f32 %v6331, 0.0
      %v6559 = vmax.f32 %v6333, 0.0
      %v6560 = vmax.f32 %v6335, 0.0
      %v6561 = vmax.f32 %v6339, 0.0
      %v6562 = vmax.f32 %v6341, 0.0
      %v6563 = vmax.f32 %v6343, 0.0
      %v6564 = vmax.f32 %v6345, 0.0
      %v6565 = vmax.f32 %v6349, 0.0
      %v6566 = vmax.f32 %v6351, 0.0
      %v6567 = vmax.f32 %v6353, 0.0
      %v6568 = vmax.f32 %v6355, 0.0
      %v6569 = vmax.f32 %v6359, 0.0
      %v6570 = vmax.f32 %v6361, 0.0
      %v6571 = vmax.f32 %v6363, 0.0
      %v6572 = vmax.f32 %v6365, 0.0
      %v6573 = vmax.f32 %v6369, 0.0
      %v6574 = vmax.f32 %v6371, 0.0
      %v6575 = vmax.f32 %v6373, 0.0
      %v6576 = vmax.f32 %v6375, 0.0
      %v6577 = vmax.f32 %v6379, 0.0
      %v6578 = vmax.f32 %v6381, 0.0
      %v6579 = vmax.f32 %v6383, 0.0
      %v6580 = vmax.f32 %v6385, 0.0
      %v6581 = vmax.f32 %v6389, 0.0
      %v6582 = vmax.f32 %v6391, 0.0
      %v6583 = vmax.f32 %v6393, 0.0
      %v6584 = vmax.f32 %v6395, 0.0
      %v6585 = vmax.f32 %v6399, 0.0
      %v6586 = vmax.f32 %v6401, 0.0
      %v6587 = vmax.f32 %v6403, 0.0
      %v6588 = vmax.f32 %v6405, 0.0
      %v6589 = vmax.f32 %v6409, 0.0
      %v6590 = vmax.f32 %v6411, 0.0
      %v6591 = vmax.f32 %v6413, 0.0
      %v6592 = vmax.f32 %v6415, 0.0
      %v6593 = vmax.f32 %v6419, 0.0
      %v6594 = vmax.f32 %v6421, 0.0
      %v6595 = vmax.f32 %v6423, 0.0
      %v6596 = vmax.f32 %v6425, 0.0
      %v6597 = vmax.f32 %v6429, 0.0
      %v6598 = vmax.f32 %v6431, 0.0
      %v6599 = vmax.f32 %v6433, 0.0
      %v6600 = vmax.f32 %v6435, 0.0
      %v6601 = vmax.f32 %v6439, 0.0
      %v6602 = vmax.f32 %v6441, 0.0
      %v6603 = vmax.f32 %v6443, 0.0
      %v6604 = vmax.f32 %v6445, 0.0
      %v6605 = vmax.f32 %v6449, 0.0
      %v6606 = vmax.f32 %v6451, 0.0
      %v6607 = vmax.f32 %v6453, 0.0
      %v6608 = vmax.f32 %v6455, 0.0
      %v6609 = vmax.f32 %v6459, 0.0
      %v6610 = vmax.f32 %v6461, 0.0
      %v6611 = vmax.f32 %v6463, 0.0
      %v6612 = vmax.f32 %v6465, 0.0
      %v6613 = vmax.f32 %v6469, 0.0
      %v6614 = vmax.f32 %v6471, 0.0
      %v6615 = vmax.f32 %v6473, 0.0
      %v6616 = vmax.f32 %v6475, 0.0
      %v6617 = vmax.f32 %v6479, 0.0
      %v6618 = vmax.f32 %v6481, 0.0
      %v6619 = vmax.f32 %v6483, 0.0
      %v6620 = vmax.f32 %v6485, 0.0
      %v6621 = vmax.f32 %v6489, 0.0
      %v6622 = vmax.f32 %v6491, 0.0
      %v6623 = vmax.f32 %v6493, 0.0
      %v6624 = vmax.f32 %v6495, 0.0
      %v6625 = vpack.c.bf16 %v6499, %v6497
      %v6626 = vpack.c.bf16 %v6500, %v6498
      %v6627 = vpack.c.bf16 %v6503, %v6501
      %v6628 = vpack.c.bf16 %v6504, %v6502
      %v6629 = vpack.c.bf16 %v6507, %v6505
      %v6630 = vpack.c.bf16 %v6508, %v6506
      %v6631 = vpack.c.bf16 %v6511, %v6509
      %v6632 = vpack.c.bf16 %v6512, %v6510
      %v6633 = vpack.c.bf16 %v6515, %v6513
      %v6634 = vpack.c.bf16 %v6516, %v6514
      %v6635 = vpack.c.bf16 %v6519, %v6517
      %v6636 = vpack.c.bf16 %v6520, %v6518
      %v6637 = vpack.c.bf16 %v6523, %v6521
      %v6638 = vpack.c.bf16 %v6524, %v6522
      %v6639 = vpack.c.bf16 %v6527, %v6525
      %v6640 = vpack.c.bf16 %v6528, %v6526
      %v6641 = vpack.c.bf16 %v6531, %v6529
      %v6642 = vpack.c.bf16 %v6532, %v6530
      %v6643 = vpack.c.bf16 %v6535, %v6533
      %v6644 = vpack.c.bf16 %v6536, %v6534
      %v6645 = vpack.c.bf16 %v6539, %v6537
      %v6646 = vpack.c.bf16 %v6540, %v6538
      %v6647 = vpack.c.bf16 %v6543, %v6541
      %v6648 = vpack.c.bf16 %v6544, %v6542
      %v6649 = vpack.c.bf16 %v6547, %v6545
      %v6650 = vpack.c.bf16 %v6548, %v6546
      %v6651 = vpack.c.bf16 %v6551, %v6549
      %v6652 = vpack.c.bf16 %v6552, %v6550
      %v6653 = vpack.c.bf16 %v6555, %v6553
      %v6654 = vpack.c.bf16 %v6556, %v6554
      %v6655 = vpack.c.bf16 %v6559, %v6557
      %v6656 = vpack.c.bf16 %v6560, %v6558
      %v6657 = vpack.c.bf16 %v6563, %v6561
      %v6658 = vpack.c.bf16 %v6564, %v6562
      %v6659 = vpack.c.bf16 %v6567, %v6565
      %v6660 = vpack.c.bf16 %v6568, %v6566
      %v6661 = vpack.c.bf16 %v6571, %v6569
      %v6662 = vpack.c.bf16 %v6572, %v6570
      %v6663 = vpack.c.bf16 %v6575, %v6573
      %v6664 = vpack.c.bf16 %v6576, %v6574
      %v6665 = vpack.c.bf16 %v6579, %v6577
      %v6666 = vpack.c.bf16 %v6580, %v6578
      %v6667 = vpack.c.bf16 %v6583, %v6581
      %v6668 = vpack.c.bf16 %v6584, %v6582
      %v6669 = vpack.c.bf16 %v6587, %v6585
      %v6670 = vpack.c.bf16 %v6588, %v6586
      %v6671 = vpack.c.bf16 %v6591, %v6589
      %v6672 = vpack.c.bf16 %v6592, %v6590
      %v6673 = vpack.c.bf16 %v6595, %v6593
      %v6674 = vpack.c.bf16 %v6596, %v6594
      %v6675 = vpack.c.bf16 %v6599, %v6597
      %v6676 = vpack.c.bf16 %v6600, %v6598
      %v6677 = vpack.c.bf16 %v6603, %v6601
      %v6678 = vpack.c.bf16 %v6604, %v6602
      %v6679 = vpack.c.bf16 %v6607, %v6605
      %v6680 = vpack.c.bf16 %v6608, %v6606
      %v6681 = vpack.c.bf16 %v6611, %v6609
      %v6682 = vpack.c.bf16 %v6612, %v6610
      %v6683 = vpack.c.bf16 %v6615, %v6613
      %v6684 = vpack.c.bf16 %v6616, %v6614
      %v6685 = vpack.c.bf16 %v6619, %v6617
      %v6686 = vpack.c.bf16 %v6620, %v6618
      %v6687 = vpack.c.bf16 %v6623, %v6621
      %v6688 = vpack.c.bf16 %v6624, %v6622
      %v6689 = vld [vmem:[%s7] sm:$0xff]
      %v6690 = vld [vmem:[%s7 + $0x8] sm:$0xff]
      %v6691 = vld [vmem:[%s7 + $0x10] sm:$0xff]
      %v6692 = vld [vmem:[%s7 + $0x18] sm:$0xf]
      %v6693 = vld [vmem:[%s7 + $0x1c] sm:$0xff]
      %v6694 = vld [vmem:[%s7 + $0x24] sm:$0xff]
      %v6695 = vld [vmem:[%s7 + $0x2c] sm:$0xff]
      %v6696 = vld [vmem:[%s7 + $0x34] sm:$0xf]
      %v6697 = vld [vmem:[%s7 + $0x38] sm:$0xff]
      %v6698 = vld [vmem:[%s7 + $0x40] sm:$0xff]
      %v6699 = vld [vmem:[%s7 + $0x48] sm:$0xff]
      %v6700 = vld [vmem:[%s7 + $0x50] sm:$0xf]
      %v6701 = vld [vmem:[%s7 + $0x54] sm:$0xff]
      %v6702 = vld [vmem:[%s7 + $0x5c] sm:$0xff]
      %v6703 = vld [vmem:[%s7 + $0x64] sm:$0xff]
      %v6704 = vld [vmem:[%s7 + $0x6c] sm:$0xf]
      %v6705 = vld [vmem:[%s7 + $0x70] sm:$0xff]
      %v6706 = vld [vmem:[%s7 + $0x78] sm:$0xff]
      %v6707 = vld [vmem:[%s7 + $0x80] sm:$0xff]
      %v6708 = vld [vmem:[%s7 + $0x88] sm:$0xf]
      %v6709 = vld [vmem:[%s7 + $0x8c] sm:$0xff]
      %v6710 = vld [vmem:[%s7 + $0x94] sm:$0xff]
      %v6711 = vld [vmem:[%s7 + $0x9c] sm:$0xff]
      %v6712 = vld [vmem:[%s7 + $0xa4] sm:$0xf]
      %v6713 = vld [vmem:[%s7 + $0xa8] sm:$0xff]
      %v6714 = vld [vmem:[%s7 + $0xb0] sm:$0xff]
      %v6715 = vld [vmem:[%s7 + $0xb8] sm:$0xff]
      %v6716 = vld [vmem:[%s7 + $0xc0] sm:$0xf]
      %v6717 = vld [vmem:[%s7 + $0xc4] sm:$0xff]
      %v6718 = vld [vmem:[%s7 + $0xcc] sm:$0xff]
      %v6719 = vld [vmem:[%s7 + $0xd4] sm:$0xff]
      %v6720 = vld [vmem:[%s7 + $0xdc] sm:$0xf]
      %v6721 = vld [vmem:[%s7 + $0xe0] sm:$0xff]
      %v6722 = vld [vmem:[%s7 + $0xe8] sm:$0xff]
      %v6723 = vld [vmem:[%s7 + $0xf0] sm:$0xff]
      %v6724 = vld [vmem:[%s7 + $0xf8] sm:$0xf]
      %v6725 = vld [vmem:[%s7 + $0xfc] sm:$0xff]
      %v6726 = vld [vmem:[%s7 + $0x104] sm:$0xff]
      %v6727 = vld [vmem:[%s7 + $0x10c] sm:$0xff]
      %v6728 = vld [vmem:[%s7 + $0x114] sm:$0xf]
      %v6729 = vld [vmem:[%s7 + $0x118] sm:$0xff]
      %v6730 = vld [vmem:[%s7 + $0x120] sm:$0xff]
      %v6731 = vld [vmem:[%s7 + $0x128] sm:$0xff]
      %v6732 = vld [vmem:[%s7 + $0x130] sm:$0xf]
      %v6733 = vld [vmem:[%s7 + $0x134] sm:$0xff]
      %v6734 = vld [vmem:[%s7 + $0x13c] sm:$0xff]
      %v6735 = vld [vmem:[%s7 + $0x144] sm:$0xff]
      %v6736 = vld [vmem:[%s7 + $0x14c] sm:$0xf]
      %v6737 = vld [vmem:[%s7 + $0x150] sm:$0xff]
      %v6738 = vld [vmem:[%s7 + $0x158] sm:$0xff]
      %v6739 = vld [vmem:[%s7 + $0x160] sm:$0xff]
      %v6740 = vld [vmem:[%s7 + $0x168] sm:$0xf]
      %v6741 = vld [vmem:[%s7 + $0x16c] sm:$0xff]
      %v6742 = vld [vmem:[%s7 + $0x174] sm:$0xff]
      %v6743 = vld [vmem:[%s7 + $0x17c] sm:$0xff]
      %v6744 = vld [vmem:[%s7 + $0x184] sm:$0xf]
      %v6745 = vld [vmem:[%s7 + $0x188] sm:$0xff]
      %v6746 = vld [vmem:[%s7 + $0x190] sm:$0xff]
      %v6747 = vld [vmem:[%s7 + $0x198] sm:$0xff]
      %v6748 = vld [vmem:[%s7 + $0x1a0] sm:$0xf]
      %v6749 = vld [vmem:[%s7 + $0x1a4] sm:$0xff]
      %v6750 = vld [vmem:[%s7 + $0x1ac] sm:$0xff]
      %v6751 = vld [vmem:[%s7 + $0x1b4] sm:$0xff]
      %v6752 = vld [vmem:[%s7 + $0x1bc] sm:$0xf]
      %v6753 = vld [vmem:[%s7 + $0x1c0] sm:$0xff]
      %v6754 = vld [vmem:[%s7 + $0x1c8] sm:$0xff]
      %v6755 = vld [vmem:[%s7 + $0x1d0] sm:$0xff]
      %v6756 = vld [vmem:[%s7 + $0x1d8] sm:$0xf]
      %v6757 = vld [vmem:[%s7 + $0x1dc] sm:$0xff]
      %v6758 = vld [vmem:[%s7 + $0x1e4] sm:$0xff]
      %v6759 = vld [vmem:[%s7 + $0x1ec] sm:$0xff]
      %v6760 = vld [vmem:[%s7 + $0x1f4] sm:$0xf]
      %v6761 = vld [vmem:[%s7 + $0x1f8] sm:$0xff]
      %v6762 = vld [vmem:[%s7 + $0x200] sm:$0xff]
      %v6763 = vld [vmem:[%s7 + $0x208] sm:$0xff]
      %v6764 = vld [vmem:[%s7 + $0x210] sm:$0xf]
      %v6765 = vld [vmem:[%s7 + $0x214] sm:$0xff]
      %v6766 = vld [vmem:[%s7 + $0x21c] sm:$0xff]
      %v6767 = vld [vmem:[%s7 + $0x224] sm:$0xff]
      %v6768 = vld [vmem:[%s7 + $0x22c] sm:$0xf]
      %v6769 = vld [vmem:[%s7 + $0x230] sm:$0xff]
      %v6770 = vld [vmem:[%s7 + $0x238] sm:$0xff]
      %v6771 = vld [vmem:[%s7 + $0x240] sm:$0xff]
      %v6772 = vld [vmem:[%s7 + $0x248] sm:$0xf]
      %v6773 = vld [vmem:[%s7 + $0x24c] sm:$0xff]
      %v6774 = vld [vmem:[%s7 + $0x254] sm:$0xff]
      %v6775 = vld [vmem:[%s7 + $0x25c] sm:$0xff]
      %v6776 = vld [vmem:[%s7 + $0x264] sm:$0xf]
      %v6777 = vld [vmem:[%s7 + $0x268] sm:$0xff]
      %v6778 = vld [vmem:[%s7 + $0x270] sm:$0xff]
      %v6779 = vld [vmem:[%s7 + $0x278] sm:$0xff]
      %v6780 = vld [vmem:[%s7 + $0x280] sm:$0xf]
      %v6781 = vld [vmem:[%s7 + $0x284] sm:$0xff]
      %v6782 = vld [vmem:[%s7 + $0x28c] sm:$0xff]
      %v6783 = vld [vmem:[%s7 + $0x294] sm:$0xff]
      %v6784 = vld [vmem:[%s7 + $0x29c] sm:$0xf]
      %v6785 = vld [vmem:[%s7 + $0x2a0] sm:$0xff]
      %v6786 = vld [vmem:[%s7 + $0x2a8] sm:$0xff]
      %v6787 = vld [vmem:[%s7 + $0x2b0] sm:$0xff]
      %v6788 = vld [vmem:[%s7 + $0x2b8] sm:$0xf]
      %v6789 = vld [vmem:[%s7 + $0x2bc] sm:$0xff]
      %v6790 = vld [vmem:[%s7 + $0x2c4] sm:$0xff]
      %v6791 = vld [vmem:[%s7 + $0x2cc] sm:$0xff]
      %v6792 = vld [vmem:[%s7 + $0x2d4] sm:$0xf]
      %v6793 = vld [vmem:[%s7 + $0x2d8] sm:$0xff]
      %v6794 = vld [vmem:[%s7 + $0x2e0] sm:$0xff]
      %v6795 = vld [vmem:[%s7 + $0x2e8] sm:$0xff]
      %v6796 = vld [vmem:[%s7 + $0x2f0] sm:$0xf]
      %v6797 = vld [vmem:[%s7 + $0x2f4] sm:$0xff]
      %v6798 = vld [vmem:[%s7 + $0x2fc] sm:$0xff]
      %v6799 = vld [vmem:[%s7 + $0x304] sm:$0xff]
      %v6800 = vld [vmem:[%s7 + $0x30c] sm:$0xf]
      %v6801 = vld [vmem:[%s7 + $0x310] sm:$0xff]
      %v6802 = vld [vmem:[%s7 + $0x318] sm:$0xff]
      %v6803 = vld [vmem:[%s7 + $0x320] sm:$0xff]
      %v6804 = vld [vmem:[%s7 + $0x328] sm:$0xf]
      %v6805 = vld [vmem:[%s7 + $0x32c] sm:$0xff]
      %v6806 = vld [vmem:[%s7 + $0x334] sm:$0xff]
      %v6807 = vld [vmem:[%s7 + $0x33c] sm:$0xff]
      %v6808 = vld [vmem:[%s7 + $0x344] sm:$0xf]
      %v6809 = vld [vmem:[%s7 + $0x348] sm:$0xff]
      %v6810 = vld [vmem:[%s7 + $0x350] sm:$0xff]
      %v6811 = vld [vmem:[%s7 + $0x358] sm:$0xff]
      %v6812 = vld [vmem:[%s7 + $0x360] sm:$0xf]
      %v6813 = vld [vmem:[%s7 + $0x364] sm:$0xff]
      %v6814 = vld [vmem:[%s7 + $0x36c] sm:$0xff]
      %v6815 = vld [vmem:[%s7 + $0x374] sm:$0xff]
      %v6816 = vld [vmem:[%s7 + $0x37c] sm:$0xf]
      %v6817 = vld [vmem:[%s8 + $0x8] sm:$0x7f]
      %v6819 = vlaneseq
      %v6820 = vshrl.u32 %v6819, 7
      %v6821 = vsub.s32 0, %v6820
      %v6822 = vrot.slane %v6817, %v6821
      %v6823 = vlaneseq
      %v6824 = vshrl.u32 %v6823, 7
      %v6825 = vsub.s32 1, %v6824
      %v6826 = vrot.slane %v6817, %v6825
      %v6827 = vlaneseq
      %v6828 = vshrl.u32 %v6827, 7
      %v6829 = vsub.s32 2, %v6828
      %v6830 = vrot.slane %v6817, %v6829
      %v6831 = vlaneseq
      %v6832 = vshrl.u32 %v6831, 7
      %v6833 = vsub.s32 3, %v6832
      %v6834 = vrot.slane %v6817, %v6833
      %v6835 = vlaneseq
      %v6836 = vshrl.u32 %v6835, 7
      %v6837 = vsub.s32 4, %v6836
      %v6838 = vrot.slane %v6817, %v6837
      %v6839 = vlaneseq
      %v6840 = vshrl.u32 %v6839, 7
      %v6841 = vsub.s32 5, %v6840
      %v6842 = vrot.slane %v6817, %v6841
      %v6843 = vlaneseq
      %v6844 = vshrl.u32 %v6843, 7
      %v6845 = vsub.s32 6, %v6844
      %v6846 = vrot.slane %v6817, %v6845
      %v6982 = vunpack.c.l.b16 %v6689
      %v6983 = vunpack.c.h.b16 %v6689
      %v6984 = vunpack.c.l.b16 %v6690
      %v6985 = vunpack.c.h.b16 %v6690
      %v6986 = vunpack.c.l.b16 %v6691
      %v6987 = vunpack.c.h.b16 %v6691
      %v6988 = vunpack.c.l.b16 %v6692
      %v6989 = vunpack.c.l.b16 %v6693
      %v6990 = vunpack.c.h.b16 %v6693
      %v6991 = vunpack.c.l.b16 %v6694
      %v6992 = vunpack.c.h.b16 %v6694
      %v6993 = vunpack.c.l.b16 %v6695
      %v6994 = vunpack.c.h.b16 %v6695
      %v6995 = vunpack.c.l.b16 %v6696
      %v6996 = vunpack.c.l.b16 %v6697
      %v6997 = vunpack.c.h.b16 %v6697
      %v6998 = vunpack.c.l.b16 %v6698
      %v6999 = vunpack.c.h.b16 %v6698
      %v7000 = vunpack.c.l.b16 %v6699
      %v7001 = vunpack.c.h.b16 %v6699
      %v7002 = vunpack.c.l.b16 %v6700
      %v7003 = vunpack.c.l.b16 %v6701
      %v7004 = vunpack.c.h.b16 %v6701
      %v7005 = vunpack.c.l.b16 %v6702
      %v7006 = vunpack.c.h.b16 %v6702
      %v7007 = vunpack.c.l.b16 %v6703
      %v7008 = vunpack.c.h.b16 %v6703
      %v7009 = vunpack.c.l.b16 %v6704
      %v7010 = vunpack.c.l.b16 %v6705
      %v7011 = vunpack.c.h.b16 %v6705
      %v7012 = vunpack.c.l.b16 %v6706
      %v7013 = vunpack.c.h.b16 %v6706
      %v7014 = vunpack.c.l.b16 %v6707
      %v7015 = vunpack.c.h.b16 %v6707
      %v7016 = vunpack.c.l.b16 %v6708
      %v7017 = vunpack.c.l.b16 %v6709
      %v7018 = vunpack.c.h.b16 %v6709
      %v7019 = vunpack.c.l.b16 %v6710
      %v7020 = vunpack.c.h.b16 %v6710
      %v7021 = vunpack.c.l.b16 %v6711
      %v7022 = vunpack.c.h.b16 %v6711
      %v7023 = vunpack.c.l.b16 %v6712
      %v7024 = vunpack.c.l.b16 %v6713
      %v7025 = vunpack.c.h.b16 %v6713
      %v7026 = vunpack.c.l.b16 %v6714
      %v7027 = vunpack.c.h.b16 %v6714
      %v7028 = vunpack.c.l.b16 %v6715
      %v7029 = vunpack.c.h.b16 %v6715
      %v7030 = vunpack.c.l.b16 %v6716
      %v7031 = vunpack.c.l.b16 %v6717
      %v7032 = vunpack.c.h.b16 %v6717
      %v7033 = vunpack.c.l.b16 %v6718
      %v7034 = vunpack.c.h.b16 %v6718
      %v7035 = vunpack.c.l.b16 %v6719
      %v7036 = vunpack.c.h.b16 %v6719
      %v7037 = vunpack.c.l.b16 %v6720
      %v7038 = vunpack.c.l.b16 %v6721
      %v7039 = vunpack.c.h.b16 %v6721
      %v7040 = vunpack.c.l.b16 %v6722
      %v7041 = vunpack.c.h.b16 %v6722
      %v7042 = vunpack.c.l.b16 %v6723
      %v7043 = vunpack.c.h.b16 %v6723
      %v7044 = vunpack.c.l.b16 %v6724
      %v7045 = vunpack.c.l.b16 %v6725
      %v7046 = vunpack.c.h.b16 %v6725
      %v7047 = vunpack.c.l.b16 %v6726
      %v7048 = vunpack.c.h.b16 %v6726
      %v7049 = vunpack.c.l.b16 %v6727
      %v7050 = vunpack.c.h.b16 %v6727
      %v7051 = vunpack.c.l.b16 %v6728
      %v7052 = vunpack.c.l.b16 %v6729
      %v7053 = vunpack.c.h.b16 %v6729
      %v7054 = vunpack.c.l.b16 %v6730
      %v7055 = vunpack.c.h.b16 %v6730
      %v7056 = vunpack.c.l.b16 %v6731
      %v7057 = vunpack.c.h.b16 %v6731
      %v7058 = vunpack.c.l.b16 %v6732
      %v7059 = vunpack.c.l.b16 %v6733
      %v7060 = vunpack.c.h.b16 %v6733
      %v7061 = vunpack.c.l.b16 %v6734
      %v7062 = vunpack.c.h.b16 %v6734
      %v7063 = vunpack.c.l.b16 %v6735
      %v7064 = vunpack.c.h.b16 %v6735
      %v7065 = vunpack.c.l.b16 %v6736
      %v7066 = vunpack.c.l.b16 %v6737
      %v7067 = vunpack.c.h.b16 %v6737
      %v7068 = vunpack.c.l.b16 %v6738
      %v7069 = vunpack.c.h.b16 %v6738
      %v7070 = vunpack.c.l.b16 %v6739
      %v7071 = vunpack.c.h.b16 %v6739
      %v7072 = vunpack.c.l.b16 %v6740
      %v7073 = vunpack.c.l.b16 %v6741
      %v7074 = vunpack.c.h.b16 %v6741
      %v7075 = vunpack.c.l.b16 %v6742
      %v7076 = vunpack.c.h.b16 %v6742
      %v7077 = vunpack.c.l.b16 %v6743
      %v7078 = vunpack.c.h.b16 %v6743
      %v7079 = vunpack.c.l.b16 %v6744
      %v7080 = vunpack.c.l.b16 %v6745
      %v7081 = vunpack.c.h.b16 %v6745
      %v7082 = vunpack.c.l.b16 %v6746
      %v7083 = vunpack.c.h.b16 %v6746
      %v7084 = vunpack.c.l.b16 %v6747
      %v7085 = vunpack.c.h.b16 %v6747
      %v7086 = vunpack.c.l.b16 %v6748
      %v7087 = vunpack.c.l.b16 %v6749
      %v7088 = vunpack.c.h.b16 %v6749
      %v7089 = vunpack.c.l.b16 %v6750
      %v7090 = vunpack.c.h.b16 %v6750
      %v7091 = vunpack.c.l.b16 %v6751
      %v7092 = vunpack.c.h.b16 %v6751
      %v7093 = vunpack.c.l.b16 %v6752
      %v7094 = vunpack.c.l.b16 %v6753
      %v7095 = vunpack.c.h.b16 %v6753
      %v7096 = vunpack.c.l.b16 %v6754
      %v7097 = vunpack.c.h.b16 %v6754
      %v7098 = vunpack.c.l.b16 %v6755
      %v7099 = vunpack.c.h.b16 %v6755
      %v7100 = vunpack.c.l.b16 %v6756
      %v7101 = vunpack.c.l.b16 %v6757
      %v7102 = vunpack.c.h.b16 %v6757
      %v7103 = vunpack.c.l.b16 %v6758
      %v7104 = vunpack.c.h.b16 %v6758
      %v7105 = vunpack.c.l.b16 %v6759
      %v7106 = vunpack.c.h.b16 %v6759
      %v7107 = vunpack.c.l.b16 %v6760
      %v7108 = vunpack.c.l.b16 %v6761
      %v7109 = vunpack.c.h.b16 %v6761
      %v7110 = vunpack.c.l.b16 %v6762
      %v7111 = vunpack.c.h.b16 %v6762
      %v7112 = vunpack.c.l.b16 %v6763
      %v7113 = vunpack.c.h.b16 %v6763
      %v7114 = vunpack.c.l.b16 %v6764
      %v7115 = vunpack.c.l.b16 %v6765
      %v7116 = vunpack.c.h.b16 %v6765
      %v7117 = vunpack.c.l.b16 %v6766
      %v7118 = vunpack.c.h.b16 %v6766
      %v7119 = vunpack.c.l.b16 %v6767
      %v7120 = vunpack.c.h.b16 %v6767
      %v7121 = vunpack.c.l.b16 %v6768
      %v7122 = vunpack.c.l.b16 %v6769
      %v7123 = vunpack.c.h.b16 %v6769
      %v7124 = vunpack.c.l.b16 %v6770
      %v7125 = vunpack.c.h.b16 %v6770
      %v7126 = vunpack.c.l.b16 %v6771
      %v7127 = vunpack.c.h.b16 %v6771
      %v7128 = vunpack.c.l.b16 %v6772
      %v7129 = vunpack.c.l.b16 %v6773
      %v7130 = vunpack.c.h.b16 %v6773
      %v7131 = vunpack.c.l.b16 %v6774
      %v7132 = vunpack.c.h.b16 %v6774
      %v7133 = vunpack.c.l.b16 %v6775
      %v7134 = vunpack.c.h.b16 %v6775
      %v7135 = vunpack.c.l.b16 %v6776
      %v7136 = vunpack.c.l.b16 %v6777
      %v7137 = vunpack.c.h.b16 %v6777
      %v7138 = vunpack.c.l.b16 %v6778
      %v7139 = vunpack.c.h.b16 %v6778
      %v7140 = vunpack.c.l.b16 %v6779
      %v7141 = vunpack.c.h.b16 %v6779
      %v7142 = vunpack.c.l.b16 %v6780
      %v7143 = vunpack.c.l.b16 %v6781
      %v7144 = vunpack.c.h.b16 %v6781
      %v7145 = vunpack.c.l.b16 %v6782
      %v7146 = vunpack.c.h.b16 %v6782
      %v7147 = vunpack.c.l.b16 %v6783
      %v7148 = vunpack.c.h.b16 %v6783
      %v7149 = vunpack.c.l.b16 %v6784
      %v7150 = vunpack.c.l.b16 %v6785
      %v7151 = vunpack.c.h.b16 %v6785
      %v7152 = vunpack.c.l.b16 %v6786
      %v7153 = vunpack.c.h.b16 %v6786
      %v7154 = vunpack.c.l.b16 %v6787
      %v7155 = vunpack.c.h.b16 %v6787
      %v7156 = vunpack.c.l.b16 %v6788
      %v7157 = vunpack.c.l.b16 %v6789
      %v7158 = vunpack.c.h.b16 %v6789
      %v7159 = vunpack.c.l.b16 %v6790
      %v7160 = vunpack.c.h.b16 %v6790
      %v7161 = vunpack.c.l.b16 %v6791
      %v7162 = vunpack.c.h.b16 %v6791
      %v7163 = vunpack.c.l.b16 %v6792
      %v7164 = vunpack.c.l.b16 %v6793
      %v7165 = vunpack.c.h.b16 %v6793
      %v7166 = vunpack.c.l.b16 %v6794
      %v7167 = vunpack.c.h.b16 %v6794
      %v7168 = vunpack.c.l.b16 %v6795
      %v7169 = vunpack.c.h.b16 %v6795
      %v7170 = vunpack.c.l.b16 %v6796
      %v7171 = vunpack.c.l.b16 %v6797
      %v7172 = vunpack.c.h.b16 %v6797
      %v7173 = vunpack.c.l.b16 %v6798
      %v7174 = vunpack.c.h.b16 %v6798
      %v7175 = vunpack.c.l.b16 %v6799
      %v7176 = vunpack.c.h.b16 %v6799
      %v7177 = vunpack.c.l.b16 %v6800
      %v7178 = vunpack.c.l.b16 %v6801
      %v7179 = vunpack.c.h.b16 %v6801
      %v7180 = vunpack.c.l.b16 %v6802
      %v7181 = vunpack.c.h.b16 %v6802
      %v7182 = vunpack.c.l.b16 %v6803
      %v7183 = vunpack.c.h.b16 %v6803
      %v7184 = vunpack.c.l.b16 %v6804
      %v7185 = vunpack.c.l.b16 %v6805
      %v7186 = vunpack.c.h.b16 %v6805
      %v7187 = vunpack.c.l.b16 %v6806
      %v7188 = vunpack.c.h.b16 %v6806
      %v7189 = vunpack.c.l.b16 %v6807
      %v7190 = vunpack.c.h.b16 %v6807
      %v7191 = vunpack.c.l.b16 %v6808
      %v7192 = vunpack.c.l.b16 %v6809
      %v7193 = vunpack.c.h.b16 %v6809
      %v7194 = vunpack.c.l.b16 %v6810
      %v7195 = vunpack.c.h.b16 %v6810
      %v7196 = vunpack.c.l.b16 %v6811
      %v7197 = vunpack.c.h.b16 %v6811
      %v7198 = vunpack.c.l.b16 %v6812
      %v7199 = vunpack.c.l.b16 %v6813
      %v7200 = vunpack.c.h.b16 %v6813
      %v7201 = vunpack.c.l.b16 %v6814
      %v7202 = vunpack.c.h.b16 %v6814
      %v7203 = vunpack.c.l.b16 %v6815
      %v7204 = vunpack.c.h.b16 %v6815
      %v7205 = vunpack.c.l.b16 %v6816
      %v7206 = vpack.c.b16 %v6989, %v6982
      %v7207 = vpack.c.b16 %v6990, %v6983
      %v7208 = vpack.c.b16 %v6991, %v6984
      %v7209 = vpack.c.b16 %v6992, %v6985
      %v7210 = vpack.c.b16 %v6993, %v6986
      %v7211 = vpack.c.b16 %v6994, %v6987
      %v7212 = vpack.c.b16 %v6995, %v6988
      %v7213 = vpack.c.b16 %v7003, %v6996
      %v7214 = vpack.c.b16 %v7004, %v6997
      %v7215 = vpack.c.b16 %v7005, %v6998
      %v7216 = vpack.c.b16 %v7006, %v6999
      %v7217 = vpack.c.b16 %v7007, %v7000
      %v7218 = vpack.c.b16 %v7008, %v7001
      %v7219 = vpack.c.b16 %v7009, %v7002
      %v7220 = vpack.c.b16 %v7017, %v7010
      %v7221 = vpack.c.b16 %v7018, %v7011
      %v7222 = vpack.c.b16 %v7019, %v7012
      %v7223 = vpack.c.b16 %v7020, %v7013
      %v7224 = vpack.c.b16 %v7021, %v7014
      %v7225 = vpack.c.b16 %v7022, %v7015
      %v7226 = vpack.c.b16 %v7023, %v7016
      %v7227 = vpack.c.b16 %v7031, %v7024
      %v7228 = vpack.c.b16 %v7032, %v7025
      %v7229 = vpack.c.b16 %v7033, %v7026
      %v7230 = vpack.c.b16 %v7034, %v7027
      %v7231 = vpack.c.b16 %v7035, %v7028
      %v7232 = vpack.c.b16 %v7036, %v7029
      %v7233 = vpack.c.b16 %v7037, %v7030
      %v7234 = vpack.c.b16 %v7045, %v7038
      %v7235 = vpack.c.b16 %v7046, %v7039
      %v7236 = vpack.c.b16 %v7047, %v7040
      %v7237 = vpack.c.b16 %v7048, %v7041
      %v7238 = vpack.c.b16 %v7049, %v7042
      %v7239 = vpack.c.b16 %v7050, %v7043
      %v7240 = vpack.c.b16 %v7051, %v7044
      %v7241 = vpack.c.b16 %v7059, %v7052
      %v7242 = vpack.c.b16 %v7060, %v7053
      %v7243 = vpack.c.b16 %v7061, %v7054
      %v7244 = vpack.c.b16 %v7062, %v7055
      %v7245 = vpack.c.b16 %v7063, %v7056
      %v7246 = vpack.c.b16 %v7064, %v7057
      %v7247 = vpack.c.b16 %v7065, %v7058
      %v7248 = vpack.c.b16 %v7073, %v7066
      %v7249 = vpack.c.b16 %v7074, %v7067
      %v7250 = vpack.c.b16 %v7075, %v7068
      %v7251 = vpack.c.b16 %v7076, %v7069
      %v7252 = vpack.c.b16 %v7077, %v7070
      %v7253 = vpack.c.b16 %v7078, %v7071
      %v7254 = vpack.c.b16 %v7079, %v7072
      %v7255 = vpack.c.b16 %v7087, %v7080
      %v7256 = vpack.c.b16 %v7088, %v7081
      %v7257 = vpack.c.b16 %v7089, %v7082
      %v7258 = vpack.c.b16 %v7090, %v7083
      %v7259 = vpack.c.b16 %v7091, %v7084
      %v7260 = vpack.c.b16 %v7092, %v7085
      %v7261 = vpack.c.b16 %v7093, %v7086
      %v7262 = vpack.c.b16 %v7101, %v7094
      %v7263 = vpack.c.b16 %v7102, %v7095
      %v7264 = vpack.c.b16 %v7103, %v7096
      %v7265 = vpack.c.b16 %v7104, %v7097
      %v7266 = vpack.c.b16 %v7105, %v7098
      %v7267 = vpack.c.b16 %v7106, %v7099
      %v7268 = vpack.c.b16 %v7107, %v7100
      %v7269 = vpack.c.b16 %v7115, %v7108
      %v7270 = vpack.c.b16 %v7116, %v7109
      %v7271 = vpack.c.b16 %v7117, %v7110
      %v7272 = vpack.c.b16 %v7118, %v7111
      %v7273 = vpack.c.b16 %v7119, %v7112
      %v7274 = vpack.c.b16 %v7120, %v7113
      %v7275 = vpack.c.b16 %v7121, %v7114
      %v7276 = vpack.c.b16 %v7129, %v7122
      %v7277 = vpack.c.b16 %v7130, %v7123
      %v7278 = vpack.c.b16 %v7131, %v7124
      %v7279 = vpack.c.b16 %v7132, %v7125
      %v7280 = vpack.c.b16 %v7133, %v7126
      %v7281 = vpack.c.b16 %v7134, %v7127
      %v7282 = vpack.c.b16 %v7135, %v7128
      %v7283 = vpack.c.b16 %v7143, %v7136
      %v7284 = vpack.c.b16 %v7144, %v7137
      %v7285 = vpack.c.b16 %v7145, %v7138
      %v7286 = vpack.c.b16 %v7146, %v7139
      %v7287 = vpack.c.b16 %v7147, %v7140
      %v7288 = vpack.c.b16 %v7148, %v7141
      %v7289 = vpack.c.b16 %v7149, %v7142
      %v7290 = vpack.c.b16 %v7157, %v7150
      %v7291 = vpack.c.b16 %v7158, %v7151
      %v7292 = vpack.c.b16 %v7159, %v7152
      %v7293 = vpack.c.b16 %v7160, %v7153
      %v7294 = vpack.c.b16 %v7161, %v7154
      %v7295 = vpack.c.b16 %v7162, %v7155
      %v7296 = vpack.c.b16 %v7163, %v7156
      %v7297 = vpack.c.b16 %v7171, %v7164
      %v7298 = vpack.c.b16 %v7172, %v7165
      %v7299 = vpack.c.b16 %v7173, %v7166
      %v7300 = vpack.c.b16 %v7174, %v7167
      %v7301 = vpack.c.b16 %v7175, %v7168
      %v7302 = vpack.c.b16 %v7176, %v7169
      %v7303 = vpack.c.b16 %v7177, %v7170
      %v7304 = vpack.c.b16 %v7185, %v7178
      %v7305 = vpack.c.b16 %v7186, %v7179
      %v7306 = vpack.c.b16 %v7187, %v7180
      %v7307 = vpack.c.b16 %v7188, %v7181
      %v7308 = vpack.c.b16 %v7189, %v7182
      %v7309 = vpack.c.b16 %v7190, %v7183
      %v7310 = vpack.c.b16 %v7191, %v7184
      %v7311 = vpack.c.b16 %v7199, %v7192
      %v7312 = vpack.c.b16 %v7200, %v7193
      %v7313 = vpack.c.b16 %v7201, %v7194
      %v7314 = vpack.c.b16 %v7202, %v7195
      %v7315 = vpack.c.b16 %v7203, %v7196
      %v7316 = vpack.c.b16 %v7204, %v7197
      %v7317 = vpack.c.b16 %v7205, %v7198
      %7430 = vmatprep.subr.bf16.mxu0 %v7256
      %7431 = vmatpush1.bf16.msra.mxu0 %v7255
      %7432 = vmatprep.subr.bf16.mxu0 %v7249
      %7433 = vmatpush1.bf16.msra.mxu0 %v7248
      %7434 = vmatprep.subr.bf16.mxu0 %v7242
      %7435 = vmatpush1.bf16.msra.mxu0 %v7241
      %7436 = vmatprep.subr.bf16.mxu0 %v7235
      %7437 = vmatpush1.bf16.msra.mxu0 %v7234
      %7438 = vmatprep.subr.bf16.mxu0 %v7228
      %7439 = vmatpush1.bf16.msra.mxu0 %v7227
      %7440 = vmatprep.subr.bf16.mxu0 %v7221
      %7441 = vmatpush1.bf16.msra.mxu0 %v7220
      %7442 = vmatprep.subr.bf16.mxu0 %v7214
      %7443 = vmatpush1.bf16.msra.mxu0 %v7213
      %7444 = vmatprep.subr.bf16.mxu0 %v7207
      %7445 = vmatpush1.bf16.msra.mxu0 %v7206
      %7446 = vmatprep.subr.bf16.mxu0 %v7312
      %7447 = vmatpush2.bf16.msra.mxu0 %v7311
      %7448 = vmatprep.subr.bf16.mxu0 %v7305
      %7449 = vmatpush2.bf16.msra.mxu0 %v7304
      %7450 = vmatprep.subr.bf16.mxu0 %v7298
      %7451 = vmatpush2.bf16.msra.mxu0 %v7297
      %7452 = vmatprep.subr.bf16.mxu0 %v7291
      %7453 = vmatpush2.bf16.msra.mxu0 %v7290
      %7454 = vmatprep.subr.bf16.mxu0 %v7284
      %7455 = vmatpush2.bf16.msra.mxu0 %v7283
      %7456 = vmatprep.subr.bf16.mxu0 %v7277
      %7457 = vmatpush2.bf16.msra.mxu0 %v7276
      %7458 = vmatprep.subr.bf16.mxu0 %v7270
      %7459 = vmatpush2.bf16.msra.mxu0 %v7269
      %7460 = vmatprep.subr.bf16.mxu0 %v7263
      %7461 = vmatpush2.bf16.msra.mxu0 %v7262
      %7462 = vmatprep.mubr.bf16.mxu0 %v6626
      %7463 = vmatmul.mubr.bf16.gmra.mxu0 %v6625
      %v7464 = vpop.f32.mrf.mxu0
      %v7465 = vadd.f32 %v6822, %v7464
      %v7466 = vpop.f32.mrf.mxu0
      %v7467 = vadd.f32 %v6826, %v7466
      %v7468 = vpop.f32.mrf.mxu0
      %v7469 = vadd.f32 %v6822, %v7468
      %v7470 = vpop.f32.mrf.mxu0
      %v7471 = vadd.f32 %v6826, %v7470
      %7472 = vmatprep.mubr.bf16.mxu0 %v6628
      %7473 = vmatmul.mubr.bf16.gmra.mxu0 %v6627
      %v7474 = vpop.f32.mrf.mxu0
      %v7475 = vadd.f32 %v6822, %v7474
      %v7476 = vpop.f32.mrf.mxu0
      %v7477 = vadd.f32 %v6826, %v7476
      %v7478 = vpop.f32.mrf.mxu0
      %v7479 = vadd.f32 %v6822, %v7478
      %v7480 = vpop.f32.mrf.mxu0
      %v7481 = vadd.f32 %v6826, %v7480
      %7482 = vmatprep.mubr.bf16.mxu0 %v6630
      %7483 = vmatmul.mubr.bf16.gmra.mxu0 %v6629
      %v7484 = vpop.f32.mrf.mxu0
      %v7485 = vadd.f32 %v6822, %v7484
      %v7486 = vpop.f32.mrf.mxu0
      %v7487 = vadd.f32 %v6826, %v7486
      %v7488 = vpop.f32.mrf.mxu0
      %v7489 = vadd.f32 %v6822, %v7488
      %v7490 = vpop.f32.mrf.mxu0
      %v7491 = vadd.f32 %v6826, %v7490
      %7492 = vmatprep.mubr.bf16.mxu0 %v6632
      %7493 = vmatmul.mubr.bf16.gmra.mxu0 %v6631
      %v7494 = vpop.f32.mrf.mxu0
      %v7495 = vadd.f32 %v6822, %v7494
      %v7496 = vpop.f32.mrf.mxu0
      %v7497 = vadd.f32 %v6826, %v7496
      %v7498 = vpop.f32.mrf.mxu0
      %v7499 = vadd.f32 %v6822, %v7498
      %v7500 = vpop.f32.mrf.mxu0
      %v7501 = vadd.f32 %v6826, %v7500
      %7502 = vmatprep.mubr.bf16.mxu0 %v6634
      %7503 = vmatmul.mubr.bf16.gmra.mxu0 %v6633
      %v7504 = vpop.f32.mrf.mxu0
      %v7505 = vadd.f32 %v6822, %v7504
      %v7506 = vpop.f32.mrf.mxu0
      %v7507 = vadd.f32 %v6826, %v7506
      %v7508 = vpop.f32.mrf.mxu0
      %v7509 = vadd.f32 %v6822, %v7508
      %v7510 = vpop.f32.mrf.mxu0
      %v7511 = vadd.f32 %v6826, %v7510
      %7512 = vmatprep.mubr.bf16.mxu0 %v6636
      %7513 = vmatmul.mubr.bf16.gmra.mxu0 %v6635
      %v7514 = vpop.f32.mrf.mxu0
      %v7515 = vadd.f32 %v6822, %v7514
      %v7516 = vpop.f32.mrf.mxu0
      %v7517 = vadd.f32 %v6826, %v7516
      %v7518 = vpop.f32.mrf.mxu0
      %v7519 = vadd.f32 %v6822, %v7518
      %v7520 = vpop.f32.mrf.mxu0
      %v7521 = vadd.f32 %v6826, %v7520
      %7522 = vmatprep.mubr.bf16.mxu0 %v6638
      %7523 = vmatmul.mubr.bf16.gmra.mxu0 %v6637
      %v7524 = vpop.f32.mrf.mxu0
      %v7525 = vadd.f32 %v6822, %v7524
      %v7526 = vpop.f32.mrf.mxu0
      %v7527 = vadd.f32 %v6826, %v7526
      %v7528 = vpop.f32.mrf.mxu0
      %v7529 = vadd.f32 %v6822, %v7528
      %v7530 = vpop.f32.mrf.mxu0
      %v7531 = vadd.f32 %v6826, %v7530
      %7532 = vmatprep.mubr.bf16.mxu0 %v6640
      %7533 = vmatmul.mubr.bf16.gmra.mxu0 %v6639
      %v7534 = vpop.f32.mrf.mxu0
      %v7535 = vadd.f32 %v6822, %v7534
      %v7536 = vpop.f32.mrf.mxu0
      %v7537 = vadd.f32 %v6826, %v7536
      %v7538 = vpop.f32.mrf.mxu0
      %v7539 = vadd.f32 %v6822, %v7538
      %v7540 = vpop.f32.mrf.mxu0
      %v7541 = vadd.f32 %v6826, %v7540
      %7542 = vmatprep.mubr.bf16.mxu0 %v6642
      %7543 = vmatmul.mubr.bf16.gmra.mxu0 %v6641
      %v7544 = vpop.f32.mrf.mxu0
      %v7545 = vadd.f32 %v6822, %v7544
      %v7546 = vpop.f32.mrf.mxu0
      %v7547 = vadd.f32 %v6826, %v7546
      %v7548 = vpop.f32.mrf.mxu0
      %v7549 = vadd.f32 %v6822, %v7548
      %v7550 = vpop.f32.mrf.mxu0
      %v7551 = vadd.f32 %v6826, %v7550
      %7552 = vmatprep.mubr.bf16.mxu0 %v6644
      %7553 = vmatmul.mubr.bf16.gmra.mxu0 %v6643
      %v7554 = vpop.f32.mrf.mxu0
      %v7555 = vadd.f32 %v6822, %v7554
      %v7556 = vpop.f32.mrf.mxu0
      %v7557 = vadd.f32 %v6826, %v7556
      %v7558 = vpop.f32.mrf.mxu0
      %v7559 = vadd.f32 %v6822, %v7558
      %v7560 = vpop.f32.mrf.mxu0
      %v7561 = vadd.f32 %v6826, %v7560
      %7562 = vmatprep.mubr.bf16.mxu0 %v6646
      %7563 = vmatmul.mubr.bf16.gmra.mxu0 %v6645
      %v7564 = vpop.f32.mrf.mxu0
      %v7565 = vadd.f32 %v6822, %v7564
      %v7566 = vpop.f32.mrf.mxu0
      %v7567 = vadd.f32 %v6826, %v7566
      %v7568 = vpop.f32.mrf.mxu0
      %v7569 = vadd.f32 %v6822, %v7568
      %v7570 = vpop.f32.mrf.mxu0
      %v7571 = vadd.f32 %v6826, %v7570
      %7572 = vmatprep.mubr.bf16.mxu0 %v6648
      %7573 = vmatmul.mubr.bf16.gmra.mxu0 %v6647
      %v7574 = vpop.f32.mrf.mxu0
      %v7575 = vadd.f32 %v6822, %v7574
      %v7576 = vpop.f32.mrf.mxu0
      %v7577 = vadd.f32 %v6826, %v7576
      %v7578 = vpop.f32.mrf.mxu0
      %v7579 = vadd.f32 %v6822, %v7578
      %v7580 = vpop.f32.mrf.mxu0
      %v7581 = vadd.f32 %v6826, %v7580
      %7582 = vmatprep.mubr.bf16.mxu0 %v6650
      %7583 = vmatmul.mubr.bf16.gmra.mxu0 %v6649
      %v7584 = vpop.f32.mrf.mxu0
      %v7585 = vadd.f32 %v6822, %v7584
      %v7586 = vpop.f32.mrf.mxu0
      %v7587 = vadd.f32 %v6826, %v7586
      %v7588 = vpop.f32.mrf.mxu0
      %v7589 = vadd.f32 %v6822, %v7588
      %v7590 = vpop.f32.mrf.mxu0
      %v7591 = vadd.f32 %v6826, %v7590
      %7592 = vmatprep.mubr.bf16.mxu0 %v6652
      %7593 = vmatmul.mubr.bf16.gmra.mxu0 %v6651
      %v7594 = vpop.f32.mrf.mxu0
      %v7595 = vadd.f32 %v6822, %v7594
      %v7596 = vpop.f32.mrf.mxu0
      %v7597 = vadd.f32 %v6826, %v7596
      %v7598 = vpop.f32.mrf.mxu0
      %v7599 = vadd.f32 %v6822, %v7598
      %v7600 = vpop.f32.mrf.mxu0
      %v7601 = vadd.f32 %v6826, %v7600
      %7602 = vmatprep.mubr.bf16.mxu0 %v6654
      %7603 = vmatmul.mubr.bf16.gmra.mxu0 %v6653
      %v7604 = vpop.f32.mrf.mxu0
      %v7605 = vadd.f32 %v6822, %v7604
      %v7606 = vpop.f32.mrf.mxu0
      %v7607 = vadd.f32 %v6826, %v7606
      %v7608 = vpop.f32.mrf.mxu0
      %v7609 = vadd.f32 %v6822, %v7608
      %v7610 = vpop.f32.mrf.mxu0
      %v7611 = vadd.f32 %v6826, %v7610
      %7612 = vmatprep.mubr.bf16.mxu0 %v6656
      %7613 = vmatmul.mubr.bf16.gmra.mxu0 %v6655
      %v7614 = vpop.f32.mrf.mxu0
      %v7615 = vadd.f32 %v6822, %v7614
      %v7616 = vpop.f32.mrf.mxu0
      %v7617 = vadd.f32 %v6826, %v7616
      %v7618 = vpop.f32.mrf.mxu0
      %v7619 = vadd.f32 %v6822, %v7618
      %v7620 = vpop.f32.mrf.mxu0
      %v7621 = vadd.f32 %v6826, %v7620
      %7622 = vmatprep.mubr.bf16.mxu0 %v6658
      %7623 = vmatmul.mubr.bf16.gmra.mxu0 %v6657
      %v7624 = vpop.f32.mrf.mxu0
      %v7625 = vadd.f32 %v6822, %v7624
      %v7626 = vpop.f32.mrf.mxu0
      %v7627 = vadd.f32 %v6826, %v7626
      %v7628 = vpop.f32.mrf.mxu0
      %v7629 = vadd.f32 %v6822, %v7628
      %v7630 = vpop.f32.mrf.mxu0
      %v7631 = vadd.f32 %v6826, %v7630
      %7632 = vmatprep.mubr.bf16.mxu0 %v6660
      %7633 = vmatmul.mubr.bf16.gmra.mxu0 %v6659
      %v7634 = vpop.f32.mrf.mxu0
      %v7635 = vadd.f32 %v6822, %v7634
      %v7636 = vpop.f32.mrf.mxu0
      %v7637 = vadd.f32 %v6826, %v7636
      %v7638 = vpop.f32.mrf.mxu0
      %v7639 = vadd.f32 %v6822, %v7638
      %v7640 = vpop.f32.mrf.mxu0
      %v7641 = vadd.f32 %v6826, %v7640
      %7642 = vmatprep.mubr.bf16.mxu0 %v6662
      %7643 = vmatmul.mubr.bf16.gmra.mxu0 %v6661
      %v7644 = vpop.f32.mrf.mxu0
      %v7645 = vadd.f32 %v6822, %v7644
      %v7646 = vpop.f32.mrf.mxu0
      %v7647 = vadd.f32 %v6826, %v7646
      %v7648 = vpop.f32.mrf.mxu0
      %v7649 = vadd.f32 %v6822, %v7648
      %v7650 = vpop.f32.mrf.mxu0
      %v7651 = vadd.f32 %v6826, %v7650
      %7652 = vmatprep.mubr.bf16.mxu0 %v6664
      %7653 = vmatmul.mubr.bf16.gmra.mxu0 %v6663
      %v7654 = vpop.f32.mrf.mxu0
      %v7655 = vadd.f32 %v6822, %v7654
      %v7656 = vpop.f32.mrf.mxu0
      %v7657 = vadd.f32 %v6826, %v7656
      %v7658 = vpop.f32.mrf.mxu0
      %v7659 = vadd.f32 %v6822, %v7658
      %v7660 = vpop.f32.mrf.mxu0
      %v7661 = vadd.f32 %v6826, %v7660
      %7662 = vmatprep.mubr.bf16.mxu0 %v6666
      %7663 = vmatmul.mubr.bf16.gmra.mxu0 %v6665
      %v7664 = vpop.f32.mrf.mxu0
      %v7665 = vadd.f32 %v6822, %v7664
      %v7666 = vpop.f32.mrf.mxu0
      %v7667 = vadd.f32 %v6826, %v7666
      %v7668 = vpop.f32.mrf.mxu0
      %v7669 = vadd.f32 %v6822, %v7668
      %v7670 = vpop.f32.mrf.mxu0
      %v7671 = vadd.f32 %v6826, %v7670
      %7672 = vmatprep.mubr.bf16.mxu0 %v6668
      %7673 = vmatmul.mubr.bf16.gmra.mxu0 %v6667
      %v7674 = vpop.f32.mrf.mxu0
      %v7675 = vadd.f32 %v6822, %v7674
      %v7676 = vpop.f32.mrf.mxu0
      %v7677 = vadd.f32 %v6826, %v7676
      %v7678 = vpop.f32.mrf.mxu0
      %v7679 = vadd.f32 %v6822, %v7678
      %v7680 = vpop.f32.mrf.mxu0
      %v7681 = vadd.f32 %v6826, %v7680
      %7682 = vmatprep.mubr.bf16.mxu0 %v6670
      %7683 = vmatmul.mubr.bf16.gmra.mxu0 %v6669
      %v7684 = vpop.f32.mrf.mxu0
      %v7685 = vadd.f32 %v6822, %v7684
      %v7686 = vpop.f32.mrf.mxu0
      %v7687 = vadd.f32 %v6826, %v7686
      %v7688 = vpop.f32.mrf.mxu0
      %v7689 = vadd.f32 %v6822, %v7688
      %v7690 = vpop.f32.mrf.mxu0
      %v7691 = vadd.f32 %v6826, %v7690
      %7692 = vmatprep.mubr.bf16.mxu0 %v6672
      %7693 = vmatmul.mubr.bf16.gmra.mxu0 %v6671
      %v7694 = vpop.f32.mrf.mxu0
      %v7695 = vadd.f32 %v6822, %v7694
      %v7696 = vpop.f32.mrf.mxu0
      %v7697 = vadd.f32 %v6826, %v7696
      %v7698 = vpop.f32.mrf.mxu0
      %v7699 = vadd.f32 %v6822, %v7698
      %v7700 = vpop.f32.mrf.mxu0
      %v7701 = vadd.f32 %v6826, %v7700
      %7702 = vmatprep.mubr.bf16.mxu0 %v6674
      %7703 = vmatmul.mubr.bf16.gmra.mxu0 %v6673
      %v7704 = vpop.f32.mrf.mxu0
      %v7705 = vadd.f32 %v6822, %v7704
      %v7706 = vpop.f32.mrf.mxu0
      %v7707 = vadd.f32 %v6826, %v7706
      %v7708 = vpop.f32.mrf.mxu0
      %v7709 = vadd.f32 %v6822, %v7708
      %v7710 = vpop.f32.mrf.mxu0
      %v7711 = vadd.f32 %v6826, %v7710
      %7712 = vmatprep.mubr.bf16.mxu0 %v6676
      %7713 = vmatmul.mubr.bf16.gmra.mxu0 %v6675
      %v7714 = vpop.f32.mrf.mxu0
      %v7715 = vadd.f32 %v6822, %v7714
      %v7716 = vpop.f32.mrf.mxu0
      %v7717 = vadd.f32 %v6826, %v7716
      %v7718 = vpop.f32.mrf.mxu0
      %v7719 = vadd.f32 %v6822, %v7718
      %v7720 = vpop.f32.mrf.mxu0
      %v7721 = vadd.f32 %v6826, %v7720
      %7722 = vmatprep.mubr.bf16.mxu0 %v6678
      %7723 = vmatmul.mubr.bf16.gmra.mxu0 %v6677
      %v7724 = vpop.f32.mrf.mxu0
      %v7725 = vadd.f32 %v6822, %v7724
      %v7726 = vpop.f32.mrf.mxu0
      %v7727 = vadd.f32 %v6826, %v7726
      %v7728 = vpop.f32.mrf.mxu0
      %v7729 = vadd.f32 %v6822, %v7728
      %v7730 = vpop.f32.mrf.mxu0
      %v7731 = vadd.f32 %v6826, %v7730
      %7732 = vmatprep.mubr.bf16.mxu0 %v6680
      %7733 = vmatmul.mubr.bf16.gmra.mxu0 %v6679
      %v7734 = vpop.f32.mrf.mxu0
      %v7735 = vadd.f32 %v6822, %v7734
      %v7736 = vpop.f32.mrf.mxu0
      %v7737 = vadd.f32 %v6826, %v7736
      %v7738 = vpop.f32.mrf.mxu0
      %v7739 = vadd.f32 %v6822, %v7738
      %v7740 = vpop.f32.mrf.mxu0
      %v7741 = vadd.f32 %v6826, %v7740
      %7742 = vmatprep.mubr.bf16.mxu0 %v6682
      %7743 = vmatmul.mubr.bf16.gmra.mxu0 %v6681
      %v7744 = vpop.f32.mrf.mxu0
      %v7745 = vadd.f32 %v6822, %v7744
      %v7746 = vpop.f32.mrf.mxu0
      %v7747 = vadd.f32 %v6826, %v7746
      %v7748 = vpop.f32.mrf.mxu0
      %v7749 = vadd.f32 %v6822, %v7748
      %v7750 = vpop.f32.mrf.mxu0
      %v7751 = vadd.f32 %v6826, %v7750
      %7752 = vmatprep.mubr.bf16.mxu0 %v6684
      %7753 = vmatmul.mubr.bf16.gmra.mxu0 %v6683
      %v7754 = vpop.f32.mrf.mxu0
      %v7755 = vadd.f32 %v6822, %v7754
      %v7756 = vpop.f32.mrf.mxu0
      %v7757 = vadd.f32 %v6826, %v7756
      %v7758 = vpop.f32.mrf.mxu0
      %v7759 = vadd.f32 %v6822, %v7758
      %v7760 = vpop.f32.mrf.mxu0
      %v7761 = vadd.f32 %v6826, %v7760
      %7762 = vmatprep.mubr.bf16.mxu0 %v6686
      %7763 = vmatmul.mubr.bf16.gmra.mxu0 %v6685
      %v7764 = vpop.f32.mrf.mxu0
      %v7765 = vadd.f32 %v6822, %v7764
      %v7766 = vpop.f32.mrf.mxu0
      %v7767 = vadd.f32 %v6826, %v7766
      %v7768 = vpop.f32.mrf.mxu0
      %v7769 = vadd.f32 %v6822, %v7768
      %v7770 = vpop.f32.mrf.mxu0
      %v7771 = vadd.f32 %v6826, %v7770
      %7772 = vmatprep.mubr.bf16.mxu0 %v6688
      %7773 = vmatmul.mubr.bf16.gmra.mxu0 %v6687
      %v7774 = vpop.f32.mrf.mxu0
      %v7775 = vadd.f32 %v6822, %v7774
      %v7776 = vpop.f32.mrf.mxu0
      %v7777 = vadd.f32 %v6826, %v7776
      %v7778 = vpop.f32.mrf.mxu0
      %v7779 = vadd.f32 %v6822, %v7778
      %v7780 = vpop.f32.mrf.mxu0
      %v7781 = vadd.f32 %v6826, %v7780
      %7782 = vdwg.mxu0
      %7783 = vmatprep.subr.bf16.mxu0 %v7258
      %7784 = vmatpush1.bf16.msra.mxu0 %v7257
      %7785 = vmatprep.subr.bf16.mxu0 %v7251
      %7786 = vmatpush1.bf16.msra.mxu0 %v7250
      %7787 = vmatprep.subr.bf16.mxu0 %v7244
      %7788 = vmatpush1.bf16.msra.mxu0 %v7243
      %7789 = vmatprep.subr.bf16.mxu0 %v7237
      %7790 = vmatpush1.bf16.msra.mxu0 %v7236
      %7791 = vmatprep.subr.bf16.mxu0 %v7230
      %7792 = vmatpush1.bf16.msra.mxu0 %v7229
      %7793 = vmatprep.subr.bf16.mxu0 %v7223
      %7794 = vmatpush1.bf16.msra.mxu0 %v7222
      %7795 = vmatprep.subr.bf16.mxu0 %v7216
      %7796 = vmatpush1.bf16.msra.mxu0 %v7215
      %7797 = vmatprep.subr.bf16.mxu0 %v7209
      %7798 = vmatpush1.bf16.msra.mxu0 %v7208
      %7799 = vmatprep.subr.bf16.mxu0 %v7314
      %7800 = vmatpush2.bf16.msra.mxu0 %v7313
      %7801 = vmatprep.subr.bf16.mxu0 %v7307
      %7802 = vmatpush2.bf16.msra.mxu0 %v7306
      %7803 = vmatprep.subr.bf16.mxu0 %v7300
      %7804 = vmatpush2.bf16.msra.mxu0 %v7299
      %7805 = vmatprep.subr.bf16.mxu0 %v7293
      %7806 = vmatpush2.bf16.msra.mxu0 %v7292
      %7807 = vmatprep.subr.bf16.mxu0 %v7286
      %7808 = vmatpush2.bf16.msra.mxu0 %v7285
      %7809 = vmatprep.subr.bf16.mxu0 %v7279
      %7810 = vmatpush2.bf16.msra.mxu0 %v7278
      %7811 = vmatprep.subr.bf16.mxu0 %v7272
      %7812 = vmatpush2.bf16.msra.mxu0 %v7271
      %7813 = vmatprep.subr.bf16.mxu0 %v7265
      %7814 = vmatpush2.bf16.msra.mxu0 %v7264
      %7815 = vmatprep.mubr.bf16.mxu0 %v6626
      %7816 = vmatmul.mubr.bf16.gmra.mxu0 %v6625
      %v7817 = vpop.f32.mrf.mxu0
      %v7818 = vadd.f32 %v6830, %v7817
      %v7819 = vpop.f32.mrf.mxu0
      %v7820 = vadd.f32 %v6834, %v7819
      %v7821 = vpop.f32.mrf.mxu0
      %v7822 = vadd.f32 %v6830, %v7821
      %v7823 = vpop.f32.mrf.mxu0
      %v7824 = vadd.f32 %v6834, %v7823
      %7825 = vmatprep.mubr.bf16.mxu0 %v6628
      %7826 = vmatmul.mubr.bf16.gmra.mxu0 %v6627
      %v7827 = vpop.f32.mrf.mxu0
      %v7828 = vadd.f32 %v6830, %v7827
      %v7829 = vpop.f32.mrf.mxu0
      %v7830 = vadd.f32 %v6834, %v7829
      %v7831 = vpop.f32.mrf.mxu0
      %v7832 = vadd.f32 %v6830, %v7831
      %v7833 = vpop.f32.mrf.mxu0
      %v7834 = vadd.f32 %v6834, %v7833
      %7835 = vmatprep.mubr.bf16.mxu0 %v6630
      %7836 = vmatmul.mubr.bf16.gmra.mxu0 %v6629
      %v7837 = vpop.f32.mrf.mxu0
      %v7838 = vadd.f32 %v6830, %v7837
      %v7839 = vpop.f32.mrf.mxu0
      %v7840 = vadd.f32 %v6834, %v7839
      %v7841 = vpop.f32.mrf.mxu0
      %v7842 = vadd.f32 %v6830, %v7841
      %v7843 = vpop.f32.mrf.mxu0
      %v7844 = vadd.f32 %v6834, %v7843
      %7845 = vmatprep.mubr.bf16.mxu0 %v6632
      %7846 = vmatmul.mubr.bf16.gmra.mxu0 %v6631
      %v7847 = vpop.f32.mrf.mxu0
      %v7848 = vadd.f32 %v6830, %v7847
      %v7849 = vpop.f32.mrf.mxu0
      %v7850 = vadd.f32 %v6834, %v7849
      %v7851 = vpop.f32.mrf.mxu0
      %v7852 = vadd.f32 %v6830, %v7851
      %v7853 = vpop.f32.mrf.mxu0
      %v7854 = vadd.f32 %v6834, %v7853
      %7855 = vmatprep.mubr.bf16.mxu0 %v6634
      %7856 = vmatmul.mubr.bf16.gmra.mxu0 %v6633
      %v7857 = vpop.f32.mrf.mxu0
      %v7858 = vadd.f32 %v6830, %v7857
      %v7859 = vpop.f32.mrf.mxu0
      %v7860 = vadd.f32 %v6834, %v7859
      %v7861 = vpop.f32.mrf.mxu0
      %v7862 = vadd.f32 %v6830, %v7861
      %v7863 = vpop.f32.mrf.mxu0
      %v7864 = vadd.f32 %v6834, %v7863
      %7865 = vmatprep.mubr.bf16.mxu0 %v6636
      %7866 = vmatmul.mubr.bf16.gmra.mxu0 %v6635
      %v7867 = vpop.f32.mrf.mxu0
      %v7868 = vadd.f32 %v6830, %v7867
      %v7869 = vpop.f32.mrf.mxu0
      %v7870 = vadd.f32 %v6834, %v7869
      %v7871 = vpop.f32.mrf.mxu0
      %v7872 = vadd.f32 %v6830, %v7871
      %v7873 = vpop.f32.mrf.mxu0
      %v7874 = vadd.f32 %v6834, %v7873
      %7875 = vmatprep.mubr.bf16.mxu0 %v6638
      %7876 = vmatmul.mubr.bf16.gmra.mxu0 %v6637
      %v7877 = vpop.f32.mrf.mxu0
      %v7878 = vadd.f32 %v6830, %v7877
      %v7879 = vpop.f32.mrf.mxu0
      %v7880 = vadd.f32 %v6834, %v7879
      %v7881 = vpop.f32.mrf.mxu0
      %v7882 = vadd.f32 %v6830, %v7881
      %v7883 = vpop.f32.mrf.mxu0
      %v7884 = vadd.f32 %v6834, %v7883
      %7885 = vmatprep.mubr.bf16.mxu0 %v6640
      %7886 = vmatmul.mubr.bf16.gmra.mxu0 %v6639
      %v7887 = vpop.f32.mrf.mxu0
      %v7888 = vadd.f32 %v6830, %v7887
      %v7889 = vpop.f32.mrf.mxu0
      %v7890 = vadd.f32 %v6834, %v7889
      %v7891 = vpop.f32.mrf.mxu0
      %v7892 = vadd.f32 %v6830, %v7891
      %v7893 = vpop.f32.mrf.mxu0
      %v7894 = vadd.f32 %v6834, %v7893
      %7895 = vmatprep.mubr.bf16.mxu0 %v6642
      %7896 = vmatmul.mubr.bf16.gmra.mxu0 %v6641
      %v7897 = vpop.f32.mrf.mxu0
      %v7898 = vadd.f32 %v6830, %v7897
      %v7899 = vpop.f32.mrf.mxu0
      %v7900 = vadd.f32 %v6834, %v7899
      %v7901 = vpop.f32.mrf.mxu0
      %v7902 = vadd.f32 %v6830, %v7901
      %v7903 = vpop.f32.mrf.mxu0
      %v7904 = vadd.f32 %v6834, %v7903
      %7905 = vmatprep.mubr.bf16.mxu0 %v6644
      %7906 = vmatmul.mubr.bf16.gmra.mxu0 %v6643
      %v7907 = vpop.f32.mrf.mxu0
      %v7908 = vadd.f32 %v6830, %v7907
      %v7909 = vpop.f32.mrf.mxu0
      %v7910 = vadd.f32 %v6834, %v7909
      %v7911 = vpop.f32.mrf.mxu0
      %v7912 = vadd.f32 %v6830, %v7911
      %v7913 = vpop.f32.mrf.mxu0
      %v7914 = vadd.f32 %v6834, %v7913
      %7915 = vmatprep.mubr.bf16.mxu0 %v6646
      %7916 = vmatmul.mubr.bf16.gmra.mxu0 %v6645
      %v7917 = vpop.f32.mrf.mxu0
      %v7918 = vadd.f32 %v6830, %v7917
      %v7919 = vpop.f32.mrf.mxu0
      %v7920 = vadd.f32 %v6834, %v7919
      %v7921 = vpop.f32.mrf.mxu0
      %v7922 = vadd.f32 %v6830, %v7921
      %v7923 = vpop.f32.mrf.mxu0
      %v7924 = vadd.f32 %v6834, %v7923
      %7925 = vmatprep.mubr.bf16.mxu0 %v6648
      %7926 = vmatmul.mubr.bf16.gmra.mxu0 %v6647
      %v7927 = vpop.f32.mrf.mxu0
      %v7928 = vadd.f32 %v6830, %v7927
      %v7929 = vpop.f32.mrf.mxu0
      %v7930 = vadd.f32 %v6834, %v7929
      %v7931 = vpop.f32.mrf.mxu0
      %v7932 = vadd.f32 %v6830, %v7931
      %v7933 = vpop.f32.mrf.mxu0
      %v7934 = vadd.f32 %v6834, %v7933
      %7935 = vmatprep.mubr.bf16.mxu0 %v6650
      %7936 = vmatmul.mubr.bf16.gmra.mxu0 %v6649
      %v7937 = vpop.f32.mrf.mxu0
      %v7938 = vadd.f32 %v6830, %v7937
      %v7939 = vpop.f32.mrf.mxu0
      %v7940 = vadd.f32 %v6834, %v7939
      %v7941 = vpop.f32.mrf.mxu0
      %v7942 = vadd.f32 %v6830, %v7941
      %v7943 = vpop.f32.mrf.mxu0
      %v7944 = vadd.f32 %v6834, %v7943
      %7945 = vmatprep.mubr.bf16.mxu0 %v6652
      %7946 = vmatmul.mubr.bf16.gmra.mxu0 %v6651
      %v7947 = vpop.f32.mrf.mxu0
      %v7948 = vadd.f32 %v6830, %v7947
      %v7949 = vpop.f32.mrf.mxu0
      %v7950 = vadd.f32 %v6834, %v7949
      %v7951 = vpop.f32.mrf.mxu0
      %v7952 = vadd.f32 %v6830, %v7951
      %v7953 = vpop.f32.mrf.mxu0
      %v7954 = vadd.f32 %v6834, %v7953
      %7955 = vmatprep.mubr.bf16.mxu0 %v6654
      %7956 = vmatmul.mubr.bf16.gmra.mxu0 %v6653
      %v7957 = vpop.f32.mrf.mxu0
      %v7958 = vadd.f32 %v6830, %v7957
      %v7959 = vpop.f32.mrf.mxu0
      %v7960 = vadd.f32 %v6834, %v7959
      %v7961 = vpop.f32.mrf.mxu0
      %v7962 = vadd.f32 %v6830, %v7961
      %v7963 = vpop.f32.mrf.mxu0
      %v7964 = vadd.f32 %v6834, %v7963
      %7965 = vmatprep.mubr.bf16.mxu0 %v6656
      %7966 = vmatmul.mubr.bf16.gmra.mxu0 %v6655
      %v7967 = vpop.f32.mrf.mxu0
      %v7968 = vadd.f32 %v6830, %v7967
      %v7969 = vpop.f32.mrf.mxu0
      %v7970 = vadd.f32 %v6834, %v7969
      %v7971 = vpop.f32.mrf.mxu0
      %v7972 = vadd.f32 %v6830, %v7971
      %v7973 = vpop.f32.mrf.mxu0
      %v7974 = vadd.f32 %v6834, %v7973
      %7975 = vmatprep.mubr.bf16.mxu0 %v6658
      %7976 = vmatmul.mubr.bf16.gmra.mxu0 %v6657
      %v7977 = vpop.f32.mrf.mxu0
      %v7978 = vadd.f32 %v6830, %v7977
      %v7979 = vpop.f32.mrf.mxu0
      %v7980 = vadd.f32 %v6834, %v7979
      %v7981 = vpop.f32.mrf.mxu0
      %v7982 = vadd.f32 %v6830, %v7981
      %v7983 = vpop.f32.mrf.mxu0
      %v7984 = vadd.f32 %v6834, %v7983
      %7985 = vmatprep.mubr.bf16.mxu0 %v6660
      %7986 = vmatmul.mubr.bf16.gmra.mxu0 %v6659
      %v7987 = vpop.f32.mrf.mxu0
      %v7988 = vadd.f32 %v6830, %v7987
      %v7989 = vpop.f32.mrf.mxu0
      %v7990 = vadd.f32 %v6834, %v7989
      %v7991 = vpop.f32.mrf.mxu0
      %v7992 = vadd.f32 %v6830, %v7991
      %v7993 = vpop.f32.mrf.mxu0
      %v7994 = vadd.f32 %v6834, %v7993
      %7995 = vmatprep.mubr.bf16.mxu0 %v6662
      %7996 = vmatmul.mubr.bf16.gmra.mxu0 %v6661
      %v7997 = vpop.f32.mrf.mxu0
      %v7998 = vadd.f32 %v6830, %v7997
      %v7999 = vpop.f32.mrf.mxu0
      %v8000 = vadd.f32 %v6834, %v7999
      %v8001 = vpop.f32.mrf.mxu0
      %v8002 = vadd.f32 %v6830, %v8001
      %v8003 = vpop.f32.mrf.mxu0
      %v8004 = vadd.f32 %v6834, %v8003
      %8005 = vmatprep.mubr.bf16.mxu0 %v6664
      %8006 = vmatmul.mubr.bf16.gmra.mxu0 %v6663
      %v8007 = vpop.f32.mrf.mxu0
      %v8008 = vadd.f32 %v6830, %v8007
      %v8009 = vpop.f32.mrf.mxu0
      %v8010 = vadd.f32 %v6834, %v8009
      %v8011 = vpop.f32.mrf.mxu0
      %v8012 = vadd.f32 %v6830, %v8011
      %v8013 = vpop.f32.mrf.mxu0
      %v8014 = vadd.f32 %v6834, %v8013
      %8015 = vmatprep.mubr.bf16.mxu0 %v6666
      %8016 = vmatmul.mubr.bf16.gmra.mxu0 %v6665
      %v8017 = vpop.f32.mrf.mxu0
      %v8018 = vadd.f32 %v6830, %v8017
      %v8019 = vpop.f32.mrf.mxu0
      %v8020 = vadd.f32 %v6834, %v8019
      %v8021 = vpop.f32.mrf.mxu0
      %v8022 = vadd.f32 %v6830, %v8021
      %v8023 = vpop.f32.mrf.mxu0
      %v8024 = vadd.f32 %v6834, %v8023
      %8025 = vmatprep.mubr.bf16.mxu0 %v6668
      %8026 = vmatmul.mubr.bf16.gmra.mxu0 %v6667
      %v8027 = vpop.f32.mrf.mxu0
      %v8028 = vadd.f32 %v6830, %v8027
      %v8029 = vpop.f32.mrf.mxu0
      %v8030 = vadd.f32 %v6834, %v8029
      %v8031 = vpop.f32.mrf.mxu0
      %v8032 = vadd.f32 %v6830, %v8031
      %v8033 = vpop.f32.mrf.mxu0
      %v8034 = vadd.f32 %v6834, %v8033
      %8035 = vmatprep.mubr.bf16.mxu0 %v6670
      %8036 = vmatmul.mubr.bf16.gmra.mxu0 %v6669
      %v8037 = vpop.f32.mrf.mxu0
      %v8038 = vadd.f32 %v6830, %v8037
      %v8039 = vpop.f32.mrf.mxu0
      %v8040 = vadd.f32 %v6834, %v8039
      %v8041 = vpop.f32.mrf.mxu0
      %v8042 = vadd.f32 %v6830, %v8041
      %v8043 = vpop.f32.mrf.mxu0
      %v8044 = vadd.f32 %v6834, %v8043
      %8045 = vmatprep.mubr.bf16.mxu0 %v6672
      %8046 = vmatmul.mubr.bf16.gmra.mxu0 %v6671
      %v8047 = vpop.f32.mrf.mxu0
      %v8048 = vadd.f32 %v6830, %v8047
      %v8049 = vpop.f32.mrf.mxu0
      %v8050 = vadd.f32 %v6834, %v8049
      %v8051 = vpop.f32.mrf.mxu0
      %v8052 = vadd.f32 %v6830, %v8051
      %v8053 = vpop.f32.mrf.mxu0
      %v8054 = vadd.f32 %v6834, %v8053
      %8055 = vmatprep.mubr.bf16.mxu0 %v6674
      %8056 = vmatmul.mubr.bf16.gmra.mxu0 %v6673
      %v8057 = vpop.f32.mrf.mxu0
      %v8058 = vadd.f32 %v6830, %v8057
      %v8059 = vpop.f32.mrf.mxu0
      %v8060 = vadd.f32 %v6834, %v8059
      %v8061 = vpop.f32.mrf.mxu0
      %v8062 = vadd.f32 %v6830, %v8061
      %v8063 = vpop.f32.mrf.mxu0
      %v8064 = vadd.f32 %v6834, %v8063
      %8065 = vmatprep.mubr.bf16.mxu0 %v6676
      %8066 = vmatmul.mubr.bf16.gmra.mxu0 %v6675
      %v8067 = vpop.f32.mrf.mxu0
      %v8068 = vadd.f32 %v6830, %v8067
      %v8069 = vpop.f32.mrf.mxu0
      %v8070 = vadd.f32 %v6834, %v8069
      %v8071 = vpop.f32.mrf.mxu0
      %v8072 = vadd.f32 %v6830, %v8071
      %v8073 = vpop.f32.mrf.mxu0
      %v8074 = vadd.f32 %v6834, %v8073
      %8075 = vmatprep.mubr.bf16.mxu0 %v6678
      %8076 = vmatmul.mubr.bf16.gmra.mxu0 %v6677
      %v8077 = vpop.f32.mrf.mxu0
      %v8078 = vadd.f32 %v6830, %v8077
      %v8079 = vpop.f32.mrf.mxu0
      %v8080 = vadd.f32 %v6834, %v8079
      %v8081 = vpop.f32.mrf.mxu0
      %v8082 = vadd.f32 %v6830, %v8081
      %v8083 = vpop.f32.mrf.mxu0
      %v8084 = vadd.f32 %v6834, %v8083
      %8085 = vmatprep.mubr.bf16.mxu0 %v6680
      %8086 = vmatmul.mubr.bf16.gmra.mxu0 %v6679
      %v8087 = vpop.f32.mrf.mxu0
      %v8088 = vadd.f32 %v6830, %v8087
      %v8089 = vpop.f32.mrf.mxu0
      %v8090 = vadd.f32 %v6834, %v8089
      %v8091 = vpop.f32.mrf.mxu0
      %v8092 = vadd.f32 %v6830, %v8091
      %v8093 = vpop.f32.mrf.mxu0
      %v8094 = vadd.f32 %v6834, %v8093
      %8095 = vmatprep.mubr.bf16.mxu0 %v6682
      %8096 = vmatmul.mubr.bf16.gmra.mxu0 %v6681
      %v8097 = vpop.f32.mrf.mxu0
      %v8098 = vadd.f32 %v6830, %v8097
      %v8099 = vpop.f32.mrf.mxu0
      %v8100 = vadd.f32 %v6834, %v8099
      %v8101 = vpop.f32.mrf.mxu0
      %v8102 = vadd.f32 %v6830, %v8101
      %v8103 = vpop.f32.mrf.mxu0
      %v8104 = vadd.f32 %v6834, %v8103
      %8105 = vmatprep.mubr.bf16.mxu0 %v6684
      %8106 = vmatmul.mubr.bf16.gmra.mxu0 %v6683
      %v8107 = vpop.f32.mrf.mxu0
      %v8108 = vadd.f32 %v6830, %v8107
      %v8109 = vpop.f32.mrf.mxu0
      %v8110 = vadd.f32 %v6834, %v8109
      %v8111 = vpop.f32.mrf.mxu0
      %v8112 = vadd.f32 %v6830, %v8111
      %v8113 = vpop.f32.mrf.mxu0
      %v8114 = vadd.f32 %v6834, %v8113
      %8115 = vmatprep.mubr.bf16.mxu0 %v6686
      %8116 = vmatmul.mubr.bf16.gmra.mxu0 %v6685
      %v8117 = vpop.f32.mrf.mxu0
      %v8118 = vadd.f32 %v6830, %v8117
      %v8119 = vpop.f32.mrf.mxu0
      %v8120 = vadd.f32 %v6834, %v8119
      %v8121 = vpop.f32.mrf.mxu0
      %v8122 = vadd.f32 %v6830, %v8121
      %v8123 = vpop.f32.mrf.mxu0
      %v8124 = vadd.f32 %v6834, %v8123
      %8125 = vmatprep.mubr.bf16.mxu0 %v6688
      %8126 = vmatmul.mubr.bf16.gmra.mxu0 %v6687
      %v8127 = vpop.f32.mrf.mxu0
      %v8128 = vadd.f32 %v6830, %v8127
      %v8129 = vpop.f32.mrf.mxu0
      %v8130 = vadd.f32 %v6834, %v8129
      %v8131 = vpop.f32.mrf.mxu0
      %v8132 = vadd.f32 %v6830, %v8131
      %v8133 = vpop.f32.mrf.mxu0
      %v8134 = vadd.f32 %v6834, %v8133
      %8135 = vdwg.mxu0
      %8136 = vmatprep.subr.bf16.mxu0 %v7260
      %8137 = vmatpush1.bf16.msra.mxu0 %v7259
      %8138 = vmatprep.subr.bf16.mxu0 %v7253
      %8139 = vmatpush1.bf16.msra.mxu0 %v7252
      %8140 = vmatprep.subr.bf16.mxu0 %v7246
      %8141 = vmatpush1.bf16.msra.mxu0 %v7245
      %8142 = vmatprep.subr.bf16.mxu0 %v7239
      %8143 = vmatpush1.bf16.msra.mxu0 %v7238
      %8144 = vmatprep.subr.bf16.mxu0 %v7232
      %8145 = vmatpush1.bf16.msra.mxu0 %v7231
      %8146 = vmatprep.subr.bf16.mxu0 %v7225
      %8147 = vmatpush1.bf16.msra.mxu0 %v7224
      %8148 = vmatprep.subr.bf16.mxu0 %v7218
      %8149 = vmatpush1.bf16.msra.mxu0 %v7217
      %8150 = vmatprep.subr.bf16.mxu0 %v7211
      %8151 = vmatpush1.bf16.msra.mxu0 %v7210
      %8152 = vmatprep.subr.bf16.mxu0 %v7316
      %8153 = vmatpush2.bf16.msra.mxu0 %v7315
      %8154 = vmatprep.subr.bf16.mxu0 %v7309
      %8155 = vmatpush2.bf16.msra.mxu0 %v7308
      %8156 = vmatprep.subr.bf16.mxu0 %v7302
      %8157 = vmatpush2.bf16.msra.mxu0 %v7301
      %8158 = vmatprep.subr.bf16.mxu0 %v7295
      %8159 = vmatpush2.bf16.msra.mxu0 %v7294
      %8160 = vmatprep.subr.bf16.mxu0 %v7288
      %8161 = vmatpush2.bf16.msra.mxu0 %v7287
      %8162 = vmatprep.subr.bf16.mxu0 %v7281
      %8163 = vmatpush2.bf16.msra.mxu0 %v7280
      %8164 = vmatprep.subr.bf16.mxu0 %v7274
      %8165 = vmatpush2.bf16.msra.mxu0 %v7273
      %8166 = vmatprep.subr.bf16.mxu0 %v7267
      %8167 = vmatpush2.bf16.msra.mxu0 %v7266
      %8168 = vmatprep.mubr.bf16.mxu0 %v6626
      %8169 = vmatmul.mubr.bf16.gmra.mxu0 %v6625
      %v8170 = vpop.f32.mrf.mxu0
      %v8171 = vadd.f32 %v6838, %v8170
      %v8172 = vpop.f32.mrf.mxu0
      %v8173 = vadd.f32 %v6842, %v8172
      %v8174 = vpop.f32.mrf.mxu0
      %v8175 = vadd.f32 %v6838, %v8174
      %v8176 = vpop.f32.mrf.mxu0
      %v8177 = vadd.f32 %v6842, %v8176
      %8178 = vmatprep.mubr.bf16.mxu0 %v6628
      %8179 = vmatmul.mubr.bf16.gmra.mxu0 %v6627
      %v8180 = vpop.f32.mrf.mxu0
      %v8181 = vadd.f32 %v6838, %v8180
      %v8182 = vpop.f32.mrf.mxu0
      %v8183 = vadd.f32 %v6842, %v8182
      %v8184 = vpop.f32.mrf.mxu0
      %v8185 = vadd.f32 %v6838, %v8184
      %v8186 = vpop.f32.mrf.mxu0
      %v8187 = vadd.f32 %v6842, %v8186
      %8188 = vmatprep.mubr.bf16.mxu0 %v6630
      %8189 = vmatmul.mubr.bf16.gmra.mxu0 %v6629
      %v8190 = vpop.f32.mrf.mxu0
      %v8191 = vadd.f32 %v6838, %v8190
      %v8192 = vpop.f32.mrf.mxu0
      %v8193 = vadd.f32 %v6842, %v8192
      %v8194 = vpop.f32.mrf.mxu0
      %v8195 = vadd.f32 %v6838, %v8194
      %v8196 = vpop.f32.mrf.mxu0
      %v8197 = vadd.f32 %v6842, %v8196
      %8198 = vmatprep.mubr.bf16.mxu0 %v6632
      %8199 = vmatmul.mubr.bf16.gmra.mxu0 %v6631
      %v8200 = vpop.f32.mrf.mxu0
      %v8201 = vadd.f32 %v6838, %v8200
      %v8202 = vpop.f32.mrf.mxu0
      %v8203 = vadd.f32 %v6842, %v8202
      %v8204 = vpop.f32.mrf.mxu0
      %v8205 = vadd.f32 %v6838, %v8204
      %v8206 = vpop.f32.mrf.mxu0
      %v8207 = vadd.f32 %v6842, %v8206
      %8208 = vmatprep.mubr.bf16.mxu0 %v6634
      %8209 = vmatmul.mubr.bf16.gmra.mxu0 %v6633
      %v8210 = vpop.f32.mrf.mxu0
      %v8211 = vadd.f32 %v6838, %v8210
      %v8212 = vpop.f32.mrf.mxu0
      %v8213 = vadd.f32 %v6842, %v8212
      %v8214 = vpop.f32.mrf.mxu0
      %v8215 = vadd.f32 %v6838, %v8214
      %v8216 = vpop.f32.mrf.mxu0
      %v8217 = vadd.f32 %v6842, %v8216
      %8218 = vmatprep.mubr.bf16.mxu0 %v6636
      %8219 = vmatmul.mubr.bf16.gmra.mxu0 %v6635
      %v8220 = vpop.f32.mrf.mxu0
      %v8221 = vadd.f32 %v6838, %v8220
      %v8222 = vpop.f32.mrf.mxu0
      %v8223 = vadd.f32 %v6842, %v8222
      %v8224 = vpop.f32.mrf.mxu0
      %v8225 = vadd.f32 %v6838, %v8224
      %v8226 = vpop.f32.mrf.mxu0
      %v8227 = vadd.f32 %v6842, %v8226
      %8228 = vmatprep.mubr.bf16.mxu0 %v6638
      %8229 = vmatmul.mubr.bf16.gmra.mxu0 %v6637
      %v8230 = vpop.f32.mrf.mxu0
      %v8231 = vadd.f32 %v6838, %v8230
      %v8232 = vpop.f32.mrf.mxu0
      %v8233 = vadd.f32 %v6842, %v8232
      %v8234 = vpop.f32.mrf.mxu0
      %v8235 = vadd.f32 %v6838, %v8234
      %v8236 = vpop.f32.mrf.mxu0
      %v8237 = vadd.f32 %v6842, %v8236
      %8238 = vmatprep.mubr.bf16.mxu0 %v6640
      %8239 = vmatmul.mubr.bf16.gmra.mxu0 %v6639
      %v8240 = vpop.f32.mrf.mxu0
      %v8241 = vadd.f32 %v6838, %v8240
      %v8242 = vpop.f32.mrf.mxu0
      %v8243 = vadd.f32 %v6842, %v8242
      %v8244 = vpop.f32.mrf.mxu0
      %v8245 = vadd.f32 %v6838, %v8244
      %v8246 = vpop.f32.mrf.mxu0
      %v8247 = vadd.f32 %v6842, %v8246
      %8248 = vmatprep.mubr.bf16.mxu0 %v6642
      %8249 = vmatmul.mubr.bf16.gmra.mxu0 %v6641
      %v8250 = vpop.f32.mrf.mxu0
      %v8251 = vadd.f32 %v6838, %v8250
      %v8252 = vpop.f32.mrf.mxu0
      %v8253 = vadd.f32 %v6842, %v8252
      %v8254 = vpop.f32.mrf.mxu0
      %v8255 = vadd.f32 %v6838, %v8254
      %v8256 = vpop.f32.mrf.mxu0
      %v8257 = vadd.f32 %v6842, %v8256
      %8258 = vmatprep.mubr.bf16.mxu0 %v6644
      %8259 = vmatmul.mubr.bf16.gmra.mxu0 %v6643
      %v8260 = vpop.f32.mrf.mxu0
      %v8261 = vadd.f32 %v6838, %v8260
      %v8262 = vpop.f32.mrf.mxu0
      %v8263 = vadd.f32 %v6842, %v8262
      %v8264 = vpop.f32.mrf.mxu0
      %v8265 = vadd.f32 %v6838, %v8264
      %v8266 = vpop.f32.mrf.mxu0
      %v8267 = vadd.f32 %v6842, %v8266
      %8268 = vmatprep.mubr.bf16.mxu0 %v6646
      %8269 = vmatmul.mubr.bf16.gmra.mxu0 %v6645
      %v8270 = vpop.f32.mrf.mxu0
      %v8271 = vadd.f32 %v6838, %v8270
      %v8272 = vpop.f32.mrf.mxu0
      %v8273 = vadd.f32 %v6842, %v8272
      %v8274 = vpop.f32.mrf.mxu0
      %v8275 = vadd.f32 %v6838, %v8274
      %v8276 = vpop.f32.mrf.mxu0
      %v8277 = vadd.f32 %v6842, %v8276
      %8278 = vmatprep.mubr.bf16.mxu0 %v6648
      %8279 = vmatmul.mubr.bf16.gmra.mxu0 %v6647
      %v8280 = vpop.f32.mrf.mxu0
      %v8281 = vadd.f32 %v6838, %v8280
      %v8282 = vpop.f32.mrf.mxu0
      %v8283 = vadd.f32 %v6842, %v8282
      %v8284 = vpop.f32.mrf.mxu0
      %v8285 = vadd.f32 %v6838, %v8284
      %v8286 = vpop.f32.mrf.mxu0
      %v8287 = vadd.f32 %v6842, %v8286
      %8288 = vmatprep.mubr.bf16.mxu0 %v6650
      %8289 = vmatmul.mubr.bf16.gmra.mxu0 %v6649
      %v8290 = vpop.f32.mrf.mxu0
      %v8291 = vadd.f32 %v6838, %v8290
      %v8292 = vpop.f32.mrf.mxu0
      %v8293 = vadd.f32 %v6842, %v8292
      %v8294 = vpop.f32.mrf.mxu0
      %v8295 = vadd.f32 %v6838, %v8294
      %v8296 = vpop.f32.mrf.mxu0
      %v8297 = vadd.f32 %v6842, %v8296
      %8298 = vmatprep.mubr.bf16.mxu0 %v6652
      %8299 = vmatmul.mubr.bf16.gmra.mxu0 %v6651
      %v8300 = vpop.f32.mrf.mxu0
      %v8301 = vadd.f32 %v6838, %v8300
      %v8302 = vpop.f32.mrf.mxu0
      %v8303 = vadd.f32 %v6842, %v8302
      %v8304 = vpop.f32.mrf.mxu0
      %v8305 = vadd.f32 %v6838, %v8304
      %v8306 = vpop.f32.mrf.mxu0
      %v8307 = vadd.f32 %v6842, %v8306
      %8308 = vmatprep.mubr.bf16.mxu0 %v6654
      %8309 = vmatmul.mubr.bf16.gmra.mxu0 %v6653
      %v8310 = vpop.f32.mrf.mxu0
      %v8311 = vadd.f32 %v6838, %v8310
      %v8312 = vpop.f32.mrf.mxu0
      %v8313 = vadd.f32 %v6842, %v8312
      %v8314 = vpop.f32.mrf.mxu0
      %v8315 = vadd.f32 %v6838, %v8314
      %v8316 = vpop.f32.mrf.mxu0
      %v8317 = vadd.f32 %v6842, %v8316
      %8318 = vmatprep.mubr.bf16.mxu0 %v6656
      %8319 = vmatmul.mubr.bf16.gmra.mxu0 %v6655
      %v8320 = vpop.f32.mrf.mxu0
      %v8321 = vadd.f32 %v6838, %v8320
      %v8322 = vpop.f32.mrf.mxu0
      %v8323 = vadd.f32 %v6842, %v8322
      %v8324 = vpop.f32.mrf.mxu0
      %v8325 = vadd.f32 %v6838, %v8324
      %v8326 = vpop.f32.mrf.mxu0
      %v8327 = vadd.f32 %v6842, %v8326
      %8328 = vmatprep.mubr.bf16.mxu0 %v6658
      %8329 = vmatmul.mubr.bf16.gmra.mxu0 %v6657
      %v8330 = vpop.f32.mrf.mxu0
      %v8331 = vadd.f32 %v6838, %v8330
      %v8332 = vpop.f32.mrf.mxu0
      %v8333 = vadd.f32 %v6842, %v8332
      %v8334 = vpop.f32.mrf.mxu0
      %v8335 = vadd.f32 %v6838, %v8334
      %v8336 = vpop.f32.mrf.mxu0
      %v8337 = vadd.f32 %v6842, %v8336
      %8338 = vmatprep.mubr.bf16.mxu0 %v6660
      %8339 = vmatmul.mubr.bf16.gmra.mxu0 %v6659
      %v8340 = vpop.f32.mrf.mxu0
      %v8341 = vadd.f32 %v6838, %v8340
      %v8342 = vpop.f32.mrf.mxu0
      %v8343 = vadd.f32 %v6842, %v8342
      %v8344 = vpop.f32.mrf.mxu0
      %v8345 = vadd.f32 %v6838, %v8344
      %v8346 = vpop.f32.mrf.mxu0
      %v8347 = vadd.f32 %v6842, %v8346
      %8348 = vmatprep.mubr.bf16.mxu0 %v6662
      %8349 = vmatmul.mubr.bf16.gmra.mxu0 %v6661
      %v8350 = vpop.f32.mrf.mxu0
      %v8351 = vadd.f32 %v6838, %v8350
      %v8352 = vpop.f32.mrf.mxu0
      %v8353 = vadd.f32 %v6842, %v8352
      %v8354 = vpop.f32.mrf.mxu0
      %v8355 = vadd.f32 %v6838, %v8354
      %v8356 = vpop.f32.mrf.mxu0
      %v8357 = vadd.f32 %v6842, %v8356
      %8358 = vmatprep.mubr.bf16.mxu0 %v6664
      %8359 = vmatmul.mubr.bf16.gmra.mxu0 %v6663
      %v8360 = vpop.f32.mrf.mxu0
      %v8361 = vadd.f32 %v6838, %v8360
      %v8362 = vpop.f32.mrf.mxu0
      %v8363 = vadd.f32 %v6842, %v8362
      %v8364 = vpop.f32.mrf.mxu0
      %v8365 = vadd.f32 %v6838, %v8364
      %v8366 = vpop.f32.mrf.mxu0
      %v8367 = vadd.f32 %v6842, %v8366
      %8368 = vmatprep.mubr.bf16.mxu0 %v6666
      %8369 = vmatmul.mubr.bf16.gmra.mxu0 %v6665
      %v8370 = vpop.f32.mrf.mxu0
      %v8371 = vadd.f32 %v6838, %v8370
      %v8372 = vpop.f32.mrf.mxu0
      %v8373 = vadd.f32 %v6842, %v8372
      %v8374 = vpop.f32.mrf.mxu0
      %v8375 = vadd.f32 %v6838, %v8374
      %v8376 = vpop.f32.mrf.mxu0
      %v8377 = vadd.f32 %v6842, %v8376
      %8378 = vmatprep.mubr.bf16.mxu0 %v6668
      %8379 = vmatmul.mubr.bf16.gmra.mxu0 %v6667
      %v8380 = vpop.f32.mrf.mxu0
      %v8381 = vadd.f32 %v6838, %v8380
      %v8382 = vpop.f32.mrf.mxu0
      %v8383 = vadd.f32 %v6842, %v8382
      %v8384 = vpop.f32.mrf.mxu0
      %v8385 = vadd.f32 %v6838, %v8384
      %v8386 = vpop.f32.mrf.mxu0
      %v8387 = vadd.f32 %v6842, %v8386
      %8388 = vmatprep.mubr.bf16.mxu0 %v6670
      %8389 = vmatmul.mubr.bf16.gmra.mxu0 %v6669
      %v8390 = vpop.f32.mrf.mxu0
      %v8391 = vadd.f32 %v6838, %v8390
      %v8392 = vpop.f32.mrf.mxu0
      %v8393 = vadd.f32 %v6842, %v8392
      %v8394 = vpop.f32.mrf.mxu0
      %v8395 = vadd.f32 %v6838, %v8394
      %v8396 = vpop.f32.mrf.mxu0
      %v8397 = vadd.f32 %v6842, %v8396
      %8398 = vmatprep.mubr.bf16.mxu0 %v6672
      %8399 = vmatmul.mubr.bf16.gmra.mxu0 %v6671
      %v8400 = vpop.f32.mrf.mxu0
      %v8401 = vadd.f32 %v6838, %v8400
      %v8402 = vpop.f32.mrf.mxu0
      %v8403 = vadd.f32 %v6842, %v8402
      %v8404 = vpop.f32.mrf.mxu0
      %v8405 = vadd.f32 %v6838, %v8404
      %v8406 = vpop.f32.mrf.mxu0
      %v8407 = vadd.f32 %v6842, %v8406
      %8408 = vmatprep.mubr.bf16.mxu0 %v6674
      %8409 = vmatmul.mubr.bf16.gmra.mxu0 %v6673
      %v8410 = vpop.f32.mrf.mxu0
      %v8411 = vadd.f32 %v6838, %v8410
      %v8412 = vpop.f32.mrf.mxu0
      %v8413 = vadd.f32 %v6842, %v8412
      %v8414 = vpop.f32.mrf.mxu0
      %v8415 = vadd.f32 %v6838, %v8414
      %v8416 = vpop.f32.mrf.mxu0
      %v8417 = vadd.f32 %v6842, %v8416
      %8418 = vmatprep.mubr.bf16.mxu0 %v6676
      %8419 = vmatmul.mubr.bf16.gmra.mxu0 %v6675
      %v8420 = vpop.f32.mrf.mxu0
      %v8421 = vadd.f32 %v6838, %v8420
      %v8422 = vpop.f32.mrf.mxu0
      %v8423 = vadd.f32 %v6842, %v8422
      %v8424 = vpop.f32.mrf.mxu0
      %v8425 = vadd.f32 %v6838, %v8424
      %v8426 = vpop.f32.mrf.mxu0
      %v8427 = vadd.f32 %v6842, %v8426
      %8428 = vmatprep.mubr.bf16.mxu0 %v6678
      %8429 = vmatmul.mubr.bf16.gmra.mxu0 %v6677
      %v8430 = vpop.f32.mrf.mxu0
      %v8431 = vadd.f32 %v6838, %v8430
      %v8432 = vpop.f32.mrf.mxu0
      %v8433 = vadd.f32 %v6842, %v8432
      %v8434 = vpop.f32.mrf.mxu0
      %v8435 = vadd.f32 %v6838, %v8434
      %v8436 = vpop.f32.mrf.mxu0
      %v8437 = vadd.f32 %v6842, %v8436
      %8438 = vmatprep.mubr.bf16.mxu0 %v6680
      %8439 = vmatmul.mubr.bf16.gmra.mxu0 %v6679
      %v8440 = vpop.f32.mrf.mxu0
      %v8441 = vadd.f32 %v6838, %v8440
      %v8442 = vpop.f32.mrf.mxu0
      %v8443 = vadd.f32 %v6842, %v8442
      %v8444 = vpop.f32.mrf.mxu0
      %v8445 = vadd.f32 %v6838, %v8444
      %v8446 = vpop.f32.mrf.mxu0
      %v8447 = vadd.f32 %v6842, %v8446
      %8448 = vmatprep.mubr.bf16.mxu0 %v6682
      %8449 = vmatmul.mubr.bf16.gmra.mxu0 %v6681
      %v8450 = vpop.f32.mrf.mxu0
      %v8451 = vadd.f32 %v6838, %v8450
      %v8452 = vpop.f32.mrf.mxu0
      %v8453 = vadd.f32 %v6842, %v8452
      %v8454 = vpop.f32.mrf.mxu0
      %v8455 = vadd.f32 %v6838, %v8454
      %v8456 = vpop.f32.mrf.mxu0
      %v8457 = vadd.f32 %v6842, %v8456
      %8458 = vmatprep.mubr.bf16.mxu0 %v6684
      %8459 = vmatmul.mubr.bf16.gmra.mxu0 %v6683
      %v8460 = vpop.f32.mrf.mxu0
      %v8461 = vadd.f32 %v6838, %v8460
      %v8462 = vpop.f32.mrf.mxu0
      %v8463 = vadd.f32 %v6842, %v8462
      %v8464 = vpop.f32.mrf.mxu0
      %v8465 = vadd.f32 %v6838, %v8464
      %v8466 = vpop.f32.mrf.mxu0
      %v8467 = vadd.f32 %v6842, %v8466
      %8468 = vmatprep.mubr.bf16.mxu0 %v6686
      %8469 = vmatmul.mubr.bf16.gmra.mxu0 %v6685
      %v8470 = vpop.f32.mrf.mxu0
      %v8471 = vadd.f32 %v6838, %v8470
      %v8472 = vpop.f32.mrf.mxu0
      %v8473 = vadd.f32 %v6842, %v8472
      %v8474 = vpop.f32.mrf.mxu0
      %v8475 = vadd.f32 %v6838, %v8474
      %v8476 = vpop.f32.mrf.mxu0
      %v8477 = vadd.f32 %v6842, %v8476
      %8478 = vmatprep.mubr.bf16.mxu0 %v6688
      %8479 = vmatmul.mubr.bf16.gmra.mxu0 %v6687
      %v8480 = vpop.f32.mrf.mxu0
      %v8481 = vadd.f32 %v6838, %v8480
      %v8482 = vpop.f32.mrf.mxu0
      %v8483 = vadd.f32 %v6842, %v8482
      %v8484 = vpop.f32.mrf.mxu0
      %v8485 = vadd.f32 %v6838, %v8484
      %v8486 = vpop.f32.mrf.mxu0
      %v8487 = vadd.f32 %v6842, %v8486
      %8488 = vdwg.mxu0
      %8489 = vmatprep.subr.bf16.mxu0 0
      %8490 = vmatpush1.bf16.msra.mxu0 %v7261
      %8491 = vmatprep.subr.bf16.mxu0 0
      %8492 = vmatpush1.bf16.msra.mxu0 %v7254
      %8493 = vmatprep.subr.bf16.mxu0 0
      %8494 = vmatpush1.bf16.msra.mxu0 %v7247
      %8495 = vmatprep.subr.bf16.mxu0 0
      %8496 = vmatpush1.bf16.msra.mxu0 %v7240
      %8497 = vmatprep.subr.bf16.mxu0 0
      %8498 = vmatpush1.bf16.msra.mxu0 %v7233
      %8499 = vmatprep.subr.bf16.mxu0 0
      %8500 = vmatpush1.bf16.msra.mxu0 %v7226
      %8501 = vmatprep.subr.bf16.mxu0 0
      %8502 = vmatpush1.bf16.msra.mxu0 %v7219
      %8503 = vmatprep.subr.bf16.mxu0 0
      %8504 = vmatpush1.bf16.msra.mxu0 %v7212
      %8505 = vmatprep.subr.bf16.mxu0 0
      %8506 = vmatpush2.bf16.msra.mxu0 %v7317
      %8507 = vmatprep.subr.bf16.mxu0 0
      %8508 = vmatpush2.bf16.msra.mxu0 %v7310
      %8509 = vmatprep.subr.bf16.mxu0 0
      %8510 = vmatpush2.bf16.msra.mxu0 %v7303
      %8511 = vmatprep.subr.bf16.mxu0 0
      %8512 = vmatpush2.bf16.msra.mxu0 %v7296
      %8513 = vmatprep.subr.bf16.mxu0 0
      %8514 = vmatpush2.bf16.msra.mxu0 %v7289
      %8515 = vmatprep.subr.bf16.mxu0 0
      %8516 = vmatpush2.bf16.msra.mxu0 %v7282
      %8517 = vmatprep.subr.bf16.mxu0 0
      %8518 = vmatpush2.bf16.msra.mxu0 %v7275
      %8519 = vmatprep.subr.bf16.mxu0 0
      %8520 = vmatpush2.bf16.msra.mxu0 %v7268
      %8521 = vmatprep.mubr.bf16.mxu0 %v6626
      %8522 = vmatmul.mubr.bf16.gmra.mxu0 %v6625
      %v8523 = vpop.f32.mrf.mxu0
      %v8524 = vadd.f32 %v6846, %v8523
      %v8525 = vpop.f32.mrf.mxu0
      %v8526 = vpop.f32.mrf.mxu0
      %v8527 = vadd.f32 %v6846, %v8526
      %v8528 = vpop.f32.mrf.mxu0
      %8529 = vmatprep.mubr.bf16.mxu0 %v6628
      %8530 = vmatmul.mubr.bf16.gmra.mxu0 %v6627
      %v8531 = vpop.f32.mrf.mxu0
      %v8532 = vadd.f32 %v6846, %v8531
      %v8533 = vpop.f32.mrf.mxu0
      %v8534 = vpop.f32.mrf.mxu0
      %v8535 = vadd.f32 %v6846, %v8534
      %v8536 = vpop.f32.mrf.mxu0
      %8537 = vmatprep.mubr.bf16.mxu0 %v6630
      %8538 = vmatmul.mubr.bf16.gmra.mxu0 %v6629
      %v8539 = vpop.f32.mrf.mxu0
      %v8540 = vadd.f32 %v6846, %v8539
      %v8541 = vpop.f32.mrf.mxu0
      %v8542 = vpop.f32.mrf.mxu0
      %v8543 = vadd.f32 %v6846, %v8542
      %v8544 = vpop.f32.mrf.mxu0
      %8545 = vmatprep.mubr.bf16.mxu0 %v6632
      %8546 = vmatmul.mubr.bf16.gmra.mxu0 %v6631
      %v8547 = vpop.f32.mrf.mxu0
      %v8548 = vadd.f32 %v6846, %v8547
      %v8549 = vpop.f32.mrf.mxu0
      %v8550 = vpop.f32.mrf.mxu0
      %v8551 = vadd.f32 %v6846, %v8550
      %v8552 = vpop.f32.mrf.mxu0
      %8553 = vmatprep.mubr.bf16.mxu0 %v6634
      %8554 = vmatmul.mubr.bf16.gmra.mxu0 %v6633
      %v8555 = vpop.f32.mrf.mxu0
      %v8556 = vadd.f32 %v6846, %v8555
      %v8557 = vpop.f32.mrf.mxu0
      %v8558 = vpop.f32.mrf.mxu0
      %v8559 = vadd.f32 %v6846, %v8558
      %v8560 = vpop.f32.mrf.mxu0
      %8561 = vmatprep.mubr.bf16.mxu0 %v6636
      %8562 = vmatmul.mubr.bf16.gmra.mxu0 %v6635
      %v8563 = vpop.f32.mrf.mxu0
      %v8564 = vadd.f32 %v6846, %v8563
      %v8565 = vpop.f32.mrf.mxu0
      %v8566 = vpop.f32.mrf.mxu0
      %v8567 = vadd.f32 %v6846, %v8566
      %v8568 = vpop.f32.mrf.mxu0
      %8569 = vmatprep.mubr.bf16.mxu0 %v6638
      %8570 = vmatmul.mubr.bf16.gmra.mxu0 %v6637
      %v8571 = vpop.f32.mrf.mxu0
      %v8572 = vadd.f32 %v6846, %v8571
      %v8573 = vpop.f32.mrf.mxu0
      %v8574 = vpop.f32.mrf.mxu0
      %v8575 = vadd.f32 %v6846, %v8574
      %v8576 = vpop.f32.mrf.mxu0
      %8577 = vmatprep.mubr.bf16.mxu0 %v6640
      %8578 = vmatmul.mubr.bf16.gmra.mxu0 %v6639
      %v8579 = vpop.f32.mrf.mxu0
      %v8580 = vadd.f32 %v6846, %v8579
      %v8581 = vpop.f32.mrf.mxu0
      %v8582 = vpop.f32.mrf.mxu0
      %v8583 = vadd.f32 %v6846, %v8582
      %v8584 = vpop.f32.mrf.mxu0
      %8585 = vmatprep.mubr.bf16.mxu0 %v6642
      %8586 = vmatmul.mubr.bf16.gmra.mxu0 %v6641
      %v8587 = vpop.f32.mrf.mxu0
      %v8588 = vadd.f32 %v6846, %v8587
      %v8589 = vpop.f32.mrf.mxu0
      %v8590 = vpop.f32.mrf.mxu0
      %v8591 = vadd.f32 %v6846, %v8590
      %v8592 = vpop.f32.mrf.mxu0
      %8593 = vmatprep.mubr.bf16.mxu0 %v6644
      %8594 = vmatmul.mubr.bf16.gmra.mxu0 %v6643
      %v8595 = vpop.f32.mrf.mxu0
      %v8596 = vadd.f32 %v6846, %v8595
      %v8597 = vpop.f32.mrf.mxu0
      %v8598 = vpop.f32.mrf.mxu0
      %v8599 = vadd.f32 %v6846, %v8598
      %v8600 = vpop.f32.mrf.mxu0
      %8601 = vmatprep.mubr.bf16.mxu0 %v6646
      %8602 = vmatmul.mubr.bf16.gmra.mxu0 %v6645
      %v8603 = vpop.f32.mrf.mxu0
      %v8604 = vadd.f32 %v6846, %v8603
      %v8605 = vpop.f32.mrf.mxu0
      %v8606 = vpop.f32.mrf.mxu0
      %v8607 = vadd.f32 %v6846, %v8606
      %v8608 = vpop.f32.mrf.mxu0
      %8609 = vmatprep.mubr.bf16.mxu0 %v6648
      %8610 = vmatmul.mubr.bf16.gmra.mxu0 %v6647
      %v8611 = vpop.f32.mrf.mxu0
      %v8612 = vadd.f32 %v6846, %v8611
      %v8613 = vpop.f32.mrf.mxu0
      %v8614 = vpop.f32.mrf.mxu0
      %v8615 = vadd.f32 %v6846, %v8614
      %v8616 = vpop.f32.mrf.mxu0
      %8617 = vmatprep.mubr.bf16.mxu0 %v6650
      %8618 = vmatmul.mubr.bf16.gmra.mxu0 %v6649
      %v8619 = vpop.f32.mrf.mxu0
      %v8620 = vadd.f32 %v6846, %v8619
      %v8621 = vpop.f32.mrf.mxu0
      %v8622 = vpop.f32.mrf.mxu0
      %v8623 = vadd.f32 %v6846, %v8622
      %v8624 = vpop.f32.mrf.mxu0
      %8625 = vmatprep.mubr.bf16.mxu0 %v6652
      %8626 = vmatmul.mubr.bf16.gmra.mxu0 %v6651
      %v8627 = vpop.f32.mrf.mxu0
      %v8628 = vadd.f32 %v6846, %v8627
      %v8629 = vpop.f32.mrf.mxu0
      %v8630 = vpop.f32.mrf.mxu0
      %v8631 = vadd.f32 %v6846, %v8630
      %v8632 = vpop.f32.mrf.mxu0
      %8633 = vmatprep.mubr.bf16.mxu0 %v6654
      %8634 = vmatmul.mubr.bf16.gmra.mxu0 %v6653
      %v8635 = vpop.f32.mrf.mxu0
      %v8636 = vadd.f32 %v6846, %v8635
      %v8637 = vpop.f32.mrf.mxu0
      %v8638 = vpop.f32.mrf.mxu0
      %v8639 = vadd.f32 %v6846, %v8638
      %v8640 = vpop.f32.mrf.mxu0
      %8641 = vmatprep.mubr.bf16.mxu0 %v6656
      %8642 = vmatmul.mubr.bf16.gmra.mxu0 %v6655
      %v8643 = vpop.f32.mrf.mxu0
      %v8644 = vadd.f32 %v6846, %v8643
      %v8645 = vpop.f32.mrf.mxu0
      %v8646 = vpop.f32.mrf.mxu0
      %v8647 = vadd.f32 %v6846, %v8646
      %v8648 = vpop.f32.mrf.mxu0
      %8649 = vmatprep.mubr.bf16.mxu0 %v6658
      %8650 = vmatmul.mubr.bf16.gmra.mxu0 %v6657
      %v8651 = vpop.f32.mrf.mxu0
      %v8652 = vadd.f32 %v6846, %v8651
      %v8653 = vpop.f32.mrf.mxu0
      %v8654 = vpop.f32.mrf.mxu0
      %v8655 = vadd.f32 %v6846, %v8654
      %v8656 = vpop.f32.mrf.mxu0
      %8657 = vmatprep.mubr.bf16.mxu0 %v6660
      %8658 = vmatmul.mubr.bf16.gmra.mxu0 %v6659
      %v8659 = vpop.f32.mrf.mxu0
      %v8660 = vadd.f32 %v6846, %v8659
      %v8661 = vpop.f32.mrf.mxu0
      %v8662 = vpop.f32.mrf.mxu0
      %v8663 = vadd.f32 %v6846, %v8662
      %v8664 = vpop.f32.mrf.mxu0
      %8665 = vmatprep.mubr.bf16.mxu0 %v6662
      %8666 = vmatmul.mubr.bf16.gmra.mxu0 %v6661
      %v8667 = vpop.f32.mrf.mxu0
      %v8668 = vadd.f32 %v6846, %v8667
      %v8669 = vpop.f32.mrf.mxu0
      %v8670 = vpop.f32.mrf.mxu0
      %v8671 = vadd.f32 %v6846, %v8670
      %v8672 = vpop.f32.mrf.mxu0
      %8673 = vmatprep.mubr.bf16.mxu0 %v6664
      %8674 = vmatmul.mubr.bf16.gmra.mxu0 %v6663
      %v8675 = vpop.f32.mrf.mxu0
      %v8676 = vadd.f32 %v6846, %v8675
      %v8677 = vpop.f32.mrf.mxu0
      %v8678 = vpop.f32.mrf.mxu0
      %v8679 = vadd.f32 %v6846, %v8678
      %v8680 = vpop.f32.mrf.mxu0
      %8681 = vmatprep.mubr.bf16.mxu0 %v6666
      %8682 = vmatmul.mubr.bf16.gmra.mxu0 %v6665
      %v8683 = vpop.f32.mrf.mxu0
      %v8684 = vadd.f32 %v6846, %v8683
      %v8685 = vpop.f32.mrf.mxu0
      %v8686 = vpop.f32.mrf.mxu0
      %v8687 = vadd.f32 %v6846, %v8686
      %v8688 = vpop.f32.mrf.mxu0
      %8689 = vmatprep.mubr.bf16.mxu0 %v6668
      %8690 = vmatmul.mubr.bf16.gmra.mxu0 %v6667
      %v8691 = vpop.f32.mrf.mxu0
      %v8692 = vadd.f32 %v6846, %v8691
      %v8693 = vpop.f32.mrf.mxu0
      %v8694 = vpop.f32.mrf.mxu0
      %v8695 = vadd.f32 %v6846, %v8694
      %v8696 = vpop.f32.mrf.mxu0
      %8697 = vmatprep.mubr.bf16.mxu0 %v6670
      %8698 = vmatmul.mubr.bf16.gmra.mxu0 %v6669
      %v8699 = vpop.f32.mrf.mxu0
      %v8700 = vadd.f32 %v6846, %v8699
      %v8701 = vpop.f32.mrf.mxu0
      %v8702 = vpop.f32.mrf.mxu0
      %v8703 = vadd.f32 %v6846, %v8702
      %v8704 = vpop.f32.mrf.mxu0
      %8705 = vmatprep.mubr.bf16.mxu0 %v6672
      %8706 = vmatmul.mubr.bf16.gmra.mxu0 %v6671
      %v8707 = vpop.f32.mrf.mxu0
      %v8708 = vadd.f32 %v6846, %v8707
      %v8709 = vpop.f32.mrf.mxu0
      %v8710 = vpop.f32.mrf.mxu0
      %v8711 = vadd.f32 %v6846, %v8710
      %v8712 = vpop.f32.mrf.mxu0
      %8713 = vmatprep.mubr.bf16.mxu0 %v6674
      %8714 = vmatmul.mubr.bf16.gmra.mxu0 %v6673
      %v8715 = vpop.f32.mrf.mxu0
      %v8716 = vadd.f32 %v6846, %v8715
      %v8717 = vpop.f32.mrf.mxu0
      %v8718 = vpop.f32.mrf.mxu0
      %v8719 = vadd.f32 %v6846, %v8718
      %v8720 = vpop.f32.mrf.mxu0
      %8721 = vmatprep.mubr.bf16.mxu0 %v6676
      %8722 = vmatmul.mubr.bf16.gmra.mxu0 %v6675
      %v8723 = vpop.f32.mrf.mxu0
      %v8724 = vadd.f32 %v6846, %v8723
      %v8725 = vpop.f32.mrf.mxu0
      %v8726 = vpop.f32.mrf.mxu0
      %v8727 = vadd.f32 %v6846, %v8726
      %v8728 = vpop.f32.mrf.mxu0
      %8729 = vmatprep.mubr.bf16.mxu0 %v6678
      %8730 = vmatmul.mubr.bf16.gmra.mxu0 %v6677
      %v8731 = vpop.f32.mrf.mxu0
      %v8732 = vadd.f32 %v6846, %v8731
      %v8733 = vpop.f32.mrf.mxu0
      %v8734 = vpop.f32.mrf.mxu0
      %v8735 = vadd.f32 %v6846, %v8734
      %v8736 = vpop.f32.mrf.mxu0
      %8737 = vmatprep.mubr.bf16.mxu0 %v6680
      %8738 = vmatmul.mubr.bf16.gmra.mxu0 %v6679
      %v8739 = vpop.f32.mrf.mxu0
      %v8740 = vadd.f32 %v6846, %v8739
      %v8741 = vpop.f32.mrf.mxu0
      %v8742 = vpop.f32.mrf.mxu0
      %v8743 = vadd.f32 %v6846, %v8742
      %v8744 = vpop.f32.mrf.mxu0
      %8745 = vmatprep.mubr.bf16.mxu0 %v6682
      %8746 = vmatmul.mubr.bf16.gmra.mxu0 %v6681
      %v8747 = vpop.f32.mrf.mxu0
      %v8748 = vadd.f32 %v6846, %v8747
      %v8749 = vpop.f32.mrf.mxu0
      %v8750 = vpop.f32.mrf.mxu0
      %v8751 = vadd.f32 %v6846, %v8750
      %v8752 = vpop.f32.mrf.mxu0
      %8753 = vmatprep.mubr.bf16.mxu0 %v6684
      %8754 = vmatmul.mubr.bf16.gmra.mxu0 %v6683
      %v8755 = vpop.f32.mrf.mxu0
      %v8756 = vadd.f32 %v6846, %v8755
      %v8757 = vpop.f32.mrf.mxu0
      %v8758 = vpop.f32.mrf.mxu0
      %v8759 = vadd.f32 %v6846, %v8758
      %v8760 = vpop.f32.mrf.mxu0
      %8761 = vmatprep.mubr.bf16.mxu0 %v6686
      %8762 = vmatmul.mubr.bf16.gmra.mxu0 %v6685
      %v8763 = vpop.f32.mrf.mxu0
      %v8764 = vadd.f32 %v6846, %v8763
      %v8765 = vpop.f32.mrf.mxu0
      %v8766 = vpop.f32.mrf.mxu0
      %v8767 = vadd.f32 %v6846, %v8766
      %v8768 = vpop.f32.mrf.mxu0
      %8769 = vmatprep.mubr.bf16.mxu0 %v6688
      %8770 = vmatmul.mubr.bf16.gmra.mxu0 %v6687
      %v8771 = vpop.f32.mrf.mxu0
      %v8772 = vadd.f32 %v6846, %v8771
      %v8773 = vpop.f32.mrf.mxu0
      %v8774 = vpop.f32.mrf.mxu0
      %v8775 = vadd.f32 %v6846, %v8774
      %v8776 = vpop.f32.mrf.mxu0
      %8777 = vdwg.mxu0
      %v8778 = vpack.c.bf16 %v7469, %v7465
      %v8779 = vpack.c.bf16 %v7471, %v7467
      %v8780 = vpack.c.bf16 %v7822, %v7818
      %v8781 = vpack.c.bf16 %v7824, %v7820
      %v8782 = vpack.c.bf16 %v8175, %v8171
      %v8783 = vpack.c.bf16 %v8177, %v8173
      %v8784 = vpack.c.bf16 %v8527, %v8524
      %v8785 = vpack.c.bf16 %v7479, %v7475
      %v8786 = vpack.c.bf16 %v7481, %v7477
      %v8787 = vpack.c.bf16 %v7832, %v7828
      %v8788 = vpack.c.bf16 %v7834, %v7830
      %v8789 = vpack.c.bf16 %v8185, %v8181
      %v8790 = vpack.c.bf16 %v8187, %v8183
      %v8791 = vpack.c.bf16 %v8535, %v8532
      %v8792 = vpack.c.bf16 %v7489, %v7485
      %v8793 = vpack.c.bf16 %v7491, %v7487
      %v8794 = vpack.c.bf16 %v7842, %v7838
      %v8795 = vpack.c.bf16 %v7844, %v7840
      %v8796 = vpack.c.bf16 %v8195, %v8191
      %v8797 = vpack.c.bf16 %v8197, %v8193
      %v8798 = vpack.c.bf16 %v8543, %v8540
      %v8799 = vpack.c.bf16 %v7499, %v7495
      %v8800 = vpack.c.bf16 %v7501, %v7497
      %v8801 = vpack.c.bf16 %v7852, %v7848
      %v8802 = vpack.c.bf16 %v7854, %v7850
      %v8803 = vpack.c.bf16 %v8205, %v8201
      %v8804 = vpack.c.bf16 %v8207, %v8203
      %v8805 = vpack.c.bf16 %v8551, %v8548
      %v8806 = vpack.c.bf16 %v7509, %v7505
      %v8807 = vpack.c.bf16 %v7511, %v7507
      %v8808 = vpack.c.bf16 %v7862, %v7858
      %v8809 = vpack.c.bf16 %v7864, %v7860
      %v8810 = vpack.c.bf16 %v8215, %v8211
      %v8811 = vpack.c.bf16 %v8217, %v8213
      %v8812 = vpack.c.bf16 %v8559, %v8556
      %v8813 = vpack.c.bf16 %v7519, %v7515
      %v8814 = vpack.c.bf16 %v7521, %v7517
      %v8815 = vpack.c.bf16 %v7872, %v7868
      %v8816 = vpack.c.bf16 %v7874, %v7870
      %v8817 = vpack.c.bf16 %v8225, %v8221
      %v8818 = vpack.c.bf16 %v8227, %v8223
      %v8819 = vpack.c.bf16 %v8567, %v8564
      %v8820 = vpack.c.bf16 %v7529, %v7525
      %v8821 = vpack.c.bf16 %v7531, %v7527
      %v8822 = vpack.c.bf16 %v7882, %v7878
      %v8823 = vpack.c.bf16 %v7884, %v7880
      %v8824 = vpack.c.bf16 %v8235, %v8231
      %v8825 = vpack.c.bf16 %v8237, %v8233
      %v8826 = vpack.c.bf16 %v8575, %v8572
      %v8827 = vpack.c.bf16 %v7539, %v7535
      %v8828 = vpack.c.bf16 %v7541, %v7537
      %v8829 = vpack.c.bf16 %v7892, %v7888
      %v8830 = vpack.c.bf16 %v7894, %v7890
      %v8831 = vpack.c.bf16 %v8245, %v8241
      %v8832 = vpack.c.bf16 %v8247, %v8243
      %v8833 = vpack.c.bf16 %v8583, %v8580
      %v8834 = vpack.c.bf16 %v7549, %v7545
      %v8835 = vpack.c.bf16 %v7551, %v7547
      %v8836 = vpack.c.bf16 %v7902, %v7898
      %v8837 = vpack.c.bf16 %v7904, %v7900
      %v8838 = vpack.c.bf16 %v8255, %v8251
      %v8839 = vpack.c.bf16 %v8257, %v8253
      %v8840 = vpack.c.bf16 %v8591, %v8588
      %v8841 = vpack.c.bf16 %v7559, %v7555
      %v8842 = vpack.c.bf16 %v7561, %v7557
      %v8843 = vpack.c.bf16 %v7912, %v7908
      %v8844 = vpack.c.bf16 %v7914, %v7910
      %v8845 = vpack.c.bf16 %v8265, %v8261
      %v8846 = vpack.c.bf16 %v8267, %v8263
      %v8847 = vpack.c.bf16 %v8599, %v8596
      %v8848 = vpack.c.bf16 %v7569, %v7565
      %v8849 = vpack.c.bf16 %v7571, %v7567
      %v8850 = vpack.c.bf16 %v7922, %v7918
      %v8851 = vpack.c.bf16 %v7924, %v7920
      %v8852 = vpack.c.bf16 %v8275, %v8271
      %v8853 = vpack.c.bf16 %v8277, %v8273
      %v8854 = vpack.c.bf16 %v8607, %v8604
      %v8855 = vpack.c.bf16 %v7579, %v7575
      %v8856 = vpack.c.bf16 %v7581, %v7577
      %v8857 = vpack.c.bf16 %v7932, %v7928
      %v8858 = vpack.c.bf16 %v7934, %v7930
      %v8859 = vpack.c.bf16 %v8285, %v8281
      %v8860 = vpack.c.bf16 %v8287, %v8283
      %v8861 = vpack.c.bf16 %v8615, %v8612
      %v8862 = vpack.c.bf16 %v7589, %v7585
      %v8863 = vpack.c.bf16 %v7591, %v7587
      %v8864 = vpack.c.bf16 %v7942, %v7938
      %v8865 = vpack.c.bf16 %v7944, %v7940
      %v8866 = vpack.c.bf16 %v8295, %v8291
      %v8867 = vpack.c.bf16 %v8297, %v8293
      %v8868 = vpack.c.bf16 %v8623, %v8620
      %v8869 = vpack.c.bf16 %v7599, %v7595
      %v8870 = vpack.c.bf16 %v7601, %v7597
      %v8871 = vpack.c.bf16 %v7952, %v7948
      %v8872 = vpack.c.bf16 %v7954, %v7950
      %v8873 = vpack.c.bf16 %v8305, %v8301
      %v8874 = vpack.c.bf16 %v8307, %v8303
      %v8875 = vpack.c.bf16 %v8631, %v8628
      %v8876 = vpack.c.bf16 %v7609, %v7605
      %v8877 = vpack.c.bf16 %v7611, %v7607
      %v8878 = vpack.c.bf16 %v7962, %v7958
      %v8879 = vpack.c.bf16 %v7964, %v7960
      %v8880 = vpack.c.bf16 %v8315, %v8311
      %v8881 = vpack.c.bf16 %v8317, %v8313
      %v8882 = vpack.c.bf16 %v8639, %v8636
      %v8883 = vpack.c.bf16 %v7619, %v7615
      %v8884 = vpack.c.bf16 %v7621, %v7617
      %v8885 = vpack.c.bf16 %v7972, %v7968
      %v8886 = vpack.c.bf16 %v7974, %v7970
      %v8887 = vpack.c.bf16 %v8325, %v8321
      %v8888 = vpack.c.bf16 %v8327, %v8323
      %v8889 = vpack.c.bf16 %v8647, %v8644
      %v8890 = vpack.c.bf16 %v7629, %v7625
      %v8891 = vpack.c.bf16 %v7631, %v7627
      %v8892 = vpack.c.bf16 %v7982, %v7978
      %v8893 = vpack.c.bf16 %v7984, %v7980
      %v8894 = vpack.c.bf16 %v8335, %v8331
      %v8895 = vpack.c.bf16 %v8337, %v8333
      %v8896 = vpack.c.bf16 %v8655, %v8652
      %v8897 = vpack.c.bf16 %v7639, %v7635
      %v8898 = vpack.c.bf16 %v7641, %v7637
      %v8899 = vpack.c.bf16 %v7992, %v7988
      %v8900 = vpack.c.bf16 %v7994, %v7990
      %v8901 = vpack.c.bf16 %v8345, %v8341
      %v8902 = vpack.c.bf16 %v8347, %v8343
      %v8903 = vpack.c.bf16 %v8663, %v8660
      %v8904 = vpack.c.bf16 %v7649, %v7645
      %v8905 = vpack.c.bf16 %v7651, %v7647
      %v8906 = vpack.c.bf16 %v8002, %v7998
      %v8907 = vpack.c.bf16 %v8004, %v8000
      %v8908 = vpack.c.bf16 %v8355, %v8351
      %v8909 = vpack.c.bf16 %v8357, %v8353
      %v8910 = vpack.c.bf16 %v8671, %v8668
      %v8911 = vpack.c.bf16 %v7659, %v7655
      %v8912 = vpack.c.bf16 %v7661, %v7657
      %v8913 = vpack.c.bf16 %v8012, %v8008
      %v8914 = vpack.c.bf16 %v8014, %v8010
      %v8915 = vpack.c.bf16 %v8365, %v8361
      %v8916 = vpack.c.bf16 %v8367, %v8363
      %v8917 = vpack.c.bf16 %v8679, %v8676
      %v8918 = vpack.c.bf16 %v7669, %v7665
      %v8919 = vpack.c.bf16 %v7671, %v7667
      %v8920 = vpack.c.bf16 %v8022, %v8018
      %v8921 = vpack.c.bf16 %v8024, %v8020
      %v8922 = vpack.c.bf16 %v8375, %v8371
      %v8923 = vpack.c.bf16 %v8377, %v8373
      %v8924 = vpack.c.bf16 %v8687, %v8684
      %v8925 = vpack.c.bf16 %v7679, %v7675
      %v8926 = vpack.c.bf16 %v7681, %v7677
      %v8927 = vpack.c.bf16 %v8032, %v8028
      %v8928 = vpack.c.bf16 %v8034, %v8030
      %v8929 = vpack.c.bf16 %v8385, %v8381
      %v8930 = vpack.c.bf16 %v8387, %v8383
      %v8931 = vpack.c.bf16 %v8695, %v8692
      %v8932 = vpack.c.bf16 %v7689, %v7685
      %v8933 = vpack.c.bf16 %v7691, %v7687
      %v8934 = vpack.c.bf16 %v8042, %v8038
      %v8935 = vpack.c.bf16 %v8044, %v8040
      %v8936 = vpack.c.bf16 %v8395, %v8391
      %v8937 = vpack.c.bf16 %v8397, %v8393
      %v8938 = vpack.c.bf16 %v8703, %v8700
      %v8939 = vpack.c.bf16 %v7699, %v7695
      %v8940 = vpack.c.bf16 %v7701, %v7697
      %v8941 = vpack.c.bf16 %v8052, %v8048
      %v8942 = vpack.c.bf16 %v8054, %v8050
      %v8943 = vpack.c.bf16 %v8405, %v8401
      %v8944 = vpack.c.bf16 %v8407, %v8403
      %v8945 = vpack.c.bf16 %v8711, %v8708
      %v8946 = vpack.c.bf16 %v7709, %v7705
      %v8947 = vpack.c.bf16 %v7711, %v7707
      %v8948 = vpack.c.bf16 %v8062, %v8058
      %v8949 = vpack.c.bf16 %v8064, %v8060
      %v8950 = vpack.c.bf16 %v8415, %v8411
      %v8951 = vpack.c.bf16 %v8417, %v8413
      %v8952 = vpack.c.bf16 %v8719, %v8716
      %v8953 = vpack.c.bf16 %v7719, %v7715
      %v8954 = vpack.c.bf16 %v7721, %v7717
      %v8955 = vpack.c.bf16 %v8072, %v8068
      %v8956 = vpack.c.bf16 %v8074, %v8070
      %v8957 = vpack.c.bf16 %v8425, %v8421
      %v8958 = vpack.c.bf16 %v8427, %v8423
      %v8959 = vpack.c.bf16 %v8727, %v8724
      %v8960 = vpack.c.bf16 %v7729, %v7725
      %v8961 = vpack.c.bf16 %v7731, %v7727
      %v8962 = vpack.c.bf16 %v8082, %v8078
      %v8963 = vpack.c.bf16 %v8084, %v8080
      %v8964 = vpack.c.bf16 %v8435, %v8431
      %v8965 = vpack.c.bf16 %v8437, %v8433
      %v8966 = vpack.c.bf16 %v8735, %v8732
      %v8967 = vpack.c.bf16 %v7739, %v7735
      %v8968 = vpack.c.bf16 %v7741, %v7737
      %v8969 = vpack.c.bf16 %v8092, %v8088
      %v8970 = vpack.c.bf16 %v8094, %v8090
      %v8971 = vpack.c.bf16 %v8445, %v8441
      %v8972 = vpack.c.bf16 %v8447, %v8443
      %v8973 = vpack.c.bf16 %v8743, %v8740
      %v8974 = vpack.c.bf16 %v7749, %v7745
      %v8975 = vpack.c.bf16 %v7751, %v7747
      %v8976 = vpack.c.bf16 %v8102, %v8098
      %v8977 = vpack.c.bf16 %v8104, %v8100
      %v8978 = vpack.c.bf16 %v8455, %v8451
      %v8979 = vpack.c.bf16 %v8457, %v8453
      %v8980 = vpack.c.bf16 %v8751, %v8748
      %v8981 = vpack.c.bf16 %v7759, %v7755
      %v8982 = vpack.c.bf16 %v7761, %v7757
      %v8983 = vpack.c.bf16 %v8112, %v8108
      %v8984 = vpack.c.bf16 %v8114, %v8110
      %v8985 = vpack.c.bf16 %v8465, %v8461
      %v8986 = vpack.c.bf16 %v8467, %v8463
      %v8987 = vpack.c.bf16 %v8759, %v8756
      %v8988 = vpack.c.bf16 %v7769, %v7765
      %v8989 = vpack.c.bf16 %v7771, %v7767
      %v8990 = vpack.c.bf16 %v8122, %v8118
      %v8991 = vpack.c.bf16 %v8124, %v8120
      %v8992 = vpack.c.bf16 %v8475, %v8471
      %v8993 = vpack.c.bf16 %v8477, %v8473
      %v8994 = vpack.c.bf16 %v8767, %v8764
      %v8995 = vpack.c.bf16 %v7779, %v7775
      %v8996 = vpack.c.bf16 %v7781, %v7777
      %v8997 = vpack.c.bf16 %v8132, %v8128
      %v8998 = vpack.c.bf16 %v8134, %v8130
      %v8999 = vpack.c.bf16 %v8485, %v8481
      %v9000 = vpack.c.bf16 %v8487, %v8483
      %v9001 = vpack.c.bf16 %v8775, %v8772
      %v9226 = vunpack.c.l.b16 %v8778
      %v9227 = vunpack.c.l.b16 %v8779
      %v9228 = vunpack.c.l.b16 %v8780
      %v9229 = vunpack.c.l.b16 %v8781
      %v9230 = vunpack.c.l.b16 %v8782
      %v9231 = vunpack.c.l.b16 %v8783
      %v9232 = vunpack.c.l.b16 %v8784
      %v9233 = vunpack.c.h.b16 %v8778
      %v9234 = vunpack.c.h.b16 %v8779
      %v9235 = vunpack.c.h.b16 %v8780
      %v9236 = vunpack.c.h.b16 %v8781
      %v9237 = vunpack.c.h.b16 %v8782
      %v9238 = vunpack.c.h.b16 %v8783
      %v9239 = vunpack.c.h.b16 %v8784
      %v9240 = vunpack.c.l.b16 %v8785
      %v9241 = vunpack.c.l.b16 %v8786
      %v9242 = vunpack.c.l.b16 %v8787
      %v9243 = vunpack.c.l.b16 %v8788
      %v9244 = vunpack.c.l.b16 %v8789
      %v9245 = vunpack.c.l.b16 %v8790
      %v9246 = vunpack.c.l.b16 %v8791
      %v9247 = vunpack.c.h.b16 %v8785
      %v9248 = vunpack.c.h.b16 %v8786
      %v9249 = vunpack.c.h.b16 %v8787
      %v9250 = vunpack.c.h.b16 %v8788
      %v9251 = vunpack.c.h.b16 %v8789
      %v9252 = vunpack.c.h.b16 %v8790
      %v9253 = vunpack.c.h.b16 %v8791
      %v9254 = vunpack.c.l.b16 %v8792
      %v9255 = vunpack.c.l.b16 %v8793
      %v9256 = vunpack.c.l.b16 %v8794
      %v9257 = vunpack.c.l.b16 %v8795
      %v9258 = vunpack.c.l.b16 %v8796
      %v9259 = vunpack.c.l.b16 %v8797
      %v9260 = vunpack.c.l.b16 %v8798
      %v9261 = vunpack.c.h.b16 %v8792
      %v9262 = vunpack.c.h.b16 %v8793
      %v9263 = vunpack.c.h.b16 %v8794
      %v9264 = vunpack.c.h.b16 %v8795
      %v9265 = vunpack.c.h.b16 %v8796
      %v9266 = vunpack.c.h.b16 %v8797
      %v9267 = vunpack.c.h.b16 %v8798
      %v9268 = vunpack.c.l.b16 %v8799
      %v9269 = vunpack.c.l.b16 %v8800
      %v9270 = vunpack.c.l.b16 %v8801
      %v9271 = vunpack.c.l.b16 %v8802
      %v9272 = vunpack.c.l.b16 %v8803
      %v9273 = vunpack.c.l.b16 %v8804
      %v9274 = vunpack.c.l.b16 %v8805
      %v9275 = vunpack.c.h.b16 %v8799
      %v9276 = vunpack.c.h.b16 %v8800
      %v9277 = vunpack.c.h.b16 %v8801
      %v9278 = vunpack.c.h.b16 %v8802
      %v9279 = vunpack.c.h.b16 %v8803
      %v9280 = vunpack.c.h.b16 %v8804
      %v9281 = vunpack.c.h.b16 %v8805
      %v9282 = vunpack.c.l.b16 %v8806
      %v9283 = vunpack.c.l.b16 %v8807
      %v9284 = vunpack.c.l.b16 %v8808
      %v9285 = vunpack.c.l.b16 %v8809
      %v9286 = vunpack.c.l.b16 %v8810
      %v9287 = vunpack.c.l.b16 %v8811
      %v9288 = vunpack.c.l.b16 %v8812
      %v9289 = vunpack.c.h.b16 %v8806
      %v9290 = vunpack.c.h.b16 %v8807
      %v9291 = vunpack.c.h.b16 %v8808
      %v9292 = vunpack.c.h.b16 %v8809
      %v9293 = vunpack.c.h.b16 %v8810
      %v9294 = vunpack.c.h.b16 %v8811
      %v9295 = vunpack.c.h.b16 %v8812
      %v9296 = vunpack.c.l.b16 %v8813
      %v9297 = vunpack.c.l.b16 %v8814
      %v9298 = vunpack.c.l.b16 %v8815
      %v9299 = vunpack.c.l.b16 %v8816
      %v9300 = vunpack.c.l.b16 %v8817
      %v9301 = vunpack.c.l.b16 %v8818
      %v9302 = vunpack.c.l.b16 %v8819
      %v9303 = vunpack.c.h.b16 %v8813
      %v9304 = vunpack.c.h.b16 %v8814
      %v9305 = vunpack.c.h.b16 %v8815
      %v9306 = vunpack.c.h.b16 %v8816
      %v9307 = vunpack.c.h.b16 %v8817
      %v9308 = vunpack.c.h.b16 %v8818
      %v9309 = vunpack.c.h.b16 %v8819
      %v9310 = vunpack.c.l.b16 %v8820
      %v9311 = vunpack.c.l.b16 %v8821
      %v9312 = vunpack.c.l.b16 %v8822
      %v9313 = vunpack.c.l.b16 %v8823
      %v9314 = vunpack.c.l.b16 %v8824
      %v9315 = vunpack.c.l.b16 %v8825
      %v9316 = vunpack.c.l.b16 %v8826
      %v9317 = vunpack.c.h.b16 %v8820
      %v9318 = vunpack.c.h.b16 %v8821
      %v9319 = vunpack.c.h.b16 %v8822
      %v9320 = vunpack.c.h.b16 %v8823
      %v9321 = vunpack.c.h.b16 %v8824
      %v9322 = vunpack.c.h.b16 %v8825
      %v9323 = vunpack.c.h.b16 %v8826
      %v9324 = vunpack.c.l.b16 %v8827
      %v9325 = vunpack.c.l.b16 %v8828
      %v9326 = vunpack.c.l.b16 %v8829
      %v9327 = vunpack.c.l.b16 %v8830
      %v9328 = vunpack.c.l.b16 %v8831
      %v9329 = vunpack.c.l.b16 %v8832
      %v9330 = vunpack.c.l.b16 %v8833
      %v9331 = vunpack.c.h.b16 %v8827
      %v9332 = vunpack.c.h.b16 %v8828
      %v9333 = vunpack.c.h.b16 %v8829
      %v9334 = vunpack.c.h.b16 %v8830
      %v9335 = vunpack.c.h.b16 %v8831
      %v9336 = vunpack.c.h.b16 %v8832
      %v9337 = vunpack.c.h.b16 %v8833
      %v9338 = vunpack.c.l.b16 %v8834
      %v9339 = vunpack.c.l.b16 %v8835
      %v9340 = vunpack.c.l.b16 %v8836
      %v9341 = vunpack.c.l.b16 %v8837
      %v9342 = vunpack.c.l.b16 %v8838
      %v9343 = vunpack.c.l.b16 %v8839
      %v9344 = vunpack.c.l.b16 %v8840
      %v9345 = vunpack.c.h.b16 %v8834
      %v9346 = vunpack.c.h.b16 %v8835
      %v9347 = vunpack.c.h.b16 %v8836
      %v9348 = vunpack.c.h.b16 %v8837
      %v9349 = vunpack.c.h.b16 %v8838
      %v9350 = vunpack.c.h.b16 %v8839
      %v9351 = vunpack.c.h.b16 %v8840
      %v9352 = vunpack.c.l.b16 %v8841
      %v9353 = vunpack.c.l.b16 %v8842
      %v9354 = vunpack.c.l.b16 %v8843
      %v9355 = vunpack.c.l.b16 %v8844
      %v9356 = vunpack.c.l.b16 %v8845
      %v9357 = vunpack.c.l.b16 %v8846
      %v9358 = vunpack.c.l.b16 %v8847
      %v9359 = vunpack.c.h.b16 %v8841
      %v9360 = vunpack.c.h.b16 %v8842
      %v9361 = vunpack.c.h.b16 %v8843
      %v9362 = vunpack.c.h.b16 %v8844
      %v9363 = vunpack.c.h.b16 %v8845
      %v9364 = vunpack.c.h.b16 %v8846
      %v9365 = vunpack.c.h.b16 %v8847
      %v9366 = vunpack.c.l.b16 %v8848
      %v9367 = vunpack.c.l.b16 %v8849
      %v9368 = vunpack.c.l.b16 %v8850
      %v9369 = vunpack.c.l.b16 %v8851
      %v9370 = vunpack.c.l.b16 %v8852
      %v9371 = vunpack.c.l.b16 %v8853
      %v9372 = vunpack.c.l.b16 %v8854
      %v9373 = vunpack.c.h.b16 %v8848
      %v9374 = vunpack.c.h.b16 %v8849
      %v9375 = vunpack.c.h.b16 %v8850
      %v9376 = vunpack.c.h.b16 %v8851
      %v9377 = vunpack.c.h.b16 %v8852
      %v9378 = vunpack.c.h.b16 %v8853
      %v9379 = vunpack.c.h.b16 %v8854
      %v9380 = vunpack.c.l.b16 %v8855
      %v9381 = vunpack.c.l.b16 %v8856
      %v9382 = vunpack.c.l.b16 %v8857
      %v9383 = vunpack.c.l.b16 %v8858
      %v9384 = vunpack.c.l.b16 %v8859
      %v9385 = vunpack.c.l.b16 %v8860
      %v9386 = vunpack.c.l.b16 %v8861
      %v9387 = vunpack.c.h.b16 %v8855
      %v9388 = vunpack.c.h.b16 %v8856
      %v9389 = vunpack.c.h.b16 %v8857
      %v9390 = vunpack.c.h.b16 %v8858
      %v9391 = vunpack.c.h.b16 %v8859
      %v9392 = vunpack.c.h.b16 %v8860
      %v9393 = vunpack.c.h.b16 %v8861
      %v9394 = vunpack.c.l.b16 %v8862
      %v9395 = vunpack.c.l.b16 %v8863
      %v9396 = vunpack.c.l.b16 %v8864
      %v9397 = vunpack.c.l.b16 %v8865
      %v9398 = vunpack.c.l.b16 %v8866
      %v9399 = vunpack.c.l.b16 %v8867
      %v9400 = vunpack.c.l.b16 %v8868
      %v9401 = vunpack.c.h.b16 %v8862
      %v9402 = vunpack.c.h.b16 %v8863
      %v9403 = vunpack.c.h.b16 %v8864
      %v9404 = vunpack.c.h.b16 %v8865
      %v9405 = vunpack.c.h.b16 %v8866
      %v9406 = vunpack.c.h.b16 %v8867
      %v9407 = vunpack.c.h.b16 %v8868
      %v9408 = vunpack.c.l.b16 %v8869
      %v9409 = vunpack.c.l.b16 %v8870
      %v9410 = vunpack.c.l.b16 %v8871
      %v9411 = vunpack.c.l.b16 %v8872
      %v9412 = vunpack.c.l.b16 %v8873
      %v9413 = vunpack.c.l.b16 %v8874
      %v9414 = vunpack.c.l.b16 %v8875
      %v9415 = vunpack.c.h.b16 %v8869
      %v9416 = vunpack.c.h.b16 %v8870
      %v9417 = vunpack.c.h.b16 %v8871
      %v9418 = vunpack.c.h.b16 %v8872
      %v9419 = vunpack.c.h.b16 %v8873
      %v9420 = vunpack.c.h.b16 %v8874
      %v9421 = vunpack.c.h.b16 %v8875
      %v9422 = vunpack.c.l.b16 %v8876
      %v9423 = vunpack.c.l.b16 %v8877
      %v9424 = vunpack.c.l.b16 %v8878
      %v9425 = vunpack.c.l.b16 %v8879
      %v9426 = vunpack.c.l.b16 %v8880
      %v9427 = vunpack.c.l.b16 %v8881
      %v9428 = vunpack.c.l.b16 %v8882
      %v9429 = vunpack.c.h.b16 %v8876
      %v9430 = vunpack.c.h.b16 %v8877
      %v9431 = vunpack.c.h.b16 %v8878
      %v9432 = vunpack.c.h.b16 %v8879
      %v9433 = vunpack.c.h.b16 %v8880
      %v9434 = vunpack.c.h.b16 %v8881
      %v9435 = vunpack.c.h.b16 %v8882
      %v9436 = vunpack.c.l.b16 %v8883
      %v9437 = vunpack.c.l.b16 %v8884
      %v9438 = vunpack.c.l.b16 %v8885
      %v9439 = vunpack.c.l.b16 %v8886
      %v9440 = vunpack.c.l.b16 %v8887
      %v9441 = vunpack.c.l.b16 %v8888
      %v9442 = vunpack.c.l.b16 %v8889
      %v9443 = vunpack.c.h.b16 %v8883
      %v9444 = vunpack.c.h.b16 %v8884
      %v9445 = vunpack.c.h.b16 %v8885
      %v9446 = vunpack.c.h.b16 %v8886
      %v9447 = vunpack.c.h.b16 %v8887
      %v9448 = vunpack.c.h.b16 %v8888
      %v9449 = vunpack.c.h.b16 %v8889
      %v9450 = vunpack.c.l.b16 %v8890
      %v9451 = vunpack.c.l.b16 %v8891
      %v9452 = vunpack.c.l.b16 %v8892
      %v9453 = vunpack.c.l.b16 %v8893
      %v9454 = vunpack.c.l.b16 %v8894
      %v9455 = vunpack.c.l.b16 %v8895
      %v9456 = vunpack.c.l.b16 %v8896
      %v9457 = vunpack.c.h.b16 %v8890
      %v9458 = vunpack.c.h.b16 %v8891
      %v9459 = vunpack.c.h.b16 %v8892
      %v9460 = vunpack.c.h.b16 %v8893
      %v9461 = vunpack.c.h.b16 %v8894
      %v9462 = vunpack.c.h.b16 %v8895
      %v9463 = vunpack.c.h.b16 %v8896
      %v9464 = vunpack.c.l.b16 %v8897
      %v9465 = vunpack.c.l.b16 %v8898
      %v9466 = vunpack.c.l.b16 %v8899
      %v9467 = vunpack.c.l.b16 %v8900
      %v9468 = vunpack.c.l.b16 %v8901
      %v9469 = vunpack.c.l.b16 %v8902
      %v9470 = vunpack.c.l.b16 %v8903
      %v9471 = vunpack.c.h.b16 %v8897
      %v9472 = vunpack.c.h.b16 %v8898
      %v9473 = vunpack.c.h.b16 %v8899
      %v9474 = vunpack.c.h.b16 %v8900
      %v9475 = vunpack.c.h.b16 %v8901
      %v9476 = vunpack.c.h.b16 %v8902
      %v9477 = vunpack.c.h.b16 %v8903
      %v9478 = vunpack.c.l.b16 %v8904
      %v9479 = vunpack.c.l.b16 %v8905
      %v9480 = vunpack.c.l.b16 %v8906
      %v9481 = vunpack.c.l.b16 %v8907
      %v9482 = vunpack.c.l.b16 %v8908
      %v9483 = vunpack.c.l.b16 %v8909
      %v9484 = vunpack.c.l.b16 %v8910
      %v9485 = vunpack.c.h.b16 %v8904
      %v9486 = vunpack.c.h.b16 %v8905
      %v9487 = vunpack.c.h.b16 %v8906
      %v9488 = vunpack.c.h.b16 %v8907
      %v9489 = vunpack.c.h.b16 %v8908
      %v9490 = vunpack.c.h.b16 %v8909
      %v9491 = vunpack.c.h.b16 %v8910
      %v9492 = vunpack.c.l.b16 %v8911
      %v9493 = vunpack.c.l.b16 %v8912
      %v9494 = vunpack.c.l.b16 %v8913
      %v9495 = vunpack.c.l.b16 %v8914
      %v9496 = vunpack.c.l.b16 %v8915
      %v9497 = vunpack.c.l.b16 %v8916
      %v9498 = vunpack.c.l.b16 %v8917
      %v9499 = vunpack.c.h.b16 %v8911
      %v9500 = vunpack.c.h.b16 %v8912
      %v9501 = vunpack.c.h.b16 %v8913
      %v9502 = vunpack.c.h.b16 %v8914
      %v9503 = vunpack.c.h.b16 %v8915
      %v9504 = vunpack.c.h.b16 %v8916
      %v9505 = vunpack.c.h.b16 %v8917
      %v9506 = vunpack.c.l.b16 %v8918
      %v9507 = vunpack.c.l.b16 %v8919
      %v9508 = vunpack.c.l.b16 %v8920
      %v9509 = vunpack.c.l.b16 %v8921
      %v9510 = vunpack.c.l.b16 %v8922
      %v9511 = vunpack.c.l.b16 %v8923
      %v9512 = vunpack.c.l.b16 %v8924
      %v9513 = vunpack.c.h.b16 %v8918
      %v9514 = vunpack.c.h.b16 %v8919
      %v9515 = vunpack.c.h.b16 %v8920
      %v9516 = vunpack.c.h.b16 %v8921
      %v9517 = vunpack.c.h.b16 %v8922
      %v9518 = vunpack.c.h.b16 %v8923
      %v9519 = vunpack.c.h.b16 %v8924
      %v9520 = vunpack.c.l.b16 %v8925
      %v9521 = vunpack.c.l.b16 %v8926
      %v9522 = vunpack.c.l.b16 %v8927
      %v9523 = vunpack.c.l.b16 %v8928
      %v9524 = vunpack.c.l.b16 %v8929
      %v9525 = vunpack.c.l.b16 %v8930
      %v9526 = vunpack.c.l.b16 %v8931
      %v9527 = vunpack.c.h.b16 %v8925
      %v9528 = vunpack.c.h.b16 %v8926
      %v9529 = vunpack.c.h.b16 %v8927
      %v9530 = vunpack.c.h.b16 %v8928
      %v9531 = vunpack.c.h.b16 %v8929
      %v9532 = vunpack.c.h.b16 %v8930
      %v9533 = vunpack.c.h.b16 %v8931
      %v9534 = vunpack.c.l.b16 %v8932
      %v9535 = vunpack.c.l.b16 %v8933
      %v9536 = vunpack.c.l.b16 %v8934
      %v9537 = vunpack.c.l.b16 %v8935
      %v9538 = vunpack.c.l.b16 %v8936
      %v9539 = vunpack.c.l.b16 %v8937
      %v9540 = vunpack.c.l.b16 %v8938
      %v9541 = vunpack.c.h.b16 %v8932
      %v9542 = vunpack.c.h.b16 %v8933
      %v9543 = vunpack.c.h.b16 %v8934
      %v9544 = vunpack.c.h.b16 %v8935
      %v9545 = vunpack.c.h.b16 %v8936
      %v9546 = vunpack.c.h.b16 %v8937
      %v9547 = vunpack.c.h.b16 %v8938
      %v9548 = vunpack.c.l.b16 %v8939
      %v9549 = vunpack.c.l.b16 %v8940
      %v9550 = vunpack.c.l.b16 %v8941
      %v9551 = vunpack.c.l.b16 %v8942
      %v9552 = vunpack.c.l.b16 %v8943
      %v9553 = vunpack.c.l.b16 %v8944
      %v9554 = vunpack.c.l.b16 %v8945
      %v9555 = vunpack.c.h.b16 %v8939
      %v9556 = vunpack.c.h.b16 %v8940
      %v9557 = vunpack.c.h.b16 %v8941
      %v9558 = vunpack.c.h.b16 %v8942
      %v9559 = vunpack.c.h.b16 %v8943
      %v9560 = vunpack.c.h.b16 %v8944
      %v9561 = vunpack.c.h.b16 %v8945
      %v9562 = vunpack.c.l.b16 %v8946
      %v9563 = vunpack.c.l.b16 %v8947
      %v9564 = vunpack.c.l.b16 %v8948
      %v9565 = vunpack.c.l.b16 %v8949
      %v9566 = vunpack.c.l.b16 %v8950
      %v9567 = vunpack.c.l.b16 %v8951
      %v9568 = vunpack.c.l.b16 %v8952
      %v9569 = vunpack.c.h.b16 %v8946
      %v9570 = vunpack.c.h.b16 %v8947
      %v9571 = vunpack.c.h.b16 %v8948
      %v9572 = vunpack.c.h.b16 %v8949
      %v9573 = vunpack.c.h.b16 %v8950
      %v9574 = vunpack.c.h.b16 %v8951
      %v9575 = vunpack.c.h.b16 %v8952
      %v9576 = vunpack.c.l.b16 %v8953
      %v9577 = vunpack.c.l.b16 %v8954
      %v9578 = vunpack.c.l.b16 %v8955
      %v9579 = vunpack.c.l.b16 %v8956
      %v9580 = vunpack.c.l.b16 %v8957
      %v9581 = vunpack.c.l.b16 %v8958
      %v9582 = vunpack.c.l.b16 %v8959
      %v9583 = vunpack.c.h.b16 %v8953
      %v9584 = vunpack.c.h.b16 %v8954
      %v9585 = vunpack.c.h.b16 %v8955
      %v9586 = vunpack.c.h.b16 %v8956
      %v9587 = vunpack.c.h.b16 %v8957
      %v9588 = vunpack.c.h.b16 %v8958
      %v9589 = vunpack.c.h.b16 %v8959
      %v9590 = vunpack.c.l.b16 %v8960
      %v9591 = vunpack.c.l.b16 %v8961
      %v9592 = vunpack.c.l.b16 %v8962
      %v9593 = vunpack.c.l.b16 %v8963
      %v9594 = vunpack.c.l.b16 %v8964
      %v9595 = vunpack.c.l.b16 %v8965
      %v9596 = vunpack.c.l.b16 %v8966
      %v9597 = vunpack.c.h.b16 %v8960
      %v9598 = vunpack.c.h.b16 %v8961
      %v9599 = vunpack.c.h.b16 %v8962
      %v9600 = vunpack.c.h.b16 %v8963
      %v9601 = vunpack.c.h.b16 %v8964
      %v9602 = vunpack.c.h.b16 %v8965
      %v9603 = vunpack.c.h.b16 %v8966
      %v9604 = vunpack.c.l.b16 %v8967
      %v9605 = vunpack.c.l.b16 %v8968
      %v9606 = vunpack.c.l.b16 %v8969
      %v9607 = vunpack.c.l.b16 %v8970
      %v9608 = vunpack.c.l.b16 %v8971
      %v9609 = vunpack.c.l.b16 %v8972
      %v9610 = vunpack.c.l.b16 %v8973
      %v9611 = vunpack.c.h.b16 %v8967
      %v9612 = vunpack.c.h.b16 %v8968
      %v9613 = vunpack.c.h.b16 %v8969
      %v9614 = vunpack.c.h.b16 %v8970
      %v9615 = vunpack.c.h.b16 %v8971
      %v9616 = vunpack.c.h.b16 %v8972
      %v9617 = vunpack.c.h.b16 %v8973
      %v9618 = vunpack.c.l.b16 %v8974
      %v9619 = vunpack.c.l.b16 %v8975
      %v9620 = vunpack.c.l.b16 %v8976
      %v9621 = vunpack.c.l.b16 %v8977
      %v9622 = vunpack.c.l.b16 %v8978
      %v9623 = vunpack.c.l.b16 %v8979
      %v9624 = vunpack.c.l.b16 %v8980
      %v9625 = vunpack.c.h.b16 %v8974
      %v9626 = vunpack.c.h.b16 %v8975
      %v9627 = vunpack.c.h.b16 %v8976
      %v9628 = vunpack.c.h.b16 %v8977
      %v9629 = vunpack.c.h.b16 %v8978
      %v9630 = vunpack.c.h.b16 %v8979
      %v9631 = vunpack.c.h.b16 %v8980
      %v9632 = vunpack.c.l.b16 %v8981
      %v9633 = vunpack.c.l.b16 %v8982
      %v9634 = vunpack.c.l.b16 %v8983
      %v9635 = vunpack.c.l.b16 %v8984
      %v9636 = vunpack.c.l.b16 %v8985
      %v9637 = vunpack.c.l.b16 %v8986
      %v9638 = vunpack.c.l.b16 %v8987
      %v9639 = vunpack.c.h.b16 %v8981
      %v9640 = vunpack.c.h.b16 %v8982
      %v9641 = vunpack.c.h.b16 %v8983
      %v9642 = vunpack.c.h.b16 %v8984
      %v9643 = vunpack.c.h.b16 %v8985
      %v9644 = vunpack.c.h.b16 %v8986
      %v9645 = vunpack.c.h.b16 %v8987
      %v9646 = vunpack.c.l.b16 %v8988
      %v9647 = vunpack.c.l.b16 %v8989
      %v9648 = vunpack.c.l.b16 %v8990
      %v9649 = vunpack.c.l.b16 %v8991
      %v9650 = vunpack.c.l.b16 %v8992
      %v9651 = vunpack.c.l.b16 %v8993
      %v9652 = vunpack.c.l.b16 %v8994
      %v9653 = vunpack.c.h.b16 %v8988
      %v9654 = vunpack.c.h.b16 %v8989
      %v9655 = vunpack.c.h.b16 %v8990
      %v9656 = vunpack.c.h.b16 %v8991
      %v9657 = vunpack.c.h.b16 %v8992
      %v9658 = vunpack.c.h.b16 %v8993
      %v9659 = vunpack.c.h.b16 %v8994
      %v9660 = vunpack.c.l.b16 %v8995
      %v9661 = vunpack.c.l.b16 %v8996
      %v9662 = vunpack.c.l.b16 %v8997
      %v9663 = vunpack.c.l.b16 %v8998
      %v9664 = vunpack.c.l.b16 %v8999
      %v9665 = vunpack.c.l.b16 %v9000
      %v9666 = vunpack.c.l.b16 %v9001
      %v9667 = vunpack.c.h.b16 %v8995
      %v9668 = vunpack.c.h.b16 %v8996
      %v9669 = vunpack.c.h.b16 %v8997
      %v9670 = vunpack.c.h.b16 %v8998
      %v9671 = vunpack.c.h.b16 %v8999
      %v9672 = vunpack.c.h.b16 %v9000
      %v9673 = vunpack.c.h.b16 %v9001
      %v9674 = vpack.c.b16 %v9227, %v9226
      %v9675 = vpack.c.b16 %v9229, %v9228
      %v9676 = vpack.c.b16 %v9231, %v9230
      %v9677 = vpack.c.b16 %v9232, %v9232
      %v9678 = vpack.c.b16 %v9234, %v9233
      %v9679 = vpack.c.b16 %v9236, %v9235
      %v9680 = vpack.c.b16 %v9238, %v9237
      %v9681 = vpack.c.b16 %v9239, %v9239
      %v9682 = vpack.c.b16 %v9241, %v9240
      %v9683 = vpack.c.b16 %v9243, %v9242
      %v9684 = vpack.c.b16 %v9245, %v9244
      %v9685 = vpack.c.b16 %v9246, %v9246
      %v9686 = vpack.c.b16 %v9248, %v9247
      %v9687 = vpack.c.b16 %v9250, %v9249
      %v9688 = vpack.c.b16 %v9252, %v9251
      %v9689 = vpack.c.b16 %v9253, %v9253
      %v9690 = vpack.c.b16 %v9255, %v9254
      %v9691 = vpack.c.b16 %v9257, %v9256
      %v9692 = vpack.c.b16 %v9259, %v9258
      %v9693 = vpack.c.b16 %v9260, %v9260
      %v9694 = vpack.c.b16 %v9262, %v9261
      %v9695 = vpack.c.b16 %v9264, %v9263
      %v9696 = vpack.c.b16 %v9266, %v9265
      %v9697 = vpack.c.b16 %v9267, %v9267
      %v9698 = vpack.c.b16 %v9269, %v9268
      %v9699 = vpack.c.b16 %v9271, %v9270
      %v9700 = vpack.c.b16 %v9273, %v9272
      %v9701 = vpack.c.b16 %v9274, %v9274
      %v9702 = vpack.c.b16 %v9276, %v9275
      %v9703 = vpack.c.b16 %v9278, %v9277
      %v9704 = vpack.c.b16 %v9280, %v9279
      %v9705 = vpack.c.b16 %v9281, %v9281
      %v9706 = vpack.c.b16 %v9283, %v9282
      %v9707 = vpack.c.b16 %v9285, %v9284
      %v9708 = vpack.c.b16 %v9287, %v9286
      %v9709 = vpack.c.b16 %v9288, %v9288
      %v9710 = vpack.c.b16 %v9290, %v9289
      %v9711 = vpack.c.b16 %v9292, %v9291
      %v9712 = vpack.c.b16 %v9294, %v9293
      %v9713 = vpack.c.b16 %v9295, %v9295
      %v9714 = vpack.c.b16 %v9297, %v9296
      %v9715 = vpack.c.b16 %v9299, %v9298
      %v9716 = vpack.c.b16 %v9301, %v9300
      %v9717 = vpack.c.b16 %v9302, %v9302
      %v9718 = vpack.c.b16 %v9304, %v9303
      %v9719 = vpack.c.b16 %v9306, %v9305
      %v9720 = vpack.c.b16 %v9308, %v9307
      %v9721 = vpack.c.b16 %v9309, %v9309
      %v9722 = vpack.c.b16 %v9311, %v9310
      %v9723 = vpack.c.b16 %v9313, %v9312
      %v9724 = vpack.c.b16 %v9315, %v9314
      %v9725 = vpack.c.b16 %v9316, %v9316
      %v9726 = vpack.c.b16 %v9318, %v9317
      %v9727 = vpack.c.b16 %v9320, %v9319
      %v9728 = vpack.c.b16 %v9322, %v9321
      %v9729 = vpack.c.b16 %v9323, %v9323
      %v9730 = vpack.c.b16 %v9325, %v9324
      %v9731 = vpack.c.b16 %v9327, %v9326
      %v9732 = vpack.c.b16 %v9329, %v9328
      %v9733 = vpack.c.b16 %v9330, %v9330
      %v9734 = vpack.c.b16 %v9332, %v9331
      %v9735 = vpack.c.b16 %v9334, %v9333
      %v9736 = vpack.c.b16 %v9336, %v9335
      %v9737 = vpack.c.b16 %v9337, %v9337
      %v9738 = vpack.c.b16 %v9339, %v9338
      %v9739 = vpack.c.b16 %v9341, %v9340
      %v9740 = vpack.c.b16 %v9343, %v9342
      %v9741 = vpack.c.b16 %v9344, %v9344
      %v9742 = vpack.c.b16 %v9346, %v9345
      %v9743 = vpack.c.b16 %v9348, %v9347
      %v9744 = vpack.c.b16 %v9350, %v9349
      %v9745 = vpack.c.b16 %v9351, %v9351
      %v9746 = vpack.c.b16 %v9353, %v9352
      %v9747 = vpack.c.b16 %v9355, %v9354
      %v9748 = vpack.c.b16 %v9357, %v9356
      %v9749 = vpack.c.b16 %v9358, %v9358
      %v9750 = vpack.c.b16 %v9360, %v9359
      %v9751 = vpack.c.b16 %v9362, %v9361
      %v9752 = vpack.c.b16 %v9364, %v9363
      %v9753 = vpack.c.b16 %v9365, %v9365
      %v9754 = vpack.c.b16 %v9367, %v9366
      %v9755 = vpack.c.b16 %v9369, %v9368
      %v9756 = vpack.c.b16 %v9371, %v9370
      %v9757 = vpack.c.b16 %v9372, %v9372
      %v9758 = vpack.c.b16 %v9374, %v9373
      %v9759 = vpack.c.b16 %v9376, %v9375
      %v9760 = vpack.c.b16 %v9378, %v9377
      %v9761 = vpack.c.b16 %v9379, %v9379
      %v9762 = vpack.c.b16 %v9381, %v9380
      %v9763 = vpack.c.b16 %v9383, %v9382
      %v9764 = vpack.c.b16 %v9385, %v9384
      %v9765 = vpack.c.b16 %v9386, %v9386
      %v9766 = vpack.c.b16 %v9388, %v9387
      %v9767 = vpack.c.b16 %v9390, %v9389
      %v9768 = vpack.c.b16 %v9392, %v9391
      %v9769 = vpack.c.b16 %v9393, %v9393
      %v9770 = vpack.c.b16 %v9395, %v9394
      %v9771 = vpack.c.b16 %v9397, %v9396
      %v9772 = vpack.c.b16 %v9399, %v9398
      %v9773 = vpack.c.b16 %v9400, %v9400
      %v9774 = vpack.c.b16 %v9402, %v9401
      %v9775 = vpack.c.b16 %v9404, %v9403
      %v9776 = vpack.c.b16 %v9406, %v9405
      %v9777 = vpack.c.b16 %v9407, %v9407
      %v9778 = vpack.c.b16 %v9409, %v9408
      %v9779 = vpack.c.b16 %v9411, %v9410
      %v9780 = vpack.c.b16 %v9413, %v9412
      %v9781 = vpack.c.b16 %v9414, %v9414
      %v9782 = vpack.c.b16 %v9416, %v9415
      %v9783 = vpack.c.b16 %v9418, %v9417
      %v9784 = vpack.c.b16 %v9420, %v9419
      %v9785 = vpack.c.b16 %v9421, %v9421
      %v9786 = vpack.c.b16 %v9423, %v9422
      %v9787 = vpack.c.b16 %v9425, %v9424
      %v9788 = vpack.c.b16 %v9427, %v9426
      %v9789 = vpack.c.b16 %v9428, %v9428
      %v9790 = vpack.c.b16 %v9430, %v9429
      %v9791 = vpack.c.b16 %v9432, %v9431
      %v9792 = vpack.c.b16 %v9434, %v9433
      %v9793 = vpack.c.b16 %v9435, %v9435
      %v9794 = vpack.c.b16 %v9437, %v9436
      %v9795 = vpack.c.b16 %v9439, %v9438
      %v9796 = vpack.c.b16 %v9441, %v9440
      %v9797 = vpack.c.b16 %v9442, %v9442
      %v9798 = vpack.c.b16 %v9444, %v9443
      %v9799 = vpack.c.b16 %v9446, %v9445
      %v9800 = vpack.c.b16 %v9448, %v9447
      %v9801 = vpack.c.b16 %v9449, %v9449
      %v9802 = vpack.c.b16 %v9451, %v9450
      %v9803 = vpack.c.b16 %v9453, %v9452
      %v9804 = vpack.c.b16 %v9455, %v9454
      %v9805 = vpack.c.b16 %v9456, %v9456
      %v9806 = vpack.c.b16 %v9458, %v9457
      %v9807 = vpack.c.b16 %v9460, %v9459
      %v9808 = vpack.c.b16 %v9462, %v9461
      %v9809 = vpack.c.b16 %v9463, %v9463
      %v9810 = vpack.c.b16 %v9465, %v9464
      %v9811 = vpack.c.b16 %v9467, %v9466
      %v9812 = vpack.c.b16 %v9469, %v9468
      %v9813 = vpack.c.b16 %v9470, %v9470
      %v9814 = vpack.c.b16 %v9472, %v9471
      %v9815 = vpack.c.b16 %v9474, %v9473
      %v9816 = vpack.c.b16 %v9476, %v9475
      %v9817 = vpack.c.b16 %v9477, %v9477
      %v9818 = vpack.c.b16 %v9479, %v9478
      %v9819 = vpack.c.b16 %v9481, %v9480
      %v9820 = vpack.c.b16 %v9483, %v9482
      %v9821 = vpack.c.b16 %v9484, %v9484
      %v9822 = vpack.c.b16 %v9486, %v9485
      %v9823 = vpack.c.b16 %v9488, %v9487
      %v9824 = vpack.c.b16 %v9490, %v9489
      %v9825 = vpack.c.b16 %v9491, %v9491
      %v9826 = vpack.c.b16 %v9493, %v9492
      %v9827 = vpack.c.b16 %v9495, %v9494
      %v9828 = vpack.c.b16 %v9497, %v9496
      %v9829 = vpack.c.b16 %v9498, %v9498
      %v9830 = vpack.c.b16 %v9500, %v9499
      %v9831 = vpack.c.b16 %v9502, %v9501
      %v9832 = vpack.c.b16 %v9504, %v9503
      %v9833 = vpack.c.b16 %v9505, %v9505
      %v9834 = vpack.c.b16 %v9507, %v9506
      %v9835 = vpack.c.b16 %v9509, %v9508
      %v9836 = vpack.c.b16 %v9511, %v9510
      %v9837 = vpack.c.b16 %v9512, %v9512
      %v9838 = vpack.c.b16 %v9514, %v9513
      %v9839 = vpack.c.b16 %v9516, %v9515
      %v9840 = vpack.c.b16 %v9518, %v9517
      %v9841 = vpack.c.b16 %v9519, %v9519
      %v9842 = vpack.c.b16 %v9521, %v9520
      %v9843 = vpack.c.b16 %v9523, %v9522
      %v9844 = vpack.c.b16 %v9525, %v9524
      %v9845 = vpack.c.b16 %v9526, %v9526
      %v9846 = vpack.c.b16 %v9528, %v9527
      %v9847 = vpack.c.b16 %v9530, %v9529
      %v9848 = vpack.c.b16 %v9532, %v9531
      %v9849 = vpack.c.b16 %v9533, %v9533
      %v9850 = vpack.c.b16 %v9535, %v9534
      %v9851 = vpack.c.b16 %v9537, %v9536
      %v9852 = vpack.c.b16 %v9539, %v9538
      %v9853 = vpack.c.b16 %v9540, %v9540
      %v9854 = vpack.c.b16 %v9542, %v9541
      %v9855 = vpack.c.b16 %v9544, %v9543
      %v9856 = vpack.c.b16 %v9546, %v9545
      %v9857 = vpack.c.b16 %v9547, %v9547
      %v9858 = vpack.c.b16 %v9549, %v9548
      %v9859 = vpack.c.b16 %v9551, %v9550
      %v9860 = vpack.c.b16 %v9553, %v9552
      %v9861 = vpack.c.b16 %v9554, %v9554
      %v9862 = vpack.c.b16 %v9556, %v9555
      %v9863 = vpack.c.b16 %v9558, %v9557
      %v9864 = vpack.c.b16 %v9560, %v9559
      %v9865 = vpack.c.b16 %v9561, %v9561
      %v9866 = vpack.c.b16 %v9563, %v9562
      %v9867 = vpack.c.b16 %v9565, %v9564
      %v9868 = vpack.c.b16 %v9567, %v9566
      %v9869 = vpack.c.b16 %v9568, %v9568
      %v9870 = vpack.c.b16 %v9570, %v9569
      %v9871 = vpack.c.b16 %v9572, %v9571
      %v9872 = vpack.c.b16 %v9574, %v9573
      %v9873 = vpack.c.b16 %v9575, %v9575
      %v9874 = vpack.c.b16 %v9577, %v9576
      %v9875 = vpack.c.b16 %v9579, %v9578
      %v9876 = vpack.c.b16 %v9581, %v9580
      %v9877 = vpack.c.b16 %v9582, %v9582
      %v9878 = vpack.c.b16 %v9584, %v9583
      %v9879 = vpack.c.b16 %v9586, %v9585
      %v9880 = vpack.c.b16 %v9588, %v9587
      %v9881 = vpack.c.b16 %v9589, %v9589
      %v9882 = vpack.c.b16 %v9591, %v9590
      %v9883 = vpack.c.b16 %v9593, %v9592
      %v9884 = vpack.c.b16 %v9595, %v9594
      %v9885 = vpack.c.b16 %v9596, %v9596
      %v9886 = vpack.c.b16 %v9598, %v9597
      %v9887 = vpack.c.b16 %v9600, %v9599
      %v9888 = vpack.c.b16 %v9602, %v9601
      %v9889 = vpack.c.b16 %v9603, %v9603
      %v9890 = vpack.c.b16 %v9605, %v9604
      %v9891 = vpack.c.b16 %v9607, %v9606
      %v9892 = vpack.c.b16 %v9609, %v9608
      %v9893 = vpack.c.b16 %v9610, %v9610
      %v9894 = vpack.c.b16 %v9612, %v9611
      %v9895 = vpack.c.b16 %v9614, %v9613
      %v9896 = vpack.c.b16 %v9616, %v9615
      %v9897 = vpack.c.b16 %v9617, %v9617
      %v9898 = vpack.c.b16 %v9619, %v9618
      %v9899 = vpack.c.b16 %v9621, %v9620
      %v9900 = vpack.c.b16 %v9623, %v9622
      %v9901 = vpack.c.b16 %v9624, %v9624
      %v9902 = vpack.c.b16 %v9626, %v9625
      %v9903 = vpack.c.b16 %v9628, %v9627
      %v9904 = vpack.c.b16 %v9630, %v9629
      %v9905 = vpack.c.b16 %v9631, %v9631
      %v9906 = vpack.c.b16 %v9633, %v9632
      %v9907 = vpack.c.b16 %v9635, %v9634
      %v9908 = vpack.c.b16 %v9637, %v9636
      %v9909 = vpack.c.b16 %v9638, %v9638
      %v9910 = vpack.c.b16 %v9640, %v9639
      %v9911 = vpack.c.b16 %v9642, %v9641
      %v9912 = vpack.c.b16 %v9644, %v9643
      %v9913 = vpack.c.b16 %v9645, %v9645
      %v9914 = vpack.c.b16 %v9647, %v9646
      %v9915 = vpack.c.b16 %v9649, %v9648
      %v9916 = vpack.c.b16 %v9651, %v9650
      %v9917 = vpack.c.b16 %v9652, %v9652
      %v9918 = vpack.c.b16 %v9654, %v9653
      %v9919 = vpack.c.b16 %v9656, %v9655
      %v9920 = vpack.c.b16 %v9658, %v9657
      %v9921 = vpack.c.b16 %v9659, %v9659
      %v9922 = vpack.c.b16 %v9661, %v9660
      %v9923 = vpack.c.b16 %v9663, %v9662
      %v9924 = vpack.c.b16 %v9665, %v9664
      %v9925 = vpack.c.b16 %v9666, %v9666
      %v9926 = vpack.c.b16 %v9668, %v9667
      %v9927 = vpack.c.b16 %v9670, %v9669
      %v9928 = vpack.c.b16 %v9672, %v9671
      %v9929 = vpack.c.b16 %v9673, %v9673
      %10186 = vst [vmem:[%s339] sm:$0xff] %v9674
      %10187 = vst [vmem:[%s339 + $0x8] sm:$0xff] %v9675
      %10188 = vst [vmem:[%s339 + $0x10] sm:$0xff] %v9676
      %vm10189 = vcmask 125952
      %10190 = vst.msk [vmem:[%s339 + $0x18] sm:$0xf] %vm10189, %v9677
      %10191 = vst [vmem:[%s339 + $0x1c] sm:$0xff] %v9678
      %10192 = vst [vmem:[%s339 + $0x24] sm:$0xff] %v9679
      %10193 = vst [vmem:[%s339 + $0x2c] sm:$0xff] %v9680
      %10194 = vst.msk [vmem:[%s339 + $0x34] sm:$0xf] %vm10189, %v9681
      %10195 = vst [vmem:[%s339 + $0x38] sm:$0xff] %v9682
      %10196 = vst [vmem:[%s339 + $0x40] sm:$0xff] %v9683
      %10197 = vst [vmem:[%s339 + $0x48] sm:$0xff] %v9684
      %10198 = vst.msk [vmem:[%s339 + $0x50] sm:$0xf] %vm10189, %v9685
      %10199 = vst [vmem:[%s339 + $0x54] sm:$0xff] %v9686
      %10200 = vst [vmem:[%s339 + $0x5c] sm:$0xff] %v9687
      %10201 = vst [vmem:[%s339 + $0x64] sm:$0xff] %v9688
      %10202 = vst.msk [vmem:[%s339 + $0x6c] sm:$0xf] %vm10189, %v9689
      %10203 = vst [vmem:[%s339 + $0x70] sm:$0xff] %v9690
      %10204 = vst [vmem:[%s339 + $0x78] sm:$0xff] %v9691
      %10205 = vst [vmem:[%s339 + $0x80] sm:$0xff] %v9692
      %10206 = vst.msk [vmem:[%s339 + $0x88] sm:$0xf] %vm10189, %v9693
      %10207 = vst [vmem:[%s339 + $0x8c] sm:$0xff] %v9694
      %10208 = vst [vmem:[%s339 + $0x94] sm:$0xff] %v9695
      %10209 = vst [vmem:[%s339 + $0x9c] sm:$0xff] %v9696
      %10210 = vst.msk [vmem:[%s339 + $0xa4] sm:$0xf] %vm10189, %v9697
      %10211 = vst [vmem:[%s339 + $0xa8] sm:$0xff] %v9698
      %10212 = vst [vmem:[%s339 + $0xb0] sm:$0xff] %v9699
      %10213 = vst [vmem:[%s339 + $0xb8] sm:$0xff] %v9700
      %10214 = vst.msk [vmem:[%s339 + $0xc0] sm:$0xf] %vm10189, %v9701
      %10215 = vst [vmem:[%s339 + $0xc4] sm:$0xff] %v9702
      %10216 = vst [vmem:[%s339 + $0xcc] sm:$0xff] %v9703
      %10217 = vst [vmem:[%s339 + $0xd4] sm:$0xff] %v9704
      %10218 = vst.msk [vmem:[%s339 + $0xdc] sm:$0xf] %vm10189, %v9705
      %10219 = vst [vmem:[%s339 + $0xe0] sm:$0xff] %v9706
      %10220 = vst [vmem:[%s339 + $0xe8] sm:$0xff] %v9707
      %10221 = vst [vmem:[%s339 + $0xf0] sm:$0xff] %v9708
      %10222 = vst.msk [vmem:[%s339 + $0xf8] sm:$0xf] %vm10189, %v9709
      %10223 = vst [vmem:[%s339 + $0xfc] sm:$0xff] %v9710
      %10224 = vst [vmem:[%s339 + $0x104] sm:$0xff] %v9711
      %10225 = vst [vmem:[%s339 + $0x10c] sm:$0xff] %v9712
      %10226 = vst.msk [vmem:[%s339 + $0x114] sm:$0xf] %vm10189, %v9713
      %10227 = vst [vmem:[%s339 + $0x118] sm:$0xff] %v9714
      %10228 = vst [vmem:[%s339 + $0x120] sm:$0xff] %v9715
      %10229 = vst [vmem:[%s339 + $0x128] sm:$0xff] %v9716
      %10230 = vst.msk [vmem:[%s339 + $0x130] sm:$0xf] %vm10189, %v9717
      %10231 = vst [vmem:[%s339 + $0x134] sm:$0xff] %v9718
      %10232 = vst [vmem:[%s339 + $0x13c] sm:$0xff] %v9719
      %10233 = vst [vmem:[%s339 + $0x144] sm:$0xff] %v9720
      %10234 = vst.msk [vmem:[%s339 + $0x14c] sm:$0xf] %vm10189, %v9721
      %10235 = vst [vmem:[%s339 + $0x150] sm:$0xff] %v9722
      %10236 = vst [vmem:[%s339 + $0x158] sm:$0xff] %v9723
      %10237 = vst [vmem:[%s339 + $0x160] sm:$0xff] %v9724
      %10238 = vst.msk [vmem:[%s339 + $0x168] sm:$0xf] %vm10189, %v9725
      %10239 = vst [vmem:[%s339 + $0x16c] sm:$0xff] %v9726
      %10240 = vst [vmem:[%s339 + $0x174] sm:$0xff] %v9727
      %10241 = vst [vmem:[%s339 + $0x17c] sm:$0xff] %v9728
      %10242 = vst.msk [vmem:[%s339 + $0x184] sm:$0xf] %vm10189, %v9729
      %10243 = vst [vmem:[%s339 + $0x188] sm:$0xff] %v9730
      %10244 = vst [vmem:[%s339 + $0x190] sm:$0xff] %v9731
      %10245 = vst [vmem:[%s339 + $0x198] sm:$0xff] %v9732
      %10246 = vst.msk [vmem:[%s339 + $0x1a0] sm:$0xf] %vm10189, %v9733
      %10247 = vst [vmem:[%s339 + $0x1a4] sm:$0xff] %v9734
      %10248 = vst [vmem:[%s339 + $0x1ac] sm:$0xff] %v9735
      %10249 = vst [vmem:[%s339 + $0x1b4] sm:$0xff] %v9736
      %10250 = vst.msk [vmem:[%s339 + $0x1bc] sm:$0xf] %vm10189, %v9737
      %10251 = vst [vmem:[%s339 + $0x1c0] sm:$0xff] %v9738
      %10252 = vst [vmem:[%s339 + $0x1c8] sm:$0xff] %v9739
      %10253 = vst [vmem:[%s339 + $0x1d0] sm:$0xff] %v9740
      %10254 = vst.msk [vmem:[%s339 + $0x1d8] sm:$0xf] %vm10189, %v9741
      %10255 = vst [vmem:[%s339 + $0x1dc] sm:$0xff] %v9742
      %10256 = vst [vmem:[%s339 + $0x1e4] sm:$0xff] %v9743
      %10257 = vst [vmem:[%s339 + $0x1ec] sm:$0xff] %v9744
      %10258 = vst.msk [vmem:[%s339 + $0x1f4] sm:$0xf] %vm10189, %v9745
      %10259 = vst [vmem:[%s339 + $0x1f8] sm:$0xff] %v9746
      %10260 = vst [vmem:[%s339 + $0x200] sm:$0xff] %v9747
      %10261 = vst [vmem:[%s339 + $0x208] sm:$0xff] %v9748
      %10262 = vst.msk [vmem:[%s339 + $0x210] sm:$0xf] %vm10189, %v9749
      %10263 = vst [vmem:[%s339 + $0x214] sm:$0xff] %v9750
      %10264 = vst [vmem:[%s339 + $0x21c] sm:$0xff] %v9751
      %10265 = vst [vmem:[%s339 + $0x224] sm:$0xff] %v9752
      %10266 = vst.msk [vmem:[%s339 + $0x22c] sm:$0xf] %vm10189, %v9753
      %10267 = vst [vmem:[%s339 + $0x230] sm:$0xff] %v9754
      %10268 = vst [vmem:[%s339 + $0x238] sm:$0xff] %v9755
      %10269 = vst [vmem:[%s339 + $0x240] sm:$0xff] %v9756
      %10270 = vst.msk [vmem:[%s339 + $0x248] sm:$0xf] %vm10189, %v9757
      %10271 = vst [vmem:[%s339 + $0x24c] sm:$0xff] %v9758
      %10272 = vst [vmem:[%s339 + $0x254] sm:$0xff] %v9759
      %10273 = vst [vmem:[%s339 + $0x25c] sm:$0xff] %v9760
      %10274 = vst.msk [vmem:[%s339 + $0x264] sm:$0xf] %vm10189, %v9761
      %10275 = vst [vmem:[%s339 + $0x268] sm:$0xff] %v9762
      %10276 = vst [vmem:[%s339 + $0x270] sm:$0xff] %v9763
      %10277 = vst [vmem:[%s339 + $0x278] sm:$0xff] %v9764
      %10278 = vst.msk [vmem:[%s339 + $0x280] sm:$0xf] %vm10189, %v9765
      %10279 = vst [vmem:[%s339 + $0x284] sm:$0xff] %v9766
      %10280 = vst [vmem:[%s339 + $0x28c] sm:$0xff] %v9767
      %10281 = vst [vmem:[%s339 + $0x294] sm:$0xff] %v9768
      %10282 = vst.msk [vmem:[%s339 + $0x29c] sm:$0xf] %vm10189, %v9769
      %10283 = vst [vmem:[%s339 + $0x2a0] sm:$0xff] %v9770
      %10284 = vst [vmem:[%s339 + $0x2a8] sm:$0xff] %v9771
      %10285 = vst [vmem:[%s339 + $0x2b0] sm:$0xff] %v9772
      %10286 = vst.msk [vmem:[%s339 + $0x2b8] sm:$0xf] %vm10189, %v9773
      %10287 = vst [vmem:[%s339 + $0x2bc] sm:$0xff] %v9774
      %10288 = vst [vmem:[%s339 + $0x2c4] sm:$0xff] %v9775
      %10289 = vst [vmem:[%s339 + $0x2cc] sm:$0xff] %v9776
      %10290 = vst.msk [vmem:[%s339 + $0x2d4] sm:$0xf] %vm10189, %v9777
      %10291 = vst [vmem:[%s339 + $0x2d8] sm:$0xff] %v9778
      %10292 = vst [vmem:[%s339 + $0x2e0] sm:$0xff] %v9779
      %10293 = vst [vmem:[%s339 + $0x2e8] sm:$0xff] %v9780
      %10294 = vst.msk [vmem:[%s339 + $0x2f0] sm:$0xf] %vm10189, %v9781
      %10295 = vst [vmem:[%s339 + $0x2f4] sm:$0xff] %v9782
      %10296 = vst [vmem:[%s339 + $0x2fc] sm:$0xff] %v9783
      %10297 = vst [vmem:[%s339 + $0x304] sm:$0xff] %v9784
      %10298 = vst.msk [vmem:[%s339 + $0x30c] sm:$0xf] %vm10189, %v9785
      %10299 = vst [vmem:[%s339 + $0x310] sm:$0xff] %v9786
      %10300 = vst [vmem:[%s339 + $0x318] sm:$0xff] %v9787
      %10301 = vst [vmem:[%s339 + $0x320] sm:$0xff] %v9788
      %10302 = vst.msk [vmem:[%s339 + $0x328] sm:$0xf] %vm10189, %v9789
      %10303 = vst [vmem:[%s339 + $0x32c] sm:$0xff] %v9790
      %10304 = vst [vmem:[%s339 + $0x334] sm:$0xff] %v9791
      %10305 = vst [vmem:[%s339 + $0x33c] sm:$0xff] %v9792
      %10306 = vst.msk [vmem:[%s339 + $0x344] sm:$0xf] %vm10189, %v9793
      %10307 = vst [vmem:[%s339 + $0x348] sm:$0xff] %v9794
      %10308 = vst [vmem:[%s339 + $0x350] sm:$0xff] %v9795
      %10309 = vst [vmem:[%s339 + $0x358] sm:$0xff] %v9796
      %10310 = vst.msk [vmem:[%s339 + $0x360] sm:$0xf] %vm10189, %v9797
      %10311 = vst [vmem:[%s339 + $0x364] sm:$0xff] %v9798
      %10312 = vst [vmem:[%s339 + $0x36c] sm:$0xff] %v9799
      %10313 = vst [vmem:[%s339 + $0x374] sm:$0xff] %v9800
      %10314 = vst.msk [vmem:[%s339 + $0x37c] sm:$0xf] %vm10189, %v9801
      %10315 = vst [vmem:[%s339 + $0x380] sm:$0xff] %v9802
      %10316 = vst [vmem:[%s339 + $0x388] sm:$0xff] %v9803
      %10317 = vst [vmem:[%s339 + $0x390] sm:$0xff] %v9804
      %10318 = vst.msk [vmem:[%s339 + $0x398] sm:$0xf] %vm10189, %v9805
      %10319 = vst [vmem:[%s339 + $0x39c] sm:$0xff] %v9806
      %10320 = vst [vmem:[%s339 + $0x3a4] sm:$0xff] %v9807
      %10321 = vst [vmem:[%s339 + $0x3ac] sm:$0xff] %v9808
      %10322 = vst.msk [vmem:[%s339 + $0x3b4] sm:$0xf] %vm10189, %v9809
      %10323 = vst [vmem:[%s339 + $0x3b8] sm:$0xff] %v9810
      %10324 = vst [vmem:[%s339 + $0x3c0] sm:$0xff] %v9811
      %10325 = vst [vmem:[%s339 + $0x3c8] sm:$0xff] %v9812
      %10326 = vst.msk [vmem:[%s339 + $0x3d0] sm:$0xf] %vm10189, %v9813
      %10327 = vst [vmem:[%s339 + $0x3d4] sm:$0xff] %v9814
      %10328 = vst [vmem:[%s339 + $0x3dc] sm:$0xff] %v9815
      %10329 = vst [vmem:[%s339 + $0x3e4] sm:$0xff] %v9816
      %10330 = vst.msk [vmem:[%s339 + $0x3ec] sm:$0xf] %vm10189, %v9817
      %10331 = vst [vmem:[%s339 + $0x3f0] sm:$0xff] %v9818
      %10332 = vst [vmem:[%s339 + $0x3f8] sm:$0xff] %v9819
      %10333 = vst [vmem:[%s339 + $0x400] sm:$0xff] %v9820
      %10334 = vst.msk [vmem:[%s339 + $0x408] sm:$0xf] %vm10189, %v9821
      %10335 = vst [vmem:[%s339 + $0x40c] sm:$0xff] %v9822
      %10336 = vst [vmem:[%s339 + $0x414] sm:$0xff] %v9823
      %10337 = vst [vmem:[%s339 + $0x41c] sm:$0xff] %v9824
      %10338 = vst.msk [vmem:[%s339 + $0x424] sm:$0xf] %vm10189, %v9825
      %10339 = vst [vmem:[%s339 + $0x428] sm:$0xff] %v9826
      %10340 = vst [vmem:[%s339 + $0x430] sm:$0xff] %v9827
      %10341 = vst [vmem:[%s339 + $0x438] sm:$0xff] %v9828
      %10342 = vst.msk [vmem:[%s339 + $0x440] sm:$0xf] %vm10189, %v9829
      %10343 = vst [vmem:[%s339 + $0x444] sm:$0xff] %v9830
      %10344 = vst [vmem:[%s339 + $0x44c] sm:$0xff] %v9831
      %10345 = vst [vmem:[%s339 + $0x454] sm:$0xff] %v9832
      %10346 = vst.msk [vmem:[%s339 + $0x45c] sm:$0xf] %vm10189, %v9833
      %10347 = vst [vmem:[%s339 + $0x460] sm:$0xff] %v9834
      %10348 = vst [vmem:[%s339 + $0x468] sm:$0xff] %v9835
      %10349 = vst [vmem:[%s339 + $0x470] sm:$0xff] %v9836
      %10350 = vst.msk [vmem:[%s339 + $0x478] sm:$0xf] %vm10189, %v9837
      %10351 = vst [vmem:[%s339 + $0x47c] sm:$0xff] %v9838
      %10352 = vst [vmem:[%s339 + $0x484] sm:$0xff] %v9839
      %10353 = vst [vmem:[%s339 + $0x48c] sm:$0xff] %v9840
      %10354 = vst.msk [vmem:[%s339 + $0x494] sm:$0xf] %vm10189, %v9841
      %10355 = vst [vmem:[%s339 + $0x498] sm:$0xff] %v9842
      %10356 = vst [vmem:[%s339 + $0x4a0] sm:$0xff] %v9843
      %10357 = vst [vmem:[%s339 + $0x4a8] sm:$0xff] %v9844
      %10358 = vst.msk [vmem:[%s339 + $0x4b0] sm:$0xf] %vm10189, %v9845
      %10359 = vst [vmem:[%s339 + $0x4b4] sm:$0xff] %v9846
      %10360 = vst [vmem:[%s339 + $0x4bc] sm:$0xff] %v9847
      %10361 = vst [vmem:[%s339 + $0x4c4] sm:$0xff] %v9848
      %10362 = vst.msk [vmem:[%s339 + $0x4cc] sm:$0xf] %vm10189, %v9849
      %10363 = vst [vmem:[%s339 + $0x4d0] sm:$0xff] %v9850
      %10364 = vst [vmem:[%s339 + $0x4d8] sm:$0xff] %v9851
      %10365 = vst [vmem:[%s339 + $0x4e0] sm:$0xff] %v9852
      %10366 = vst.msk [vmem:[%s339 + $0x4e8] sm:$0xf] %vm10189, %v9853
      %10367 = vst [vmem:[%s339 + $0x4ec] sm:$0xff] %v9854
      %10368 = vst [vmem:[%s339 + $0x4f4] sm:$0xff] %v9855
      %10369 = vst [vmem:[%s339 + $0x4fc] sm:$0xff] %v9856
      %10370 = vst.msk [vmem:[%s339 + $0x504] sm:$0xf] %vm10189, %v9857
      %10371 = vst [vmem:[%s339 + $0x508] sm:$0xff] %v9858
      %10372 = vst [vmem:[%s339 + $0x510] sm:$0xff] %v9859
      %10373 = vst [vmem:[%s339 + $0x518] sm:$0xff] %v9860
      %10374 = vst.msk [vmem:[%s339 + $0x520] sm:$0xf] %vm10189, %v9861
      %10375 = vst [vmem:[%s339 + $0x524] sm:$0xff] %v9862
      %10376 = vst [vmem:[%s339 + $0x52c] sm:$0xff] %v9863
      %10377 = vst [vmem:[%s339 + $0x534] sm:$0xff] %v9864
      %10378 = vst.msk [vmem:[%s339 + $0x53c] sm:$0xf] %vm10189, %v9865
      %10379 = vst [vmem:[%s339 + $0x540] sm:$0xff] %v9866
      %10380 = vst [vmem:[%s339 + $0x548] sm:$0xff] %v9867
      %10381 = vst [vmem:[%s339 + $0x550] sm:$0xff] %v9868
      %10382 = vst.msk [vmem:[%s339 + $0x558] sm:$0xf] %vm10189, %v9869
      %10383 = vst [vmem:[%s339 + $0x55c] sm:$0xff] %v9870
      %10384 = vst [vmem:[%s339 + $0x564] sm:$0xff] %v9871
      %10385 = vst [vmem:[%s339 + $0x56c] sm:$0xff] %v9872
      %10386 = vst.msk [vmem:[%s339 + $0x574] sm:$0xf] %vm10189, %v9873
      %10387 = vst [vmem:[%s339 + $0x578] sm:$0xff] %v9874
      %10388 = vst [vmem:[%s339 + $0x580] sm:$0xff] %v9875
      %10389 = vst [vmem:[%s339 + $0x588] sm:$0xff] %v9876
      %10390 = vst.msk [vmem:[%s339 + $0x590] sm:$0xf] %vm10189, %v9877
      %10391 = vst [vmem:[%s339 + $0x594] sm:$0xff] %v9878
      %10392 = vst [vmem:[%s339 + $0x59c] sm:$0xff] %v9879
      %10393 = vst [vmem:[%s339 + $0x5a4] sm:$0xff] %v9880
      %10394 = vst.msk [vmem:[%s339 + $0x5ac] sm:$0xf] %vm10189, %v9881
      %10395 = vst [vmem:[%s339 + $0x5b0] sm:$0xff] %v9882
      %10396 = vst [vmem:[%s339 + $0x5b8] sm:$0xff] %v9883
      %10397 = vst [vmem:[%s339 + $0x5c0] sm:$0xff] %v9884
      %10398 = vst.msk [vmem:[%s339 + $0x5c8] sm:$0xf] %vm10189, %v9885
      %10399 = vst [vmem:[%s339 + $0x5cc] sm:$0xff] %v9886
      %10400 = vst [vmem:[%s339 + $0x5d4] sm:$0xff] %v9887
      %10401 = vst [vmem:[%s339 + $0x5dc] sm:$0xff] %v9888
      %10402 = vst.msk [vmem:[%s339 + $0x5e4] sm:$0xf] %vm10189, %v9889
      %10403 = vst [vmem:[%s339 + $0x5e8] sm:$0xff] %v9890
      %10404 = vst [vmem:[%s339 + $0x5f0] sm:$0xff] %v9891
      %10405 = vst [vmem:[%s339 + $0x5f8] sm:$0xff] %v9892
      %10406 = vst.msk [vmem:[%s339 + $0x600] sm:$0xf] %vm10189, %v9893
      %10407 = vst [vmem:[%s339 + $0x604] sm:$0xff] %v9894
      %10408 = vst [vmem:[%s339 + $0x60c] sm:$0xff] %v9895
      %10409 = vst [vmem:[%s339 + $0x614] sm:$0xff] %v9896
      %10410 = vst.msk [vmem:[%s339 + $0x61c] sm:$0xf] %vm10189, %v9897
      %10411 = vst [vmem:[%s339 + $0x620] sm:$0xff] %v9898
      %10412 = vst [vmem:[%s339 + $0x628] sm:$0xff] %v9899
      %10413 = vst [vmem:[%s339 + $0x630] sm:$0xff] %v9900
      %10414 = vst.msk [vmem:[%s339 + $0x638] sm:$0xf] %vm10189, %v9901
      %10415 = vst [vmem:[%s339 + $0x63c] sm:$0xff] %v9902
      %10416 = vst [vmem:[%s339 + $0x644] sm:$0xff] %v9903
      %10417 = vst [vmem:[%s339 + $0x64c] sm:$0xff] %v9904
      %10418 = vst.msk [vmem:[%s339 + $0x654] sm:$0xf] %vm10189, %v9905
      %10419 = vst [vmem:[%s339 + $0x658] sm:$0xff] %v9906
      %10420 = vst [vmem:[%s339 + $0x660] sm:$0xff] %v9907
      %10421 = vst [vmem:[%s339 + $0x668] sm:$0xff] %v9908
      %10422 = vst.msk [vmem:[%s339 + $0x670] sm:$0xf] %vm10189, %v9909
      %10423 = vst [vmem:[%s339 + $0x674] sm:$0xff] %v9910
      %10424 = vst [vmem:[%s339 + $0x67c] sm:$0xff] %v9911
      %10425 = vst [vmem:[%s339 + $0x684] sm:$0xff] %v9912
      %10426 = vst.msk [vmem:[%s339 + $0x68c] sm:$0xf] %vm10189, %v9913
      %10427 = vst [vmem:[%s339 + $0x690] sm:$0xff] %v9914
      %10428 = vst [vmem:[%s339 + $0x698] sm:$0xff] %v9915
      %10429 = vst [vmem:[%s339 + $0x6a0] sm:$0xff] %v9916
      %10430 = vst.msk [vmem:[%s339 + $0x6a8] sm:$0xf] %vm10189, %v9917
      %10431 = vst [vmem:[%s339 + $0x6ac] sm:$0xff] %v9918
      %10432 = vst [vmem:[%s339 + $0x6b4] sm:$0xff] %v9919
      %10433 = vst [vmem:[%s339 + $0x6bc] sm:$0xff] %v9920
      %10434 = vst.msk [vmem:[%s339 + $0x6c4] sm:$0xf] %vm10189, %v9921
      %10435 = vst [vmem:[%s339 + $0x6c8] sm:$0xff] %v9922
      %10436 = vst [vmem:[%s339 + $0x6d0] sm:$0xff] %v9923
      %10437 = vst [vmem:[%s339 + $0x6d8] sm:$0xff] %v9924
      %10438 = vst.msk [vmem:[%s339 + $0x6e0] sm:$0xf] %vm10189, %v9925
      %10439 = vst [vmem:[%s339 + $0x6e4] sm:$0xff] %v9926
      %10440 = vst [vmem:[%s339 + $0x6ec] sm:$0xff] %v9927
      %10441 = vst [vmem:[%s339 + $0x6f4] sm:$0xff] %v9928
      %10442 = vst.msk [vmem:[%s339 + $0x6fc] sm:$0xf] %vm10189, %v9929
      %s10443 = smul.u32 64, %s20
      %p10444 = scmp.lt.s32.totalorder %s10443, 255
      %s10445 = scalar_select %p10444, %s10443, 255
      %s10446 = smul.addr %s10445, 7
      %s10447 = smul.addr %s10446, 4
      %s10448 = scalar_lea.vmem %s9, %s10447
      // Predicated region
      $region57: #{autoencoder_forward.1} parent=55 // pred_check
        %p10449 = pneg %p232
      $region58: #{autoencoder_forward.1} parent=55 // pred_check_branch
        %10451 = sbr.rel (%p10449) target = $region60
      $region59: #{autoencoder_forward.1} parent=55 // pred_region
        %s10452 = smul.u32 64, %s20
      $region60: #{autoencoder_forward.1} parent=55 // pred_fallthru
        _
    $region56: #{autoencoder_forward.1} parent=5 // pred_fallthru
      _
    %p10453 = scmp.le.s32.totalorder 2, %s15
    // Predicated region
    $region61: #{autoencoder_forward.1} parent=5 // pred_check
      %p10454 = pneg %p10453
    $region62: #{autoencoder_forward.1} parent=5 // pred_check_branch
      %10456 = sbr.rel (%p10454) target = $region64
    $region63: #{autoencoder_forward.1} parent=5 // pred_region
      %s10457 = ssub.s32 %s15, 2
      // Predicated region
      $region65: #{autoencoder_forward.1} parent=63 // pred_check
        %p10458 = pneg %p238
      $region66: #{autoencoder_forward.1} parent=63 // pred_check_branch
        %10460 = sbr.rel (%p10458) target = $region68
      $region67: #{autoencoder_forward.1} parent=63 // pred_region
        %s10461 = smul.u32 64, %s21
        %p10462 = scmp.lt.s32.totalorder %s10461, 255
        %s10463 = scalar_select %p10462, %s10461, 255
        %s10464 = smul.addr %s10463, 7
        %s10465 = smul.addr %s10464, 4
        %s10466 = scalar_lea.vmem %s9, %s10465
      $region68: #{autoencoder_forward.1} parent=63 // pred_fallthru
        _
    $region64: #{autoencoder_forward.1} parent=5 // pred_fallthru
      _
  $region6: #{autoencoder_forward.1} parent=0 // loop_footer
    %s19 = sadd.s32 1, %s15
  $region7: #{autoencoder_forward.1} parent=0 // loop_footer_branch
    %14 = sbr.rel target = $region3
  $region8: #{autoencoder_forward.1} parent=0 // loop_exit
    _

</llo_original>
